<compile_context>
chip_gen: v5e
topology: v5e:2x2
jax: 0.10.0
libtpu: 0.0.40
codegen_flags: <defaults>
</compile_context>

<pallas_src>
import functools

import jax
import jax.numpy as jnp
from jax.experimental import pallas as pl
from jax.experimental.pallas import tpu as pltpu


def _shifted_tap(plane, dy, dx, h_idx, w_idx, H, W):
    """Returns t with t[h, w] = plane[h+dy, w+dx], zero outside [0,H) x [0,W)."""
    sh = plane
    if dy != 0:
        sh = pltpu.roll(sh, shift=(-dy) % H, axis=0)   # sublane (H) rotation
    if dx != 0:
        sh = pltpu.roll(sh, shift=(-dx) % W, axis=1)   # lane (W) rotation
    if dy != 0 or dx != 0:
        valid = ((h_idx + dy >= 0) & (h_idx + dy < H) &
                 (w_idx + dx >= 0) & (w_idx + dx < W))
        sh = jnp.where(valid, sh, 0.0)                 # mask wrap-around / border
    return sh


def _conv3x3_folded(planes, w_ref, b_ref, C_in, C_out, d, h_idx, w_idx, H, W):
    """3x3 'same' conv (dilation d). Weights/bias already have BN folded in.

    planes: list of C_in (H, W) float32 arrays (one per input channel).
    w_ref : SMEM ref, flat (C_out*C_in*3*3,) float32, row-major (o, i, ky, kx).
    b_ref : SMEM ref, (C_out,) float32.
    Returns: list of C_out (H, W) float32 arrays (no activation applied).
    """
    accs = [jnp.zeros((H, W), jnp.float32) for _ in range(C_out)]
    for ky in range(3):
        for kx in range(3):
            dy = (ky - 1) * d
            dx = (kx - 1) * d
            for i in range(C_in):
                tap = _shifted_tap(planes[i], dy, dx, h_idx, w_idx, H, W)
                for o in range(C_out):
                    widx = ((o * C_in + i) * 3 + ky) * 3 + kx
                    accs[o] = accs[o] + w_ref[widx] * tap
    return [accs[o] + b_ref[o] for o in range(C_out)]


def _residual_block_kernel(x_ref, w1_ref, b1_ref, w2_ref, b2_ref, out_ref, *,
                           C, H, W, d, slope):
    """Fused conv-bn-lrelu-conv-bn-(+x)-lrelu for one batch element (NCHW)."""
    h_idx = jax.lax.broadcasted_iota(jnp.int32, (H, W), 0)
    w_idx = jax.lax.broadcasted_iota(jnp.int32, (H, W), 1)

    def leaky(v):
        return jnp.where(v > 0, v, slope * v)

    x_planes = [x_ref[0, c].astype(jnp.float32) for c in range(C)]

    # conv1 (+ folded BN1) + LeakyReLU
    h1 = _conv3x3_folded(x_planes, w1_ref, b1_ref, C, C, d, h_idx, w_idx, H, W)
    h1 = [leaky(v) for v in h1]

    # conv2 (+ folded BN2) + residual + LeakyReLU, written directly in NCHW
    h2 = _conv3x3_folded(h1, w2_ref, b2_ref, C, C, d, h_idx, w_idx, H, W)
    for c in range(C):
        out_ref[0, c] = leaky(h2[c] + x_planes[c]).astype(out_ref.dtype)


def residual_block(x, params, *, dilation=1, stride=1, eps=1e-5,
                   negative_slope=0.2):
    """JAX/Pallas equivalent of ResidualBlock.forward (eval-mode BatchNorm)."""
    if stride != 1:
        raise NotImplementedError("only stride == 1 is supported (residual add)")
    B, C, H, W = x.shape
    w1, b1 = params["conv1_w"], params["conv1_b"]
    w2, b2 = params["conv2_w"], params["conv2_b"]
    assert w1.shape == (C, C, 3, 3) and w2.shape == (C, C, 3, 3)

    # Fold eval-mode BatchNorm (gamma, beta, running mean/var) into conv w/b.
    s1 = (params["bn1_gamma"] / jnp.sqrt(params["bn1_var"] + eps)).astype(jnp.float32)
    w1f = (w1.astype(jnp.float32) * s1[:, None, None, None]).reshape(-1)
    b1f = (b1.astype(jnp.float32) - params["bn1_mean"]) * s1 + params["bn1_beta"]
    s2 = (params["bn2_gamma"] / jnp.sqrt(params["bn2_var"] + eps)).astype(jnp.float32)
    w2f = (w2.astype(jnp.float32) * s2[:, None, None, None]).reshape(-1)
    b2f = (b2.astype(jnp.float32) - params["bn2_mean"]) * s2 + params["bn2_beta"]

    kernel = functools.partial(_residual_block_kernel, C=C, H=H, W=W,
                               d=dilation, slope=negative_slope)
    smem = pl.BlockSpec(memory_space=pltpu.MemorySpace.SMEM)

    return pl.pallas_call(
        kernel,
        out_shape=jax.ShapeDtypeStruct((B, C, H, W), x.dtype),
        grid_spec=pltpu.PrefetchScalarGridSpec(
            num_scalar_prefetch=0,
            grid=(B,),
            in_specs=[
                pl.BlockSpec((1, C, H, W), lambda b: (b, 0, 0, 0)),  # x (NCHW)
                smem, smem, smem, smem,                              # folded params
            ],
            out_specs=pl.BlockSpec((1, C, H, W), lambda b: (b, 0, 0, 0)),
        ),
        compiler_params=pltpu.CompilerParams(
            dimension_semantics=("parallel",),
        ),
    )(x, w1f, b1f, w2f, b2f)


def _reference(x, params, *, dilation=1, eps=1e-5, negative_slope=0.2):
    """Pure-JAX reference matching the PyTorch module (eval-mode BN)."""
    def conv(z, w, b, d):
        y = jax.lax.conv_general_dilated(
            z, w, window_strides=(1, 1), padding=[(d, d), (d, d)],
            rhs_dilation=(d, d), dimension_numbers=("NCHW", "OIHW", "NCHW"))
        return y + b[None, :, None, None]

    def bn(z, gamma, beta, mean, var):
        return ((z - mean[None, :, None, None])
                / jnp.sqrt(var[None, :, None, None] + eps)
                * gamma[None, :, None, None] + beta[None, :, None, None])

    def lrelu(z):
        return jnp.where(z > 0, z, negative_slope * z)

    h = lrelu(bn(conv(x, params["conv1_w"], params["conv1_b"], dilation),
                 params["bn1_gamma"], params["bn1_beta"],
                 params["bn1_mean"], params["bn1_var"]))
    h = bn(conv(h, params["conv2_w"], params["conv2_b"], dilation),
           params["bn2_gamma"], params["bn2_beta"],
           params["bn2_mean"], params["bn2_var"])
    return lrelu(h + x)


if __name__ == "__main__":
    B, C, H, W = 2, 4, 16, 16

    key = jax.random.PRNGKey(0)
    ks = jax.random.split(key, 7)
    x = jax.random.normal(ks[0], (B, C, H, W), dtype=jnp.float32)

    def bn_params(k):
        k1, k2, k3, k4 = jax.random.split(k, 4)
        return (1.0 + 0.1 * jax.random.normal(k1, (C,), jnp.float32),    # gamma
                0.1 * jax.random.normal(k2, (C,), jnp.float32),          # beta
                0.1 * jax.random.normal(k3, (C,), jnp.float32),          # running_mean
                0.5 + jnp.abs(jax.random.normal(k4, (C,), jnp.float32))) # running_var

    g1, be1, m1, v1 = bn_params(ks[1])
    g2, be2, m2, v2 = bn_params(ks[2])
    params = dict(
        conv1_w=0.2 * jax.random.normal(ks[3], (C, C, 3, 3), jnp.float32),
        conv1_b=0.1 * jax.random.normal(ks[4], (C,), jnp.float32),
        conv2_w=0.2 * jax.random.normal(ks[5], (C, C, 3, 3), jnp.float32),
        conv2_b=0.1 * jax.random.normal(ks[6], (C,), jnp.float32),
        bn1_gamma=g1, bn1_beta=be1, bn1_mean=m1, bn1_var=v1,
        bn2_gamma=g2, bn2_beta=be2, bn2_mean=m2, bn2_var=v2,
    )

    for dilation in (1, 2):   # module uses padding = dilation (same-size output)
        out = residual_block(x, params, dilation=dilation)
        out = jax.block_until_ready(out)
        ref = _reference(x, params, dilation=dilation)
        assert out.shape == (B, C, H, W)
        assert out.dtype == x.dtype
        err = float(jnp.max(jnp.abs(out - ref)))
        assert jnp.allclose(out, ref, atol=1e-4, rtol=1e-4), \
            f"mismatch vs reference (dilation={dilation}), max abs err = {err}"

    print("KERNEL_OK")
</pallas_src>

<mosaic_0001>
module attributes {stable_mosaic.version = 11 : i64} {
  func.func @_residual_block_kernel(%arg0: i32, %arg1: memref<1x4x16x16xf32, #tpu.memory_space<vmem>>, %arg2: memref<144xf32, #tpu.memory_space<smem>>, %arg3: memref<4xf32, #tpu.memory_space<smem>>, %arg4: memref<144xf32, #tpu.memory_space<smem>>, %arg5: memref<4xf32, #tpu.memory_space<smem>>, %arg6: memref<1x4x16x16xf32, #tpu.memory_space<vmem>>) attributes {dimension_semantics = [#tpu.dimension_semantics<parallel>], iteration_bounds = array<i64: 2>, scalar_prefetch = 0 : i64, scratch_operands = 0 : i64, tpu.core_type = #tpu.core_type<tc>, window_params = [{transform_indices = @transform_0, window_bounds = array<i64: 1, 4, 16, 16>}, {transform_indices = @transform_1, window_bounds = array<i64: 144>}, {transform_indices = @transform_2, window_bounds = array<i64: 4>}, {transform_indices = @transform_3, window_bounds = array<i64: 144>}, {transform_indices = @transform_4, window_bounds = array<i64: 4>}, {transform_indices = @transform_5, window_bounds = array<i64: 1, 4, 16, 16>}]} {
    %0 = tpu.iota {dimensions = array<i32: 0>} : vector<16x16xi32>
    %1 = tpu.iota {dimensions = array<i32: 1>} : vector<16x16xi32>
    %c0 = arith.constant 0 : index
    %c0_0 = arith.constant 0 : index
    %c0_1 = arith.constant 0 : index
    %c0_2 = arith.constant 0 : index
    %2 = vector.load %arg1[%c0, %c0_0, %c0_1, %c0_2] : memref<1x4x16x16xf32, #tpu.memory_space<vmem>>, vector<1x1x16x16xf32>
    %3 = vector.shape_cast %2 : vector<1x1x16x16xf32> to vector<16x16xf32>
    %c0_3 = arith.constant 0 : index
    %c1 = arith.constant 1 : index
    %c0_4 = arith.constant 0 : index
    %c0_5 = arith.constant 0 : index
    %4 = vector.load %arg1[%c0_3, %c1, %c0_4, %c0_5] : memref<1x4x16x16xf32, #tpu.memory_space<vmem>>, vector<1x1x16x16xf32>
    %5 = vector.shape_cast %4 : vector<1x1x16x16xf32> to vector<16x16xf32>
    %c0_6 = arith.constant 0 : index
    %c2 = arith.constant 2 : index
    %c0_7 = arith.constant 0 : index
    %c0_8 = arith.constant 0 : index
    %6 = vector.load %arg1[%c0_6, %c2, %c0_7, %c0_8] : memref<1x4x16x16xf32, #tpu.memory_space<vmem>>, vector<1x1x16x16xf32>
    %7 = vector.shape_cast %6 : vector<1x1x16x16xf32> to vector<16x16xf32>
    %c0_9 = arith.constant 0 : index
    %c3 = arith.constant 3 : index
    %c0_10 = arith.constant 0 : index
    %c0_11 = arith.constant 0 : index
    %8 = vector.load %arg1[%c0_9, %c3, %c0_10, %c0_11] : memref<1x4x16x16xf32, #tpu.memory_space<vmem>>, vector<1x1x16x16xf32>
    %9 = vector.shape_cast %8 : vector<1x1x16x16xf32> to vector<16x16xf32>
    %cst = arith.constant 0.000000e+00 : f32
    %10 = vector.broadcast %cst : f32 to vector<16x16xf32>
    %cst_12 = arith.constant 0.000000e+00 : f32
    %11 = vector.broadcast %cst_12 : f32 to vector<16x16xf32>
    %cst_13 = arith.constant 0.000000e+00 : f32
    %12 = vector.broadcast %cst_13 : f32 to vector<16x16xf32>
    %cst_14 = arith.constant 0.000000e+00 : f32
    %13 = vector.broadcast %cst_14 : f32 to vector<16x16xf32>
    %c1_i32 = arith.constant 1 : i32
    %14 = tpu.dynamic_rotate %3 by %c1_i32 dim 0 : vector<16x16xf32>, i32 -> vector<16x16xf32>
    %c1_i32_15 = arith.constant 1 : i32
    %15 = tpu.dynamic_rotate %14 by %c1_i32_15 dim 1 : vector<16x16xf32>, i32 -> vector<16x16xf32>
    %c-1_i32 = arith.constant -1 : i32
    %16 = vector.broadcast %c-1_i32 : i32 to vector<16x16xi32>
    %17 = arith.addi %0, %16 : vector<16x16xi32>
    %c0_i32 = arith.constant 0 : i32
    %18 = vector.broadcast %c0_i32 : i32 to vector<16x16xi32>
    %19 = arith.cmpi sge, %17, %18 : vector<16x16xi32>
    %c-1_i32_16 = arith.constant -1 : i32
    %20 = vector.broadcast %c-1_i32_16 : i32 to vector<16x16xi32>
    %21 = arith.addi %0, %20 : vector<16x16xi32>
    %c16_i32 = arith.constant 16 : i32
    %22 = vector.broadcast %c16_i32 : i32 to vector<16x16xi32>
    %23 = arith.cmpi slt, %21, %22 : vector<16x16xi32>
    %24 = arith.andi %19, %23 : vector<16x16xi1>
    %c-1_i32_17 = arith.constant -1 : i32
    %25 = vector.broadcast %c-1_i32_17 : i32 to vector<16x16xi32>
    %26 = arith.addi %1, %25 : vector<16x16xi32>
    %c0_i32_18 = arith.constant 0 : i32
    %27 = vector.broadcast %c0_i32_18 : i32 to vector<16x16xi32>
    %28 = arith.cmpi sge, %26, %27 : vector<16x16xi32>
    %29 = arith.andi %24, %28 : vector<16x16xi1>
    %c-1_i32_19 = arith.constant -1 : i32
    %30 = vector.broadcast %c-1_i32_19 : i32 to vector<16x16xi32>
    %31 = arith.addi %1, %30 : vector<16x16xi32>
    %c16_i32_20 = arith.constant 16 : i32
    %32 = vector.broadcast %c16_i32_20 : i32 to vector<16x16xi32>
    %33 = arith.cmpi slt, %31, %32 : vector<16x16xi32>
    %34 = arith.andi %29, %33 : vector<16x16xi1>
    %cst_21 = arith.constant 0.000000e+00 : f32
    %35 = vector.broadcast %cst_21 : f32 to vector<16x16xf32>
    %36 = arith.select %34, %15, %35 : vector<16x16xi1>, vector<16x16xf32>
    %c0_22 = arith.constant 0 : index
    %37 = memref.load %arg2[%c0_22] : memref<144xf32, #tpu.memory_space<smem>>
    %38 = vector.broadcast %37 : f32 to vector<16x16xf32>
    %39 = arith.mulf %38, %36 : vector<16x16xf32>
    %40 = arith.addf %10, %39 : vector<16x16xf32>
    %c36 = arith.constant 36 : index
    %41 = memref.load %arg2[%c36] : memref<144xf32, #tpu.memory_space<smem>>
    %42 = vector.broadcast %41 : f32 to vector<16x16xf32>
    %43 = arith.mulf %42, %36 : vector<16x16xf32>
    %44 = arith.addf %11, %43 : vector<16x16xf32>
    %c72 = arith.constant 72 : index
    %45 = memref.load %arg2[%c72] : memref<144xf32, #tpu.memory_space<smem>>
    %46 = vector.broadcast %45 : f32 to vector<16x16xf32>
    %47 = arith.mulf %46, %36 : vector<16x16xf32>
    %48 = arith.addf %12, %47 : vector<16x16xf32>
    %c108 = arith.constant 108 : index
    %49 = memref.load %arg2[%c108] : memref<144xf32, #tpu.memory_space<smem>>
    %50 = vector.broadcast %49 : f32 to vector<16x16xf32>
    %51 = arith.mulf %50, %36 : vector<16x16xf32>
    %52 = arith.addf %13, %51 : vector<16x16xf32>
    %c1_i32_23 = arith.constant 1 : i32
    %53 = tpu.dynamic_rotate %5 by %c1_i32_23 dim 0 : vector<16x16xf32>, i32 -> vector<16x16xf32>
    %c1_i32_24 = arith.constant 1 : i32
    %54 = tpu.dynamic_rotate %53 by %c1_i32_24 dim 1 : vector<16x16xf32>, i32 -> vector<16x16xf32>
    %c-1_i32_25 = arith.constant -1 : i32
    %55 = vector.broadcast %c-1_i32_25 : i32 to vector<16x16xi32>
    %56 = arith.addi %0, %55 : vector<16x16xi32>
    %c0_i32_26 = arith.constant 0 : i32
    %57 = vector.broadcast %c0_i32_26 : i32 to vector<16x16xi32>
    %58 = arith.cmpi sge, %56, %57 : vector<16x16xi32>
    %c-1_i32_27 = arith.constant -1 : i32
    %59 = vector.broadcast %c-1_i32_27 : i32 to vector<16x16xi32>
    %60 = arith.addi %0, %59 : vector<16x16xi32>
    %c16_i32_28 = arith.constant 16 : i32
    %61 = vector.broadcast %c16_i32_28 : i32 to vector<16x16xi32>
    %62 = arith.cmpi slt, %60, %61 : vector<16x16xi32>
    %63 = arith.andi %58, %62 : vector<16x16xi1>
    %c-1_i32_29 = arith.constant -1 : i32
    %64 = vector.broadcast %c-1_i32_29 : i32 to vector<16x16xi32>
    %65 = arith.addi %1, %64 : vector<16x16xi32>
    %c0_i32_30 = arith.constant 0 : i32
    %66 = vector.broadcast %c0_i32_30 : i32 to vector<16x16xi32>
    %67 = arith.cmpi sge, %65, %66 : vector<16x16xi32>
    %68 = arith.andi %63, %67 : vector<16x16xi1>
    %c-1_i32_31 = arith.constant -1 : i32
    %69 = vector.broadcast %c-1_i32_31 : i32 to vector<16x16xi32>
    %70 = arith.addi %1, %69 : vector<16x16xi32>
    %c16_i32_32 = arith.constant 16 : i32
    %71 = vector.broadcast %c16_i32_32 : i32 to vector<16x16xi32>
    %72 = arith.cmpi slt, %70, %71 : vector<16x16xi32>
    %73 = arith.andi %68, %72 : vector<16x16xi1>
    %cst_33 = arith.constant 0.000000e+00 : f32
    %74 = vector.broadcast %cst_33 : f32 to vector<16x16xf32>
    %75 = arith.select %73, %54, %74 : vector<16x16xi1>, vector<16x16xf32>
    %c9 = arith.constant 9 : index
    %76 = memref.load %arg2[%c9] : memref<144xf32, #tpu.memory_space<smem>>
    %77 = vector.broadcast %76 : f32 to vector<16x16xf32>
    %78 = arith.mulf %77, %75 : vector<16x16xf32>
    %79 = arith.addf %40, %78 : vector<16x16xf32>
    %c45 = arith.constant 45 : index
    %80 = memref.load %arg2[%c45] : memref<144xf32, #tpu.memory_space<smem>>
    %81 = vector.broadcast %80 : f32 to vector<16x16xf32>
    %82 = arith.mulf %81, %75 : vector<16x16xf32>
    %83 = arith.addf %44, %82 : vector<16x16xf32>
    %c81 = arith.constant 81 : index
    %84 = memref.load %arg2[%c81] : memref<144xf32, #tpu.memory_space<smem>>
    %85 = vector.broadcast %84 : f32 to vector<16x16xf32>
    %86 = arith.mulf %85, %75 : vector<16x16xf32>
    %87 = arith.addf %48, %86 : vector<16x16xf32>
    %c117 = arith.constant 117 : index
    %88 = memref.load %arg2[%c117] : memref<144xf32, #tpu.memory_space<smem>>
    %89 = vector.broadcast %88 : f32 to vector<16x16xf32>
    %90 = arith.mulf %89, %75 : vector<16x16xf32>
    %91 = arith.addf %52, %90 : vector<16x16xf32>
    %c1_i32_34 = arith.constant 1 : i32
    %92 = tpu.dynamic_rotate %7 by %c1_i32_34 dim 0 : vector<16x16xf32>, i32 -> vector<16x16xf32>
    %c1_i32_35 = arith.constant 1 : i32
    %93 = tpu.dynamic_rotate %92 by %c1_i32_35 dim 1 : vector<16x16xf32>, i32 -> vector<16x16xf32>
    %c-1_i32_36 = arith.constant -1 : i32
    %94 = vector.broadcast %c-1_i32_36 : i32 to vector<16x16xi32>
    %95 = arith.addi %0, %94 : vector<16x16xi32>
    %c0_i32_37 = arith.constant 0 : i32
    %96 = vector.broadcast %c0_i32_37 : i32 to vector<16x16xi32>
    %97 = arith.cmpi sge, %95, %96 : vector<16x16xi32>
    %c-1_i32_38 = arith.constant -1 : i32
    %98 = vector.broadcast %c-1_i32_38 : i32 to vector<16x16xi32>
    %99 = arith.addi %0, %98 : vector<16x16xi32>
    %c16_i32_39 = arith.constant 16 : i32
    %100 = vector.broadcast %c16_i32_39 : i32 to vector<16x16xi32>
    %101 = arith.cmpi slt, %99, %100 : vector<16x16xi32>
    %102 = arith.andi %97, %101 : vector<16x16xi1>
    %c-1_i32_40 = arith.constant -1 : i32
    %103 = vector.broadcast %c-1_i32_40 : i32 to vector<16x16xi32>
    %104 = arith.addi %1, %103 : vector<16x16xi32>
    %c0_i32_41 = arith.constant 0 : i32
    %105 = vector.broadcast %c0_i32_41 : i32 to vector<16x16xi32>
    %106 = arith.cmpi sge, %104, %105 : vector<16x16xi32>
    %107 = arith.andi %102, %106 : vector<16x16xi1>
    %c-1_i32_42 = arith.constant -1 : i32
    %108 = vector.broadcast %c-1_i32_42 : i32 to vector<16x16xi32>
    %109 = arith.addi %1, %108 : vector<16x16xi32>
    %c16_i32_43 = arith.constant 16 : i32
    %110 = vector.broadcast %c16_i32_43 : i32 to vector<16x16xi32>
    %111 = arith.cmpi slt, %109, %110 : vector<16x16xi32>
    %112 = arith.andi %107, %111 : vector<16x16xi1>
    %cst_44 = arith.constant 0.000000e+00 : f32
    %113 = vector.broadcast %cst_44 : f32 to vector<16x16xf32>
    %114 = arith.select %112, %93, %113 : vector<16x16xi1>, vector<16x16xf32>
    %c18 = arith.constant 18 : index
    %115 = memref.load %arg2[%c18] : memref<144xf32, #tpu.memory_space<smem>>
    %116 = vector.broadcast %115 : f32 to vector<16x16xf32>
    %117 = arith.mulf %116, %114 : vector<16x16xf32>
    %118 = arith.addf %79, %117 : vector<16x16xf32>
    %c54 = arith.constant 54 : index
    %119 = memref.load %arg2[%c54] : memref<144xf32, #tpu.memory_space<smem>>
    %120 = vector.broadcast %119 : f32 to vector<16x16xf32>
    %121 = arith.mulf %120, %114 : vector<16x16xf32>
    %122 = arith.addf %83, %121 : vector<16x16xf32>
    %c90 = arith.constant 90 : index
    %123 = memref.load %arg2[%c90] : memref<144xf32, #tpu.memory_space<smem>>
    %124 = vector.broadcast %123 : f32 to vector<16x16xf32>
    %125 = arith.mulf %124, %114 : vector<16x16xf32>
    %126 = arith.addf %87, %125 : vector<16x16xf32>
    %c126 = arith.constant 126 : index
    %127 = memref.load %arg2[%c126] : memref<144xf32, #tpu.memory_space<smem>>
    %128 = vector.broadcast %127 : f32 to vector<16x16xf32>
    %129 = arith.mulf %128, %114 : vector<16x16xf32>
    %130 = arith.addf %91, %129 : vector<16x16xf32>
    %c1_i32_45 = arith.constant 1 : i32
    %131 = tpu.dynamic_rotate %9 by %c1_i32_45 dim 0 : vector<16x16xf32>, i32 -> vector<16x16xf32>
    %c1_i32_46 = arith.constant 1 : i32
    %132 = tpu.dynamic_rotate %131 by %c1_i32_46 dim 1 : vector<16x16xf32>, i32 -> vector<16x16xf32>
    %c-1_i32_47 = arith.constant -1 : i32
    %133 = vector.broadcast %c-1_i32_47 : i32 to vector<16x16xi32>
    %134 = arith.addi %0, %133 : vector<16x16xi32>
    %c0_i32_48 = arith.constant 0 : i32
    %135 = vector.broadcast %c0_i32_48 : i32 to vector<16x16xi32>
    %136 = arith.cmpi sge, %134, %135 : vector<16x16xi32>
    %c-1_i32_49 = arith.constant -1 : i32
    %137 = vector.broadcast %c-1_i32_49 : i32 to vector<16x16xi32>
    %138 = arith.addi %0, %137 : vector<16x16xi32>
    %c16_i32_50 = arith.constant 16 : i32
    %139 = vector.broadcast %c16_i32_50 : i32 to vector<16x16xi32>
    %140 = arith.cmpi slt, %138, %139 : vector<16x16xi32>
    %141 = arith.andi %136, %140 : vector<16x16xi1>
    %c-1_i32_51 = arith.constant -1 : i32
    %142 = vector.broadcast %c-1_i32_51 : i32 to vector<16x16xi32>
    %143 = arith.addi %1, %142 : vector<16x16xi32>
    %c0_i32_52 = arith.constant 0 : i32
    %144 = vector.broadcast %c0_i32_52 : i32 to vector<16x16xi32>
    %145 = arith.cmpi sge, %143, %144 : vector<16x16xi32>
    %146 = arith.andi %141, %145 : vector<16x16xi1>
    %c-1_i32_53 = arith.constant -1 : i32
    %147 = vector.broadcast %c-1_i32_53 : i32 to vector<16x16xi32>
    %148 = arith.addi %1, %147 : vector<16x16xi32>
    %c16_i32_54 = arith.constant 16 : i32
    %149 = vector.broadcast %c16_i32_54 : i32 to vector<16x16xi32>
    %150 = arith.cmpi slt, %148, %149 : vector<16x16xi32>
    %151 = arith.andi %146, %150 : vector<16x16xi1>
    %cst_55 = arith.constant 0.000000e+00 : f32
    %152 = vector.broadcast %cst_55 : f32 to vector<16x16xf32>
    %153 = arith.select %151, %132, %152 : vector<16x16xi1>, vector<16x16xf32>
    %c27 = arith.constant 27 : index
    %154 = memref.load %arg2[%c27] : memref<144xf32, #tpu.memory_space<smem>>
    %155 = vector.broadcast %154 : f32 to vector<16x16xf32>
    %156 = arith.mulf %155, %153 : vector<16x16xf32>
    %157 = arith.addf %118, %156 : vector<16x16xf32>
    %c63 = arith.constant 63 : index
    %158 = memref.load %arg2[%c63] : memref<144xf32, #tpu.memory_space<smem>>
    %159 = vector.broadcast %158 : f32 to vector<16x16xf32>
    %160 = arith.mulf %159, %153 : vector<16x16xf32>
    %161 = arith.addf %122, %160 : vector<16x16xf32>
    %c99 = arith.constant 99 : index
    %162 = memref.load %arg2[%c99] : memref<144xf32, #tpu.memory_space<smem>>
    %163 = vector.broadcast %162 : f32 to vector<16x16xf32>
    %164 = arith.mulf %163, %153 : vector<16x16xf32>
    %165 = arith.addf %126, %164 : vector<16x16xf32>
    %c135 = arith.constant 135 : index
    %166 = memref.load %arg2[%c135] : memref<144xf32, #tpu.memory_space<smem>>
    %167 = vector.broadcast %166 : f32 to vector<16x16xf32>
    %168 = arith.mulf %167, %153 : vector<16x16xf32>
    %169 = arith.addf %130, %168 : vector<16x16xf32>
    %c1_i32_56 = arith.constant 1 : i32
    %170 = tpu.dynamic_rotate %3 by %c1_i32_56 dim 0 : vector<16x16xf32>, i32 -> vector<16x16xf32>
    %c-1_i32_57 = arith.constant -1 : i32
    %171 = vector.broadcast %c-1_i32_57 : i32 to vector<16x16xi32>
    %172 = arith.addi %0, %171 : vector<16x16xi32>
    %c0_i32_58 = arith.constant 0 : i32
    %173 = vector.broadcast %c0_i32_58 : i32 to vector<16x16xi32>
    %174 = arith.cmpi sge, %172, %173 : vector<16x16xi32>
    %c-1_i32_59 = arith.constant -1 : i32
    %175 = vector.broadcast %c-1_i32_59 : i32 to vector<16x16xi32>
    %176 = arith.addi %0, %175 : vector<16x16xi32>
    %c16_i32_60 = arith.constant 16 : i32
    %177 = vector.broadcast %c16_i32_60 : i32 to vector<16x16xi32>
    %178 = arith.cmpi slt, %176, %177 : vector<16x16xi32>
    %179 = arith.andi %174, %178 : vector<16x16xi1>
    %c0_i32_61 = arith.constant 0 : i32
    %180 = vector.broadcast %c0_i32_61 : i32 to vector<16x16xi32>
    %181 = arith.addi %1, %180 : vector<16x16xi32>
    %c0_i32_62 = arith.constant 0 : i32
    %182 = vector.broadcast %c0_i32_62 : i32 to vector<16x16xi32>
    %183 = arith.cmpi sge, %181, %182 : vector<16x16xi32>
    %184 = arith.andi %179, %183 : vector<16x16xi1>
    %c0_i32_63 = arith.constant 0 : i32
    %185 = vector.broadcast %c0_i32_63 : i32 to vector<16x16xi32>
    %186 = arith.addi %1, %185 : vector<16x16xi32>
    %c16_i32_64 = arith.constant 16 : i32
    %187 = vector.broadcast %c16_i32_64 : i32 to vector<16x16xi32>
    %188 = arith.cmpi slt, %186, %187 : vector<16x16xi32>
    %189 = arith.andi %184, %188 : vector<16x16xi1>
    %cst_65 = arith.constant 0.000000e+00 : f32
    %190 = vector.broadcast %cst_65 : f32 to vector<16x16xf32>
    %191 = arith.select %189, %170, %190 : vector<16x16xi1>, vector<16x16xf32>
    %c1_66 = arith.constant 1 : index
    %192 = memref.load %arg2[%c1_66] : memref<144xf32, #tpu.memory_space<smem>>
    %193 = vector.broadcast %192 : f32 to vector<16x16xf32>
    %194 = arith.mulf %193, %191 : vector<16x16xf32>
    %195 = arith.addf %157, %194 : vector<16x16xf32>
    %c37 = arith.constant 37 : index
    %196 = memref.load %arg2[%c37] : memref<144xf32, #tpu.memory_space<smem>>
    %197 = vector.broadcast %196 : f32 to vector<16x16xf32>
    %198 = arith.mulf %197, %191 : vector<16x16xf32>
    %199 = arith.addf %161, %198 : vector<16x16xf32>
    %c73 = arith.constant 73 : index
    %200 = memref.load %arg2[%c73] : memref<144xf32, #tpu.memory_space<smem>>
    %201 = vector.broadcast %200 : f32 to vector<16x16xf32>
    %202 = arith.mulf %201, %191 : vector<16x16xf32>
    %203 = arith.addf %165, %202 : vector<16x16xf32>
    %c109 = arith.constant 109 : index
    %204 = memref.load %arg2[%c109] : memref<144xf32, #tpu.memory_space<smem>>
    %205 = vector.broadcast %204 : f32 to vector<16x16xf32>
    %206 = arith.mulf %205, %191 : vector<16x16xf32>
    %207 = arith.addf %169, %206 : vector<16x16xf32>
    %c1_i32_67 = arith.constant 1 : i32
    %208 = tpu.dynamic_rotate %5 by %c1_i32_67 dim 0 : vector<16x16xf32>, i32 -> vector<16x16xf32>
    %c-1_i32_68 = arith.constant -1 : i32
    %209 = vector.broadcast %c-1_i32_68 : i32 to vector<16x16xi32>
    %210 = arith.addi %0, %209 : vector<16x16xi32>
    %c0_i32_69 = arith.constant 0 : i32
    %211 = vector.broadcast %c0_i32_69 : i32 to vector<16x16xi32>
    %212 = arith.cmpi sge, %210, %211 : vector<16x16xi32>
    %c-1_i32_70 = arith.constant -1 : i32
    %213 = vector.broadcast %c-1_i32_70 : i32 to vector<16x16xi32>
    %214 = arith.addi %0, %213 : vector<16x16xi32>
    %c16_i32_71 = arith.constant 16 : i32
    %215 = vector.broadcast %c16_i32_71 : i32 to vector<16x16xi32>
    %216 = arith.cmpi slt, %214, %215 : vector<16x16xi32>
    %217 = arith.andi %212, %216 : vector<16x16xi1>
    %c0_i32_72 = arith.constant 0 : i32
    %218 = vector.broadcast %c0_i32_72 : i32 to vector<16x16xi32>
    %219 = arith.addi %1, %218 : vector<16x16xi32>
    %c0_i32_73 = arith.constant 0 : i32
    %220 = vector.broadcast %c0_i32_73 : i32 to vector<16x16xi32>
    %221 = arith.cmpi sge, %219, %220 : vector<16x16xi32>
    %222 = arith.andi %217, %221 : vector<16x16xi1>
    %c0_i32_74 = arith.constant 0 : i32
    %223 = vector.broadcast %c0_i32_74 : i32 to vector<16x16xi32>
    %224 = arith.addi %1, %223 : vector<16x16xi32>
    %c16_i32_75 = arith.constant 16 : i32
    %225 = vector.broadcast %c16_i32_75 : i32 to vector<16x16xi32>
    %226 = arith.cmpi slt, %224, %225 : vector<16x16xi32>
    %227 = arith.andi %222, %226 : vector<16x16xi1>
    %cst_76 = arith.constant 0.000000e+00 : f32
    %228 = vector.broadcast %cst_76 : f32 to vector<16x16xf32>
    %229 = arith.select %227, %208, %228 : vector<16x16xi1>, vector<16x16xf32>
    %c10 = arith.constant 10 : index
    %230 = memref.load %arg2[%c10] : memref<144xf32, #tpu.memory_space<smem>>
    %231 = vector.broadcast %230 : f32 to vector<16x16xf32>
    %232 = arith.mulf %231, %229 : vector<16x16xf32>
    %233 = arith.addf %195, %232 : vector<16x16xf32>
    %c46 = arith.constant 46 : index
    %234 = memref.load %arg2[%c46] : memref<144xf32, #tpu.memory_space<smem>>
    %235 = vector.broadcast %234 : f32 to vector<16x16xf32>
    %236 = arith.mulf %235, %229 : vector<16x16xf32>
    %237 = arith.addf %199, %236 : vector<16x16xf32>
    %c82 = arith.constant 82 : index
    %238 = memref.load %arg2[%c82] : memref<144xf32, #tpu.memory_space<smem>>
    %239 = vector.broadcast %238 : f32 to vector<16x16xf32>
    %240 = arith.mulf %239, %229 : vector<16x16xf32>
    %241 = arith.addf %203, %240 : vector<16x16xf32>
    %c118 = arith.constant 118 : index
    %242 = memref.load %arg2[%c118] : memref<144xf32, #tpu.memory_space<smem>>
    %243 = vector.broadcast %242 : f32 to vector<16x16xf32>
    %244 = arith.mulf %243, %229 : vector<16x16xf32>
    %245 = arith.addf %207, %244 : vector<16x16xf32>
    %c1_i32_77 = arith.constant 1 : i32
    %246 = tpu.dynamic_rotate %7 by %c1_i32_77 dim 0 : vector<16x16xf32>, i32 -> vector<16x16xf32>
    %c-1_i32_78 = arith.constant -1 : i32
    %247 = vector.broadcast %c-1_i32_78 : i32 to vector<16x16xi32>
    %248 = arith.addi %0, %247 : vector<16x16xi32>
    %c0_i32_79 = arith.constant 0 : i32
    %249 = vector.broadcast %c0_i32_79 : i32 to vector<16x16xi32>
    %250 = arith.cmpi sge, %248, %249 : vector<16x16xi32>
    %c-1_i32_80 = arith.constant -1 : i32
    %251 = vector.broadcast %c-1_i32_80 : i32 to vector<16x16xi32>
    %252 = arith.addi %0, %251 : vector<16x16xi32>
    %c16_i32_81 = arith.constant 16 : i32
    %253 = vector.broadcast %c16_i32_81 : i32 to vector<16x16xi32>
    %254 = arith.cmpi slt, %252, %253 : vector<16x16xi32>
    %255 = arith.andi %250, %254 : vector<16x16xi1>
    %c0_i32_82 = arith.constant 0 : i32
    %256 = vector.broadcast %c0_i32_82 : i32 to vector<16x16xi32>
    %257 = arith.addi %1, %256 : vector<16x16xi32>
    %c0_i32_83 = arith.constant 0 : i32
    %258 = vector.broadcast %c0_i32_83 : i32 to vector<16x16xi32>
    %259 = arith.cmpi sge, %257, %258 : vector<16x16xi32>
    %260 = arith.andi %255, %259 : vector<16x16xi1>
    %c0_i32_84 = arith.constant 0 : i32
    %261 = vector.broadcast %c0_i32_84 : i32 to vector<16x16xi32>
    %262 = arith.addi %1, %261 : vector<16x16xi32>
    %c16_i32_85 = arith.constant 16 : i32
    %263 = vector.broadcast %c16_i32_85 : i32 to vector<16x16xi32>
    %264 = arith.cmpi slt, %262, %263 : vector<16x16xi32>
    %265 = arith.andi %260, %264 : vector<16x16xi1>
    %cst_86 = arith.constant 0.000000e+00 : f32
    %266 = vector.broadcast %cst_86 : f32 to vector<16x16xf32>
    %267 = arith.select %265, %246, %266 : vector<16x16xi1>, vector<16x16xf32>
    %c19 = arith.constant 19 : index
    %268 = memref.load %arg2[%c19] : memref<144xf32, #tpu.memory_space<smem>>
    %269 = vector.broadcast %268 : f32 to vector<16x16xf32>
    %270 = arith.mulf %269, %267 : vector<16x16xf32>
    %271 = arith.addf %233, %270 : vector<16x16xf32>
    %c55 = arith.constant 55 : index
    %272 = memref.load %arg2[%c55] : memref<144xf32, #tpu.memory_space<smem>>
    %273 = vector.broadcast %272 : f32 to vector<16x16xf32>
    %274 = arith.mulf %273, %267 : vector<16x16xf32>
    %275 = arith.addf %237, %274 : vector<16x16xf32>
    %c91 = arith.constant 91 : index
    %276 = memref.load %arg2[%c91] : memref<144xf32, #tpu.memory_space<smem>>
    %277 = vector.broadcast %276 : f32 to vector<16x16xf32>
    %278 = arith.mulf %277, %267 : vector<16x16xf32>
    %279 = arith.addf %241, %278 : vector<16x16xf32>
    %c127 = arith.constant 127 : index
    %280 = memref.load %arg2[%c127] : memref<144xf32, #tpu.memory_space<smem>>
    %281 = vector.broadcast %280 : f32 to vector<16x16xf32>
    %282 = arith.mulf %281, %267 : vector<16x16xf32>
    %283 = arith.addf %245, %282 : vector<16x16xf32>
    %c1_i32_87 = arith.constant 1 : i32
    %284 = tpu.dynamic_rotate %9 by %c1_i32_87 dim 0 : vector<16x16xf32>, i32 -> vector<16x16xf32>
    %c-1_i32_88 = arith.constant -1 : i32
    %285 = vector.broadcast %c-1_i32_88 : i32 to vector<16x16xi32>
    %286 = arith.addi %0, %285 : vector<16x16xi32>
    %c0_i32_89 = arith.constant 0 : i32
    %287 = vector.broadcast %c0_i32_89 : i32 to vector<16x16xi32>
    %288 = arith.cmpi sge, %286, %287 : vector<16x16xi32>
    %c-1_i32_90 = arith.constant -1 : i32
    %289 = vector.broadcast %c-1_i32_90 : i32 to vector<16x16xi32>
    %290 = arith.addi %0, %289 : vector<16x16xi32>
    %c16_i32_91 = arith.constant 16 : i32
    %291 = vector.broadcast %c16_i32_91 : i32 to vector<16x16xi32>
    %292 = arith.cmpi slt, %290, %291 : vector<16x16xi32>
    %293 = arith.andi %288, %292 : vector<16x16xi1>
    %c0_i32_92 = arith.constant 0 : i32
    %294 = vector.broadcast %c0_i32_92 : i32 to vector<16x16xi32>
    %295 = arith.addi %1, %294 : vector<16x16xi32>
    %c0_i32_93 = arith.constant 0 : i32
    %296 = vector.broadcast %c0_i32_93 : i32 to vector<16x16xi32>
    %297 = arith.cmpi sge, %295, %296 : vector<16x16xi32>
    %298 = arith.andi %293, %297 : vector<16x16xi1>
    %c0_i32_94 = arith.constant 0 : i32
    %299 = vector.broadcast %c0_i32_94 : i32 to vector<16x16xi32>
    %300 = arith.addi %1, %299 : vector<16x16xi32>
    %c16_i32_95 = arith.constant 16 : i32
    %301 = vector.broadcast %c16_i32_95 : i32 to vector<16x16xi32>
    %302 = arith.cmpi slt, %300, %301 : vector<16x16xi32>
    %303 = arith.andi %298, %302 : vector<16x16xi1>
    %cst_96 = arith.constant 0.000000e+00 : f32
    %304 = vector.broadcast %cst_96 : f32 to vector<16x16xf32>
    %305 = arith.select %303, %284, %304 : vector<16x16xi1>, vector<16x16xf32>
    %c28 = arith.constant 28 : index
    %306 = memref.load %arg2[%c28] : memref<144xf32, #tpu.memory_space<smem>>
    %307 = vector.broadcast %306 : f32 to vector<16x16xf32>
    %308 = arith.mulf %307, %305 : vector<16x16xf32>
    %309 = arith.addf %271, %308 : vector<16x16xf32>
    %c64 = arith.constant 64 : index
    %310 = memref.load %arg2[%c64] : memref<144xf32, #tpu.memory_space<smem>>
    %311 = vector.broadcast %310 : f32 to vector<16x16xf32>
    %312 = arith.mulf %311, %305 : vector<16x16xf32>
    %313 = arith.addf %275, %312 : vector<16x16xf32>
    %c100 = arith.constant 100 : index
    %314 = memref.load %arg2[%c100] : memref<144xf32, #tpu.memory_space<smem>>
    %315 = vector.broadcast %314 : f32 to vector<16x16xf32>
    %316 = arith.mulf %315, %305 : vector<16x16xf32>
    %317 = arith.addf %279, %316 : vector<16x16xf32>
    %c136 = arith.constant 136 : index
    %318 = memref.load %arg2[%c136] : memref<144xf32, #tpu.memory_space<smem>>
    %319 = vector.broadcast %318 : f32 to vector<16x16xf32>
    %320 = arith.mulf %319, %305 : vector<16x16xf32>
    %321 = arith.addf %283, %320 : vector<16x16xf32>
    %c1_i32_97 = arith.constant 1 : i32
    %322 = tpu.dynamic_rotate %3 by %c1_i32_97 dim 0 : vector<16x16xf32>, i32 -> vector<16x16xf32>
    %c15_i32 = arith.constant 15 : i32
    %323 = tpu.dynamic_rotate %322 by %c15_i32 dim 1 : vector<16x16xf32>, i32 -> vector<16x16xf32>
    %c-1_i32_98 = arith.constant -1 : i32
    %324 = vector.broadcast %c-1_i32_98 : i32 to vector<16x16xi32>
    %325 = arith.addi %0, %324 : vector<16x16xi32>
    %c0_i32_99 = arith.constant 0 : i32
    %326 = vector.broadcast %c0_i32_99 : i32 to vector<16x16xi32>
    %327 = arith.cmpi sge, %325, %326 : vector<16x16xi32>
    %c-1_i32_100 = arith.constant -1 : i32
    %328 = vector.broadcast %c-1_i32_100 : i32 to vector<16x16xi32>
    %329 = arith.addi %0, %328 : vector<16x16xi32>
    %c16_i32_101 = arith.constant 16 : i32
    %330 = vector.broadcast %c16_i32_101 : i32 to vector<16x16xi32>
    %331 = arith.cmpi slt, %329, %330 : vector<16x16xi32>
    %332 = arith.andi %327, %331 : vector<16x16xi1>
    %c1_i32_102 = arith.constant 1 : i32
    %333 = vector.broadcast %c1_i32_102 : i32 to vector<16x16xi32>
    %334 = arith.addi %1, %333 : vector<16x16xi32>
    %c0_i32_103 = arith.constant 0 : i32
    %335 = vector.broadcast %c0_i32_103 : i32 to vector<16x16xi32>
    %336 = arith.cmpi sge, %334, %335 : vector<16x16xi32>
    %337 = arith.andi %332, %336 : vector<16x16xi1>
    %c1_i32_104 = arith.constant 1 : i32
    %338 = vector.broadcast %c1_i32_104 : i32 to vector<16x16xi32>
    %339 = arith.addi %1, %338 : vector<16x16xi32>
    %c16_i32_105 = arith.constant 16 : i32
    %340 = vector.broadcast %c16_i32_105 : i32 to vector<16x16xi32>
    %341 = arith.cmpi slt, %339, %340 : vector<16x16xi32>
    %342 = arith.andi %337, %341 : vector<16x16xi1>
    %cst_106 = arith.constant 0.000000e+00 : f32
    %343 = vector.broadcast %cst_106 : f32 to vector<16x16xf32>
    %344 = arith.select %342, %323, %343 : vector<16x16xi1>, vector<16x16xf32>
    %c2_107 = arith.constant 2 : index
    %345 = memref.load %arg2[%c2_107] : memref<144xf32, #tpu.memory_space<smem>>
    %346 = vector.broadcast %345 : f32 to vector<16x16xf32>
    %347 = arith.mulf %346, %344 : vector<16x16xf32>
    %348 = arith.addf %309, %347 : vector<16x16xf32>
    %c38 = arith.constant 38 : index
    %349 = memref.load %arg2[%c38] : memref<144xf32, #tpu.memory_space<smem>>
    %350 = vector.broadcast %349 : f32 to vector<16x16xf32>
    %351 = arith.mulf %350, %344 : vector<16x16xf32>
    %352 = arith.addf %313, %351 : vector<16x16xf32>
    %c74 = arith.constant 74 : index
    %353 = memref.load %arg2[%c74] : memref<144xf32, #tpu.memory_space<smem>>
    %354 = vector.broadcast %353 : f32 to vector<16x16xf32>
    %355 = arith.mulf %354, %344 : vector<16x16xf32>
    %356 = arith.addf %317, %355 : vector<16x16xf32>
    %c110 = arith.constant 110 : index
    %357 = memref.load %arg2[%c110] : memref<144xf32, #tpu.memory_space<smem>>
    %358 = vector.broadcast %357 : f32 to vector<16x16xf32>
    %359 = arith.mulf %358, %344 : vector<16x16xf32>
    %360 = arith.addf %321, %359 : vector<16x16xf32>
    %c1_i32_108 = arith.constant 1 : i32
    %361 = tpu.dynamic_rotate %5 by %c1_i32_108 dim 0 : vector<16x16xf32>, i32 -> vector<16x16xf32>
    %c15_i32_109 = arith.constant 15 : i32
    %362 = tpu.dynamic_rotate %361 by %c15_i32_109 dim 1 : vector<16x16xf32>, i32 -> vector<16x16xf32>
    %c-1_i32_110 = arith.constant -1 : i32
    %363 = vector.broadcast %c-1_i32_110 : i32 to vector<16x16xi32>
    %364 = arith.addi %0, %363 : vector<16x16xi32>
    %c0_i32_111 = arith.constant 0 : i32
    %365 = vector.broadcast %c0_i32_111 : i32 to vector<16x16xi32>
    %366 = arith.cmpi sge, %364, %365 : vector<16x16xi32>
    %c-1_i32_112 = arith.constant -1 : i32
    %367 = vector.broadcast %c-1_i32_112 : i32 to vector<16x16xi32>
    %368 = arith.addi %0, %367 : vector<16x16xi32>
    %c16_i32_113 = arith.constant 16 : i32
    %369 = vector.broadcast %c16_i32_113 : i32 to vector<16x16xi32>
    %370 = arith.cmpi slt, %368, %369 : vector<16x16xi32>
    %371 = arith.andi %366, %370 : vector<16x16xi1>
    %c1_i32_114 = arith.constant 1 : i32
    %372 = vector.broadcast %c1_i32_114 : i32 to vector<16x16xi32>
    %373 = arith.addi %1, %372 : vector<16x16xi32>
    %c0_i32_115 = arith.constant 0 : i32
    %374 = vector.broadcast %c0_i32_115 : i32 to vector<16x16xi32>
    %375 = arith.cmpi sge, %373, %374 : vector<16x16xi32>
    %376 = arith.andi %371, %375 : vector<16x16xi1>
    %c1_i32_116 = arith.constant 1 : i32
    %377 = vector.broadcast %c1_i32_116 : i32 to vector<16x16xi32>
    %378 = arith.addi %1, %377 : vector<16x16xi32>
    %c16_i32_117 = arith.constant 16 : i32
    %379 = vector.broadcast %c16_i32_117 : i32 to vector<16x16xi32>
    %380 = arith.cmpi slt, %378, %379 : vector<16x16xi32>
    %381 = arith.andi %376, %380 : vector<16x16xi1>
    %cst_118 = arith.constant 0.000000e+00 : f32
    %382 = vector.broadcast %cst_118 : f32 to vector<16x16xf32>
    %383 = arith.select %381, %362, %382 : vector<16x16xi1>, vector<16x16xf32>
    %c11 = arith.constant 11 : index
    %384 = memref.load %arg2[%c11] : memref<144xf32, #tpu.memory_space<smem>>
    %385 = vector.broadcast %384 : f32 to vector<16x16xf32>
    %386 = arith.mulf %385, %383 : vector<16x16xf32>
    %387 = arith.addf %348, %386 : vector<16x16xf32>
    %c47 = arith.constant 47 : index
    %388 = memref.load %arg2[%c47] : memref<144xf32, #tpu.memory_space<smem>>
    %389 = vector.broadcast %388 : f32 to vector<16x16xf32>
    %390 = arith.mulf %389, %383 : vector<16x16xf32>
    %391 = arith.addf %352, %390 : vector<16x16xf32>
    %c83 = arith.constant 83 : index
    %392 = memref.load %arg2[%c83] : memref<144xf32, #tpu.memory_space<smem>>
    %393 = vector.broadcast %392 : f32 to vector<16x16xf32>
    %394 = arith.mulf %393, %383 : vector<16x16xf32>
    %395 = arith.addf %356, %394 : vector<16x16xf32>
    %c119 = arith.constant 119 : index
    %396 = memref.load %arg2[%c119] : memref<144xf32, #tpu.memory_space<smem>>
    %397 = vector.broadcast %396 : f32 to vector<16x16xf32>
    %398 = arith.mulf %397, %383 : vector<16x16xf32>
    %399 = arith.addf %360, %398 : vector<16x16xf32>
    %c1_i32_119 = arith.constant 1 : i32
    %400 = tpu.dynamic_rotate %7 by %c1_i32_119 dim 0 : vector<16x16xf32>, i32 -> vector<16x16xf32>
    %c15_i32_120 = arith.constant 15 : i32
    %401 = tpu.dynamic_rotate %400 by %c15_i32_120 dim 1 : vector<16x16xf32>, i32 -> vector<16x16xf32>
    %c-1_i32_121 = arith.constant -1 : i32
    %402 = vector.broadcast %c-1_i32_121 : i32 to vector<16x16xi32>
    %403 = arith.addi %0, %402 : vector<16x16xi32>
    %c0_i32_122 = arith.constant 0 : i32
    %404 = vector.broadcast %c0_i32_122 : i32 to vector<16x16xi32>
    %405 = arith.cmpi sge, %403, %404 : vector<16x16xi32>
    %c-1_i32_123 = arith.constant -1 : i32
    %406 = vector.broadcast %c-1_i32_123 : i32 to vector<16x16xi32>
    %407 = arith.addi %0, %406 : vector<16x16xi32>
    %c16_i32_124 = arith.constant 16 : i32
    %408 = vector.broadcast %c16_i32_124 : i32 to vector<16x16xi32>
    %409 = arith.cmpi slt, %407, %408 : vector<16x16xi32>
    %410 = arith.andi %405, %409 : vector<16x16xi1>
    %c1_i32_125 = arith.constant 1 : i32
    %411 = vector.broadcast %c1_i32_125 : i32 to vector<16x16xi32>
    %412 = arith.addi %1, %411 : vector<16x16xi32>
    %c0_i32_126 = arith.constant 0 : i32
    %413 = vector.broadcast %c0_i32_126 : i32 to vector<16x16xi32>
    %414 = arith.cmpi sge, %412, %413 : vector<16x16xi32>
    %415 = arith.andi %410, %414 : vector<16x16xi1>
    %c1_i32_127 = arith.constant 1 : i32
    %416 = vector.broadcast %c1_i32_127 : i32 to vector<16x16xi32>
    %417 = arith.addi %1, %416 : vector<16x16xi32>
    %c16_i32_128 = arith.constant 16 : i32
    %418 = vector.broadcast %c16_i32_128 : i32 to vector<16x16xi32>
    %419 = arith.cmpi slt, %417, %418 : vector<16x16xi32>
    %420 = arith.andi %415, %419 : vector<16x16xi1>
    %cst_129 = arith.constant 0.000000e+00 : f32
    %421 = vector.broadcast %cst_129 : f32 to vector<16x16xf32>
    %422 = arith.select %420, %401, %421 : vector<16x16xi1>, vector<16x16xf32>
    %c20 = arith.constant 20 : index
    %423 = memref.load %arg2[%c20] : memref<144xf32, #tpu.memory_space<smem>>
    %424 = vector.broadcast %423 : f32 to vector<16x16xf32>
    %425 = arith.mulf %424, %422 : vector<16x16xf32>
    %426 = arith.addf %387, %425 : vector<16x16xf32>
    %c56 = arith.constant 56 : index
    %427 = memref.load %arg2[%c56] : memref<144xf32, #tpu.memory_space<smem>>
    %428 = vector.broadcast %427 : f32 to vector<16x16xf32>
    %429 = arith.mulf %428, %422 : vector<16x16xf32>
    %430 = arith.addf %391, %429 : vector<16x16xf32>
    %c92 = arith.constant 92 : index
    %431 = memref.load %arg2[%c92] : memref<144xf32, #tpu.memory_space<smem>>
    %432 = vector.broadcast %431 : f32 to vector<16x16xf32>
    %433 = arith.mulf %432, %422 : vector<16x16xf32>
    %434 = arith.addf %395, %433 : vector<16x16xf32>
    %c128 = arith.constant 128 : index
    %435 = memref.load %arg2[%c128] : memref<144xf32, #tpu.memory_space<smem>>
    %436 = vector.broadcast %435 : f32 to vector<16x16xf32>
    %437 = arith.mulf %436, %422 : vector<16x16xf32>
    %438 = arith.addf %399, %437 : vector<16x16xf32>
    %c1_i32_130 = arith.constant 1 : i32
    %439 = tpu.dynamic_rotate %9 by %c1_i32_130 dim 0 : vector<16x16xf32>, i32 -> vector<16x16xf32>
    %c15_i32_131 = arith.constant 15 : i32
    %440 = tpu.dynamic_rotate %439 by %c15_i32_131 dim 1 : vector<16x16xf32>, i32 -> vector<16x16xf32>
    %c-1_i32_132 = arith.constant -1 : i32
    %441 = vector.broadcast %c-1_i32_132 : i32 to vector<16x16xi32>
    %442 = arith.addi %0, %441 : vector<16x16xi32>
    %c0_i32_133 = arith.constant 0 : i32
    %443 = vector.broadcast %c0_i32_133 : i32 to vector<16x16xi32>
    %444 = arith.cmpi sge, %442, %443 : vector<16x16xi32>
    %c-1_i32_134 = arith.constant -1 : i32
    %445 = vector.broadcast %c-1_i32_134 : i32 to vector<16x16xi32>
    %446 = arith.addi %0, %445 : vector<16x16xi32>
    %c16_i32_135 = arith.constant 16 : i32
    %447 = vector.broadcast %c16_i32_135 : i32 to vector<16x16xi32>
    %448 = arith.cmpi slt, %446, %447 : vector<16x16xi32>
    %449 = arith.andi %444, %448 : vector<16x16xi1>
    %c1_i32_136 = arith.constant 1 : i32
    %450 = vector.broadcast %c1_i32_136 : i32 to vector<16x16xi32>
    %451 = arith.addi %1, %450 : vector<16x16xi32>
    %c0_i32_137 = arith.constant 0 : i32
    %452 = vector.broadcast %c0_i32_137 : i32 to vector<16x16xi32>
    %453 = arith.cmpi sge, %451, %452 : vector<16x16xi32>
    %454 = arith.andi %449, %453 : vector<16x16xi1>
    %c1_i32_138 = arith.constant 1 : i32
    %455 = vector.broadcast %c1_i32_138 : i32 to vector<16x16xi32>
    %456 = arith.addi %1, %455 : vector<16x16xi32>
    %c16_i32_139 = arith.constant 16 : i32
    %457 = vector.broadcast %c16_i32_139 : i32 to vector<16x16xi32>
    %458 = arith.cmpi slt, %456, %457 : vector<16x16xi32>
    %459 = arith.andi %454, %458 : vector<16x16xi1>
    %cst_140 = arith.constant 0.000000e+00 : f32
    %460 = vector.broadcast %cst_140 : f32 to vector<16x16xf32>
    %461 = arith.select %459, %440, %460 : vector<16x16xi1>, vector<16x16xf32>
    %c29 = arith.constant 29 : index
    %462 = memref.load %arg2[%c29] : memref<144xf32, #tpu.memory_space<smem>>
    %463 = vector.broadcast %462 : f32 to vector<16x16xf32>
    %464 = arith.mulf %463, %461 : vector<16x16xf32>
    %465 = arith.addf %426, %464 : vector<16x16xf32>
    %c65 = arith.constant 65 : index
    %466 = memref.load %arg2[%c65] : memref<144xf32, #tpu.memory_space<smem>>
    %467 = vector.broadcast %466 : f32 to vector<16x16xf32>
    %468 = arith.mulf %467, %461 : vector<16x16xf32>
    %469 = arith.addf %430, %468 : vector<16x16xf32>
    %c101 = arith.constant 101 : index
    %470 = memref.load %arg2[%c101] : memref<144xf32, #tpu.memory_space<smem>>
    %471 = vector.broadcast %470 : f32 to vector<16x16xf32>
    %472 = arith.mulf %471, %461 : vector<16x16xf32>
    %473 = arith.addf %434, %472 : vector<16x16xf32>
    %c137 = arith.constant 137 : index
    %474 = memref.load %arg2[%c137] : memref<144xf32, #tpu.memory_space<smem>>
    %475 = vector.broadcast %474 : f32 to vector<16x16xf32>
    %476 = arith.mulf %475, %461 : vector<16x16xf32>
    %477 = arith.addf %438, %476 : vector<16x16xf32>
    %c1_i32_141 = arith.constant 1 : i32
    %478 = tpu.dynamic_rotate %3 by %c1_i32_141 dim 1 : vector<16x16xf32>, i32 -> vector<16x16xf32>
    %c0_i32_142 = arith.constant 0 : i32
    %479 = vector.broadcast %c0_i32_142 : i32 to vector<16x16xi32>
    %480 = arith.addi %0, %479 : vector<16x16xi32>
    %c0_i32_143 = arith.constant 0 : i32
    %481 = vector.broadcast %c0_i32_143 : i32 to vector<16x16xi32>
    %482 = arith.cmpi sge, %480, %481 : vector<16x16xi32>
    %c0_i32_144 = arith.constant 0 : i32
    %483 = vector.broadcast %c0_i32_144 : i32 to vector<16x16xi32>
    %484 = arith.addi %0, %483 : vector<16x16xi32>
    %c16_i32_145 = arith.constant 16 : i32
    %485 = vector.broadcast %c16_i32_145 : i32 to vector<16x16xi32>
    %486 = arith.cmpi slt, %484, %485 : vector<16x16xi32>
    %487 = arith.andi %482, %486 : vector<16x16xi1>
    %c-1_i32_146 = arith.constant -1 : i32
    %488 = vector.broadcast %c-1_i32_146 : i32 to vector<16x16xi32>
    %489 = arith.addi %1, %488 : vector<16x16xi32>
    %c0_i32_147 = arith.constant 0 : i32
    %490 = vector.broadcast %c0_i32_147 : i32 to vector<16x16xi32>
    %491 = arith.cmpi sge, %489, %490 : vector<16x16xi32>
    %492 = arith.andi %487, %491 : vector<16x16xi1>
    %c-1_i32_148 = arith.constant -1 : i32
    %493 = vector.broadcast %c-1_i32_148 : i32 to vector<16x16xi32>
    %494 = arith.addi %1, %493 : vector<16x16xi32>
    %c16_i32_149 = arith.constant 16 : i32
    %495 = vector.broadcast %c16_i32_149 : i32 to vector<16x16xi32>
    %496 = arith.cmpi slt, %494, %495 : vector<16x16xi32>
    %497 = arith.andi %492, %496 : vector<16x16xi1>
    %cst_150 = arith.constant 0.000000e+00 : f32
    %498 = vector.broadcast %cst_150 : f32 to vector<16x16xf32>
    %499 = arith.select %497, %478, %498 : vector<16x16xi1>, vector<16x16xf32>
    %c3_151 = arith.constant 3 : index
    %500 = memref.load %arg2[%c3_151] : memref<144xf32, #tpu.memory_space<smem>>
    %501 = vector.broadcast %500 : f32 to vector<16x16xf32>
    %502 = arith.mulf %501, %499 : vector<16x16xf32>
    %503 = arith.addf %465, %502 : vector<16x16xf32>
    %c39 = arith.constant 39 : index
    %504 = memref.load %arg2[%c39] : memref<144xf32, #tpu.memory_space<smem>>
    %505 = vector.broadcast %504 : f32 to vector<16x16xf32>
    %506 = arith.mulf %505, %499 : vector<16x16xf32>
    %507 = arith.addf %469, %506 : vector<16x16xf32>
    %c75 = arith.constant 75 : index
    %508 = memref.load %arg2[%c75] : memref<144xf32, #tpu.memory_space<smem>>
    %509 = vector.broadcast %508 : f32 to vector<16x16xf32>
    %510 = arith.mulf %509, %499 : vector<16x16xf32>
    %511 = arith.addf %473, %510 : vector<16x16xf32>
    %c111 = arith.constant 111 : index
    %512 = memref.load %arg2[%c111] : memref<144xf32, #tpu.memory_space<smem>>
    %513 = vector.broadcast %512 : f32 to vector<16x16xf32>
    %514 = arith.mulf %513, %499 : vector<16x16xf32>
    %515 = arith.addf %477, %514 : vector<16x16xf32>
    %c1_i32_152 = arith.constant 1 : i32
    %516 = tpu.dynamic_rotate %5 by %c1_i32_152 dim 1 : vector<16x16xf32>, i32 -> vector<16x16xf32>
    %c0_i32_153 = arith.constant 0 : i32
    %517 = vector.broadcast %c0_i32_153 : i32 to vector<16x16xi32>
    %518 = arith.addi %0, %517 : vector<16x16xi32>
    %c0_i32_154 = arith.constant 0 : i32
    %519 = vector.broadcast %c0_i32_154 : i32 to vector<16x16xi32>
    %520 = arith.cmpi sge, %518, %519 : vector<16x16xi32>
    %c0_i32_155 = arith.constant 0 : i32
    %521 = vector.broadcast %c0_i32_155 : i32 to vector<16x16xi32>
    %522 = arith.addi %0, %521 : vector<16x16xi32>
    %c16_i32_156 = arith.constant 16 : i32
    %523 = vector.broadcast %c16_i32_156 : i32 to vector<16x16xi32>
    %524 = arith.cmpi slt, %522, %523 : vector<16x16xi32>
    %525 = arith.andi %520, %524 : vector<16x16xi1>
    %c-1_i32_157 = arith.constant -1 : i32
    %526 = vector.broadcast %c-1_i32_157 : i32 to vector<16x16xi32>
    %527 = arith.addi %1, %526 : vector<16x16xi32>
    %c0_i32_158 = arith.constant 0 : i32
    %528 = vector.broadcast %c0_i32_158 : i32 to vector<16x16xi32>
    %529 = arith.cmpi sge, %527, %528 : vector<16x16xi32>
    %530 = arith.andi %525, %529 : vector<16x16xi1>
    %c-1_i32_159 = arith.constant -1 : i32
    %531 = vector.broadcast %c-1_i32_159 : i32 to vector<16x16xi32>
    %532 = arith.addi %1, %531 : vector<16x16xi32>
    %c16_i32_160 = arith.constant 16 : i32
    %533 = vector.broadcast %c16_i32_160 : i32 to vector<16x16xi32>
    %534 = arith.cmpi slt, %532, %533 : vector<16x16xi32>
    %535 = arith.andi %530, %534 : vector<16x16xi1>
    %cst_161 = arith.constant 0.000000e+00 : f32
    %536 = vector.broadcast %cst_161 : f32 to vector<16x16xf32>
    %537 = arith.select %535, %516, %536 : vector<16x16xi1>, vector<16x16xf32>
    %c12 = arith.constant 12 : index
    %538 = memref.load %arg2[%c12] : memref<144xf32, #tpu.memory_space<smem>>
    %539 = vector.broadcast %538 : f32 to vector<16x16xf32>
    %540 = arith.mulf %539, %537 : vector<16x16xf32>
    %541 = arith.addf %503, %540 : vector<16x16xf32>
    %c48 = arith.constant 48 : index
    %542 = memref.load %arg2[%c48] : memref<144xf32, #tpu.memory_space<smem>>
    %543 = vector.broadcast %542 : f32 to vector<16x16xf32>
    %544 = arith.mulf %543, %537 : vector<16x16xf32>
    %545 = arith.addf %507, %544 : vector<16x16xf32>
    %c84 = arith.constant 84 : index
    %546 = memref.load %arg2[%c84] : memref<144xf32, #tpu.memory_space<smem>>
    %547 = vector.broadcast %546 : f32 to vector<16x16xf32>
    %548 = arith.mulf %547, %537 : vector<16x16xf32>
    %549 = arith.addf %511, %548 : vector<16x16xf32>
    %c120 = arith.constant 120 : index
    %550 = memref.load %arg2[%c120] : memref<144xf32, #tpu.memory_space<smem>>
    %551 = vector.broadcast %550 : f32 to vector<16x16xf32>
    %552 = arith.mulf %551, %537 : vector<16x16xf32>
    %553 = arith.addf %515, %552 : vector<16x16xf32>
    %c1_i32_162 = arith.constant 1 : i32
    %554 = tpu.dynamic_rotate %7 by %c1_i32_162 dim 1 : vector<16x16xf32>, i32 -> vector<16x16xf32>
    %c0_i32_163 = arith.constant 0 : i32
    %555 = vector.broadcast %c0_i32_163 : i32 to vector<16x16xi32>
    %556 = arith.addi %0, %555 : vector<16x16xi32>
    %c0_i32_164 = arith.constant 0 : i32
    %557 = vector.broadcast %c0_i32_164 : i32 to vector<16x16xi32>
    %558 = arith.cmpi sge, %556, %557 : vector<16x16xi32>
    %c0_i32_165 = arith.constant 0 : i32
    %559 = vector.broadcast %c0_i32_165 : i32 to vector<16x16xi32>
    %560 = arith.addi %0, %559 : vector<16x16xi32>
    %c16_i32_166 = arith.constant 16 : i32
    %561 = vector.broadcast %c16_i32_166 : i32 to vector<16x16xi32>
    %562 = arith.cmpi slt, %560, %561 : vector<16x16xi32>
    %563 = arith.andi %558, %562 : vector<16x16xi1>
    %c-1_i32_167 = arith.constant -1 : i32
    %564 = vector.broadcast %c-1_i32_167 : i32 to vector<16x16xi32>
    %565 = arith.addi %1, %564 : vector<16x16xi32>
    %c0_i32_168 = arith.constant 0 : i32
    %566 = vector.broadcast %c0_i32_168 : i32 to vector<16x16xi32>
    %567 = arith.cmpi sge, %565, %566 : vector<16x16xi32>
    %568 = arith.andi %563, %567 : vector<16x16xi1>
    %c-1_i32_169 = arith.constant -1 : i32
    %569 = vector.broadcast %c-1_i32_169 : i32 to vector<16x16xi32>
    %570 = arith.addi %1, %569 : vector<16x16xi32>
    %c16_i32_170 = arith.constant 16 : i32
    %571 = vector.broadcast %c16_i32_170 : i32 to vector<16x16xi32>
    %572 = arith.cmpi slt, %570, %571 : vector<16x16xi32>
    %573 = arith.andi %568, %572 : vector<16x16xi1>
    %cst_171 = arith.constant 0.000000e+00 : f32
    %574 = vector.broadcast %cst_171 : f32 to vector<16x16xf32>
    %575 = arith.select %573, %554, %574 : vector<16x16xi1>, vector<16x16xf32>
    %c21 = arith.constant 21 : index
    %576 = memref.load %arg2[%c21] : memref<144xf32, #tpu.memory_space<smem>>
    %577 = vector.broadcast %576 : f32 to vector<16x16xf32>
    %578 = arith.mulf %577, %575 : vector<16x16xf32>
    %579 = arith.addf %541, %578 : vector<16x16xf32>
    %c57 = arith.constant 57 : index
    %580 = memref.load %arg2[%c57] : memref<144xf32, #tpu.memory_space<smem>>
    %581 = vector.broadcast %580 : f32 to vector<16x16xf32>
    %582 = arith.mulf %581, %575 : vector<16x16xf32>
    %583 = arith.addf %545, %582 : vector<16x16xf32>
    %c93 = arith.constant 93 : index
    %584 = memref.load %arg2[%c93] : memref<144xf32, #tpu.memory_space<smem>>
    %585 = vector.broadcast %584 : f32 to vector<16x16xf32>
    %586 = arith.mulf %585, %575 : vector<16x16xf32>
    %587 = arith.addf %549, %586 : vector<16x16xf32>
    %c129 = arith.constant 129 : index
    %588 = memref.load %arg2[%c129] : memref<144xf32, #tpu.memory_space<smem>>
    %589 = vector.broadcast %588 : f32 to vector<16x16xf32>
    %590 = arith.mulf %589, %575 : vector<16x16xf32>
    %591 = arith.addf %553, %590 : vector<16x16xf32>
    %c1_i32_172 = arith.constant 1 : i32
    %592 = tpu.dynamic_rotate %9 by %c1_i32_172 dim 1 : vector<16x16xf32>, i32 -> vector<16x16xf32>
    %c0_i32_173 = arith.constant 0 : i32
    %593 = vector.broadcast %c0_i32_173 : i32 to vector<16x16xi32>
    %594 = arith.addi %0, %593 : vector<16x16xi32>
    %c0_i32_174 = arith.constant 0 : i32
    %595 = vector.broadcast %c0_i32_174 : i32 to vector<16x16xi32>
    %596 = arith.cmpi sge, %594, %595 : vector<16x16xi32>
    %c0_i32_175 = arith.constant 0 : i32
    %597 = vector.broadcast %c0_i32_175 : i32 to vector<16x16xi32>
    %598 = arith.addi %0, %597 : vector<16x16xi32>
    %c16_i32_176 = arith.constant 16 : i32
    %599 = vector.broadcast %c16_i32_176 : i32 to vector<16x16xi32>
    %600 = arith.cmpi slt, %598, %599 : vector<16x16xi32>
    %601 = arith.andi %596, %600 : vector<16x16xi1>
    %c-1_i32_177 = arith.constant -1 : i32
    %602 = vector.broadcast %c-1_i32_177 : i32 to vector<16x16xi32>
    %603 = arith.addi %1, %602 : vector<16x16xi32>
    %c0_i32_178 = arith.constant 0 : i32
    %604 = vector.broadcast %c0_i32_178 : i32 to vector<16x16xi32>
    %605 = arith.cmpi sge, %603, %604 : vector<16x16xi32>
    %606 = arith.andi %601, %605 : vector<16x16xi1>
    %c-1_i32_179 = arith.constant -1 : i32
    %607 = vector.broadcast %c-1_i32_179 : i32 to vector<16x16xi32>
    %608 = arith.addi %1, %607 : vector<16x16xi32>
    %c16_i32_180 = arith.constant 16 : i32
    %609 = vector.broadcast %c16_i32_180 : i32 to vector<16x16xi32>
    %610 = arith.cmpi slt, %608, %609 : vector<16x16xi32>
    %611 = arith.andi %606, %610 : vector<16x16xi1>
    %cst_181 = arith.constant 0.000000e+00 : f32
    %612 = vector.broadcast %cst_181 : f32 to vector<16x16xf32>
    %613 = arith.select %611, %592, %612 : vector<16x16xi1>, vector<16x16xf32>
    %c30 = arith.constant 30 : index
    %614 = memref.load %arg2[%c30] : memref<144xf32, #tpu.memory_space<smem>>
    %615 = vector.broadcast %614 : f32 to vector<16x16xf32>
    %616 = arith.mulf %615, %613 : vector<16x16xf32>
    %617 = arith.addf %579, %616 : vector<16x16xf32>
    %c66 = arith.constant 66 : index
    %618 = memref.load %arg2[%c66] : memref<144xf32, #tpu.memory_space<smem>>
    %619 = vector.broadcast %618 : f32 to vector<16x16xf32>
    %620 = arith.mulf %619, %613 : vector<16x16xf32>
    %621 = arith.addf %583, %620 : vector<16x16xf32>
    %c102 = arith.constant 102 : index
    %622 = memref.load %arg2[%c102] : memref<144xf32, #tpu.memory_space<smem>>
    %623 = vector.broadcast %622 : f32 to vector<16x16xf32>
    %624 = arith.mulf %623, %613 : vector<16x16xf32>
    %625 = arith.addf %587, %624 : vector<16x16xf32>
    %c138 = arith.constant 138 : index
    %626 = memref.load %arg2[%c138] : memref<144xf32, #tpu.memory_space<smem>>
    %627 = vector.broadcast %626 : f32 to vector<16x16xf32>
    %628 = arith.mulf %627, %613 : vector<16x16xf32>
    %629 = arith.addf %591, %628 : vector<16x16xf32>
    %c4 = arith.constant 4 : index
    %630 = memref.load %arg2[%c4] : memref<144xf32, #tpu.memory_space<smem>>
    %631 = vector.broadcast %630 : f32 to vector<16x16xf32>
    %632 = arith.mulf %631, %3 : vector<16x16xf32>
    %633 = arith.addf %617, %632 : vector<16x16xf32>
    %c40 = arith.constant 40 : index
    %634 = memref.load %arg2[%c40] : memref<144xf32, #tpu.memory_space<smem>>
    %635 = vector.broadcast %634 : f32 to vector<16x16xf32>
    %636 = arith.mulf %635, %3 : vector<16x16xf32>
    %637 = arith.addf %621, %636 : vector<16x16xf32>
    %c76 = arith.constant 76 : index
    %638 = memref.load %arg2[%c76] : memref<144xf32, #tpu.memory_space<smem>>
    %639 = vector.broadcast %638 : f32 to vector<16x16xf32>
    %640 = arith.mulf %639, %3 : vector<16x16xf32>
    %641 = arith.addf %625, %640 : vector<16x16xf32>
    %c112 = arith.constant 112 : index
    %642 = memref.load %arg2[%c112] : memref<144xf32, #tpu.memory_space<smem>>
    %643 = vector.broadcast %642 : f32 to vector<16x16xf32>
    %644 = arith.mulf %643, %3 : vector<16x16xf32>
    %645 = arith.addf %629, %644 : vector<16x16xf32>
    %c13 = arith.constant 13 : index
    %646 = memref.load %arg2[%c13] : memref<144xf32, #tpu.memory_space<smem>>
    %647 = vector.broadcast %646 : f32 to vector<16x16xf32>
    %648 = arith.mulf %647, %5 : vector<16x16xf32>
    %649 = arith.addf %633, %648 : vector<16x16xf32>
    %c49 = arith.constant 49 : index
    %650 = memref.load %arg2[%c49] : memref<144xf32, #tpu.memory_space<smem>>
    %651 = vector.broadcast %650 : f32 to vector<16x16xf32>
    %652 = arith.mulf %651, %5 : vector<16x16xf32>
    %653 = arith.addf %637, %652 : vector<16x16xf32>
    %c85 = arith.constant 85 : index
    %654 = memref.load %arg2[%c85] : memref<144xf32, #tpu.memory_space<smem>>
    %655 = vector.broadcast %654 : f32 to vector<16x16xf32>
    %656 = arith.mulf %655, %5 : vector<16x16xf32>
    %657 = arith.addf %641, %656 : vector<16x16xf32>
    %c121 = arith.constant 121 : index
    %658 = memref.load %arg2[%c121] : memref<144xf32, #tpu.memory_space<smem>>
    %659 = vector.broadcast %658 : f32 to vector<16x16xf32>
    %660 = arith.mulf %659, %5 : vector<16x16xf32>
    %661 = arith.addf %645, %660 : vector<16x16xf32>
    %c22 = arith.constant 22 : index
    %662 = memref.load %arg2[%c22] : memref<144xf32, #tpu.memory_space<smem>>
    %663 = vector.broadcast %662 : f32 to vector<16x16xf32>
    %664 = arith.mulf %663, %7 : vector<16x16xf32>
    %665 = arith.addf %649, %664 : vector<16x16xf32>
    %c58 = arith.constant 58 : index
    %666 = memref.load %arg2[%c58] : memref<144xf32, #tpu.memory_space<smem>>
    %667 = vector.broadcast %666 : f32 to vector<16x16xf32>
    %668 = arith.mulf %667, %7 : vector<16x16xf32>
    %669 = arith.addf %653, %668 : vector<16x16xf32>
    %c94 = arith.constant 94 : index
    %670 = memref.load %arg2[%c94] : memref<144xf32, #tpu.memory_space<smem>>
    %671 = vector.broadcast %670 : f32 to vector<16x16xf32>
    %672 = arith.mulf %671, %7 : vector<16x16xf32>
    %673 = arith.addf %657, %672 : vector<16x16xf32>
    %c130 = arith.constant 130 : index
    %674 = memref.load %arg2[%c130] : memref<144xf32, #tpu.memory_space<smem>>
    %675 = vector.broadcast %674 : f32 to vector<16x16xf32>
    %676 = arith.mulf %675, %7 : vector<16x16xf32>
    %677 = arith.addf %661, %676 : vector<16x16xf32>
    %c31 = arith.constant 31 : index
    %678 = memref.load %arg2[%c31] : memref<144xf32, #tpu.memory_space<smem>>
    %679 = vector.broadcast %678 : f32 to vector<16x16xf32>
    %680 = arith.mulf %679, %9 : vector<16x16xf32>
    %681 = arith.addf %665, %680 : vector<16x16xf32>
    %c67 = arith.constant 67 : index
    %682 = memref.load %arg2[%c67] : memref<144xf32, #tpu.memory_space<smem>>
    %683 = vector.broadcast %682 : f32 to vector<16x16xf32>
    %684 = arith.mulf %683, %9 : vector<16x16xf32>
    %685 = arith.addf %669, %684 : vector<16x16xf32>
    %c103 = arith.constant 103 : index
    %686 = memref.load %arg2[%c103] : memref<144xf32, #tpu.memory_space<smem>>
    %687 = vector.broadcast %686 : f32 to vector<16x16xf32>
    %688 = arith.mulf %687, %9 : vector<16x16xf32>
    %689 = arith.addf %673, %688 : vector<16x16xf32>
    %c139 = arith.constant 139 : index
    %690 = memref.load %arg2[%c139] : memref<144xf32, #tpu.memory_space<smem>>
    %691 = vector.broadcast %690 : f32 to vector<16x16xf32>
    %692 = arith.mulf %691, %9 : vector<16x16xf32>
    %693 = arith.addf %677, %692 : vector<16x16xf32>
    %c15_i32_182 = arith.constant 15 : i32
    %694 = tpu.dynamic_rotate %3 by %c15_i32_182 dim 1 : vector<16x16xf32>, i32 -> vector<16x16xf32>
    %c0_i32_183 = arith.constant 0 : i32
    %695 = vector.broadcast %c0_i32_183 : i32 to vector<16x16xi32>
    %696 = arith.addi %0, %695 : vector<16x16xi32>
    %c0_i32_184 = arith.constant 0 : i32
    %697 = vector.broadcast %c0_i32_184 : i32 to vector<16x16xi32>
    %698 = arith.cmpi sge, %696, %697 : vector<16x16xi32>
    %c0_i32_185 = arith.constant 0 : i32
    %699 = vector.broadcast %c0_i32_185 : i32 to vector<16x16xi32>
    %700 = arith.addi %0, %699 : vector<16x16xi32>
    %c16_i32_186 = arith.constant 16 : i32
    %701 = vector.broadcast %c16_i32_186 : i32 to vector<16x16xi32>
    %702 = arith.cmpi slt, %700, %701 : vector<16x16xi32>
    %703 = arith.andi %698, %702 : vector<16x16xi1>
    %c1_i32_187 = arith.constant 1 : i32
    %704 = vector.broadcast %c1_i32_187 : i32 to vector<16x16xi32>
    %705 = arith.addi %1, %704 : vector<16x16xi32>
    %c0_i32_188 = arith.constant 0 : i32
    %706 = vector.broadcast %c0_i32_188 : i32 to vector<16x16xi32>
    %707 = arith.cmpi sge, %705, %706 : vector<16x16xi32>
    %708 = arith.andi %703, %707 : vector<16x16xi1>
    %c1_i32_189 = arith.constant 1 : i32
    %709 = vector.broadcast %c1_i32_189 : i32 to vector<16x16xi32>
    %710 = arith.addi %1, %709 : vector<16x16xi32>
    %c16_i32_190 = arith.constant 16 : i32
    %711 = vector.broadcast %c16_i32_190 : i32 to vector<16x16xi32>
    %712 = arith.cmpi slt, %710, %711 : vector<16x16xi32>
    %713 = arith.andi %708, %712 : vector<16x16xi1>
    %cst_191 = arith.constant 0.000000e+00 : f32
    %714 = vector.broadcast %cst_191 : f32 to vector<16x16xf32>
    %715 = arith.select %713, %694, %714 : vector<16x16xi1>, vector<16x16xf32>
    %c5 = arith.constant 5 : index
    %716 = memref.load %arg2[%c5] : memref<144xf32, #tpu.memory_space<smem>>
    %717 = vector.broadcast %716 : f32 to vector<16x16xf32>
    %718 = arith.mulf %717, %715 : vector<16x16xf32>
    %719 = arith.addf %681, %718 : vector<16x16xf32>
    %c41 = arith.constant 41 : index
    %720 = memref.load %arg2[%c41] : memref<144xf32, #tpu.memory_space<smem>>
    %721 = vector.broadcast %720 : f32 to vector<16x16xf32>
    %722 = arith.mulf %721, %715 : vector<16x16xf32>
    %723 = arith.addf %685, %722 : vector<16x16xf32>
    %c77 = arith.constant 77 : index
    %724 = memref.load %arg2[%c77] : memref<144xf32, #tpu.memory_space<smem>>
    %725 = vector.broadcast %724 : f32 to vector<16x16xf32>
    %726 = arith.mulf %725, %715 : vector<16x16xf32>
    %727 = arith.addf %689, %726 : vector<16x16xf32>
    %c113 = arith.constant 113 : index
    %728 = memref.load %arg2[%c113] : memref<144xf32, #tpu.memory_space<smem>>
    %729 = vector.broadcast %728 : f32 to vector<16x16xf32>
    %730 = arith.mulf %729, %715 : vector<16x16xf32>
    %731 = arith.addf %693, %730 : vector<16x16xf32>
    %c15_i32_192 = arith.constant 15 : i32
    %732 = tpu.dynamic_rotate %5 by %c15_i32_192 dim 1 : vector<16x16xf32>, i32 -> vector<16x16xf32>
    %c0_i32_193 = arith.constant 0 : i32
    %733 = vector.broadcast %c0_i32_193 : i32 to vector<16x16xi32>
    %734 = arith.addi %0, %733 : vector<16x16xi32>
    %c0_i32_194 = arith.constant 0 : i32
    %735 = vector.broadcast %c0_i32_194 : i32 to vector<16x16xi32>
    %736 = arith.cmpi sge, %734, %735 : vector<16x16xi32>
    %c0_i32_195 = arith.constant 0 : i32
    %737 = vector.broadcast %c0_i32_195 : i32 to vector<16x16xi32>
    %738 = arith.addi %0, %737 : vector<16x16xi32>
    %c16_i32_196 = arith.constant 16 : i32
    %739 = vector.broadcast %c16_i32_196 : i32 to vector<16x16xi32>
    %740 = arith.cmpi slt, %738, %739 : vector<16x16xi32>
    %741 = arith.andi %736, %740 : vector<16x16xi1>
    %c1_i32_197 = arith.constant 1 : i32
    %742 = vector.broadcast %c1_i32_197 : i32 to vector<16x16xi32>
    %743 = arith.addi %1, %742 : vector<16x16xi32>
    %c0_i32_198 = arith.constant 0 : i32
    %744 = vector.broadcast %c0_i32_198 : i32 to vector<16x16xi32>
    %745 = arith.cmpi sge, %743, %744 : vector<16x16xi32>
    %746 = arith.andi %741, %745 : vector<16x16xi1>
    %c1_i32_199 = arith.constant 1 : i32
    %747 = vector.broadcast %c1_i32_199 : i32 to vector<16x16xi32>
    %748 = arith.addi %1, %747 : vector<16x16xi32>
    %c16_i32_200 = arith.constant 16 : i32
    %749 = vector.broadcast %c16_i32_200 : i32 to vector<16x16xi32>
    %750 = arith.cmpi slt, %748, %749 : vector<16x16xi32>
    %751 = arith.andi %746, %750 : vector<16x16xi1>
    %cst_201 = arith.constant 0.000000e+00 : f32
    %752 = vector.broadcast %cst_201 : f32 to vector<16x16xf32>
    %753 = arith.select %751, %732, %752 : vector<16x16xi1>, vector<16x16xf32>
    %c14 = arith.constant 14 : index
    %754 = memref.load %arg2[%c14] : memref<144xf32, #tpu.memory_space<smem>>
    %755 = vector.broadcast %754 : f32 to vector<16x16xf32>
    %756 = arith.mulf %755, %753 : vector<16x16xf32>
    %757 = arith.addf %719, %756 : vector<16x16xf32>
    %c50 = arith.constant 50 : index
    %758 = memref.load %arg2[%c50] : memref<144xf32, #tpu.memory_space<smem>>
    %759 = vector.broadcast %758 : f32 to vector<16x16xf32>
    %760 = arith.mulf %759, %753 : vector<16x16xf32>
    %761 = arith.addf %723, %760 : vector<16x16xf32>
    %c86 = arith.constant 86 : index
    %762 = memref.load %arg2[%c86] : memref<144xf32, #tpu.memory_space<smem>>
    %763 = vector.broadcast %762 : f32 to vector<16x16xf32>
    %764 = arith.mulf %763, %753 : vector<16x16xf32>
    %765 = arith.addf %727, %764 : vector<16x16xf32>
    %c122 = arith.constant 122 : index
    %766 = memref.load %arg2[%c122] : memref<144xf32, #tpu.memory_space<smem>>
    %767 = vector.broadcast %766 : f32 to vector<16x16xf32>
    %768 = arith.mulf %767, %753 : vector<16x16xf32>
    %769 = arith.addf %731, %768 : vector<16x16xf32>
    %c15_i32_202 = arith.constant 15 : i32
    %770 = tpu.dynamic_rotate %7 by %c15_i32_202 dim 1 : vector<16x16xf32>, i32 -> vector<16x16xf32>
    %c0_i32_203 = arith.constant 0 : i32
    %771 = vector.broadcast %c0_i32_203 : i32 to vector<16x16xi32>
    %772 = arith.addi %0, %771 : vector<16x16xi32>
    %c0_i32_204 = arith.constant 0 : i32
    %773 = vector.broadcast %c0_i32_204 : i32 to vector<16x16xi32>
    %774 = arith.cmpi sge, %772, %773 : vector<16x16xi32>
    %c0_i32_205 = arith.constant 0 : i32
    %775 = vector.broadcast %c0_i32_205 : i32 to vector<16x16xi32>
    %776 = arith.addi %0, %775 : vector<16x16xi32>
    %c16_i32_206 = arith.constant 16 : i32
    %777 = vector.broadcast %c16_i32_206 : i32 to vector<16x16xi32>
    %778 = arith.cmpi slt, %776, %777 : vector<16x16xi32>
    %779 = arith.andi %774, %778 : vector<16x16xi1>
    %c1_i32_207 = arith.constant 1 : i32
    %780 = vector.broadcast %c1_i32_207 : i32 to vector<16x16xi32>
    %781 = arith.addi %1, %780 : vector<16x16xi32>
    %c0_i32_208 = arith.constant 0 : i32
    %782 = vector.broadcast %c0_i32_208 : i32 to vector<16x16xi32>
    %783 = arith.cmpi sge, %781, %782 : vector<16x16xi32>
    %784 = arith.andi %779, %783 : vector<16x16xi1>
    %c1_i32_209 = arith.constant 1 : i32
    %785 = vector.broadcast %c1_i32_209 : i32 to vector<16x16xi32>
    %786 = arith.addi %1, %785 : vector<16x16xi32>
    %c16_i32_210 = arith.constant 16 : i32
    %787 = vector.broadcast %c16_i32_210 : i32 to vector<16x16xi32>
    %788 = arith.cmpi slt, %786, %787 : vector<16x16xi32>
    %789 = arith.andi %784, %788 : vector<16x16xi1>
    %cst_211 = arith.constant 0.000000e+00 : f32
    %790 = vector.broadcast %cst_211 : f32 to vector<16x16xf32>
    %791 = arith.select %789, %770, %790 : vector<16x16xi1>, vector<16x16xf32>
    %c23 = arith.constant 23 : index
    %792 = memref.load %arg2[%c23] : memref<144xf32, #tpu.memory_space<smem>>
    %793 = vector.broadcast %792 : f32 to vector<16x16xf32>
    %794 = arith.mulf %793, %791 : vector<16x16xf32>
    %795 = arith.addf %757, %794 : vector<16x16xf32>
    %c59 = arith.constant 59 : index
    %796 = memref.load %arg2[%c59] : memref<144xf32, #tpu.memory_space<smem>>
    %797 = vector.broadcast %796 : f32 to vector<16x16xf32>
    %798 = arith.mulf %797, %791 : vector<16x16xf32>
    %799 = arith.addf %761, %798 : vector<16x16xf32>
    %c95 = arith.constant 95 : index
    %800 = memref.load %arg2[%c95] : memref<144xf32, #tpu.memory_space<smem>>
    %801 = vector.broadcast %800 : f32 to vector<16x16xf32>
    %802 = arith.mulf %801, %791 : vector<16x16xf32>
    %803 = arith.addf %765, %802 : vector<16x16xf32>
    %c131 = arith.constant 131 : index
    %804 = memref.load %arg2[%c131] : memref<144xf32, #tpu.memory_space<smem>>
    %805 = vector.broadcast %804 : f32 to vector<16x16xf32>
    %806 = arith.mulf %805, %791 : vector<16x16xf32>
    %807 = arith.addf %769, %806 : vector<16x16xf32>
    %c15_i32_212 = arith.constant 15 : i32
    %808 = tpu.dynamic_rotate %9 by %c15_i32_212 dim 1 : vector<16x16xf32>, i32 -> vector<16x16xf32>
    %c0_i32_213 = arith.constant 0 : i32
    %809 = vector.broadcast %c0_i32_213 : i32 to vector<16x16xi32>
    %810 = arith.addi %0, %809 : vector<16x16xi32>
    %c0_i32_214 = arith.constant 0 : i32
    %811 = vector.broadcast %c0_i32_214 : i32 to vector<16x16xi32>
    %812 = arith.cmpi sge, %810, %811 : vector<16x16xi32>
    %c0_i32_215 = arith.constant 0 : i32
    %813 = vector.broadcast %c0_i32_215 : i32 to vector<16x16xi32>
    %814 = arith.addi %0, %813 : vector<16x16xi32>
    %c16_i32_216 = arith.constant 16 : i32
    %815 = vector.broadcast %c16_i32_216 : i32 to vector<16x16xi32>
    %816 = arith.cmpi slt, %814, %815 : vector<16x16xi32>
    %817 = arith.andi %812, %816 : vector<16x16xi1>
    %c1_i32_217 = arith.constant 1 : i32
    %818 = vector.broadcast %c1_i32_217 : i32 to vector<16x16xi32>
    %819 = arith.addi %1, %818 : vector<16x16xi32>
    %c0_i32_218 = arith.constant 0 : i32
    %820 = vector.broadcast %c0_i32_218 : i32 to vector<16x16xi32>
    %821 = arith.cmpi sge, %819, %820 : vector<16x16xi32>
    %822 = arith.andi %817, %821 : vector<16x16xi1>
    %c1_i32_219 = arith.constant 1 : i32
    %823 = vector.broadcast %c1_i32_219 : i32 to vector<16x16xi32>
    %824 = arith.addi %1, %823 : vector<16x16xi32>
    %c16_i32_220 = arith.constant 16 : i32
    %825 = vector.broadcast %c16_i32_220 : i32 to vector<16x16xi32>
    %826 = arith.cmpi slt, %824, %825 : vector<16x16xi32>
    %827 = arith.andi %822, %826 : vector<16x16xi1>
    %cst_221 = arith.constant 0.000000e+00 : f32
    %828 = vector.broadcast %cst_221 : f32 to vector<16x16xf32>
    %829 = arith.select %827, %808, %828 : vector<16x16xi1>, vector<16x16xf32>
    %c32 = arith.constant 32 : index
    %830 = memref.load %arg2[%c32] : memref<144xf32, #tpu.memory_space<smem>>
    %831 = vector.broadcast %830 : f32 to vector<16x16xf32>
    %832 = arith.mulf %831, %829 : vector<16x16xf32>
    %833 = arith.addf %795, %832 : vector<16x16xf32>
    %c68 = arith.constant 68 : index
    %834 = memref.load %arg2[%c68] : memref<144xf32, #tpu.memory_space<smem>>
    %835 = vector.broadcast %834 : f32 to vector<16x16xf32>
    %836 = arith.mulf %835, %829 : vector<16x16xf32>
    %837 = arith.addf %799, %836 : vector<16x16xf32>
    %c104 = arith.constant 104 : index
    %838 = memref.load %arg2[%c104] : memref<144xf32, #tpu.memory_space<smem>>
    %839 = vector.broadcast %838 : f32 to vector<16x16xf32>
    %840 = arith.mulf %839, %829 : vector<16x16xf32>
    %841 = arith.addf %803, %840 : vector<16x16xf32>
    %c140 = arith.constant 140 : index
    %842 = memref.load %arg2[%c140] : memref<144xf32, #tpu.memory_space<smem>>
    %843 = vector.broadcast %842 : f32 to vector<16x16xf32>
    %844 = arith.mulf %843, %829 : vector<16x16xf32>
    %845 = arith.addf %807, %844 : vector<16x16xf32>
    %c15_i32_222 = arith.constant 15 : i32
    %846 = tpu.dynamic_rotate %3 by %c15_i32_222 dim 0 : vector<16x16xf32>, i32 -> vector<16x16xf32>
    %c1_i32_223 = arith.constant 1 : i32
    %847 = tpu.dynamic_rotate %846 by %c1_i32_223 dim 1 : vector<16x16xf32>, i32 -> vector<16x16xf32>
    %c1_i32_224 = arith.constant 1 : i32
    %848 = vector.broadcast %c1_i32_224 : i32 to vector<16x16xi32>
    %849 = arith.addi %0, %848 : vector<16x16xi32>
    %c0_i32_225 = arith.constant 0 : i32
    %850 = vector.broadcast %c0_i32_225 : i32 to vector<16x16xi32>
    %851 = arith.cmpi sge, %849, %850 : vector<16x16xi32>
    %c1_i32_226 = arith.constant 1 : i32
    %852 = vector.broadcast %c1_i32_226 : i32 to vector<16x16xi32>
    %853 = arith.addi %0, %852 : vector<16x16xi32>
    %c16_i32_227 = arith.constant 16 : i32
    %854 = vector.broadcast %c16_i32_227 : i32 to vector<16x16xi32>
    %855 = arith.cmpi slt, %853, %854 : vector<16x16xi32>
    %856 = arith.andi %851, %855 : vector<16x16xi1>
    %c-1_i32_228 = arith.constant -1 : i32
    %857 = vector.broadcast %c-1_i32_228 : i32 to vector<16x16xi32>
    %858 = arith.addi %1, %857 : vector<16x16xi32>
    %c0_i32_229 = arith.constant 0 : i32
    %859 = vector.broadcast %c0_i32_229 : i32 to vector<16x16xi32>
    %860 = arith.cmpi sge, %858, %859 : vector<16x16xi32>
    %861 = arith.andi %856, %860 : vector<16x16xi1>
    %c-1_i32_230 = arith.constant -1 : i32
    %862 = vector.broadcast %c-1_i32_230 : i32 to vector<16x16xi32>
    %863 = arith.addi %1, %862 : vector<16x16xi32>
    %c16_i32_231 = arith.constant 16 : i32
    %864 = vector.broadcast %c16_i32_231 : i32 to vector<16x16xi32>
    %865 = arith.cmpi slt, %863, %864 : vector<16x16xi32>
    %866 = arith.andi %861, %865 : vector<16x16xi1>
    %cst_232 = arith.constant 0.000000e+00 : f32
    %867 = vector.broadcast %cst_232 : f32 to vector<16x16xf32>
    %868 = arith.select %866, %847, %867 : vector<16x16xi1>, vector<16x16xf32>
    %c6 = arith.constant 6 : index
    %869 = memref.load %arg2[%c6] : memref<144xf32, #tpu.memory_space<smem>>
    %870 = vector.broadcast %869 : f32 to vector<16x16xf32>
    %871 = arith.mulf %870, %868 : vector<16x16xf32>
    %872 = arith.addf %833, %871 : vector<16x16xf32>
    %c42 = arith.constant 42 : index
    %873 = memref.load %arg2[%c42] : memref<144xf32, #tpu.memory_space<smem>>
    %874 = vector.broadcast %873 : f32 to vector<16x16xf32>
    %875 = arith.mulf %874, %868 : vector<16x16xf32>
    %876 = arith.addf %837, %875 : vector<16x16xf32>
    %c78 = arith.constant 78 : index
    %877 = memref.load %arg2[%c78] : memref<144xf32, #tpu.memory_space<smem>>
    %878 = vector.broadcast %877 : f32 to vector<16x16xf32>
    %879 = arith.mulf %878, %868 : vector<16x16xf32>
    %880 = arith.addf %841, %879 : vector<16x16xf32>
    %c114 = arith.constant 114 : index
    %881 = memref.load %arg2[%c114] : memref<144xf32, #tpu.memory_space<smem>>
    %882 = vector.broadcast %881 : f32 to vector<16x16xf32>
    %883 = arith.mulf %882, %868 : vector<16x16xf32>
    %884 = arith.addf %845, %883 : vector<16x16xf32>
    %c15_i32_233 = arith.constant 15 : i32
    %885 = tpu.dynamic_rotate %5 by %c15_i32_233 dim 0 : vector<16x16xf32>, i32 -> vector<16x16xf32>
    %c1_i32_234 = arith.constant 1 : i32
    %886 = tpu.dynamic_rotate %885 by %c1_i32_234 dim 1 : vector<16x16xf32>, i32 -> vector<16x16xf32>
    %c1_i32_235 = arith.constant 1 : i32
    %887 = vector.broadcast %c1_i32_235 : i32 to vector<16x16xi32>
    %888 = arith.addi %0, %887 : vector<16x16xi32>
    %c0_i32_236 = arith.constant 0 : i32
    %889 = vector.broadcast %c0_i32_236 : i32 to vector<16x16xi32>
    %890 = arith.cmpi sge, %888, %889 : vector<16x16xi32>
    %c1_i32_237 = arith.constant 1 : i32
    %891 = vector.broadcast %c1_i32_237 : i32 to vector<16x16xi32>
    %892 = arith.addi %0, %891 : vector<16x16xi32>
    %c16_i32_238 = arith.constant 16 : i32
    %893 = vector.broadcast %c16_i32_238 : i32 to vector<16x16xi32>
    %894 = arith.cmpi slt, %892, %893 : vector<16x16xi32>
    %895 = arith.andi %890, %894 : vector<16x16xi1>
    %c-1_i32_239 = arith.constant -1 : i32
    %896 = vector.broadcast %c-1_i32_239 : i32 to vector<16x16xi32>
    %897 = arith.addi %1, %896 : vector<16x16xi32>
    %c0_i32_240 = arith.constant 0 : i32
    %898 = vector.broadcast %c0_i32_240 : i32 to vector<16x16xi32>
    %899 = arith.cmpi sge, %897, %898 : vector<16x16xi32>
    %900 = arith.andi %895, %899 : vector<16x16xi1>
    %c-1_i32_241 = arith.constant -1 : i32
    %901 = vector.broadcast %c-1_i32_241 : i32 to vector<16x16xi32>
    %902 = arith.addi %1, %901 : vector<16x16xi32>
    %c16_i32_242 = arith.constant 16 : i32
    %903 = vector.broadcast %c16_i32_242 : i32 to vector<16x16xi32>
    %904 = arith.cmpi slt, %902, %903 : vector<16x16xi32>
    %905 = arith.andi %900, %904 : vector<16x16xi1>
    %cst_243 = arith.constant 0.000000e+00 : f32
    %906 = vector.broadcast %cst_243 : f32 to vector<16x16xf32>
    %907 = arith.select %905, %886, %906 : vector<16x16xi1>, vector<16x16xf32>
    %c15 = arith.constant 15 : index
    %908 = memref.load %arg2[%c15] : memref<144xf32, #tpu.memory_space<smem>>
    %909 = vector.broadcast %908 : f32 to vector<16x16xf32>
    %910 = arith.mulf %909, %907 : vector<16x16xf32>
    %911 = arith.addf %872, %910 : vector<16x16xf32>
    %c51 = arith.constant 51 : index
    %912 = memref.load %arg2[%c51] : memref<144xf32, #tpu.memory_space<smem>>
    %913 = vector.broadcast %912 : f32 to vector<16x16xf32>
    %914 = arith.mulf %913, %907 : vector<16x16xf32>
    %915 = arith.addf %876, %914 : vector<16x16xf32>
    %c87 = arith.constant 87 : index
    %916 = memref.load %arg2[%c87] : memref<144xf32, #tpu.memory_space<smem>>
    %917 = vector.broadcast %916 : f32 to vector<16x16xf32>
    %918 = arith.mulf %917, %907 : vector<16x16xf32>
    %919 = arith.addf %880, %918 : vector<16x16xf32>
    %c123 = arith.constant 123 : index
    %920 = memref.load %arg2[%c123] : memref<144xf32, #tpu.memory_space<smem>>
    %921 = vector.broadcast %920 : f32 to vector<16x16xf32>
    %922 = arith.mulf %921, %907 : vector<16x16xf32>
    %923 = arith.addf %884, %922 : vector<16x16xf32>
    %c15_i32_244 = arith.constant 15 : i32
    %924 = tpu.dynamic_rotate %7 by %c15_i32_244 dim 0 : vector<16x16xf32>, i32 -> vector<16x16xf32>
    %c1_i32_245 = arith.constant 1 : i32
    %925 = tpu.dynamic_rotate %924 by %c1_i32_245 dim 1 : vector<16x16xf32>, i32 -> vector<16x16xf32>
    %c1_i32_246 = arith.constant 1 : i32
    %926 = vector.broadcast %c1_i32_246 : i32 to vector<16x16xi32>
    %927 = arith.addi %0, %926 : vector<16x16xi32>
    %c0_i32_247 = arith.constant 0 : i32
    %928 = vector.broadcast %c0_i32_247 : i32 to vector<16x16xi32>
    %929 = arith.cmpi sge, %927, %928 : vector<16x16xi32>
    %c1_i32_248 = arith.constant 1 : i32
    %930 = vector.broadcast %c1_i32_248 : i32 to vector<16x16xi32>
    %931 = arith.addi %0, %930 : vector<16x16xi32>
    %c16_i32_249 = arith.constant 16 : i32
    %932 = vector.broadcast %c16_i32_249 : i32 to vector<16x16xi32>
    %933 = arith.cmpi slt, %931, %932 : vector<16x16xi32>
    %934 = arith.andi %929, %933 : vector<16x16xi1>
    %c-1_i32_250 = arith.constant -1 : i32
    %935 = vector.broadcast %c-1_i32_250 : i32 to vector<16x16xi32>
    %936 = arith.addi %1, %935 : vector<16x16xi32>
    %c0_i32_251 = arith.constant 0 : i32
    %937 = vector.broadcast %c0_i32_251 : i32 to vector<16x16xi32>
    %938 = arith.cmpi sge, %936, %937 : vector<16x16xi32>
    %939 = arith.andi %934, %938 : vector<16x16xi1>
    %c-1_i32_252 = arith.constant -1 : i32
    %940 = vector.broadcast %c-1_i32_252 : i32 to vector<16x16xi32>
    %941 = arith.addi %1, %940 : vector<16x16xi32>
    %c16_i32_253 = arith.constant 16 : i32
    %942 = vector.broadcast %c16_i32_253 : i32 to vector<16x16xi32>
    %943 = arith.cmpi slt, %941, %942 : vector<16x16xi32>
    %944 = arith.andi %939, %943 : vector<16x16xi1>
    %cst_254 = arith.constant 0.000000e+00 : f32
    %945 = vector.broadcast %cst_254 : f32 to vector<16x16xf32>
    %946 = arith.select %944, %925, %945 : vector<16x16xi1>, vector<16x16xf32>
    %c24 = arith.constant 24 : index
    %947 = memref.load %arg2[%c24] : memref<144xf32, #tpu.memory_space<smem>>
    %948 = vector.broadcast %947 : f32 to vector<16x16xf32>
    %949 = arith.mulf %948, %946 : vector<16x16xf32>
    %950 = arith.addf %911, %949 : vector<16x16xf32>
    %c60 = arith.constant 60 : index
    %951 = memref.load %arg2[%c60] : memref<144xf32, #tpu.memory_space<smem>>
    %952 = vector.broadcast %951 : f32 to vector<16x16xf32>
    %953 = arith.mulf %952, %946 : vector<16x16xf32>
    %954 = arith.addf %915, %953 : vector<16x16xf32>
    %c96 = arith.constant 96 : index
    %955 = memref.load %arg2[%c96] : memref<144xf32, #tpu.memory_space<smem>>
    %956 = vector.broadcast %955 : f32 to vector<16x16xf32>
    %957 = arith.mulf %956, %946 : vector<16x16xf32>
    %958 = arith.addf %919, %957 : vector<16x16xf32>
    %c132 = arith.constant 132 : index
    %959 = memref.load %arg2[%c132] : memref<144xf32, #tpu.memory_space<smem>>
    %960 = vector.broadcast %959 : f32 to vector<16x16xf32>
    %961 = arith.mulf %960, %946 : vector<16x16xf32>
    %962 = arith.addf %923, %961 : vector<16x16xf32>
    %c15_i32_255 = arith.constant 15 : i32
    %963 = tpu.dynamic_rotate %9 by %c15_i32_255 dim 0 : vector<16x16xf32>, i32 -> vector<16x16xf32>
    %c1_i32_256 = arith.constant 1 : i32
    %964 = tpu.dynamic_rotate %963 by %c1_i32_256 dim 1 : vector<16x16xf32>, i32 -> vector<16x16xf32>
    %c1_i32_257 = arith.constant 1 : i32
    %965 = vector.broadcast %c1_i32_257 : i32 to vector<16x16xi32>
    %966 = arith.addi %0, %965 : vector<16x16xi32>
    %c0_i32_258 = arith.constant 0 : i32
    %967 = vector.broadcast %c0_i32_258 : i32 to vector<16x16xi32>
    %968 = arith.cmpi sge, %966, %967 : vector<16x16xi32>
    %c1_i32_259 = arith.constant 1 : i32
    %969 = vector.broadcast %c1_i32_259 : i32 to vector<16x16xi32>
    %970 = arith.addi %0, %969 : vector<16x16xi32>
    %c16_i32_260 = arith.constant 16 : i32
    %971 = vector.broadcast %c16_i32_260 : i32 to vector<16x16xi32>
    %972 = arith.cmpi slt, %970, %971 : vector<16x16xi32>
    %973 = arith.andi %968, %972 : vector<16x16xi1>
    %c-1_i32_261 = arith.constant -1 : i32
    %974 = vector.broadcast %c-1_i32_261 : i32 to vector<16x16xi32>
    %975 = arith.addi %1, %974 : vector<16x16xi32>
    %c0_i32_262 = arith.constant 0 : i32
    %976 = vector.broadcast %c0_i32_262 : i32 to vector<16x16xi32>
    %977 = arith.cmpi sge, %975, %976 : vector<16x16xi32>
    %978 = arith.andi %973, %977 : vector<16x16xi1>
    %c-1_i32_263 = arith.constant -1 : i32
    %979 = vector.broadcast %c-1_i32_263 : i32 to vector<16x16xi32>
    %980 = arith.addi %1, %979 : vector<16x16xi32>
    %c16_i32_264 = arith.constant 16 : i32
    %981 = vector.broadcast %c16_i32_264 : i32 to vector<16x16xi32>
    %982 = arith.cmpi slt, %980, %981 : vector<16x16xi32>
    %983 = arith.andi %978, %982 : vector<16x16xi1>
    %cst_265 = arith.constant 0.000000e+00 : f32
    %984 = vector.broadcast %cst_265 : f32 to vector<16x16xf32>
    %985 = arith.select %983, %964, %984 : vector<16x16xi1>, vector<16x16xf32>
    %c33 = arith.constant 33 : index
    %986 = memref.load %arg2[%c33] : memref<144xf32, #tpu.memory_space<smem>>
    %987 = vector.broadcast %986 : f32 to vector<16x16xf32>
    %988 = arith.mulf %987, %985 : vector<16x16xf32>
    %989 = arith.addf %950, %988 : vector<16x16xf32>
    %c69 = arith.constant 69 : index
    %990 = memref.load %arg2[%c69] : memref<144xf32, #tpu.memory_space<smem>>
    %991 = vector.broadcast %990 : f32 to vector<16x16xf32>
    %992 = arith.mulf %991, %985 : vector<16x16xf32>
    %993 = arith.addf %954, %992 : vector<16x16xf32>
    %c105 = arith.constant 105 : index
    %994 = memref.load %arg2[%c105] : memref<144xf32, #tpu.memory_space<smem>>
    %995 = vector.broadcast %994 : f32 to vector<16x16xf32>
    %996 = arith.mulf %995, %985 : vector<16x16xf32>
    %997 = arith.addf %958, %996 : vector<16x16xf32>
    %c141 = arith.constant 141 : index
    %998 = memref.load %arg2[%c141] : memref<144xf32, #tpu.memory_space<smem>>
    %999 = vector.broadcast %998 : f32 to vector<16x16xf32>
    %1000 = arith.mulf %999, %985 : vector<16x16xf32>
    %1001 = arith.addf %962, %1000 : vector<16x16xf32>
    %c15_i32_266 = arith.constant 15 : i32
    %1002 = tpu.dynamic_rotate %3 by %c15_i32_266 dim 0 : vector<16x16xf32>, i32 -> vector<16x16xf32>
    %c1_i32_267 = arith.constant 1 : i32
    %1003 = vector.broadcast %c1_i32_267 : i32 to vector<16x16xi32>
    %1004 = arith.addi %0, %1003 : vector<16x16xi32>
    %c0_i32_268 = arith.constant 0 : i32
    %1005 = vector.broadcast %c0_i32_268 : i32 to vector<16x16xi32>
    %1006 = arith.cmpi sge, %1004, %1005 : vector<16x16xi32>
    %c1_i32_269 = arith.constant 1 : i32
    %1007 = vector.broadcast %c1_i32_269 : i32 to vector<16x16xi32>
    %1008 = arith.addi %0, %1007 : vector<16x16xi32>
    %c16_i32_270 = arith.constant 16 : i32
    %1009 = vector.broadcast %c16_i32_270 : i32 to vector<16x16xi32>
    %1010 = arith.cmpi slt, %1008, %1009 : vector<16x16xi32>
    %1011 = arith.andi %1006, %1010 : vector<16x16xi1>
    %c0_i32_271 = arith.constant 0 : i32
    %1012 = vector.broadcast %c0_i32_271 : i32 to vector<16x16xi32>
    %1013 = arith.addi %1, %1012 : vector<16x16xi32>
    %c0_i32_272 = arith.constant 0 : i32
    %1014 = vector.broadcast %c0_i32_272 : i32 to vector<16x16xi32>
    %1015 = arith.cmpi sge, %1013, %1014 : vector<16x16xi32>
    %1016 = arith.andi %1011, %1015 : vector<16x16xi1>
    %c0_i32_273 = arith.constant 0 : i32
    %1017 = vector.broadcast %c0_i32_273 : i32 to vector<16x16xi32>
    %1018 = arith.addi %1, %1017 : vector<16x16xi32>
    %c16_i32_274 = arith.constant 16 : i32
    %1019 = vector.broadcast %c16_i32_274 : i32 to vector<16x16xi32>
    %1020 = arith.cmpi slt, %1018, %1019 : vector<16x16xi32>
    %1021 = arith.andi %1016, %1020 : vector<16x16xi1>
    %cst_275 = arith.constant 0.000000e+00 : f32
    %1022 = vector.broadcast %cst_275 : f32 to vector<16x16xf32>
    %1023 = arith.select %1021, %1002, %1022 : vector<16x16xi1>, vector<16x16xf32>
    %c7 = arith.constant 7 : index
    %1024 = memref.load %arg2[%c7] : memref<144xf32, #tpu.memory_space<smem>>
    %1025 = vector.broadcast %1024 : f32 to vector<16x16xf32>
    %1026 = arith.mulf %1025, %1023 : vector<16x16xf32>
    %1027 = arith.addf %989, %1026 : vector<16x16xf32>
    %c43 = arith.constant 43 : index
    %1028 = memref.load %arg2[%c43] : memref<144xf32, #tpu.memory_space<smem>>
    %1029 = vector.broadcast %1028 : f32 to vector<16x16xf32>
    %1030 = arith.mulf %1029, %1023 : vector<16x16xf32>
    %1031 = arith.addf %993, %1030 : vector<16x16xf32>
    %c79 = arith.constant 79 : index
    %1032 = memref.load %arg2[%c79] : memref<144xf32, #tpu.memory_space<smem>>
    %1033 = vector.broadcast %1032 : f32 to vector<16x16xf32>
    %1034 = arith.mulf %1033, %1023 : vector<16x16xf32>
    %1035 = arith.addf %997, %1034 : vector<16x16xf32>
    %c115 = arith.constant 115 : index
    %1036 = memref.load %arg2[%c115] : memref<144xf32, #tpu.memory_space<smem>>
    %1037 = vector.broadcast %1036 : f32 to vector<16x16xf32>
    %1038 = arith.mulf %1037, %1023 : vector<16x16xf32>
    %1039 = arith.addf %1001, %1038 : vector<16x16xf32>
    %c15_i32_276 = arith.constant 15 : i32
    %1040 = tpu.dynamic_rotate %5 by %c15_i32_276 dim 0 : vector<16x16xf32>, i32 -> vector<16x16xf32>
    %c1_i32_277 = arith.constant 1 : i32
    %1041 = vector.broadcast %c1_i32_277 : i32 to vector<16x16xi32>
    %1042 = arith.addi %0, %1041 : vector<16x16xi32>
    %c0_i32_278 = arith.constant 0 : i32
    %1043 = vector.broadcast %c0_i32_278 : i32 to vector<16x16xi32>
    %1044 = arith.cmpi sge, %1042, %1043 : vector<16x16xi32>
    %c1_i32_279 = arith.constant 1 : i32
    %1045 = vector.broadcast %c1_i32_279 : i32 to vector<16x16xi32>
    %1046 = arith.addi %0, %1045 : vector<16x16xi32>
    %c16_i32_280 = arith.constant 16 : i32
    %1047 = vector.broadcast %c16_i32_280 : i32 to vector<16x16xi32>
    %1048 = arith.cmpi slt, %1046, %1047 : vector<16x16xi32>
    %1049 = arith.andi %1044, %1048 : vector<16x16xi1>
    %c0_i32_281 = arith.constant 0 : i32
    %1050 = vector.broadcast %c0_i32_281 : i32 to vector<16x16xi32>
    %1051 = arith.addi %1, %1050 : vector<16x16xi32>
    %c0_i32_282 = arith.constant 0 : i32
    %1052 = vector.broadcast %c0_i32_282 : i32 to vector<16x16xi32>
    %1053 = arith.cmpi sge, %1051, %1052 : vector<16x16xi32>
    %1054 = arith.andi %1049, %1053 : vector<16x16xi1>
    %c0_i32_283 = arith.constant 0 : i32
    %1055 = vector.broadcast %c0_i32_283 : i32 to vector<16x16xi32>
    %1056 = arith.addi %1, %1055 : vector<16x16xi32>
    %c16_i32_284 = arith.constant 16 : i32
    %1057 = vector.broadcast %c16_i32_284 : i32 to vector<16x16xi32>
    %1058 = arith.cmpi slt, %1056, %1057 : vector<16x16xi32>
    %1059 = arith.andi %1054, %1058 : vector<16x16xi1>
    %cst_285 = arith.constant 0.000000e+00 : f32
    %1060 = vector.broadcast %cst_285 : f32 to vector<16x16xf32>
    %1061 = arith.select %1059, %1040, %1060 : vector<16x16xi1>, vector<16x16xf32>
    %c16 = arith.constant 16 : index
    %1062 = memref.load %arg2[%c16] : memref<144xf32, #tpu.memory_space<smem>>
    %1063 = vector.broadcast %1062 : f32 to vector<16x16xf32>
    %1064 = arith.mulf %1063, %1061 : vector<16x16xf32>
    %1065 = arith.addf %1027, %1064 : vector<16x16xf32>
    %c52 = arith.constant 52 : index
    %1066 = memref.load %arg2[%c52] : memref<144xf32, #tpu.memory_space<smem>>
    %1067 = vector.broadcast %1066 : f32 to vector<16x16xf32>
    %1068 = arith.mulf %1067, %1061 : vector<16x16xf32>
    %1069 = arith.addf %1031, %1068 : vector<16x16xf32>
    %c88 = arith.constant 88 : index
    %1070 = memref.load %arg2[%c88] : memref<144xf32, #tpu.memory_space<smem>>
    %1071 = vector.broadcast %1070 : f32 to vector<16x16xf32>
    %1072 = arith.mulf %1071, %1061 : vector<16x16xf32>
    %1073 = arith.addf %1035, %1072 : vector<16x16xf32>
    %c124 = arith.constant 124 : index
    %1074 = memref.load %arg2[%c124] : memref<144xf32, #tpu.memory_space<smem>>
    %1075 = vector.broadcast %1074 : f32 to vector<16x16xf32>
    %1076 = arith.mulf %1075, %1061 : vector<16x16xf32>
    %1077 = arith.addf %1039, %1076 : vector<16x16xf32>
    %c15_i32_286 = arith.constant 15 : i32
    %1078 = tpu.dynamic_rotate %7 by %c15_i32_286 dim 0 : vector<16x16xf32>, i32 -> vector<16x16xf32>
    %c1_i32_287 = arith.constant 1 : i32
    %1079 = vector.broadcast %c1_i32_287 : i32 to vector<16x16xi32>
    %1080 = arith.addi %0, %1079 : vector<16x16xi32>
    %c0_i32_288 = arith.constant 0 : i32
    %1081 = vector.broadcast %c0_i32_288 : i32 to vector<16x16xi32>
    %1082 = arith.cmpi sge, %1080, %1081 : vector<16x16xi32>
    %c1_i32_289 = arith.constant 1 : i32
    %1083 = vector.broadcast %c1_i32_289 : i32 to vector<16x16xi32>
    %1084 = arith.addi %0, %1083 : vector<16x16xi32>
    %c16_i32_290 = arith.constant 16 : i32
    %1085 = vector.broadcast %c16_i32_290 : i32 to vector<16x16xi32>
    %1086 = arith.cmpi slt, %1084, %1085 : vector<16x16xi32>
    %1087 = arith.andi %1082, %1086 : vector<16x16xi1>
    %c0_i32_291 = arith.constant 0 : i32
    %1088 = vector.broadcast %c0_i32_291 : i32 to vector<16x16xi32>
    %1089 = arith.addi %1, %1088 : vector<16x16xi32>
    %c0_i32_292 = arith.constant 0 : i32
    %1090 = vector.broadcast %c0_i32_292 : i32 to vector<16x16xi32>
    %1091 = arith.cmpi sge, %1089, %1090 : vector<16x16xi32>
    %1092 = arith.andi %1087, %1091 : vector<16x16xi1>
    %c0_i32_293 = arith.constant 0 : i32
    %1093 = vector.broadcast %c0_i32_293 : i32 to vector<16x16xi32>
    %1094 = arith.addi %1, %1093 : vector<16x16xi32>
    %c16_i32_294 = arith.constant 16 : i32
    %1095 = vector.broadcast %c16_i32_294 : i32 to vector<16x16xi32>
    %1096 = arith.cmpi slt, %1094, %1095 : vector<16x16xi32>
    %1097 = arith.andi %1092, %1096 : vector<16x16xi1>
    %cst_295 = arith.constant 0.000000e+00 : f32
    %1098 = vector.broadcast %cst_295 : f32 to vector<16x16xf32>
    %1099 = arith.select %1097, %1078, %1098 : vector<16x16xi1>, vector<16x16xf32>
    %c25 = arith.constant 25 : index
    %1100 = memref.load %arg2[%c25] : memref<144xf32, #tpu.memory_space<smem>>
    %1101 = vector.broadcast %1100 : f32 to vector<16x16xf32>
    %1102 = arith.mulf %1101, %1099 : vector<16x16xf32>
    %1103 = arith.addf %1065, %1102 : vector<16x16xf32>
    %c61 = arith.constant 61 : index
    %1104 = memref.load %arg2[%c61] : memref<144xf32, #tpu.memory_space<smem>>
    %1105 = vector.broadcast %1104 : f32 to vector<16x16xf32>
    %1106 = arith.mulf %1105, %1099 : vector<16x16xf32>
    %1107 = arith.addf %1069, %1106 : vector<16x16xf32>
    %c97 = arith.constant 97 : index
    %1108 = memref.load %arg2[%c97] : memref<144xf32, #tpu.memory_space<smem>>
    %1109 = vector.broadcast %1108 : f32 to vector<16x16xf32>
    %1110 = arith.mulf %1109, %1099 : vector<16x16xf32>
    %1111 = arith.addf %1073, %1110 : vector<16x16xf32>
    %c133 = arith.constant 133 : index
    %1112 = memref.load %arg2[%c133] : memref<144xf32, #tpu.memory_space<smem>>
    %1113 = vector.broadcast %1112 : f32 to vector<16x16xf32>
    %1114 = arith.mulf %1113, %1099 : vector<16x16xf32>
    %1115 = arith.addf %1077, %1114 : vector<16x16xf32>
    %c15_i32_296 = arith.constant 15 : i32
    %1116 = tpu.dynamic_rotate %9 by %c15_i32_296 dim 0 : vector<16x16xf32>, i32 -> vector<16x16xf32>
    %c1_i32_297 = arith.constant 1 : i32
    %1117 = vector.broadcast %c1_i32_297 : i32 to vector<16x16xi32>
    %1118 = arith.addi %0, %1117 : vector<16x16xi32>
    %c0_i32_298 = arith.constant 0 : i32
    %1119 = vector.broadcast %c0_i32_298 : i32 to vector<16x16xi32>
    %1120 = arith.cmpi sge, %1118, %1119 : vector<16x16xi32>
    %c1_i32_299 = arith.constant 1 : i32
    %1121 = vector.broadcast %c1_i32_299 : i32 to vector<16x16xi32>
    %1122 = arith.addi %0, %1121 : vector<16x16xi32>
    %c16_i32_300 = arith.constant 16 : i32
    %1123 = vector.broadcast %c16_i32_300 : i32 to vector<16x16xi32>
    %1124 = arith.cmpi slt, %1122, %1123 : vector<16x16xi32>
    %1125 = arith.andi %1120, %1124 : vector<16x16xi1>
    %c0_i32_301 = arith.constant 0 : i32
    %1126 = vector.broadcast %c0_i32_301 : i32 to vector<16x16xi32>
    %1127 = arith.addi %1, %1126 : vector<16x16xi32>
    %c0_i32_302 = arith.constant 0 : i32
    %1128 = vector.broadcast %c0_i32_302 : i32 to vector<16x16xi32>
    %1129 = arith.cmpi sge, %1127, %1128 : vector<16x16xi32>
    %1130 = arith.andi %1125, %1129 : vector<16x16xi1>
    %c0_i32_303 = arith.constant 0 : i32
    %1131 = vector.broadcast %c0_i32_303 : i32 to vector<16x16xi32>
    %1132 = arith.addi %1, %1131 : vector<16x16xi32>
    %c16_i32_304 = arith.constant 16 : i32
    %1133 = vector.broadcast %c16_i32_304 : i32 to vector<16x16xi32>
    %1134 = arith.cmpi slt, %1132, %1133 : vector<16x16xi32>
    %1135 = arith.andi %1130, %1134 : vector<16x16xi1>
    %cst_305 = arith.constant 0.000000e+00 : f32
    %1136 = vector.broadcast %cst_305 : f32 to vector<16x16xf32>
    %1137 = arith.select %1135, %1116, %1136 : vector<16x16xi1>, vector<16x16xf32>
    %c34 = arith.constant 34 : index
    %1138 = memref.load %arg2[%c34] : memref<144xf32, #tpu.memory_space<smem>>
    %1139 = vector.broadcast %1138 : f32 to vector<16x16xf32>
    %1140 = arith.mulf %1139, %1137 : vector<16x16xf32>
    %1141 = arith.addf %1103, %1140 : vector<16x16xf32>
    %c70 = arith.constant 70 : index
    %1142 = memref.load %arg2[%c70] : memref<144xf32, #tpu.memory_space<smem>>
    %1143 = vector.broadcast %1142 : f32 to vector<16x16xf32>
    %1144 = arith.mulf %1143, %1137 : vector<16x16xf32>
    %1145 = arith.addf %1107, %1144 : vector<16x16xf32>
    %c106 = arith.constant 106 : index
    %1146 = memref.load %arg2[%c106] : memref<144xf32, #tpu.memory_space<smem>>
    %1147 = vector.broadcast %1146 : f32 to vector<16x16xf32>
    %1148 = arith.mulf %1147, %1137 : vector<16x16xf32>
    %1149 = arith.addf %1111, %1148 : vector<16x16xf32>
    %c142 = arith.constant 142 : index
    %1150 = memref.load %arg2[%c142] : memref<144xf32, #tpu.memory_space<smem>>
    %1151 = vector.broadcast %1150 : f32 to vector<16x16xf32>
    %1152 = arith.mulf %1151, %1137 : vector<16x16xf32>
    %1153 = arith.addf %1115, %1152 : vector<16x16xf32>
    %c15_i32_306 = arith.constant 15 : i32
    %1154 = tpu.dynamic_rotate %3 by %c15_i32_306 dim 0 : vector<16x16xf32>, i32 -> vector<16x16xf32>
    %c15_i32_307 = arith.constant 15 : i32
    %1155 = tpu.dynamic_rotate %1154 by %c15_i32_307 dim 1 : vector<16x16xf32>, i32 -> vector<16x16xf32>
    %c1_i32_308 = arith.constant 1 : i32
    %1156 = vector.broadcast %c1_i32_308 : i32 to vector<16x16xi32>
    %1157 = arith.addi %0, %1156 : vector<16x16xi32>
    %c0_i32_309 = arith.constant 0 : i32
    %1158 = vector.broadcast %c0_i32_309 : i32 to vector<16x16xi32>
    %1159 = arith.cmpi sge, %1157, %1158 : vector<16x16xi32>
    %c1_i32_310 = arith.constant 1 : i32
    %1160 = vector.broadcast %c1_i32_310 : i32 to vector<16x16xi32>
    %1161 = arith.addi %0, %1160 : vector<16x16xi32>
    %c16_i32_311 = arith.constant 16 : i32
    %1162 = vector.broadcast %c16_i32_311 : i32 to vector<16x16xi32>
    %1163 = arith.cmpi slt, %1161, %1162 : vector<16x16xi32>
    %1164 = arith.andi %1159, %1163 : vector<16x16xi1>
    %c1_i32_312 = arith.constant 1 : i32
    %1165 = vector.broadcast %c1_i32_312 : i32 to vector<16x16xi32>
    %1166 = arith.addi %1, %1165 : vector<16x16xi32>
    %c0_i32_313 = arith.constant 0 : i32
    %1167 = vector.broadcast %c0_i32_313 : i32 to vector<16x16xi32>
    %1168 = arith.cmpi sge, %1166, %1167 : vector<16x16xi32>
    %1169 = arith.andi %1164, %1168 : vector<16x16xi1>
    %c1_i32_314 = arith.constant 1 : i32
    %1170 = vector.broadcast %c1_i32_314 : i32 to vector<16x16xi32>
    %1171 = arith.addi %1, %1170 : vector<16x16xi32>
    %c16_i32_315 = arith.constant 16 : i32
    %1172 = vector.broadcast %c16_i32_315 : i32 to vector<16x16xi32>
    %1173 = arith.cmpi slt, %1171, %1172 : vector<16x16xi32>
    %1174 = arith.andi %1169, %1173 : vector<16x16xi1>
    %cst_316 = arith.constant 0.000000e+00 : f32
    %1175 = vector.broadcast %cst_316 : f32 to vector<16x16xf32>
    %1176 = arith.select %1174, %1155, %1175 : vector<16x16xi1>, vector<16x16xf32>
    %c8 = arith.constant 8 : index
    %1177 = memref.load %arg2[%c8] : memref<144xf32, #tpu.memory_space<smem>>
    %1178 = vector.broadcast %1177 : f32 to vector<16x16xf32>
    %1179 = arith.mulf %1178, %1176 : vector<16x16xf32>
    %1180 = arith.addf %1141, %1179 : vector<16x16xf32>
    %c44 = arith.constant 44 : index
    %1181 = memref.load %arg2[%c44] : memref<144xf32, #tpu.memory_space<smem>>
    %1182 = vector.broadcast %1181 : f32 to vector<16x16xf32>
    %1183 = arith.mulf %1182, %1176 : vector<16x16xf32>
    %1184 = arith.addf %1145, %1183 : vector<16x16xf32>
    %c80 = arith.constant 80 : index
    %1185 = memref.load %arg2[%c80] : memref<144xf32, #tpu.memory_space<smem>>
    %1186 = vector.broadcast %1185 : f32 to vector<16x16xf32>
    %1187 = arith.mulf %1186, %1176 : vector<16x16xf32>
    %1188 = arith.addf %1149, %1187 : vector<16x16xf32>
    %c116 = arith.constant 116 : index
    %1189 = memref.load %arg2[%c116] : memref<144xf32, #tpu.memory_space<smem>>
    %1190 = vector.broadcast %1189 : f32 to vector<16x16xf32>
    %1191 = arith.mulf %1190, %1176 : vector<16x16xf32>
    %1192 = arith.addf %1153, %1191 : vector<16x16xf32>
    %c15_i32_317 = arith.constant 15 : i32
    %1193 = tpu.dynamic_rotate %5 by %c15_i32_317 dim 0 : vector<16x16xf32>, i32 -> vector<16x16xf32>
    %c15_i32_318 = arith.constant 15 : i32
    %1194 = tpu.dynamic_rotate %1193 by %c15_i32_318 dim 1 : vector<16x16xf32>, i32 -> vector<16x16xf32>
    %c1_i32_319 = arith.constant 1 : i32
    %1195 = vector.broadcast %c1_i32_319 : i32 to vector<16x16xi32>
    %1196 = arith.addi %0, %1195 : vector<16x16xi32>
    %c0_i32_320 = arith.constant 0 : i32
    %1197 = vector.broadcast %c0_i32_320 : i32 to vector<16x16xi32>
    %1198 = arith.cmpi sge, %1196, %1197 : vector<16x16xi32>
    %c1_i32_321 = arith.constant 1 : i32
    %1199 = vector.broadcast %c1_i32_321 : i32 to vector<16x16xi32>
    %1200 = arith.addi %0, %1199 : vector<16x16xi32>
    %c16_i32_322 = arith.constant 16 : i32
    %1201 = vector.broadcast %c16_i32_322 : i32 to vector<16x16xi32>
    %1202 = arith.cmpi slt, %1200, %1201 : vector<16x16xi32>
    %1203 = arith.andi %1198, %1202 : vector<16x16xi1>
    %c1_i32_323 = arith.constant 1 : i32
    %1204 = vector.broadcast %c1_i32_323 : i32 to vector<16x16xi32>
    %1205 = arith.addi %1, %1204 : vector<16x16xi32>
    %c0_i32_324 = arith.constant 0 : i32
    %1206 = vector.broadcast %c0_i32_324 : i32 to vector<16x16xi32>
    %1207 = arith.cmpi sge, %1205, %1206 : vector<16x16xi32>
    %1208 = arith.andi %1203, %1207 : vector<16x16xi1>
    %c1_i32_325 = arith.constant 1 : i32
    %1209 = vector.broadcast %c1_i32_325 : i32 to vector<16x16xi32>
    %1210 = arith.addi %1, %1209 : vector<16x16xi32>
    %c16_i32_326 = arith.constant 16 : i32
    %1211 = vector.broadcast %c16_i32_326 : i32 to vector<16x16xi32>
    %1212 = arith.cmpi slt, %1210, %1211 : vector<16x16xi32>
    %1213 = arith.andi %1208, %1212 : vector<16x16xi1>
    %cst_327 = arith.constant 0.000000e+00 : f32
    %1214 = vector.broadcast %cst_327 : f32 to vector<16x16xf32>
    %1215 = arith.select %1213, %1194, %1214 : vector<16x16xi1>, vector<16x16xf32>
    %c17 = arith.constant 17 : index
    %1216 = memref.load %arg2[%c17] : memref<144xf32, #tpu.memory_space<smem>>
    %1217 = vector.broadcast %1216 : f32 to vector<16x16xf32>
    %1218 = arith.mulf %1217, %1215 : vector<16x16xf32>
    %1219 = arith.addf %1180, %1218 : vector<16x16xf32>
    %c53 = arith.constant 53 : index
    %1220 = memref.load %arg2[%c53] : memref<144xf32, #tpu.memory_space<smem>>
    %1221 = vector.broadcast %1220 : f32 to vector<16x16xf32>
    %1222 = arith.mulf %1221, %1215 : vector<16x16xf32>
    %1223 = arith.addf %1184, %1222 : vector<16x16xf32>
    %c89 = arith.constant 89 : index
    %1224 = memref.load %arg2[%c89] : memref<144xf32, #tpu.memory_space<smem>>
    %1225 = vector.broadcast %1224 : f32 to vector<16x16xf32>
    %1226 = arith.mulf %1225, %1215 : vector<16x16xf32>
    %1227 = arith.addf %1188, %1226 : vector<16x16xf32>
    %c125 = arith.constant 125 : index
    %1228 = memref.load %arg2[%c125] : memref<144xf32, #tpu.memory_space<smem>>
    %1229 = vector.broadcast %1228 : f32 to vector<16x16xf32>
    %1230 = arith.mulf %1229, %1215 : vector<16x16xf32>
    %1231 = arith.addf %1192, %1230 : vector<16x16xf32>
    %c15_i32_328 = arith.constant 15 : i32
    %1232 = tpu.dynamic_rotate %7 by %c15_i32_328 dim 0 : vector<16x16xf32>, i32 -> vector<16x16xf32>
    %c15_i32_329 = arith.constant 15 : i32
    %1233 = tpu.dynamic_rotate %1232 by %c15_i32_329 dim 1 : vector<16x16xf32>, i32 -> vector<16x16xf32>
    %c1_i32_330 = arith.constant 1 : i32
    %1234 = vector.broadcast %c1_i32_330 : i32 to vector<16x16xi32>
    %1235 = arith.addi %0, %1234 : vector<16x16xi32>
    %c0_i32_331 = arith.constant 0 : i32
    %1236 = vector.broadcast %c0_i32_331 : i32 to vector<16x16xi32>
    %1237 = arith.cmpi sge, %1235, %1236 : vector<16x16xi32>
    %c1_i32_332 = arith.constant 1 : i32
    %1238 = vector.broadcast %c1_i32_332 : i32 to vector<16x16xi32>
    %1239 = arith.addi %0, %1238 : vector<16x16xi32>
    %c16_i32_333 = arith.constant 16 : i32
    %1240 = vector.broadcast %c16_i32_333 : i32 to vector<16x16xi32>
    %1241 = arith.cmpi slt, %1239, %1240 : vector<16x16xi32>
    %1242 = arith.andi %1237, %1241 : vector<16x16xi1>
    %c1_i32_334 = arith.constant 1 : i32
    %1243 = vector.broadcast %c1_i32_334 : i32 to vector<16x16xi32>
    %1244 = arith.addi %1, %1243 : vector<16x16xi32>
    %c0_i32_335 = arith.constant 0 : i32
    %1245 = vector.broadcast %c0_i32_335 : i32 to vector<16x16xi32>
    %1246 = arith.cmpi sge, %1244, %1245 : vector<16x16xi32>
    %1247 = arith.andi %1242, %1246 : vector<16x16xi1>
    %c1_i32_336 = arith.constant 1 : i32
    %1248 = vector.broadcast %c1_i32_336 : i32 to vector<16x16xi32>
    %1249 = arith.addi %1, %1248 : vector<16x16xi32>
    %c16_i32_337 = arith.constant 16 : i32
    %1250 = vector.broadcast %c16_i32_337 : i32 to vector<16x16xi32>
    %1251 = arith.cmpi slt, %1249, %1250 : vector<16x16xi32>
    %1252 = arith.andi %1247, %1251 : vector<16x16xi1>
    %cst_338 = arith.constant 0.000000e+00 : f32
    %1253 = vector.broadcast %cst_338 : f32 to vector<16x16xf32>
    %1254 = arith.select %1252, %1233, %1253 : vector<16x16xi1>, vector<16x16xf32>
    %c26 = arith.constant 26 : index
    %1255 = memref.load %arg2[%c26] : memref<144xf32, #tpu.memory_space<smem>>
    %1256 = vector.broadcast %1255 : f32 to vector<16x16xf32>
    %1257 = arith.mulf %1256, %1254 : vector<16x16xf32>
    %1258 = arith.addf %1219, %1257 : vector<16x16xf32>
    %c62 = arith.constant 62 : index
    %1259 = memref.load %arg2[%c62] : memref<144xf32, #tpu.memory_space<smem>>
    %1260 = vector.broadcast %1259 : f32 to vector<16x16xf32>
    %1261 = arith.mulf %1260, %1254 : vector<16x16xf32>
    %1262 = arith.addf %1223, %1261 : vector<16x16xf32>
    %c98 = arith.constant 98 : index
    %1263 = memref.load %arg2[%c98] : memref<144xf32, #tpu.memory_space<smem>>
    %1264 = vector.broadcast %1263 : f32 to vector<16x16xf32>
    %1265 = arith.mulf %1264, %1254 : vector<16x16xf32>
    %1266 = arith.addf %1227, %1265 : vector<16x16xf32>
    %c134 = arith.constant 134 : index
    %1267 = memref.load %arg2[%c134] : memref<144xf32, #tpu.memory_space<smem>>
    %1268 = vector.broadcast %1267 : f32 to vector<16x16xf32>
    %1269 = arith.mulf %1268, %1254 : vector<16x16xf32>
    %1270 = arith.addf %1231, %1269 : vector<16x16xf32>
    %c15_i32_339 = arith.constant 15 : i32
    %1271 = tpu.dynamic_rotate %9 by %c15_i32_339 dim 0 : vector<16x16xf32>, i32 -> vector<16x16xf32>
    %c15_i32_340 = arith.constant 15 : i32
    %1272 = tpu.dynamic_rotate %1271 by %c15_i32_340 dim 1 : vector<16x16xf32>, i32 -> vector<16x16xf32>
    %c1_i32_341 = arith.constant 1 : i32
    %1273 = vector.broadcast %c1_i32_341 : i32 to vector<16x16xi32>
    %1274 = arith.addi %0, %1273 : vector<16x16xi32>
    %c0_i32_342 = arith.constant 0 : i32
    %1275 = vector.broadcast %c0_i32_342 : i32 to vector<16x16xi32>
    %1276 = arith.cmpi sge, %1274, %1275 : vector<16x16xi32>
    %c1_i32_343 = arith.constant 1 : i32
    %1277 = vector.broadcast %c1_i32_343 : i32 to vector<16x16xi32>
    %1278 = arith.addi %0, %1277 : vector<16x16xi32>
    %c16_i32_344 = arith.constant 16 : i32
    %1279 = vector.broadcast %c16_i32_344 : i32 to vector<16x16xi32>
    %1280 = arith.cmpi slt, %1278, %1279 : vector<16x16xi32>
    %1281 = arith.andi %1276, %1280 : vector<16x16xi1>
    %c1_i32_345 = arith.constant 1 : i32
    %1282 = vector.broadcast %c1_i32_345 : i32 to vector<16x16xi32>
    %1283 = arith.addi %1, %1282 : vector<16x16xi32>
    %c0_i32_346 = arith.constant 0 : i32
    %1284 = vector.broadcast %c0_i32_346 : i32 to vector<16x16xi32>
    %1285 = arith.cmpi sge, %1283, %1284 : vector<16x16xi32>
    %1286 = arith.andi %1281, %1285 : vector<16x16xi1>
    %c1_i32_347 = arith.constant 1 : i32
    %1287 = vector.broadcast %c1_i32_347 : i32 to vector<16x16xi32>
    %1288 = arith.addi %1, %1287 : vector<16x16xi32>
    %c16_i32_348 = arith.constant 16 : i32
    %1289 = vector.broadcast %c16_i32_348 : i32 to vector<16x16xi32>
    %1290 = arith.cmpi slt, %1288, %1289 : vector<16x16xi32>
    %1291 = arith.andi %1286, %1290 : vector<16x16xi1>
    %cst_349 = arith.constant 0.000000e+00 : f32
    %1292 = vector.broadcast %cst_349 : f32 to vector<16x16xf32>
    %1293 = arith.select %1291, %1272, %1292 : vector<16x16xi1>, vector<16x16xf32>
    %c35 = arith.constant 35 : index
    %1294 = memref.load %arg2[%c35] : memref<144xf32, #tpu.memory_space<smem>>
    %1295 = vector.broadcast %1294 : f32 to vector<16x16xf32>
    %1296 = arith.mulf %1295, %1293 : vector<16x16xf32>
    %1297 = arith.addf %1258, %1296 : vector<16x16xf32>
    %c71 = arith.constant 71 : index
    %1298 = memref.load %arg2[%c71] : memref<144xf32, #tpu.memory_space<smem>>
    %1299 = vector.broadcast %1298 : f32 to vector<16x16xf32>
    %1300 = arith.mulf %1299, %1293 : vector<16x16xf32>
    %1301 = arith.addf %1262, %1300 : vector<16x16xf32>
    %c107 = arith.constant 107 : index
    %1302 = memref.load %arg2[%c107] : memref<144xf32, #tpu.memory_space<smem>>
    %1303 = vector.broadcast %1302 : f32 to vector<16x16xf32>
    %1304 = arith.mulf %1303, %1293 : vector<16x16xf32>
    %1305 = arith.addf %1266, %1304 : vector<16x16xf32>
    %c143 = arith.constant 143 : index
    %1306 = memref.load %arg2[%c143] : memref<144xf32, #tpu.memory_space<smem>>
    %1307 = vector.broadcast %1306 : f32 to vector<16x16xf32>
    %1308 = arith.mulf %1307, %1293 : vector<16x16xf32>
    %1309 = arith.addf %1270, %1308 : vector<16x16xf32>
    %c0_350 = arith.constant 0 : index
    %1310 = memref.load %arg3[%c0_350] : memref<4xf32, #tpu.memory_space<smem>>
    %1311 = vector.broadcast %1310 : f32 to vector<16x16xf32>
    %1312 = arith.addf %1297, %1311 : vector<16x16xf32>
    %c1_351 = arith.constant 1 : index
    %1313 = memref.load %arg3[%c1_351] : memref<4xf32, #tpu.memory_space<smem>>
    %1314 = vector.broadcast %1313 : f32 to vector<16x16xf32>
    %1315 = arith.addf %1301, %1314 : vector<16x16xf32>
    %c2_352 = arith.constant 2 : index
    %1316 = memref.load %arg3[%c2_352] : memref<4xf32, #tpu.memory_space<smem>>
    %1317 = vector.broadcast %1316 : f32 to vector<16x16xf32>
    %1318 = arith.addf %1305, %1317 : vector<16x16xf32>
    %c3_353 = arith.constant 3 : index
    %1319 = memref.load %arg3[%c3_353] : memref<4xf32, #tpu.memory_space<smem>>
    %1320 = vector.broadcast %1319 : f32 to vector<16x16xf32>
    %1321 = arith.addf %1309, %1320 : vector<16x16xf32>
    %cst_354 = arith.constant 0.000000e+00 : f32
    %1322 = vector.broadcast %cst_354 : f32 to vector<16x16xf32>
    %1323 = arith.cmpf ogt, %1312, %1322 : vector<16x16xf32>
    %cst_355 = arith.constant 2.000000e-01 : f32
    %1324 = vector.broadcast %cst_355 : f32 to vector<16x16xf32>
    %1325 = arith.mulf %1324, %1312 : vector<16x16xf32>
    %1326 = arith.select %1323, %1312, %1325 : vector<16x16xi1>, vector<16x16xf32>
    %cst_356 = arith.constant 0.000000e+00 : f32
    %1327 = vector.broadcast %cst_356 : f32 to vector<16x16xf32>
    %1328 = arith.cmpf ogt, %1315, %1327 : vector<16x16xf32>
    %cst_357 = arith.constant 2.000000e-01 : f32
    %1329 = vector.broadcast %cst_357 : f32 to vector<16x16xf32>
    %1330 = arith.mulf %1329, %1315 : vector<16x16xf32>
    %1331 = arith.select %1328, %1315, %1330 : vector<16x16xi1>, vector<16x16xf32>
    %cst_358 = arith.constant 0.000000e+00 : f32
    %1332 = vector.broadcast %cst_358 : f32 to vector<16x16xf32>
    %1333 = arith.cmpf ogt, %1318, %1332 : vector<16x16xf32>
    %cst_359 = arith.constant 2.000000e-01 : f32
    %1334 = vector.broadcast %cst_359 : f32 to vector<16x16xf32>
    %1335 = arith.mulf %1334, %1318 : vector<16x16xf32>
    %1336 = arith.select %1333, %1318, %1335 : vector<16x16xi1>, vector<16x16xf32>
    %cst_360 = arith.constant 0.000000e+00 : f32
    %1337 = vector.broadcast %cst_360 : f32 to vector<16x16xf32>
    %1338 = arith.cmpf ogt, %1321, %1337 : vector<16x16xf32>
    %cst_361 = arith.constant 2.000000e-01 : f32
    %1339 = vector.broadcast %cst_361 : f32 to vector<16x16xf32>
    %1340 = arith.mulf %1339, %1321 : vector<16x16xf32>
    %1341 = arith.select %1338, %1321, %1340 : vector<16x16xi1>, vector<16x16xf32>
    %cst_362 = arith.constant 0.000000e+00 : f32
    %1342 = vector.broadcast %cst_362 : f32 to vector<16x16xf32>
    %cst_363 = arith.constant 0.000000e+00 : f32
    %1343 = vector.broadcast %cst_363 : f32 to vector<16x16xf32>
    %cst_364 = arith.constant 0.000000e+00 : f32
    %1344 = vector.broadcast %cst_364 : f32 to vector<16x16xf32>
    %cst_365 = arith.constant 0.000000e+00 : f32
    %1345 = vector.broadcast %cst_365 : f32 to vector<16x16xf32>
    %c1_i32_366 = arith.constant 1 : i32
    %1346 = tpu.dynamic_rotate %1326 by %c1_i32_366 dim 0 : vector<16x16xf32>, i32 -> vector<16x16xf32>
    %c1_i32_367 = arith.constant 1 : i32
    %1347 = tpu.dynamic_rotate %1346 by %c1_i32_367 dim 1 : vector<16x16xf32>, i32 -> vector<16x16xf32>
    %c-1_i32_368 = arith.constant -1 : i32
    %1348 = vector.broadcast %c-1_i32_368 : i32 to vector<16x16xi32>
    %1349 = arith.addi %0, %1348 : vector<16x16xi32>
    %c0_i32_369 = arith.constant 0 : i32
    %1350 = vector.broadcast %c0_i32_369 : i32 to vector<16x16xi32>
    %1351 = arith.cmpi sge, %1349, %1350 : vector<16x16xi32>
    %c-1_i32_370 = arith.constant -1 : i32
    %1352 = vector.broadcast %c-1_i32_370 : i32 to vector<16x16xi32>
    %1353 = arith.addi %0, %1352 : vector<16x16xi32>
    %c16_i32_371 = arith.constant 16 : i32
    %1354 = vector.broadcast %c16_i32_371 : i32 to vector<16x16xi32>
    %1355 = arith.cmpi slt, %1353, %1354 : vector<16x16xi32>
    %1356 = arith.andi %1351, %1355 : vector<16x16xi1>
    %c-1_i32_372 = arith.constant -1 : i32
    %1357 = vector.broadcast %c-1_i32_372 : i32 to vector<16x16xi32>
    %1358 = arith.addi %1, %1357 : vector<16x16xi32>
    %c0_i32_373 = arith.constant 0 : i32
    %1359 = vector.broadcast %c0_i32_373 : i32 to vector<16x16xi32>
    %1360 = arith.cmpi sge, %1358, %1359 : vector<16x16xi32>
    %1361 = arith.andi %1356, %1360 : vector<16x16xi1>
    %c-1_i32_374 = arith.constant -1 : i32
    %1362 = vector.broadcast %c-1_i32_374 : i32 to vector<16x16xi32>
    %1363 = arith.addi %1, %1362 : vector<16x16xi32>
    %c16_i32_375 = arith.constant 16 : i32
    %1364 = vector.broadcast %c16_i32_375 : i32 to vector<16x16xi32>
    %1365 = arith.cmpi slt, %1363, %1364 : vector<16x16xi32>
    %1366 = arith.andi %1361, %1365 : vector<16x16xi1>
    %cst_376 = arith.constant 0.000000e+00 : f32
    %1367 = vector.broadcast %cst_376 : f32 to vector<16x16xf32>
    %1368 = arith.select %1366, %1347, %1367 : vector<16x16xi1>, vector<16x16xf32>
    %c0_377 = arith.constant 0 : index
    %1369 = memref.load %arg4[%c0_377] : memref<144xf32, #tpu.memory_space<smem>>
    %1370 = vector.broadcast %1369 : f32 to vector<16x16xf32>
    %1371 = arith.mulf %1370, %1368 : vector<16x16xf32>
    %1372 = arith.addf %1342, %1371 : vector<16x16xf32>
    %c36_378 = arith.constant 36 : index
    %1373 = memref.load %arg4[%c36_378] : memref<144xf32, #tpu.memory_space<smem>>
    %1374 = vector.broadcast %1373 : f32 to vector<16x16xf32>
    %1375 = arith.mulf %1374, %1368 : vector<16x16xf32>
    %1376 = arith.addf %1343, %1375 : vector<16x16xf32>
    %c72_379 = arith.constant 72 : index
    %1377 = memref.load %arg4[%c72_379] : memref<144xf32, #tpu.memory_space<smem>>
    %1378 = vector.broadcast %1377 : f32 to vector<16x16xf32>
    %1379 = arith.mulf %1378, %1368 : vector<16x16xf32>
    %1380 = arith.addf %1344, %1379 : vector<16x16xf32>
    %c108_380 = arith.constant 108 : index
    %1381 = memref.load %arg4[%c108_380] : memref<144xf32, #tpu.memory_space<smem>>
    %1382 = vector.broadcast %1381 : f32 to vector<16x16xf32>
    %1383 = arith.mulf %1382, %1368 : vector<16x16xf32>
    %1384 = arith.addf %1345, %1383 : vector<16x16xf32>
    %c1_i32_381 = arith.constant 1 : i32
    %1385 = tpu.dynamic_rotate %1331 by %c1_i32_381 dim 0 : vector<16x16xf32>, i32 -> vector<16x16xf32>
    %c1_i32_382 = arith.constant 1 : i32
    %1386 = tpu.dynamic_rotate %1385 by %c1_i32_382 dim 1 : vector<16x16xf32>, i32 -> vector<16x16xf32>
    %c-1_i32_383 = arith.constant -1 : i32
    %1387 = vector.broadcast %c-1_i32_383 : i32 to vector<16x16xi32>
    %1388 = arith.addi %0, %1387 : vector<16x16xi32>
    %c0_i32_384 = arith.constant 0 : i32
    %1389 = vector.broadcast %c0_i32_384 : i32 to vector<16x16xi32>
    %1390 = arith.cmpi sge, %1388, %1389 : vector<16x16xi32>
    %c-1_i32_385 = arith.constant -1 : i32
    %1391 = vector.broadcast %c-1_i32_385 : i32 to vector<16x16xi32>
    %1392 = arith.addi %0, %1391 : vector<16x16xi32>
    %c16_i32_386 = arith.constant 16 : i32
    %1393 = vector.broadcast %c16_i32_386 : i32 to vector<16x16xi32>
    %1394 = arith.cmpi slt, %1392, %1393 : vector<16x16xi32>
    %1395 = arith.andi %1390, %1394 : vector<16x16xi1>
    %c-1_i32_387 = arith.constant -1 : i32
    %1396 = vector.broadcast %c-1_i32_387 : i32 to vector<16x16xi32>
    %1397 = arith.addi %1, %1396 : vector<16x16xi32>
    %c0_i32_388 = arith.constant 0 : i32
    %1398 = vector.broadcast %c0_i32_388 : i32 to vector<16x16xi32>
    %1399 = arith.cmpi sge, %1397, %1398 : vector<16x16xi32>
    %1400 = arith.andi %1395, %1399 : vector<16x16xi1>
    %c-1_i32_389 = arith.constant -1 : i32
    %1401 = vector.broadcast %c-1_i32_389 : i32 to vector<16x16xi32>
    %1402 = arith.addi %1, %1401 : vector<16x16xi32>
    %c16_i32_390 = arith.constant 16 : i32
    %1403 = vector.broadcast %c16_i32_390 : i32 to vector<16x16xi32>
    %1404 = arith.cmpi slt, %1402, %1403 : vector<16x16xi32>
    %1405 = arith.andi %1400, %1404 : vector<16x16xi1>
    %cst_391 = arith.constant 0.000000e+00 : f32
    %1406 = vector.broadcast %cst_391 : f32 to vector<16x16xf32>
    %1407 = arith.select %1405, %1386, %1406 : vector<16x16xi1>, vector<16x16xf32>
    %c9_392 = arith.constant 9 : index
    %1408 = memref.load %arg4[%c9_392] : memref<144xf32, #tpu.memory_space<smem>>
    %1409 = vector.broadcast %1408 : f32 to vector<16x16xf32>
    %1410 = arith.mulf %1409, %1407 : vector<16x16xf32>
    %1411 = arith.addf %1372, %1410 : vector<16x16xf32>
    %c45_393 = arith.constant 45 : index
    %1412 = memref.load %arg4[%c45_393] : memref<144xf32, #tpu.memory_space<smem>>
    %1413 = vector.broadcast %1412 : f32 to vector<16x16xf32>
    %1414 = arith.mulf %1413, %1407 : vector<16x16xf32>
    %1415 = arith.addf %1376, %1414 : vector<16x16xf32>
    %c81_394 = arith.constant 81 : index
    %1416 = memref.load %arg4[%c81_394] : memref<144xf32, #tpu.memory_space<smem>>
    %1417 = vector.broadcast %1416 : f32 to vector<16x16xf32>
    %1418 = arith.mulf %1417, %1407 : vector<16x16xf32>
    %1419 = arith.addf %1380, %1418 : vector<16x16xf32>
    %c117_395 = arith.constant 117 : index
    %1420 = memref.load %arg4[%c117_395] : memref<144xf32, #tpu.memory_space<smem>>
    %1421 = vector.broadcast %1420 : f32 to vector<16x16xf32>
    %1422 = arith.mulf %1421, %1407 : vector<16x16xf32>
    %1423 = arith.addf %1384, %1422 : vector<16x16xf32>
    %c1_i32_396 = arith.constant 1 : i32
    %1424 = tpu.dynamic_rotate %1336 by %c1_i32_396 dim 0 : vector<16x16xf32>, i32 -> vector<16x16xf32>
    %c1_i32_397 = arith.constant 1 : i32
    %1425 = tpu.dynamic_rotate %1424 by %c1_i32_397 dim 1 : vector<16x16xf32>, i32 -> vector<16x16xf32>
    %c-1_i32_398 = arith.constant -1 : i32
    %1426 = vector.broadcast %c-1_i32_398 : i32 to vector<16x16xi32>
    %1427 = arith.addi %0, %1426 : vector<16x16xi32>
    %c0_i32_399 = arith.constant 0 : i32
    %1428 = vector.broadcast %c0_i32_399 : i32 to vector<16x16xi32>
    %1429 = arith.cmpi sge, %1427, %1428 : vector<16x16xi32>
    %c-1_i32_400 = arith.constant -1 : i32
    %1430 = vector.broadcast %c-1_i32_400 : i32 to vector<16x16xi32>
    %1431 = arith.addi %0, %1430 : vector<16x16xi32>
    %c16_i32_401 = arith.constant 16 : i32
    %1432 = vector.broadcast %c16_i32_401 : i32 to vector<16x16xi32>
    %1433 = arith.cmpi slt, %1431, %1432 : vector<16x16xi32>
    %1434 = arith.andi %1429, %1433 : vector<16x16xi1>
    %c-1_i32_402 = arith.constant -1 : i32
    %1435 = vector.broadcast %c-1_i32_402 : i32 to vector<16x16xi32>
    %1436 = arith.addi %1, %1435 : vector<16x16xi32>
    %c0_i32_403 = arith.constant 0 : i32
    %1437 = vector.broadcast %c0_i32_403 : i32 to vector<16x16xi32>
    %1438 = arith.cmpi sge, %1436, %1437 : vector<16x16xi32>
    %1439 = arith.andi %1434, %1438 : vector<16x16xi1>
    %c-1_i32_404 = arith.constant -1 : i32
    %1440 = vector.broadcast %c-1_i32_404 : i32 to vector<16x16xi32>
    %1441 = arith.addi %1, %1440 : vector<16x16xi32>
    %c16_i32_405 = arith.constant 16 : i32
    %1442 = vector.broadcast %c16_i32_405 : i32 to vector<16x16xi32>
    %1443 = arith.cmpi slt, %1441, %1442 : vector<16x16xi32>
    %1444 = arith.andi %1439, %1443 : vector<16x16xi1>
    %cst_406 = arith.constant 0.000000e+00 : f32
    %1445 = vector.broadcast %cst_406 : f32 to vector<16x16xf32>
    %1446 = arith.select %1444, %1425, %1445 : vector<16x16xi1>, vector<16x16xf32>
    %c18_407 = arith.constant 18 : index
    %1447 = memref.load %arg4[%c18_407] : memref<144xf32, #tpu.memory_space<smem>>
    %1448 = vector.broadcast %1447 : f32 to vector<16x16xf32>
    %1449 = arith.mulf %1448, %1446 : vector<16x16xf32>
    %1450 = arith.addf %1411, %1449 : vector<16x16xf32>
    %c54_408 = arith.constant 54 : index
    %1451 = memref.load %arg4[%c54_408] : memref<144xf32, #tpu.memory_space<smem>>
    %1452 = vector.broadcast %1451 : f32 to vector<16x16xf32>
    %1453 = arith.mulf %1452, %1446 : vector<16x16xf32>
    %1454 = arith.addf %1415, %1453 : vector<16x16xf32>
    %c90_409 = arith.constant 90 : index
    %1455 = memref.load %arg4[%c90_409] : memref<144xf32, #tpu.memory_space<smem>>
    %1456 = vector.broadcast %1455 : f32 to vector<16x16xf32>
    %1457 = arith.mulf %1456, %1446 : vector<16x16xf32>
    %1458 = arith.addf %1419, %1457 : vector<16x16xf32>
    %c126_410 = arith.constant 126 : index
    %1459 = memref.load %arg4[%c126_410] : memref<144xf32, #tpu.memory_space<smem>>
    %1460 = vector.broadcast %1459 : f32 to vector<16x16xf32>
    %1461 = arith.mulf %1460, %1446 : vector<16x16xf32>
    %1462 = arith.addf %1423, %1461 : vector<16x16xf32>
    %c1_i32_411 = arith.constant 1 : i32
    %1463 = tpu.dynamic_rotate %1341 by %c1_i32_411 dim 0 : vector<16x16xf32>, i32 -> vector<16x16xf32>
    %c1_i32_412 = arith.constant 1 : i32
    %1464 = tpu.dynamic_rotate %1463 by %c1_i32_412 dim 1 : vector<16x16xf32>, i32 -> vector<16x16xf32>
    %c-1_i32_413 = arith.constant -1 : i32
    %1465 = vector.broadcast %c-1_i32_413 : i32 to vector<16x16xi32>
    %1466 = arith.addi %0, %1465 : vector<16x16xi32>
    %c0_i32_414 = arith.constant 0 : i32
    %1467 = vector.broadcast %c0_i32_414 : i32 to vector<16x16xi32>
    %1468 = arith.cmpi sge, %1466, %1467 : vector<16x16xi32>
    %c-1_i32_415 = arith.constant -1 : i32
    %1469 = vector.broadcast %c-1_i32_415 : i32 to vector<16x16xi32>
    %1470 = arith.addi %0, %1469 : vector<16x16xi32>
    %c16_i32_416 = arith.constant 16 : i32
    %1471 = vector.broadcast %c16_i32_416 : i32 to vector<16x16xi32>
    %1472 = arith.cmpi slt, %1470, %1471 : vector<16x16xi32>
    %1473 = arith.andi %1468, %1472 : vector<16x16xi1>
    %c-1_i32_417 = arith.constant -1 : i32
    %1474 = vector.broadcast %c-1_i32_417 : i32 to vector<16x16xi32>
    %1475 = arith.addi %1, %1474 : vector<16x16xi32>
    %c0_i32_418 = arith.constant 0 : i32
    %1476 = vector.broadcast %c0_i32_418 : i32 to vector<16x16xi32>
    %1477 = arith.cmpi sge, %1475, %1476 : vector<16x16xi32>
    %1478 = arith.andi %1473, %1477 : vector<16x16xi1>
    %c-1_i32_419 = arith.constant -1 : i32
    %1479 = vector.broadcast %c-1_i32_419 : i32 to vector<16x16xi32>
    %1480 = arith.addi %1, %1479 : vector<16x16xi32>
    %c16_i32_420 = arith.constant 16 : i32
    %1481 = vector.broadcast %c16_i32_420 : i32 to vector<16x16xi32>
    %1482 = arith.cmpi slt, %1480, %1481 : vector<16x16xi32>
    %1483 = arith.andi %1478, %1482 : vector<16x16xi1>
    %cst_421 = arith.constant 0.000000e+00 : f32
    %1484 = vector.broadcast %cst_421 : f32 to vector<16x16xf32>
    %1485 = arith.select %1483, %1464, %1484 : vector<16x16xi1>, vector<16x16xf32>
    %c27_422 = arith.constant 27 : index
    %1486 = memref.load %arg4[%c27_422] : memref<144xf32, #tpu.memory_space<smem>>
    %1487 = vector.broadcast %1486 : f32 to vector<16x16xf32>
    %1488 = arith.mulf %1487, %1485 : vector<16x16xf32>
    %1489 = arith.addf %1450, %1488 : vector<16x16xf32>
    %c63_423 = arith.constant 63 : index
    %1490 = memref.load %arg4[%c63_423] : memref<144xf32, #tpu.memory_space<smem>>
    %1491 = vector.broadcast %1490 : f32 to vector<16x16xf32>
    %1492 = arith.mulf %1491, %1485 : vector<16x16xf32>
    %1493 = arith.addf %1454, %1492 : vector<16x16xf32>
    %c99_424 = arith.constant 99 : index
    %1494 = memref.load %arg4[%c99_424] : memref<144xf32, #tpu.memory_space<smem>>
    %1495 = vector.broadcast %1494 : f32 to vector<16x16xf32>
    %1496 = arith.mulf %1495, %1485 : vector<16x16xf32>
    %1497 = arith.addf %1458, %1496 : vector<16x16xf32>
    %c135_425 = arith.constant 135 : index
    %1498 = memref.load %arg4[%c135_425] : memref<144xf32, #tpu.memory_space<smem>>
    %1499 = vector.broadcast %1498 : f32 to vector<16x16xf32>
    %1500 = arith.mulf %1499, %1485 : vector<16x16xf32>
    %1501 = arith.addf %1462, %1500 : vector<16x16xf32>
    %c1_i32_426 = arith.constant 1 : i32
    %1502 = tpu.dynamic_rotate %1326 by %c1_i32_426 dim 0 : vector<16x16xf32>, i32 -> vector<16x16xf32>
    %c-1_i32_427 = arith.constant -1 : i32
    %1503 = vector.broadcast %c-1_i32_427 : i32 to vector<16x16xi32>
    %1504 = arith.addi %0, %1503 : vector<16x16xi32>
    %c0_i32_428 = arith.constant 0 : i32
    %1505 = vector.broadcast %c0_i32_428 : i32 to vector<16x16xi32>
    %1506 = arith.cmpi sge, %1504, %1505 : vector<16x16xi32>
    %c-1_i32_429 = arith.constant -1 : i32
    %1507 = vector.broadcast %c-1_i32_429 : i32 to vector<16x16xi32>
    %1508 = arith.addi %0, %1507 : vector<16x16xi32>
    %c16_i32_430 = arith.constant 16 : i32
    %1509 = vector.broadcast %c16_i32_430 : i32 to vector<16x16xi32>
    %1510 = arith.cmpi slt, %1508, %1509 : vector<16x16xi32>
    %1511 = arith.andi %1506, %1510 : vector<16x16xi1>
    %c0_i32_431 = arith.constant 0 : i32
    %1512 = vector.broadcast %c0_i32_431 : i32 to vector<16x16xi32>
    %1513 = arith.addi %1, %1512 : vector<16x16xi32>
    %c0_i32_432 = arith.constant 0 : i32
    %1514 = vector.broadcast %c0_i32_432 : i32 to vector<16x16xi32>
    %1515 = arith.cmpi sge, %1513, %1514 : vector<16x16xi32>
    %1516 = arith.andi %1511, %1515 : vector<16x16xi1>
    %c0_i32_433 = arith.constant 0 : i32
    %1517 = vector.broadcast %c0_i32_433 : i32 to vector<16x16xi32>
    %1518 = arith.addi %1, %1517 : vector<16x16xi32>
    %c16_i32_434 = arith.constant 16 : i32
    %1519 = vector.broadcast %c16_i32_434 : i32 to vector<16x16xi32>
    %1520 = arith.cmpi slt, %1518, %1519 : vector<16x16xi32>
    %1521 = arith.andi %1516, %1520 : vector<16x16xi1>
    %cst_435 = arith.constant 0.000000e+00 : f32
    %1522 = vector.broadcast %cst_435 : f32 to vector<16x16xf32>
    %1523 = arith.select %1521, %1502, %1522 : vector<16x16xi1>, vector<16x16xf32>
    %c1_436 = arith.constant 1 : index
    %1524 = memref.load %arg4[%c1_436] : memref<144xf32, #tpu.memory_space<smem>>
    %1525 = vector.broadcast %1524 : f32 to vector<16x16xf32>
    %1526 = arith.mulf %1525, %1523 : vector<16x16xf32>
    %1527 = arith.addf %1489, %1526 : vector<16x16xf32>
    %c37_437 = arith.constant 37 : index
    %1528 = memref.load %arg4[%c37_437] : memref<144xf32, #tpu.memory_space<smem>>
    %1529 = vector.broadcast %1528 : f32 to vector<16x16xf32>
    %1530 = arith.mulf %1529, %1523 : vector<16x16xf32>
    %1531 = arith.addf %1493, %1530 : vector<16x16xf32>
    %c73_438 = arith.constant 73 : index
    %1532 = memref.load %arg4[%c73_438] : memref<144xf32, #tpu.memory_space<smem>>
    %1533 = vector.broadcast %1532 : f32 to vector<16x16xf32>
    %1534 = arith.mulf %1533, %1523 : vector<16x16xf32>
    %1535 = arith.addf %1497, %1534 : vector<16x16xf32>
    %c109_439 = arith.constant 109 : index
    %1536 = memref.load %arg4[%c109_439] : memref<144xf32, #tpu.memory_space<smem>>
    %1537 = vector.broadcast %1536 : f32 to vector<16x16xf32>
    %1538 = arith.mulf %1537, %1523 : vector<16x16xf32>
    %1539 = arith.addf %1501, %1538 : vector<16x16xf32>
    %c1_i32_440 = arith.constant 1 : i32
    %1540 = tpu.dynamic_rotate %1331 by %c1_i32_440 dim 0 : vector<16x16xf32>, i32 -> vector<16x16xf32>
    %c-1_i32_441 = arith.constant -1 : i32
    %1541 = vector.broadcast %c-1_i32_441 : i32 to vector<16x16xi32>
    %1542 = arith.addi %0, %1541 : vector<16x16xi32>
    %c0_i32_442 = arith.constant 0 : i32
    %1543 = vector.broadcast %c0_i32_442 : i32 to vector<16x16xi32>
    %1544 = arith.cmpi sge, %1542, %1543 : vector<16x16xi32>
    %c-1_i32_443 = arith.constant -1 : i32
    %1545 = vector.broadcast %c-1_i32_443 : i32 to vector<16x16xi32>
    %1546 = arith.addi %0, %1545 : vector<16x16xi32>
    %c16_i32_444 = arith.constant 16 : i32
    %1547 = vector.broadcast %c16_i32_444 : i32 to vector<16x16xi32>
    %1548 = arith.cmpi slt, %1546, %1547 : vector<16x16xi32>
    %1549 = arith.andi %1544, %1548 : vector<16x16xi1>
    %c0_i32_445 = arith.constant 0 : i32
    %1550 = vector.broadcast %c0_i32_445 : i32 to vector<16x16xi32>
    %1551 = arith.addi %1, %1550 : vector<16x16xi32>
    %c0_i32_446 = arith.constant 0 : i32
    %1552 = vector.broadcast %c0_i32_446 : i32 to vector<16x16xi32>
    %1553 = arith.cmpi sge, %1551, %1552 : vector<16x16xi32>
    %1554 = arith.andi %1549, %1553 : vector<16x16xi1>
    %c0_i32_447 = arith.constant 0 : i32
    %1555 = vector.broadcast %c0_i32_447 : i32 to vector<16x16xi32>
    %1556 = arith.addi %1, %1555 : vector<16x16xi32>
    %c16_i32_448 = arith.constant 16 : i32
    %1557 = vector.broadcast %c16_i32_448 : i32 to vector<16x16xi32>
    %1558 = arith.cmpi slt, %1556, %1557 : vector<16x16xi32>
    %1559 = arith.andi %1554, %1558 : vector<16x16xi1>
    %cst_449 = arith.constant 0.000000e+00 : f32
    %1560 = vector.broadcast %cst_449 : f32 to vector<16x16xf32>
    %1561 = arith.select %1559, %1540, %1560 : vector<16x16xi1>, vector<16x16xf32>
    %c10_450 = arith.constant 10 : index
    %1562 = memref.load %arg4[%c10_450] : memref<144xf32, #tpu.memory_space<smem>>
    %1563 = vector.broadcast %1562 : f32 to vector<16x16xf32>
    %1564 = arith.mulf %1563, %1561 : vector<16x16xf32>
    %1565 = arith.addf %1527, %1564 : vector<16x16xf32>
    %c46_451 = arith.constant 46 : index
    %1566 = memref.load %arg4[%c46_451] : memref<144xf32, #tpu.memory_space<smem>>
    %1567 = vector.broadcast %1566 : f32 to vector<16x16xf32>
    %1568 = arith.mulf %1567, %1561 : vector<16x16xf32>
    %1569 = arith.addf %1531, %1568 : vector<16x16xf32>
    %c82_452 = arith.constant 82 : index
    %1570 = memref.load %arg4[%c82_452] : memref<144xf32, #tpu.memory_space<smem>>
    %1571 = vector.broadcast %1570 : f32 to vector<16x16xf32>
    %1572 = arith.mulf %1571, %1561 : vector<16x16xf32>
    %1573 = arith.addf %1535, %1572 : vector<16x16xf32>
    %c118_453 = arith.constant 118 : index
    %1574 = memref.load %arg4[%c118_453] : memref<144xf32, #tpu.memory_space<smem>>
    %1575 = vector.broadcast %1574 : f32 to vector<16x16xf32>
    %1576 = arith.mulf %1575, %1561 : vector<16x16xf32>
    %1577 = arith.addf %1539, %1576 : vector<16x16xf32>
    %c1_i32_454 = arith.constant 1 : i32
    %1578 = tpu.dynamic_rotate %1336 by %c1_i32_454 dim 0 : vector<16x16xf32>, i32 -> vector<16x16xf32>
    %c-1_i32_455 = arith.constant -1 : i32
    %1579 = vector.broadcast %c-1_i32_455 : i32 to vector<16x16xi32>
    %1580 = arith.addi %0, %1579 : vector<16x16xi32>
    %c0_i32_456 = arith.constant 0 : i32
    %1581 = vector.broadcast %c0_i32_456 : i32 to vector<16x16xi32>
    %1582 = arith.cmpi sge, %1580, %1581 : vector<16x16xi32>
    %c-1_i32_457 = arith.constant -1 : i32
    %1583 = vector.broadcast %c-1_i32_457 : i32 to vector<16x16xi32>
    %1584 = arith.addi %0, %1583 : vector<16x16xi32>
    %c16_i32_458 = arith.constant 16 : i32
    %1585 = vector.broadcast %c16_i32_458 : i32 to vector<16x16xi32>
    %1586 = arith.cmpi slt, %1584, %1585 : vector<16x16xi32>
    %1587 = arith.andi %1582, %1586 : vector<16x16xi1>
    %c0_i32_459 = arith.constant 0 : i32
    %1588 = vector.broadcast %c0_i32_459 : i32 to vector<16x16xi32>
    %1589 = arith.addi %1, %1588 : vector<16x16xi32>
    %c0_i32_460 = arith.constant 0 : i32
    %1590 = vector.broadcast %c0_i32_460 : i32 to vector<16x16xi32>
    %1591 = arith.cmpi sge, %1589, %1590 : vector<16x16xi32>
    %1592 = arith.andi %1587, %1591 : vector<16x16xi1>
    %c0_i32_461 = arith.constant 0 : i32
    %1593 = vector.broadcast %c0_i32_461 : i32 to vector<16x16xi32>
    %1594 = arith.addi %1, %1593 : vector<16x16xi32>
    %c16_i32_462 = arith.constant 16 : i32
    %1595 = vector.broadcast %c16_i32_462 : i32 to vector<16x16xi32>
    %1596 = arith.cmpi slt, %1594, %1595 : vector<16x16xi32>
    %1597 = arith.andi %1592, %1596 : vector<16x16xi1>
    %cst_463 = arith.constant 0.000000e+00 : f32
    %1598 = vector.broadcast %cst_463 : f32 to vector<16x16xf32>
    %1599 = arith.select %1597, %1578, %1598 : vector<16x16xi1>, vector<16x16xf32>
    %c19_464 = arith.constant 19 : index
    %1600 = memref.load %arg4[%c19_464] : memref<144xf32, #tpu.memory_space<smem>>
    %1601 = vector.broadcast %1600 : f32 to vector<16x16xf32>
    %1602 = arith.mulf %1601, %1599 : vector<16x16xf32>
    %1603 = arith.addf %1565, %1602 : vector<16x16xf32>
    %c55_465 = arith.constant 55 : index
    %1604 = memref.load %arg4[%c55_465] : memref<144xf32, #tpu.memory_space<smem>>
    %1605 = vector.broadcast %1604 : f32 to vector<16x16xf32>
    %1606 = arith.mulf %1605, %1599 : vector<16x16xf32>
    %1607 = arith.addf %1569, %1606 : vector<16x16xf32>
    %c91_466 = arith.constant 91 : index
    %1608 = memref.load %arg4[%c91_466] : memref<144xf32, #tpu.memory_space<smem>>
    %1609 = vector.broadcast %1608 : f32 to vector<16x16xf32>
    %1610 = arith.mulf %1609, %1599 : vector<16x16xf32>
    %1611 = arith.addf %1573, %1610 : vector<16x16xf32>
    %c127_467 = arith.constant 127 : index
    %1612 = memref.load %arg4[%c127_467] : memref<144xf32, #tpu.memory_space<smem>>
    %1613 = vector.broadcast %1612 : f32 to vector<16x16xf32>
    %1614 = arith.mulf %1613, %1599 : vector<16x16xf32>
    %1615 = arith.addf %1577, %1614 : vector<16x16xf32>
    %c1_i32_468 = arith.constant 1 : i32
    %1616 = tpu.dynamic_rotate %1341 by %c1_i32_468 dim 0 : vector<16x16xf32>, i32 -> vector<16x16xf32>
    %c-1_i32_469 = arith.constant -1 : i32
    %1617 = vector.broadcast %c-1_i32_469 : i32 to vector<16x16xi32>
    %1618 = arith.addi %0, %1617 : vector<16x16xi32>
    %c0_i32_470 = arith.constant 0 : i32
    %1619 = vector.broadcast %c0_i32_470 : i32 to vector<16x16xi32>
    %1620 = arith.cmpi sge, %1618, %1619 : vector<16x16xi32>
    %c-1_i32_471 = arith.constant -1 : i32
    %1621 = vector.broadcast %c-1_i32_471 : i32 to vector<16x16xi32>
    %1622 = arith.addi %0, %1621 : vector<16x16xi32>
    %c16_i32_472 = arith.constant 16 : i32
    %1623 = vector.broadcast %c16_i32_472 : i32 to vector<16x16xi32>
    %1624 = arith.cmpi slt, %1622, %1623 : vector<16x16xi32>
    %1625 = arith.andi %1620, %1624 : vector<16x16xi1>
    %c0_i32_473 = arith.constant 0 : i32
    %1626 = vector.broadcast %c0_i32_473 : i32 to vector<16x16xi32>
    %1627 = arith.addi %1, %1626 : vector<16x16xi32>
    %c0_i32_474 = arith.constant 0 : i32
    %1628 = vector.broadcast %c0_i32_474 : i32 to vector<16x16xi32>
    %1629 = arith.cmpi sge, %1627, %1628 : vector<16x16xi32>
    %1630 = arith.andi %1625, %1629 : vector<16x16xi1>
    %c0_i32_475 = arith.constant 0 : i32
    %1631 = vector.broadcast %c0_i32_475 : i32 to vector<16x16xi32>
    %1632 = arith.addi %1, %1631 : vector<16x16xi32>
    %c16_i32_476 = arith.constant 16 : i32
    %1633 = vector.broadcast %c16_i32_476 : i32 to vector<16x16xi32>
    %1634 = arith.cmpi slt, %1632, %1633 : vector<16x16xi32>
    %1635 = arith.andi %1630, %1634 : vector<16x16xi1>
    %cst_477 = arith.constant 0.000000e+00 : f32
    %1636 = vector.broadcast %cst_477 : f32 to vector<16x16xf32>
    %1637 = arith.select %1635, %1616, %1636 : vector<16x16xi1>, vector<16x16xf32>
    %c28_478 = arith.constant 28 : index
    %1638 = memref.load %arg4[%c28_478] : memref<144xf32, #tpu.memory_space<smem>>
    %1639 = vector.broadcast %1638 : f32 to vector<16x16xf32>
    %1640 = arith.mulf %1639, %1637 : vector<16x16xf32>
    %1641 = arith.addf %1603, %1640 : vector<16x16xf32>
    %c64_479 = arith.constant 64 : index
    %1642 = memref.load %arg4[%c64_479] : memref<144xf32, #tpu.memory_space<smem>>
    %1643 = vector.broadcast %1642 : f32 to vector<16x16xf32>
    %1644 = arith.mulf %1643, %1637 : vector<16x16xf32>
    %1645 = arith.addf %1607, %1644 : vector<16x16xf32>
    %c100_480 = arith.constant 100 : index
    %1646 = memref.load %arg4[%c100_480] : memref<144xf32, #tpu.memory_space<smem>>
    %1647 = vector.broadcast %1646 : f32 to vector<16x16xf32>
    %1648 = arith.mulf %1647, %1637 : vector<16x16xf32>
    %1649 = arith.addf %1611, %1648 : vector<16x16xf32>
    %c136_481 = arith.constant 136 : index
    %1650 = memref.load %arg4[%c136_481] : memref<144xf32, #tpu.memory_space<smem>>
    %1651 = vector.broadcast %1650 : f32 to vector<16x16xf32>
    %1652 = arith.mulf %1651, %1637 : vector<16x16xf32>
    %1653 = arith.addf %1615, %1652 : vector<16x16xf32>
    %c1_i32_482 = arith.constant 1 : i32
    %1654 = tpu.dynamic_rotate %1326 by %c1_i32_482 dim 0 : vector<16x16xf32>, i32 -> vector<16x16xf32>
    %c15_i32_483 = arith.constant 15 : i32
    %1655 = tpu.dynamic_rotate %1654 by %c15_i32_483 dim 1 : vector<16x16xf32>, i32 -> vector<16x16xf32>
    %c-1_i32_484 = arith.constant -1 : i32
    %1656 = vector.broadcast %c-1_i32_484 : i32 to vector<16x16xi32>
    %1657 = arith.addi %0, %1656 : vector<16x16xi32>
    %c0_i32_485 = arith.constant 0 : i32
    %1658 = vector.broadcast %c0_i32_485 : i32 to vector<16x16xi32>
    %1659 = arith.cmpi sge, %1657, %1658 : vector<16x16xi32>
    %c-1_i32_486 = arith.constant -1 : i32
    %1660 = vector.broadcast %c-1_i32_486 : i32 to vector<16x16xi32>
    %1661 = arith.addi %0, %1660 : vector<16x16xi32>
    %c16_i32_487 = arith.constant 16 : i32
    %1662 = vector.broadcast %c16_i32_487 : i32 to vector<16x16xi32>
    %1663 = arith.cmpi slt, %1661, %1662 : vector<16x16xi32>
    %1664 = arith.andi %1659, %1663 : vector<16x16xi1>
    %c1_i32_488 = arith.constant 1 : i32
    %1665 = vector.broadcast %c1_i32_488 : i32 to vector<16x16xi32>
    %1666 = arith.addi %1, %1665 : vector<16x16xi32>
    %c0_i32_489 = arith.constant 0 : i32
    %1667 = vector.broadcast %c0_i32_489 : i32 to vector<16x16xi32>
    %1668 = arith.cmpi sge, %1666, %1667 : vector<16x16xi32>
    %1669 = arith.andi %1664, %1668 : vector<16x16xi1>
    %c1_i32_490 = arith.constant 1 : i32
    %1670 = vector.broadcast %c1_i32_490 : i32 to vector<16x16xi32>
    %1671 = arith.addi %1, %1670 : vector<16x16xi32>
    %c16_i32_491 = arith.constant 16 : i32
    %1672 = vector.broadcast %c16_i32_491 : i32 to vector<16x16xi32>
    %1673 = arith.cmpi slt, %1671, %1672 : vector<16x16xi32>
    %1674 = arith.andi %1669, %1673 : vector<16x16xi1>
    %cst_492 = arith.constant 0.000000e+00 : f32
    %1675 = vector.broadcast %cst_492 : f32 to vector<16x16xf32>
    %1676 = arith.select %1674, %1655, %1675 : vector<16x16xi1>, vector<16x16xf32>
    %c2_493 = arith.constant 2 : index
    %1677 = memref.load %arg4[%c2_493] : memref<144xf32, #tpu.memory_space<smem>>
    %1678 = vector.broadcast %1677 : f32 to vector<16x16xf32>
    %1679 = arith.mulf %1678, %1676 : vector<16x16xf32>
    %1680 = arith.addf %1641, %1679 : vector<16x16xf32>
    %c38_494 = arith.constant 38 : index
    %1681 = memref.load %arg4[%c38_494] : memref<144xf32, #tpu.memory_space<smem>>
    %1682 = vector.broadcast %1681 : f32 to vector<16x16xf32>
    %1683 = arith.mulf %1682, %1676 : vector<16x16xf32>
    %1684 = arith.addf %1645, %1683 : vector<16x16xf32>
    %c74_495 = arith.constant 74 : index
    %1685 = memref.load %arg4[%c74_495] : memref<144xf32, #tpu.memory_space<smem>>
    %1686 = vector.broadcast %1685 : f32 to vector<16x16xf32>
    %1687 = arith.mulf %1686, %1676 : vector<16x16xf32>
    %1688 = arith.addf %1649, %1687 : vector<16x16xf32>
    %c110_496 = arith.constant 110 : index
    %1689 = memref.load %arg4[%c110_496] : memref<144xf32, #tpu.memory_space<smem>>
    %1690 = vector.broadcast %1689 : f32 to vector<16x16xf32>
    %1691 = arith.mulf %1690, %1676 : vector<16x16xf32>
    %1692 = arith.addf %1653, %1691 : vector<16x16xf32>
    %c1_i32_497 = arith.constant 1 : i32
    %1693 = tpu.dynamic_rotate %1331 by %c1_i32_497 dim 0 : vector<16x16xf32>, i32 -> vector<16x16xf32>
    %c15_i32_498 = arith.constant 15 : i32
    %1694 = tpu.dynamic_rotate %1693 by %c15_i32_498 dim 1 : vector<16x16xf32>, i32 -> vector<16x16xf32>
    %c-1_i32_499 = arith.constant -1 : i32
    %1695 = vector.broadcast %c-1_i32_499 : i32 to vector<16x16xi32>
    %1696 = arith.addi %0, %1695 : vector<16x16xi32>
    %c0_i32_500 = arith.constant 0 : i32
    %1697 = vector.broadcast %c0_i32_500 : i32 to vector<16x16xi32>
    %1698 = arith.cmpi sge, %1696, %1697 : vector<16x16xi32>
    %c-1_i32_501 = arith.constant -1 : i32
    %1699 = vector.broadcast %c-1_i32_501 : i32 to vector<16x16xi32>
    %1700 = arith.addi %0, %1699 : vector<16x16xi32>
    %c16_i32_502 = arith.constant 16 : i32
    %1701 = vector.broadcast %c16_i32_502 : i32 to vector<16x16xi32>
    %1702 = arith.cmpi slt, %1700, %1701 : vector<16x16xi32>
    %1703 = arith.andi %1698, %1702 : vector<16x16xi1>
    %c1_i32_503 = arith.constant 1 : i32
    %1704 = vector.broadcast %c1_i32_503 : i32 to vector<16x16xi32>
    %1705 = arith.addi %1, %1704 : vector<16x16xi32>
    %c0_i32_504 = arith.constant 0 : i32
    %1706 = vector.broadcast %c0_i32_504 : i32 to vector<16x16xi32>
    %1707 = arith.cmpi sge, %1705, %1706 : vector<16x16xi32>
    %1708 = arith.andi %1703, %1707 : vector<16x16xi1>
    %c1_i32_505 = arith.constant 1 : i32
    %1709 = vector.broadcast %c1_i32_505 : i32 to vector<16x16xi32>
    %1710 = arith.addi %1, %1709 : vector<16x16xi32>
    %c16_i32_506 = arith.constant 16 : i32
    %1711 = vector.broadcast %c16_i32_506 : i32 to vector<16x16xi32>
    %1712 = arith.cmpi slt, %1710, %1711 : vector<16x16xi32>
    %1713 = arith.andi %1708, %1712 : vector<16x16xi1>
    %cst_507 = arith.constant 0.000000e+00 : f32
    %1714 = vector.broadcast %cst_507 : f32 to vector<16x16xf32>
    %1715 = arith.select %1713, %1694, %1714 : vector<16x16xi1>, vector<16x16xf32>
    %c11_508 = arith.constant 11 : index
    %1716 = memref.load %arg4[%c11_508] : memref<144xf32, #tpu.memory_space<smem>>
    %1717 = vector.broadcast %1716 : f32 to vector<16x16xf32>
    %1718 = arith.mulf %1717, %1715 : vector<16x16xf32>
    %1719 = arith.addf %1680, %1718 : vector<16x16xf32>
    %c47_509 = arith.constant 47 : index
    %1720 = memref.load %arg4[%c47_509] : memref<144xf32, #tpu.memory_space<smem>>
    %1721 = vector.broadcast %1720 : f32 to vector<16x16xf32>
    %1722 = arith.mulf %1721, %1715 : vector<16x16xf32>
    %1723 = arith.addf %1684, %1722 : vector<16x16xf32>
    %c83_510 = arith.constant 83 : index
    %1724 = memref.load %arg4[%c83_510] : memref<144xf32, #tpu.memory_space<smem>>
    %1725 = vector.broadcast %1724 : f32 to vector<16x16xf32>
    %1726 = arith.mulf %1725, %1715 : vector<16x16xf32>
    %1727 = arith.addf %1688, %1726 : vector<16x16xf32>
    %c119_511 = arith.constant 119 : index
    %1728 = memref.load %arg4[%c119_511] : memref<144xf32, #tpu.memory_space<smem>>
    %1729 = vector.broadcast %1728 : f32 to vector<16x16xf32>
    %1730 = arith.mulf %1729, %1715 : vector<16x16xf32>
    %1731 = arith.addf %1692, %1730 : vector<16x16xf32>
    %c1_i32_512 = arith.constant 1 : i32
    %1732 = tpu.dynamic_rotate %1336 by %c1_i32_512 dim 0 : vector<16x16xf32>, i32 -> vector<16x16xf32>
    %c15_i32_513 = arith.constant 15 : i32
    %1733 = tpu.dynamic_rotate %1732 by %c15_i32_513 dim 1 : vector<16x16xf32>, i32 -> vector<16x16xf32>
    %c-1_i32_514 = arith.constant -1 : i32
    %1734 = vector.broadcast %c-1_i32_514 : i32 to vector<16x16xi32>
    %1735 = arith.addi %0, %1734 : vector<16x16xi32>
    %c0_i32_515 = arith.constant 0 : i32
    %1736 = vector.broadcast %c0_i32_515 : i32 to vector<16x16xi32>
    %1737 = arith.cmpi sge, %1735, %1736 : vector<16x16xi32>
    %c-1_i32_516 = arith.constant -1 : i32
    %1738 = vector.broadcast %c-1_i32_516 : i32 to vector<16x16xi32>
    %1739 = arith.addi %0, %1738 : vector<16x16xi32>
    %c16_i32_517 = arith.constant 16 : i32
    %1740 = vector.broadcast %c16_i32_517 : i32 to vector<16x16xi32>
    %1741 = arith.cmpi slt, %1739, %1740 : vector<16x16xi32>
    %1742 = arith.andi %1737, %1741 : vector<16x16xi1>
    %c1_i32_518 = arith.constant 1 : i32
    %1743 = vector.broadcast %c1_i32_518 : i32 to vector<16x16xi32>
    %1744 = arith.addi %1, %1743 : vector<16x16xi32>
    %c0_i32_519 = arith.constant 0 : i32
    %1745 = vector.broadcast %c0_i32_519 : i32 to vector<16x16xi32>
    %1746 = arith.cmpi sge, %1744, %1745 : vector<16x16xi32>
    %1747 = arith.andi %1742, %1746 : vector<16x16xi1>
    %c1_i32_520 = arith.constant 1 : i32
    %1748 = vector.broadcast %c1_i32_520 : i32 to vector<16x16xi32>
    %1749 = arith.addi %1, %1748 : vector<16x16xi32>
    %c16_i32_521 = arith.constant 16 : i32
    %1750 = vector.broadcast %c16_i32_521 : i32 to vector<16x16xi32>
    %1751 = arith.cmpi slt, %1749, %1750 : vector<16x16xi32>
    %1752 = arith.andi %1747, %1751 : vector<16x16xi1>
    %cst_522 = arith.constant 0.000000e+00 : f32
    %1753 = vector.broadcast %cst_522 : f32 to vector<16x16xf32>
    %1754 = arith.select %1752, %1733, %1753 : vector<16x16xi1>, vector<16x16xf32>
    %c20_523 = arith.constant 20 : index
    %1755 = memref.load %arg4[%c20_523] : memref<144xf32, #tpu.memory_space<smem>>
    %1756 = vector.broadcast %1755 : f32 to vector<16x16xf32>
    %1757 = arith.mulf %1756, %1754 : vector<16x16xf32>
    %1758 = arith.addf %1719, %1757 : vector<16x16xf32>
    %c56_524 = arith.constant 56 : index
    %1759 = memref.load %arg4[%c56_524] : memref<144xf32, #tpu.memory_space<smem>>
    %1760 = vector.broadcast %1759 : f32 to vector<16x16xf32>
    %1761 = arith.mulf %1760, %1754 : vector<16x16xf32>
    %1762 = arith.addf %1723, %1761 : vector<16x16xf32>
    %c92_525 = arith.constant 92 : index
    %1763 = memref.load %arg4[%c92_525] : memref<144xf32, #tpu.memory_space<smem>>
    %1764 = vector.broadcast %1763 : f32 to vector<16x16xf32>
    %1765 = arith.mulf %1764, %1754 : vector<16x16xf32>
    %1766 = arith.addf %1727, %1765 : vector<16x16xf32>
    %c128_526 = arith.constant 128 : index
    %1767 = memref.load %arg4[%c128_526] : memref<144xf32, #tpu.memory_space<smem>>
    %1768 = vector.broadcast %1767 : f32 to vector<16x16xf32>
    %1769 = arith.mulf %1768, %1754 : vector<16x16xf32>
    %1770 = arith.addf %1731, %1769 : vector<16x16xf32>
    %c1_i32_527 = arith.constant 1 : i32
    %1771 = tpu.dynamic_rotate %1341 by %c1_i32_527 dim 0 : vector<16x16xf32>, i32 -> vector<16x16xf32>
    %c15_i32_528 = arith.constant 15 : i32
    %1772 = tpu.dynamic_rotate %1771 by %c15_i32_528 dim 1 : vector<16x16xf32>, i32 -> vector<16x16xf32>
    %c-1_i32_529 = arith.constant -1 : i32
    %1773 = vector.broadcast %c-1_i32_529 : i32 to vector<16x16xi32>
    %1774 = arith.addi %0, %1773 : vector<16x16xi32>
    %c0_i32_530 = arith.constant 0 : i32
    %1775 = vector.broadcast %c0_i32_530 : i32 to vector<16x16xi32>
    %1776 = arith.cmpi sge, %1774, %1775 : vector<16x16xi32>
    %c-1_i32_531 = arith.constant -1 : i32
    %1777 = vector.broadcast %c-1_i32_531 : i32 to vector<16x16xi32>
    %1778 = arith.addi %0, %1777 : vector<16x16xi32>
    %c16_i32_532 = arith.constant 16 : i32
    %1779 = vector.broadcast %c16_i32_532 : i32 to vector<16x16xi32>
    %1780 = arith.cmpi slt, %1778, %1779 : vector<16x16xi32>
    %1781 = arith.andi %1776, %1780 : vector<16x16xi1>
    %c1_i32_533 = arith.constant 1 : i32
    %1782 = vector.broadcast %c1_i32_533 : i32 to vector<16x16xi32>
    %1783 = arith.addi %1, %1782 : vector<16x16xi32>
    %c0_i32_534 = arith.constant 0 : i32
    %1784 = vector.broadcast %c0_i32_534 : i32 to vector<16x16xi32>
    %1785 = arith.cmpi sge, %1783, %1784 : vector<16x16xi32>
    %1786 = arith.andi %1781, %1785 : vector<16x16xi1>
    %c1_i32_535 = arith.constant 1 : i32
    %1787 = vector.broadcast %c1_i32_535 : i32 to vector<16x16xi32>
    %1788 = arith.addi %1, %1787 : vector<16x16xi32>
    %c16_i32_536 = arith.constant 16 : i32
    %1789 = vector.broadcast %c16_i32_536 : i32 to vector<16x16xi32>
    %1790 = arith.cmpi slt, %1788, %1789 : vector<16x16xi32>
    %1791 = arith.andi %1786, %1790 : vector<16x16xi1>
    %cst_537 = arith.constant 0.000000e+00 : f32
    %1792 = vector.broadcast %cst_537 : f32 to vector<16x16xf32>
    %1793 = arith.select %1791, %1772, %1792 : vector<16x16xi1>, vector<16x16xf32>
    %c29_538 = arith.constant 29 : index
    %1794 = memref.load %arg4[%c29_538] : memref<144xf32, #tpu.memory_space<smem>>
    %1795 = vector.broadcast %1794 : f32 to vector<16x16xf32>
    %1796 = arith.mulf %1795, %1793 : vector<16x16xf32>
    %1797 = arith.addf %1758, %1796 : vector<16x16xf32>
    %c65_539 = arith.constant 65 : index
    %1798 = memref.load %arg4[%c65_539] : memref<144xf32, #tpu.memory_space<smem>>
    %1799 = vector.broadcast %1798 : f32 to vector<16x16xf32>
    %1800 = arith.mulf %1799, %1793 : vector<16x16xf32>
    %1801 = arith.addf %1762, %1800 : vector<16x16xf32>
    %c101_540 = arith.constant 101 : index
    %1802 = memref.load %arg4[%c101_540] : memref<144xf32, #tpu.memory_space<smem>>
    %1803 = vector.broadcast %1802 : f32 to vector<16x16xf32>
    %1804 = arith.mulf %1803, %1793 : vector<16x16xf32>
    %1805 = arith.addf %1766, %1804 : vector<16x16xf32>
    %c137_541 = arith.constant 137 : index
    %1806 = memref.load %arg4[%c137_541] : memref<144xf32, #tpu.memory_space<smem>>
    %1807 = vector.broadcast %1806 : f32 to vector<16x16xf32>
    %1808 = arith.mulf %1807, %1793 : vector<16x16xf32>
    %1809 = arith.addf %1770, %1808 : vector<16x16xf32>
    %c1_i32_542 = arith.constant 1 : i32
    %1810 = tpu.dynamic_rotate %1326 by %c1_i32_542 dim 1 : vector<16x16xf32>, i32 -> vector<16x16xf32>
    %c0_i32_543 = arith.constant 0 : i32
    %1811 = vector.broadcast %c0_i32_543 : i32 to vector<16x16xi32>
    %1812 = arith.addi %0, %1811 : vector<16x16xi32>
    %c0_i32_544 = arith.constant 0 : i32
    %1813 = vector.broadcast %c0_i32_544 : i32 to vector<16x16xi32>
    %1814 = arith.cmpi sge, %1812, %1813 : vector<16x16xi32>
    %c0_i32_545 = arith.constant 0 : i32
    %1815 = vector.broadcast %c0_i32_545 : i32 to vector<16x16xi32>
    %1816 = arith.addi %0, %1815 : vector<16x16xi32>
    %c16_i32_546 = arith.constant 16 : i32
    %1817 = vector.broadcast %c16_i32_546 : i32 to vector<16x16xi32>
    %1818 = arith.cmpi slt, %1816, %1817 : vector<16x16xi32>
    %1819 = arith.andi %1814, %1818 : vector<16x16xi1>
    %c-1_i32_547 = arith.constant -1 : i32
    %1820 = vector.broadcast %c-1_i32_547 : i32 to vector<16x16xi32>
    %1821 = arith.addi %1, %1820 : vector<16x16xi32>
    %c0_i32_548 = arith.constant 0 : i32
    %1822 = vector.broadcast %c0_i32_548 : i32 to vector<16x16xi32>
    %1823 = arith.cmpi sge, %1821, %1822 : vector<16x16xi32>
    %1824 = arith.andi %1819, %1823 : vector<16x16xi1>
    %c-1_i32_549 = arith.constant -1 : i32
    %1825 = vector.broadcast %c-1_i32_549 : i32 to vector<16x16xi32>
    %1826 = arith.addi %1, %1825 : vector<16x16xi32>
    %c16_i32_550 = arith.constant 16 : i32
    %1827 = vector.broadcast %c16_i32_550 : i32 to vector<16x16xi32>
    %1828 = arith.cmpi slt, %1826, %1827 : vector<16x16xi32>
    %1829 = arith.andi %1824, %1828 : vector<16x16xi1>
    %cst_551 = arith.constant 0.000000e+00 : f32
    %1830 = vector.broadcast %cst_551 : f32 to vector<16x16xf32>
    %1831 = arith.select %1829, %1810, %1830 : vector<16x16xi1>, vector<16x16xf32>
    %c3_552 = arith.constant 3 : index
    %1832 = memref.load %arg4[%c3_552] : memref<144xf32, #tpu.memory_space<smem>>
    %1833 = vector.broadcast %1832 : f32 to vector<16x16xf32>
    %1834 = arith.mulf %1833, %1831 : vector<16x16xf32>
    %1835 = arith.addf %1797, %1834 : vector<16x16xf32>
    %c39_553 = arith.constant 39 : index
    %1836 = memref.load %arg4[%c39_553] : memref<144xf32, #tpu.memory_space<smem>>
    %1837 = vector.broadcast %1836 : f32 to vector<16x16xf32>
    %1838 = arith.mulf %1837, %1831 : vector<16x16xf32>
    %1839 = arith.addf %1801, %1838 : vector<16x16xf32>
    %c75_554 = arith.constant 75 : index
    %1840 = memref.load %arg4[%c75_554] : memref<144xf32, #tpu.memory_space<smem>>
    %1841 = vector.broadcast %1840 : f32 to vector<16x16xf32>
    %1842 = arith.mulf %1841, %1831 : vector<16x16xf32>
    %1843 = arith.addf %1805, %1842 : vector<16x16xf32>
    %c111_555 = arith.constant 111 : index
    %1844 = memref.load %arg4[%c111_555] : memref<144xf32, #tpu.memory_space<smem>>
    %1845 = vector.broadcast %1844 : f32 to vector<16x16xf32>
    %1846 = arith.mulf %1845, %1831 : vector<16x16xf32>
    %1847 = arith.addf %1809, %1846 : vector<16x16xf32>
    %c1_i32_556 = arith.constant 1 : i32
    %1848 = tpu.dynamic_rotate %1331 by %c1_i32_556 dim 1 : vector<16x16xf32>, i32 -> vector<16x16xf32>
    %c0_i32_557 = arith.constant 0 : i32
    %1849 = vector.broadcast %c0_i32_557 : i32 to vector<16x16xi32>
    %1850 = arith.addi %0, %1849 : vector<16x16xi32>
    %c0_i32_558 = arith.constant 0 : i32
    %1851 = vector.broadcast %c0_i32_558 : i32 to vector<16x16xi32>
    %1852 = arith.cmpi sge, %1850, %1851 : vector<16x16xi32>
    %c0_i32_559 = arith.constant 0 : i32
    %1853 = vector.broadcast %c0_i32_559 : i32 to vector<16x16xi32>
    %1854 = arith.addi %0, %1853 : vector<16x16xi32>
    %c16_i32_560 = arith.constant 16 : i32
    %1855 = vector.broadcast %c16_i32_560 : i32 to vector<16x16xi32>
    %1856 = arith.cmpi slt, %1854, %1855 : vector<16x16xi32>
    %1857 = arith.andi %1852, %1856 : vector<16x16xi1>
    %c-1_i32_561 = arith.constant -1 : i32
    %1858 = vector.broadcast %c-1_i32_561 : i32 to vector<16x16xi32>
    %1859 = arith.addi %1, %1858 : vector<16x16xi32>
    %c0_i32_562 = arith.constant 0 : i32
    %1860 = vector.broadcast %c0_i32_562 : i32 to vector<16x16xi32>
    %1861 = arith.cmpi sge, %1859, %1860 : vector<16x16xi32>
    %1862 = arith.andi %1857, %1861 : vector<16x16xi1>
    %c-1_i32_563 = arith.constant -1 : i32
    %1863 = vector.broadcast %c-1_i32_563 : i32 to vector<16x16xi32>
    %1864 = arith.addi %1, %1863 : vector<16x16xi32>
    %c16_i32_564 = arith.constant 16 : i32
    %1865 = vector.broadcast %c16_i32_564 : i32 to vector<16x16xi32>
    %1866 = arith.cmpi slt, %1864, %1865 : vector<16x16xi32>
    %1867 = arith.andi %1862, %1866 : vector<16x16xi1>
    %cst_565 = arith.constant 0.000000e+00 : f32
    %1868 = vector.broadcast %cst_565 : f32 to vector<16x16xf32>
    %1869 = arith.select %1867, %1848, %1868 : vector<16x16xi1>, vector<16x16xf32>
    %c12_566 = arith.constant 12 : index
    %1870 = memref.load %arg4[%c12_566] : memref<144xf32, #tpu.memory_space<smem>>
    %1871 = vector.broadcast %1870 : f32 to vector<16x16xf32>
    %1872 = arith.mulf %1871, %1869 : vector<16x16xf32>
    %1873 = arith.addf %1835, %1872 : vector<16x16xf32>
    %c48_567 = arith.constant 48 : index
    %1874 = memref.load %arg4[%c48_567] : memref<144xf32, #tpu.memory_space<smem>>
    %1875 = vector.broadcast %1874 : f32 to vector<16x16xf32>
    %1876 = arith.mulf %1875, %1869 : vector<16x16xf32>
    %1877 = arith.addf %1839, %1876 : vector<16x16xf32>
    %c84_568 = arith.constant 84 : index
    %1878 = memref.load %arg4[%c84_568] : memref<144xf32, #tpu.memory_space<smem>>
    %1879 = vector.broadcast %1878 : f32 to vector<16x16xf32>
    %1880 = arith.mulf %1879, %1869 : vector<16x16xf32>
    %1881 = arith.addf %1843, %1880 : vector<16x16xf32>
    %c120_569 = arith.constant 120 : index
    %1882 = memref.load %arg4[%c120_569] : memref<144xf32, #tpu.memory_space<smem>>
    %1883 = vector.broadcast %1882 : f32 to vector<16x16xf32>
    %1884 = arith.mulf %1883, %1869 : vector<16x16xf32>
    %1885 = arith.addf %1847, %1884 : vector<16x16xf32>
    %c1_i32_570 = arith.constant 1 : i32
    %1886 = tpu.dynamic_rotate %1336 by %c1_i32_570 dim 1 : vector<16x16xf32>, i32 -> vector<16x16xf32>
    %c0_i32_571 = arith.constant 0 : i32
    %1887 = vector.broadcast %c0_i32_571 : i32 to vector<16x16xi32>
    %1888 = arith.addi %0, %1887 : vector<16x16xi32>
    %c0_i32_572 = arith.constant 0 : i32
    %1889 = vector.broadcast %c0_i32_572 : i32 to vector<16x16xi32>
    %1890 = arith.cmpi sge, %1888, %1889 : vector<16x16xi32>
    %c0_i32_573 = arith.constant 0 : i32
    %1891 = vector.broadcast %c0_i32_573 : i32 to vector<16x16xi32>
    %1892 = arith.addi %0, %1891 : vector<16x16xi32>
    %c16_i32_574 = arith.constant 16 : i32
    %1893 = vector.broadcast %c16_i32_574 : i32 to vector<16x16xi32>
    %1894 = arith.cmpi slt, %1892, %1893 : vector<16x16xi32>
    %1895 = arith.andi %1890, %1894 : vector<16x16xi1>
    %c-1_i32_575 = arith.constant -1 : i32
    %1896 = vector.broadcast %c-1_i32_575 : i32 to vector<16x16xi32>
    %1897 = arith.addi %1, %1896 : vector<16x16xi32>
    %c0_i32_576 = arith.constant 0 : i32
    %1898 = vector.broadcast %c0_i32_576 : i32 to vector<16x16xi32>
    %1899 = arith.cmpi sge, %1897, %1898 : vector<16x16xi32>
    %1900 = arith.andi %1895, %1899 : vector<16x16xi1>
    %c-1_i32_577 = arith.constant -1 : i32
    %1901 = vector.broadcast %c-1_i32_577 : i32 to vector<16x16xi32>
    %1902 = arith.addi %1, %1901 : vector<16x16xi32>
    %c16_i32_578 = arith.constant 16 : i32
    %1903 = vector.broadcast %c16_i32_578 : i32 to vector<16x16xi32>
    %1904 = arith.cmpi slt, %1902, %1903 : vector<16x16xi32>
    %1905 = arith.andi %1900, %1904 : vector<16x16xi1>
    %cst_579 = arith.constant 0.000000e+00 : f32
    %1906 = vector.broadcast %cst_579 : f32 to vector<16x16xf32>
    %1907 = arith.select %1905, %1886, %1906 : vector<16x16xi1>, vector<16x16xf32>
    %c21_580 = arith.constant 21 : index
    %1908 = memref.load %arg4[%c21_580] : memref<144xf32, #tpu.memory_space<smem>>
    %1909 = vector.broadcast %1908 : f32 to vector<16x16xf32>
    %1910 = arith.mulf %1909, %1907 : vector<16x16xf32>
    %1911 = arith.addf %1873, %1910 : vector<16x16xf32>
    %c57_581 = arith.constant 57 : index
    %1912 = memref.load %arg4[%c57_581] : memref<144xf32, #tpu.memory_space<smem>>
    %1913 = vector.broadcast %1912 : f32 to vector<16x16xf32>
    %1914 = arith.mulf %1913, %1907 : vector<16x16xf32>
    %1915 = arith.addf %1877, %1914 : vector<16x16xf32>
    %c93_582 = arith.constant 93 : index
    %1916 = memref.load %arg4[%c93_582] : memref<144xf32, #tpu.memory_space<smem>>
    %1917 = vector.broadcast %1916 : f32 to vector<16x16xf32>
    %1918 = arith.mulf %1917, %1907 : vector<16x16xf32>
    %1919 = arith.addf %1881, %1918 : vector<16x16xf32>
    %c129_583 = arith.constant 129 : index
    %1920 = memref.load %arg4[%c129_583] : memref<144xf32, #tpu.memory_space<smem>>
    %1921 = vector.broadcast %1920 : f32 to vector<16x16xf32>
    %1922 = arith.mulf %1921, %1907 : vector<16x16xf32>
    %1923 = arith.addf %1885, %1922 : vector<16x16xf32>
    %c1_i32_584 = arith.constant 1 : i32
    %1924 = tpu.dynamic_rotate %1341 by %c1_i32_584 dim 1 : vector<16x16xf32>, i32 -> vector<16x16xf32>
    %c0_i32_585 = arith.constant 0 : i32
    %1925 = vector.broadcast %c0_i32_585 : i32 to vector<16x16xi32>
    %1926 = arith.addi %0, %1925 : vector<16x16xi32>
    %c0_i32_586 = arith.constant 0 : i32
    %1927 = vector.broadcast %c0_i32_586 : i32 to vector<16x16xi32>
    %1928 = arith.cmpi sge, %1926, %1927 : vector<16x16xi32>
    %c0_i32_587 = arith.constant 0 : i32
    %1929 = vector.broadcast %c0_i32_587 : i32 to vector<16x16xi32>
    %1930 = arith.addi %0, %1929 : vector<16x16xi32>
    %c16_i32_588 = arith.constant 16 : i32
    %1931 = vector.broadcast %c16_i32_588 : i32 to vector<16x16xi32>
    %1932 = arith.cmpi slt, %1930, %1931 : vector<16x16xi32>
    %1933 = arith.andi %1928, %1932 : vector<16x16xi1>
    %c-1_i32_589 = arith.constant -1 : i32
    %1934 = vector.broadcast %c-1_i32_589 : i32 to vector<16x16xi32>
    %1935 = arith.addi %1, %1934 : vector<16x16xi32>
    %c0_i32_590 = arith.constant 0 : i32
    %1936 = vector.broadcast %c0_i32_590 : i32 to vector<16x16xi32>
    %1937 = arith.cmpi sge, %1935, %1936 : vector<16x16xi32>
    %1938 = arith.andi %1933, %1937 : vector<16x16xi1>
    %c-1_i32_591 = arith.constant -1 : i32
    %1939 = vector.broadcast %c-1_i32_591 : i32 to vector<16x16xi32>
    %1940 = arith.addi %1, %1939 : vector<16x16xi32>
    %c16_i32_592 = arith.constant 16 : i32
    %1941 = vector.broadcast %c16_i32_592 : i32 to vector<16x16xi32>
    %1942 = arith.cmpi slt, %1940, %1941 : vector<16x16xi32>
    %1943 = arith.andi %1938, %1942 : vector<16x16xi1>
    %cst_593 = arith.constant 0.000000e+00 : f32
    %1944 = vector.broadcast %cst_593 : f32 to vector<16x16xf32>
    %1945 = arith.select %1943, %1924, %1944 : vector<16x16xi1>, vector<16x16xf32>
    %c30_594 = arith.constant 30 : index
    %1946 = memref.load %arg4[%c30_594] : memref<144xf32, #tpu.memory_space<smem>>
    %1947 = vector.broadcast %1946 : f32 to vector<16x16xf32>
    %1948 = arith.mulf %1947, %1945 : vector<16x16xf32>
    %1949 = arith.addf %1911, %1948 : vector<16x16xf32>
    %c66_595 = arith.constant 66 : index
    %1950 = memref.load %arg4[%c66_595] : memref<144xf32, #tpu.memory_space<smem>>
    %1951 = vector.broadcast %1950 : f32 to vector<16x16xf32>
    %1952 = arith.mulf %1951, %1945 : vector<16x16xf32>
    %1953 = arith.addf %1915, %1952 : vector<16x16xf32>
    %c102_596 = arith.constant 102 : index
    %1954 = memref.load %arg4[%c102_596] : memref<144xf32, #tpu.memory_space<smem>>
    %1955 = vector.broadcast %1954 : f32 to vector<16x16xf32>
    %1956 = arith.mulf %1955, %1945 : vector<16x16xf32>
    %1957 = arith.addf %1919, %1956 : vector<16x16xf32>
    %c138_597 = arith.constant 138 : index
    %1958 = memref.load %arg4[%c138_597] : memref<144xf32, #tpu.memory_space<smem>>
    %1959 = vector.broadcast %1958 : f32 to vector<16x16xf32>
    %1960 = arith.mulf %1959, %1945 : vector<16x16xf32>
    %1961 = arith.addf %1923, %1960 : vector<16x16xf32>
    %c4_598 = arith.constant 4 : index
    %1962 = memref.load %arg4[%c4_598] : memref<144xf32, #tpu.memory_space<smem>>
    %1963 = vector.broadcast %1962 : f32 to vector<16x16xf32>
    %1964 = arith.mulf %1963, %1326 : vector<16x16xf32>
    %1965 = arith.addf %1949, %1964 : vector<16x16xf32>
    %c40_599 = arith.constant 40 : index
    %1966 = memref.load %arg4[%c40_599] : memref<144xf32, #tpu.memory_space<smem>>
    %1967 = vector.broadcast %1966 : f32 to vector<16x16xf32>
    %1968 = arith.mulf %1967, %1326 : vector<16x16xf32>
    %1969 = arith.addf %1953, %1968 : vector<16x16xf32>
    %c76_600 = arith.constant 76 : index
    %1970 = memref.load %arg4[%c76_600] : memref<144xf32, #tpu.memory_space<smem>>
    %1971 = vector.broadcast %1970 : f32 to vector<16x16xf32>
    %1972 = arith.mulf %1971, %1326 : vector<16x16xf32>
    %1973 = arith.addf %1957, %1972 : vector<16x16xf32>
    %c112_601 = arith.constant 112 : index
    %1974 = memref.load %arg4[%c112_601] : memref<144xf32, #tpu.memory_space<smem>>
    %1975 = vector.broadcast %1974 : f32 to vector<16x16xf32>
    %1976 = arith.mulf %1975, %1326 : vector<16x16xf32>
    %1977 = arith.addf %1961, %1976 : vector<16x16xf32>
    %c13_602 = arith.constant 13 : index
    %1978 = memref.load %arg4[%c13_602] : memref<144xf32, #tpu.memory_space<smem>>
    %1979 = vector.broadcast %1978 : f32 to vector<16x16xf32>
    %1980 = arith.mulf %1979, %1331 : vector<16x16xf32>
    %1981 = arith.addf %1965, %1980 : vector<16x16xf32>
    %c49_603 = arith.constant 49 : index
    %1982 = memref.load %arg4[%c49_603] : memref<144xf32, #tpu.memory_space<smem>>
    %1983 = vector.broadcast %1982 : f32 to vector<16x16xf32>
    %1984 = arith.mulf %1983, %1331 : vector<16x16xf32>
    %1985 = arith.addf %1969, %1984 : vector<16x16xf32>
    %c85_604 = arith.constant 85 : index
    %1986 = memref.load %arg4[%c85_604] : memref<144xf32, #tpu.memory_space<smem>>
    %1987 = vector.broadcast %1986 : f32 to vector<16x16xf32>
    %1988 = arith.mulf %1987, %1331 : vector<16x16xf32>
    %1989 = arith.addf %1973, %1988 : vector<16x16xf32>
    %c121_605 = arith.constant 121 : index
    %1990 = memref.load %arg4[%c121_605] : memref<144xf32, #tpu.memory_space<smem>>
    %1991 = vector.broadcast %1990 : f32 to vector<16x16xf32>
    %1992 = arith.mulf %1991, %1331 : vector<16x16xf32>
    %1993 = arith.addf %1977, %1992 : vector<16x16xf32>
    %c22_606 = arith.constant 22 : index
    %1994 = memref.load %arg4[%c22_606] : memref<144xf32, #tpu.memory_space<smem>>
    %1995 = vector.broadcast %1994 : f32 to vector<16x16xf32>
    %1996 = arith.mulf %1995, %1336 : vector<16x16xf32>
    %1997 = arith.addf %1981, %1996 : vector<16x16xf32>
    %c58_607 = arith.constant 58 : index
    %1998 = memref.load %arg4[%c58_607] : memref<144xf32, #tpu.memory_space<smem>>
    %1999 = vector.broadcast %1998 : f32 to vector<16x16xf32>
    %2000 = arith.mulf %1999, %1336 : vector<16x16xf32>
    %2001 = arith.addf %1985, %2000 : vector<16x16xf32>
    %c94_608 = arith.constant 94 : index
    %2002 = memref.load %arg4[%c94_608] : memref<144xf32, #tpu.memory_space<smem>>
    %2003 = vector.broadcast %2002 : f32 to vector<16x16xf32>
    %2004 = arith.mulf %2003, %1336 : vector<16x16xf32>
    %2005 = arith.addf %1989, %2004 : vector<16x16xf32>
    %c130_609 = arith.constant 130 : index
    %2006 = memref.load %arg4[%c130_609] : memref<144xf32, #tpu.memory_space<smem>>
    %2007 = vector.broadcast %2006 : f32 to vector<16x16xf32>
    %2008 = arith.mulf %2007, %1336 : vector<16x16xf32>
    %2009 = arith.addf %1993, %2008 : vector<16x16xf32>
    %c31_610 = arith.constant 31 : index
    %2010 = memref.load %arg4[%c31_610] : memref<144xf32, #tpu.memory_space<smem>>
    %2011 = vector.broadcast %2010 : f32 to vector<16x16xf32>
    %2012 = arith.mulf %2011, %1341 : vector<16x16xf32>
    %2013 = arith.addf %1997, %2012 : vector<16x16xf32>
    %c67_611 = arith.constant 67 : index
    %2014 = memref.load %arg4[%c67_611] : memref<144xf32, #tpu.memory_space<smem>>
    %2015 = vector.broadcast %2014 : f32 to vector<16x16xf32>
    %2016 = arith.mulf %2015, %1341 : vector<16x16xf32>
    %2017 = arith.addf %2001, %2016 : vector<16x16xf32>
    %c103_612 = arith.constant 103 : index
    %2018 = memref.load %arg4[%c103_612] : memref<144xf32, #tpu.memory_space<smem>>
    %2019 = vector.broadcast %2018 : f32 to vector<16x16xf32>
    %2020 = arith.mulf %2019, %1341 : vector<16x16xf32>
    %2021 = arith.addf %2005, %2020 : vector<16x16xf32>
    %c139_613 = arith.constant 139 : index
    %2022 = memref.load %arg4[%c139_613] : memref<144xf32, #tpu.memory_space<smem>>
    %2023 = vector.broadcast %2022 : f32 to vector<16x16xf32>
    %2024 = arith.mulf %2023, %1341 : vector<16x16xf32>
    %2025 = arith.addf %2009, %2024 : vector<16x16xf32>
    %c15_i32_614 = arith.constant 15 : i32
    %2026 = tpu.dynamic_rotate %1326 by %c15_i32_614 dim 1 : vector<16x16xf32>, i32 -> vector<16x16xf32>
    %c0_i32_615 = arith.constant 0 : i32
    %2027 = vector.broadcast %c0_i32_615 : i32 to vector<16x16xi32>
    %2028 = arith.addi %0, %2027 : vector<16x16xi32>
    %c0_i32_616 = arith.constant 0 : i32
    %2029 = vector.broadcast %c0_i32_616 : i32 to vector<16x16xi32>
    %2030 = arith.cmpi sge, %2028, %2029 : vector<16x16xi32>
    %c0_i32_617 = arith.constant 0 : i32
    %2031 = vector.broadcast %c0_i32_617 : i32 to vector<16x16xi32>
    %2032 = arith.addi %0, %2031 : vector<16x16xi32>
    %c16_i32_618 = arith.constant 16 : i32
    %2033 = vector.broadcast %c16_i32_618 : i32 to vector<16x16xi32>
    %2034 = arith.cmpi slt, %2032, %2033 : vector<16x16xi32>
    %2035 = arith.andi %2030, %2034 : vector<16x16xi1>
    %c1_i32_619 = arith.constant 1 : i32
    %2036 = vector.broadcast %c1_i32_619 : i32 to vector<16x16xi32>
    %2037 = arith.addi %1, %2036 : vector<16x16xi32>
    %c0_i32_620 = arith.constant 0 : i32
    %2038 = vector.broadcast %c0_i32_620 : i32 to vector<16x16xi32>
    %2039 = arith.cmpi sge, %2037, %2038 : vector<16x16xi32>
    %2040 = arith.andi %2035, %2039 : vector<16x16xi1>
    %c1_i32_621 = arith.constant 1 : i32
    %2041 = vector.broadcast %c1_i32_621 : i32 to vector<16x16xi32>
    %2042 = arith.addi %1, %2041 : vector<16x16xi32>
    %c16_i32_622 = arith.constant 16 : i32
    %2043 = vector.broadcast %c16_i32_622 : i32 to vector<16x16xi32>
    %2044 = arith.cmpi slt, %2042, %2043 : vector<16x16xi32>
    %2045 = arith.andi %2040, %2044 : vector<16x16xi1>
    %cst_623 = arith.constant 0.000000e+00 : f32
    %2046 = vector.broadcast %cst_623 : f32 to vector<16x16xf32>
    %2047 = arith.select %2045, %2026, %2046 : vector<16x16xi1>, vector<16x16xf32>
    %c5_624 = arith.constant 5 : index
    %2048 = memref.load %arg4[%c5_624] : memref<144xf32, #tpu.memory_space<smem>>
    %2049 = vector.broadcast %2048 : f32 to vector<16x16xf32>
    %2050 = arith.mulf %2049, %2047 : vector<16x16xf32>
    %2051 = arith.addf %2013, %2050 : vector<16x16xf32>
    %c41_625 = arith.constant 41 : index
    %2052 = memref.load %arg4[%c41_625] : memref<144xf32, #tpu.memory_space<smem>>
    %2053 = vector.broadcast %2052 : f32 to vector<16x16xf32>
    %2054 = arith.mulf %2053, %2047 : vector<16x16xf32>
    %2055 = arith.addf %2017, %2054 : vector<16x16xf32>
    %c77_626 = arith.constant 77 : index
    %2056 = memref.load %arg4[%c77_626] : memref<144xf32, #tpu.memory_space<smem>>
    %2057 = vector.broadcast %2056 : f32 to vector<16x16xf32>
    %2058 = arith.mulf %2057, %2047 : vector<16x16xf32>
    %2059 = arith.addf %2021, %2058 : vector<16x16xf32>
    %c113_627 = arith.constant 113 : index
    %2060 = memref.load %arg4[%c113_627] : memref<144xf32, #tpu.memory_space<smem>>
    %2061 = vector.broadcast %2060 : f32 to vector<16x16xf32>
    %2062 = arith.mulf %2061, %2047 : vector<16x16xf32>
    %2063 = arith.addf %2025, %2062 : vector<16x16xf32>
    %c15_i32_628 = arith.constant 15 : i32
    %2064 = tpu.dynamic_rotate %1331 by %c15_i32_628 dim 1 : vector<16x16xf32>, i32 -> vector<16x16xf32>
    %c0_i32_629 = arith.constant 0 : i32
    %2065 = vector.broadcast %c0_i32_629 : i32 to vector<16x16xi32>
    %2066 = arith.addi %0, %2065 : vector<16x16xi32>
    %c0_i32_630 = arith.constant 0 : i32
    %2067 = vector.broadcast %c0_i32_630 : i32 to vector<16x16xi32>
    %2068 = arith.cmpi sge, %2066, %2067 : vector<16x16xi32>
    %c0_i32_631 = arith.constant 0 : i32
    %2069 = vector.broadcast %c0_i32_631 : i32 to vector<16x16xi32>
    %2070 = arith.addi %0, %2069 : vector<16x16xi32>
    %c16_i32_632 = arith.constant 16 : i32
    %2071 = vector.broadcast %c16_i32_632 : i32 to vector<16x16xi32>
    %2072 = arith.cmpi slt, %2070, %2071 : vector<16x16xi32>
    %2073 = arith.andi %2068, %2072 : vector<16x16xi1>
    %c1_i32_633 = arith.constant 1 : i32
    %2074 = vector.broadcast %c1_i32_633 : i32 to vector<16x16xi32>
    %2075 = arith.addi %1, %2074 : vector<16x16xi32>
    %c0_i32_634 = arith.constant 0 : i32
    %2076 = vector.broadcast %c0_i32_634 : i32 to vector<16x16xi32>
    %2077 = arith.cmpi sge, %2075, %2076 : vector<16x16xi32>
    %2078 = arith.andi %2073, %2077 : vector<16x16xi1>
    %c1_i32_635 = arith.constant 1 : i32
    %2079 = vector.broadcast %c1_i32_635 : i32 to vector<16x16xi32>
    %2080 = arith.addi %1, %2079 : vector<16x16xi32>
    %c16_i32_636 = arith.constant 16 : i32
    %2081 = vector.broadcast %c16_i32_636 : i32 to vector<16x16xi32>
    %2082 = arith.cmpi slt, %2080, %2081 : vector<16x16xi32>
    %2083 = arith.andi %2078, %2082 : vector<16x16xi1>
    %cst_637 = arith.constant 0.000000e+00 : f32
    %2084 = vector.broadcast %cst_637 : f32 to vector<16x16xf32>
    %2085 = arith.select %2083, %2064, %2084 : vector<16x16xi1>, vector<16x16xf32>
    %c14_638 = arith.constant 14 : index
    %2086 = memref.load %arg4[%c14_638] : memref<144xf32, #tpu.memory_space<smem>>
    %2087 = vector.broadcast %2086 : f32 to vector<16x16xf32>
    %2088 = arith.mulf %2087, %2085 : vector<16x16xf32>
    %2089 = arith.addf %2051, %2088 : vector<16x16xf32>
    %c50_639 = arith.constant 50 : index
    %2090 = memref.load %arg4[%c50_639] : memref<144xf32, #tpu.memory_space<smem>>
    %2091 = vector.broadcast %2090 : f32 to vector<16x16xf32>
    %2092 = arith.mulf %2091, %2085 : vector<16x16xf32>
    %2093 = arith.addf %2055, %2092 : vector<16x16xf32>
    %c86_640 = arith.constant 86 : index
    %2094 = memref.load %arg4[%c86_640] : memref<144xf32, #tpu.memory_space<smem>>
    %2095 = vector.broadcast %2094 : f32 to vector<16x16xf32>
    %2096 = arith.mulf %2095, %2085 : vector<16x16xf32>
    %2097 = arith.addf %2059, %2096 : vector<16x16xf32>
    %c122_641 = arith.constant 122 : index
    %2098 = memref.load %arg4[%c122_641] : memref<144xf32, #tpu.memory_space<smem>>
    %2099 = vector.broadcast %2098 : f32 to vector<16x16xf32>
    %2100 = arith.mulf %2099, %2085 : vector<16x16xf32>
    %2101 = arith.addf %2063, %2100 : vector<16x16xf32>
    %c15_i32_642 = arith.constant 15 : i32
    %2102 = tpu.dynamic_rotate %1336 by %c15_i32_642 dim 1 : vector<16x16xf32>, i32 -> vector<16x16xf32>
    %c0_i32_643 = arith.constant 0 : i32
    %2103 = vector.broadcast %c0_i32_643 : i32 to vector<16x16xi32>
    %2104 = arith.addi %0, %2103 : vector<16x16xi32>
    %c0_i32_644 = arith.constant 0 : i32
    %2105 = vector.broadcast %c0_i32_644 : i32 to vector<16x16xi32>
    %2106 = arith.cmpi sge, %2104, %2105 : vector<16x16xi32>
    %c0_i32_645 = arith.constant 0 : i32
    %2107 = vector.broadcast %c0_i32_645 : i32 to vector<16x16xi32>
    %2108 = arith.addi %0, %2107 : vector<16x16xi32>
    %c16_i32_646 = arith.constant 16 : i32
    %2109 = vector.broadcast %c16_i32_646 : i32 to vector<16x16xi32>
    %2110 = arith.cmpi slt, %2108, %2109 : vector<16x16xi32>
    %2111 = arith.andi %2106, %2110 : vector<16x16xi1>
    %c1_i32_647 = arith.constant 1 : i32
    %2112 = vector.broadcast %c1_i32_647 : i32 to vector<16x16xi32>
    %2113 = arith.addi %1, %2112 : vector<16x16xi32>
    %c0_i32_648 = arith.constant 0 : i32
    %2114 = vector.broadcast %c0_i32_648 : i32 to vector<16x16xi32>
    %2115 = arith.cmpi sge, %2113, %2114 : vector<16x16xi32>
    %2116 = arith.andi %2111, %2115 : vector<16x16xi1>
    %c1_i32_649 = arith.constant 1 : i32
    %2117 = vector.broadcast %c1_i32_649 : i32 to vector<16x16xi32>
    %2118 = arith.addi %1, %2117 : vector<16x16xi32>
    %c16_i32_650 = arith.constant 16 : i32
    %2119 = vector.broadcast %c16_i32_650 : i32 to vector<16x16xi32>
    %2120 = arith.cmpi slt, %2118, %2119 : vector<16x16xi32>
    %2121 = arith.andi %2116, %2120 : vector<16x16xi1>
    %cst_651 = arith.constant 0.000000e+00 : f32
    %2122 = vector.broadcast %cst_651 : f32 to vector<16x16xf32>
    %2123 = arith.select %2121, %2102, %2122 : vector<16x16xi1>, vector<16x16xf32>
    %c23_652 = arith.constant 23 : index
    %2124 = memref.load %arg4[%c23_652] : memref<144xf32, #tpu.memory_space<smem>>
    %2125 = vector.broadcast %2124 : f32 to vector<16x16xf32>
    %2126 = arith.mulf %2125, %2123 : vector<16x16xf32>
    %2127 = arith.addf %2089, %2126 : vector<16x16xf32>
    %c59_653 = arith.constant 59 : index
    %2128 = memref.load %arg4[%c59_653] : memref<144xf32, #tpu.memory_space<smem>>
    %2129 = vector.broadcast %2128 : f32 to vector<16x16xf32>
    %2130 = arith.mulf %2129, %2123 : vector<16x16xf32>
    %2131 = arith.addf %2093, %2130 : vector<16x16xf32>
    %c95_654 = arith.constant 95 : index
    %2132 = memref.load %arg4[%c95_654] : memref<144xf32, #tpu.memory_space<smem>>
    %2133 = vector.broadcast %2132 : f32 to vector<16x16xf32>
    %2134 = arith.mulf %2133, %2123 : vector<16x16xf32>
    %2135 = arith.addf %2097, %2134 : vector<16x16xf32>
    %c131_655 = arith.constant 131 : index
    %2136 = memref.load %arg4[%c131_655] : memref<144xf32, #tpu.memory_space<smem>>
    %2137 = vector.broadcast %2136 : f32 to vector<16x16xf32>
    %2138 = arith.mulf %2137, %2123 : vector<16x16xf32>
    %2139 = arith.addf %2101, %2138 : vector<16x16xf32>
    %c15_i32_656 = arith.constant 15 : i32
    %2140 = tpu.dynamic_rotate %1341 by %c15_i32_656 dim 1 : vector<16x16xf32>, i32 -> vector<16x16xf32>
    %c0_i32_657 = arith.constant 0 : i32
    %2141 = vector.broadcast %c0_i32_657 : i32 to vector<16x16xi32>
    %2142 = arith.addi %0, %2141 : vector<16x16xi32>
    %c0_i32_658 = arith.constant 0 : i32
    %2143 = vector.broadcast %c0_i32_658 : i32 to vector<16x16xi32>
    %2144 = arith.cmpi sge, %2142, %2143 : vector<16x16xi32>
    %c0_i32_659 = arith.constant 0 : i32
    %2145 = vector.broadcast %c0_i32_659 : i32 to vector<16x16xi32>
    %2146 = arith.addi %0, %2145 : vector<16x16xi32>
    %c16_i32_660 = arith.constant 16 : i32
    %2147 = vector.broadcast %c16_i32_660 : i32 to vector<16x16xi32>
    %2148 = arith.cmpi slt, %2146, %2147 : vector<16x16xi32>
    %2149 = arith.andi %2144, %2148 : vector<16x16xi1>
    %c1_i32_661 = arith.constant 1 : i32
    %2150 = vector.broadcast %c1_i32_661 : i32 to vector<16x16xi32>
    %2151 = arith.addi %1, %2150 : vector<16x16xi32>
    %c0_i32_662 = arith.constant 0 : i32
    %2152 = vector.broadcast %c0_i32_662 : i32 to vector<16x16xi32>
    %2153 = arith.cmpi sge, %2151, %2152 : vector<16x16xi32>
    %2154 = arith.andi %2149, %2153 : vector<16x16xi1>
    %c1_i32_663 = arith.constant 1 : i32
    %2155 = vector.broadcast %c1_i32_663 : i32 to vector<16x16xi32>
    %2156 = arith.addi %1, %2155 : vector<16x16xi32>
    %c16_i32_664 = arith.constant 16 : i32
    %2157 = vector.broadcast %c16_i32_664 : i32 to vector<16x16xi32>
    %2158 = arith.cmpi slt, %2156, %2157 : vector<16x16xi32>
    %2159 = arith.andi %2154, %2158 : vector<16x16xi1>
    %cst_665 = arith.constant 0.000000e+00 : f32
    %2160 = vector.broadcast %cst_665 : f32 to vector<16x16xf32>
    %2161 = arith.select %2159, %2140, %2160 : vector<16x16xi1>, vector<16x16xf32>
    %c32_666 = arith.constant 32 : index
    %2162 = memref.load %arg4[%c32_666] : memref<144xf32, #tpu.memory_space<smem>>
    %2163 = vector.broadcast %2162 : f32 to vector<16x16xf32>
    %2164 = arith.mulf %2163, %2161 : vector<16x16xf32>
    %2165 = arith.addf %2127, %2164 : vector<16x16xf32>
    %c68_667 = arith.constant 68 : index
    %2166 = memref.load %arg4[%c68_667] : memref<144xf32, #tpu.memory_space<smem>>
    %2167 = vector.broadcast %2166 : f32 to vector<16x16xf32>
    %2168 = arith.mulf %2167, %2161 : vector<16x16xf32>
    %2169 = arith.addf %2131, %2168 : vector<16x16xf32>
    %c104_668 = arith.constant 104 : index
    %2170 = memref.load %arg4[%c104_668] : memref<144xf32, #tpu.memory_space<smem>>
    %2171 = vector.broadcast %2170 : f32 to vector<16x16xf32>
    %2172 = arith.mulf %2171, %2161 : vector<16x16xf32>
    %2173 = arith.addf %2135, %2172 : vector<16x16xf32>
    %c140_669 = arith.constant 140 : index
    %2174 = memref.load %arg4[%c140_669] : memref<144xf32, #tpu.memory_space<smem>>
    %2175 = vector.broadcast %2174 : f32 to vector<16x16xf32>
    %2176 = arith.mulf %2175, %2161 : vector<16x16xf32>
    %2177 = arith.addf %2139, %2176 : vector<16x16xf32>
    %c15_i32_670 = arith.constant 15 : i32
    %2178 = tpu.dynamic_rotate %1326 by %c15_i32_670 dim 0 : vector<16x16xf32>, i32 -> vector<16x16xf32>
    %c1_i32_671 = arith.constant 1 : i32
    %2179 = tpu.dynamic_rotate %2178 by %c1_i32_671 dim 1 : vector<16x16xf32>, i32 -> vector<16x16xf32>
    %c1_i32_672 = arith.constant 1 : i32
    %2180 = vector.broadcast %c1_i32_672 : i32 to vector<16x16xi32>
    %2181 = arith.addi %0, %2180 : vector<16x16xi32>
    %c0_i32_673 = arith.constant 0 : i32
    %2182 = vector.broadcast %c0_i32_673 : i32 to vector<16x16xi32>
    %2183 = arith.cmpi sge, %2181, %2182 : vector<16x16xi32>
    %c1_i32_674 = arith.constant 1 : i32
    %2184 = vector.broadcast %c1_i32_674 : i32 to vector<16x16xi32>
    %2185 = arith.addi %0, %2184 : vector<16x16xi32>
    %c16_i32_675 = arith.constant 16 : i32
    %2186 = vector.broadcast %c16_i32_675 : i32 to vector<16x16xi32>
    %2187 = arith.cmpi slt, %2185, %2186 : vector<16x16xi32>
    %2188 = arith.andi %2183, %2187 : vector<16x16xi1>
    %c-1_i32_676 = arith.constant -1 : i32
    %2189 = vector.broadcast %c-1_i32_676 : i32 to vector<16x16xi32>
    %2190 = arith.addi %1, %2189 : vector<16x16xi32>
    %c0_i32_677 = arith.constant 0 : i32
    %2191 = vector.broadcast %c0_i32_677 : i32 to vector<16x16xi32>
    %2192 = arith.cmpi sge, %2190, %2191 : vector<16x16xi32>
    %2193 = arith.andi %2188, %2192 : vector<16x16xi1>
    %c-1_i32_678 = arith.constant -1 : i32
    %2194 = vector.broadcast %c-1_i32_678 : i32 to vector<16x16xi32>
    %2195 = arith.addi %1, %2194 : vector<16x16xi32>
    %c16_i32_679 = arith.constant 16 : i32
    %2196 = vector.broadcast %c16_i32_679 : i32 to vector<16x16xi32>
    %2197 = arith.cmpi slt, %2195, %2196 : vector<16x16xi32>
    %2198 = arith.andi %2193, %2197 : vector<16x16xi1>
    %cst_680 = arith.constant 0.000000e+00 : f32
    %2199 = vector.broadcast %cst_680 : f32 to vector<16x16xf32>
    %2200 = arith.select %2198, %2179, %2199 : vector<16x16xi1>, vector<16x16xf32>
    %c6_681 = arith.constant 6 : index
    %2201 = memref.load %arg4[%c6_681] : memref<144xf32, #tpu.memory_space<smem>>
    %2202 = vector.broadcast %2201 : f32 to vector<16x16xf32>
    %2203 = arith.mulf %2202, %2200 : vector<16x16xf32>
    %2204 = arith.addf %2165, %2203 : vector<16x16xf32>
    %c42_682 = arith.constant 42 : index
    %2205 = memref.load %arg4[%c42_682] : memref<144xf32, #tpu.memory_space<smem>>
    %2206 = vector.broadcast %2205 : f32 to vector<16x16xf32>
    %2207 = arith.mulf %2206, %2200 : vector<16x16xf32>
    %2208 = arith.addf %2169, %2207 : vector<16x16xf32>
    %c78_683 = arith.constant 78 : index
    %2209 = memref.load %arg4[%c78_683] : memref<144xf32, #tpu.memory_space<smem>>
    %2210 = vector.broadcast %2209 : f32 to vector<16x16xf32>
    %2211 = arith.mulf %2210, %2200 : vector<16x16xf32>
    %2212 = arith.addf %2173, %2211 : vector<16x16xf32>
    %c114_684 = arith.constant 114 : index
    %2213 = memref.load %arg4[%c114_684] : memref<144xf32, #tpu.memory_space<smem>>
    %2214 = vector.broadcast %2213 : f32 to vector<16x16xf32>
    %2215 = arith.mulf %2214, %2200 : vector<16x16xf32>
    %2216 = arith.addf %2177, %2215 : vector<16x16xf32>
    %c15_i32_685 = arith.constant 15 : i32
    %2217 = tpu.dynamic_rotate %1331 by %c15_i32_685 dim 0 : vector<16x16xf32>, i32 -> vector<16x16xf32>
    %c1_i32_686 = arith.constant 1 : i32
    %2218 = tpu.dynamic_rotate %2217 by %c1_i32_686 dim 1 : vector<16x16xf32>, i32 -> vector<16x16xf32>
    %c1_i32_687 = arith.constant 1 : i32
    %2219 = vector.broadcast %c1_i32_687 : i32 to vector<16x16xi32>
    %2220 = arith.addi %0, %2219 : vector<16x16xi32>
    %c0_i32_688 = arith.constant 0 : i32
    %2221 = vector.broadcast %c0_i32_688 : i32 to vector<16x16xi32>
    %2222 = arith.cmpi sge, %2220, %2221 : vector<16x16xi32>
    %c1_i32_689 = arith.constant 1 : i32
    %2223 = vector.broadcast %c1_i32_689 : i32 to vector<16x16xi32>
    %2224 = arith.addi %0, %2223 : vector<16x16xi32>
    %c16_i32_690 = arith.constant 16 : i32
    %2225 = vector.broadcast %c16_i32_690 : i32 to vector<16x16xi32>
    %2226 = arith.cmpi slt, %2224, %2225 : vector<16x16xi32>
    %2227 = arith.andi %2222, %2226 : vector<16x16xi1>
    %c-1_i32_691 = arith.constant -1 : i32
    %2228 = vector.broadcast %c-1_i32_691 : i32 to vector<16x16xi32>
    %2229 = arith.addi %1, %2228 : vector<16x16xi32>
    %c0_i32_692 = arith.constant 0 : i32
    %2230 = vector.broadcast %c0_i32_692 : i32 to vector<16x16xi32>
    %2231 = arith.cmpi sge, %2229, %2230 : vector<16x16xi32>
    %2232 = arith.andi %2227, %2231 : vector<16x16xi1>
    %c-1_i32_693 = arith.constant -1 : i32
    %2233 = vector.broadcast %c-1_i32_693 : i32 to vector<16x16xi32>
    %2234 = arith.addi %1, %2233 : vector<16x16xi32>
    %c16_i32_694 = arith.constant 16 : i32
    %2235 = vector.broadcast %c16_i32_694 : i32 to vector<16x16xi32>
    %2236 = arith.cmpi slt, %2234, %2235 : vector<16x16xi32>
    %2237 = arith.andi %2232, %2236 : vector<16x16xi1>
    %cst_695 = arith.constant 0.000000e+00 : f32
    %2238 = vector.broadcast %cst_695 : f32 to vector<16x16xf32>
    %2239 = arith.select %2237, %2218, %2238 : vector<16x16xi1>, vector<16x16xf32>
    %c15_696 = arith.constant 15 : index
    %2240 = memref.load %arg4[%c15_696] : memref<144xf32, #tpu.memory_space<smem>>
    %2241 = vector.broadcast %2240 : f32 to vector<16x16xf32>
    %2242 = arith.mulf %2241, %2239 : vector<16x16xf32>
    %2243 = arith.addf %2204, %2242 : vector<16x16xf32>
    %c51_697 = arith.constant 51 : index
    %2244 = memref.load %arg4[%c51_697] : memref<144xf32, #tpu.memory_space<smem>>
    %2245 = vector.broadcast %2244 : f32 to vector<16x16xf32>
    %2246 = arith.mulf %2245, %2239 : vector<16x16xf32>
    %2247 = arith.addf %2208, %2246 : vector<16x16xf32>
    %c87_698 = arith.constant 87 : index
    %2248 = memref.load %arg4[%c87_698] : memref<144xf32, #tpu.memory_space<smem>>
    %2249 = vector.broadcast %2248 : f32 to vector<16x16xf32>
    %2250 = arith.mulf %2249, %2239 : vector<16x16xf32>
    %2251 = arith.addf %2212, %2250 : vector<16x16xf32>
    %c123_699 = arith.constant 123 : index
    %2252 = memref.load %arg4[%c123_699] : memref<144xf32, #tpu.memory_space<smem>>
    %2253 = vector.broadcast %2252 : f32 to vector<16x16xf32>
    %2254 = arith.mulf %2253, %2239 : vector<16x16xf32>
    %2255 = arith.addf %2216, %2254 : vector<16x16xf32>
    %c15_i32_700 = arith.constant 15 : i32
    %2256 = tpu.dynamic_rotate %1336 by %c15_i32_700 dim 0 : vector<16x16xf32>, i32 -> vector<16x16xf32>
    %c1_i32_701 = arith.constant 1 : i32
    %2257 = tpu.dynamic_rotate %2256 by %c1_i32_701 dim 1 : vector<16x16xf32>, i32 -> vector<16x16xf32>
    %c1_i32_702 = arith.constant 1 : i32
    %2258 = vector.broadcast %c1_i32_702 : i32 to vector<16x16xi32>
    %2259 = arith.addi %0, %2258 : vector<16x16xi32>
    %c0_i32_703 = arith.constant 0 : i32
    %2260 = vector.broadcast %c0_i32_703 : i32 to vector<16x16xi32>
    %2261 = arith.cmpi sge, %2259, %2260 : vector<16x16xi32>
    %c1_i32_704 = arith.constant 1 : i32
    %2262 = vector.broadcast %c1_i32_704 : i32 to vector<16x16xi32>
    %2263 = arith.addi %0, %2262 : vector<16x16xi32>
    %c16_i32_705 = arith.constant 16 : i32
    %2264 = vector.broadcast %c16_i32_705 : i32 to vector<16x16xi32>
    %2265 = arith.cmpi slt, %2263, %2264 : vector<16x16xi32>
    %2266 = arith.andi %2261, %2265 : vector<16x16xi1>
    %c-1_i32_706 = arith.constant -1 : i32
    %2267 = vector.broadcast %c-1_i32_706 : i32 to vector<16x16xi32>
    %2268 = arith.addi %1, %2267 : vector<16x16xi32>
    %c0_i32_707 = arith.constant 0 : i32
    %2269 = vector.broadcast %c0_i32_707 : i32 to vector<16x16xi32>
    %2270 = arith.cmpi sge, %2268, %2269 : vector<16x16xi32>
    %2271 = arith.andi %2266, %2270 : vector<16x16xi1>
    %c-1_i32_708 = arith.constant -1 : i32
    %2272 = vector.broadcast %c-1_i32_708 : i32 to vector<16x16xi32>
    %2273 = arith.addi %1, %2272 : vector<16x16xi32>
    %c16_i32_709 = arith.constant 16 : i32
    %2274 = vector.broadcast %c16_i32_709 : i32 to vector<16x16xi32>
    %2275 = arith.cmpi slt, %2273, %2274 : vector<16x16xi32>
    %2276 = arith.andi %2271, %2275 : vector<16x16xi1>
    %cst_710 = arith.constant 0.000000e+00 : f32
    %2277 = vector.broadcast %cst_710 : f32 to vector<16x16xf32>
    %2278 = arith.select %2276, %2257, %2277 : vector<16x16xi1>, vector<16x16xf32>
    %c24_711 = arith.constant 24 : index
    %2279 = memref.load %arg4[%c24_711] : memref<144xf32, #tpu.memory_space<smem>>
    %2280 = vector.broadcast %2279 : f32 to vector<16x16xf32>
    %2281 = arith.mulf %2280, %2278 : vector<16x16xf32>
    %2282 = arith.addf %2243, %2281 : vector<16x16xf32>
    %c60_712 = arith.constant 60 : index
    %2283 = memref.load %arg4[%c60_712] : memref<144xf32, #tpu.memory_space<smem>>
    %2284 = vector.broadcast %2283 : f32 to vector<16x16xf32>
    %2285 = arith.mulf %2284, %2278 : vector<16x16xf32>
    %2286 = arith.addf %2247, %2285 : vector<16x16xf32>
    %c96_713 = arith.constant 96 : index
    %2287 = memref.load %arg4[%c96_713] : memref<144xf32, #tpu.memory_space<smem>>
    %2288 = vector.broadcast %2287 : f32 to vector<16x16xf32>
    %2289 = arith.mulf %2288, %2278 : vector<16x16xf32>
    %2290 = arith.addf %2251, %2289 : vector<16x16xf32>
    %c132_714 = arith.constant 132 : index
    %2291 = memref.load %arg4[%c132_714] : memref<144xf32, #tpu.memory_space<smem>>
    %2292 = vector.broadcast %2291 : f32 to vector<16x16xf32>
    %2293 = arith.mulf %2292, %2278 : vector<16x16xf32>
    %2294 = arith.addf %2255, %2293 : vector<16x16xf32>
    %c15_i32_715 = arith.constant 15 : i32
    %2295 = tpu.dynamic_rotate %1341 by %c15_i32_715 dim 0 : vector<16x16xf32>, i32 -> vector<16x16xf32>
    %c1_i32_716 = arith.constant 1 : i32
    %2296 = tpu.dynamic_rotate %2295 by %c1_i32_716 dim 1 : vector<16x16xf32>, i32 -> vector<16x16xf32>
    %c1_i32_717 = arith.constant 1 : i32
    %2297 = vector.broadcast %c1_i32_717 : i32 to vector<16x16xi32>
    %2298 = arith.addi %0, %2297 : vector<16x16xi32>
    %c0_i32_718 = arith.constant 0 : i32
    %2299 = vector.broadcast %c0_i32_718 : i32 to vector<16x16xi32>
    %2300 = arith.cmpi sge, %2298, %2299 : vector<16x16xi32>
    %c1_i32_719 = arith.constant 1 : i32
    %2301 = vector.broadcast %c1_i32_719 : i32 to vector<16x16xi32>
    %2302 = arith.addi %0, %2301 : vector<16x16xi32>
    %c16_i32_720 = arith.constant 16 : i32
    %2303 = vector.broadcast %c16_i32_720 : i32 to vector<16x16xi32>
    %2304 = arith.cmpi slt, %2302, %2303 : vector<16x16xi32>
    %2305 = arith.andi %2300, %2304 : vector<16x16xi1>
    %c-1_i32_721 = arith.constant -1 : i32
    %2306 = vector.broadcast %c-1_i32_721 : i32 to vector<16x16xi32>
    %2307 = arith.addi %1, %2306 : vector<16x16xi32>
    %c0_i32_722 = arith.constant 0 : i32
    %2308 = vector.broadcast %c0_i32_722 : i32 to vector<16x16xi32>
    %2309 = arith.cmpi sge, %2307, %2308 : vector<16x16xi32>
    %2310 = arith.andi %2305, %2309 : vector<16x16xi1>
    %c-1_i32_723 = arith.constant -1 : i32
    %2311 = vector.broadcast %c-1_i32_723 : i32 to vector<16x16xi32>
    %2312 = arith.addi %1, %2311 : vector<16x16xi32>
    %c16_i32_724 = arith.constant 16 : i32
    %2313 = vector.broadcast %c16_i32_724 : i32 to vector<16x16xi32>
    %2314 = arith.cmpi slt, %2312, %2313 : vector<16x16xi32>
    %2315 = arith.andi %2310, %2314 : vector<16x16xi1>
    %cst_725 = arith.constant 0.000000e+00 : f32
    %2316 = vector.broadcast %cst_725 : f32 to vector<16x16xf32>
    %2317 = arith.select %2315, %2296, %2316 : vector<16x16xi1>, vector<16x16xf32>
    %c33_726 = arith.constant 33 : index
    %2318 = memref.load %arg4[%c33_726] : memref<144xf32, #tpu.memory_space<smem>>
    %2319 = vector.broadcast %2318 : f32 to vector<16x16xf32>
    %2320 = arith.mulf %2319, %2317 : vector<16x16xf32>
    %2321 = arith.addf %2282, %2320 : vector<16x16xf32>
    %c69_727 = arith.constant 69 : index
    %2322 = memref.load %arg4[%c69_727] : memref<144xf32, #tpu.memory_space<smem>>
    %2323 = vector.broadcast %2322 : f32 to vector<16x16xf32>
    %2324 = arith.mulf %2323, %2317 : vector<16x16xf32>
    %2325 = arith.addf %2286, %2324 : vector<16x16xf32>
    %c105_728 = arith.constant 105 : index
    %2326 = memref.load %arg4[%c105_728] : memref<144xf32, #tpu.memory_space<smem>>
    %2327 = vector.broadcast %2326 : f32 to vector<16x16xf32>
    %2328 = arith.mulf %2327, %2317 : vector<16x16xf32>
    %2329 = arith.addf %2290, %2328 : vector<16x16xf32>
    %c141_729 = arith.constant 141 : index
    %2330 = memref.load %arg4[%c141_729] : memref<144xf32, #tpu.memory_space<smem>>
    %2331 = vector.broadcast %2330 : f32 to vector<16x16xf32>
    %2332 = arith.mulf %2331, %2317 : vector<16x16xf32>
    %2333 = arith.addf %2294, %2332 : vector<16x16xf32>
    %c15_i32_730 = arith.constant 15 : i32
    %2334 = tpu.dynamic_rotate %1326 by %c15_i32_730 dim 0 : vector<16x16xf32>, i32 -> vector<16x16xf32>
    %c1_i32_731 = arith.constant 1 : i32
    %2335 = vector.broadcast %c1_i32_731 : i32 to vector<16x16xi32>
    %2336 = arith.addi %0, %2335 : vector<16x16xi32>
    %c0_i32_732 = arith.constant 0 : i32
    %2337 = vector.broadcast %c0_i32_732 : i32 to vector<16x16xi32>
    %2338 = arith.cmpi sge, %2336, %2337 : vector<16x16xi32>
    %c1_i32_733 = arith.constant 1 : i32
    %2339 = vector.broadcast %c1_i32_733 : i32 to vector<16x16xi32>
    %2340 = arith.addi %0, %2339 : vector<16x16xi32>
    %c16_i32_734 = arith.constant 16 : i32
    %2341 = vector.broadcast %c16_i32_734 : i32 to vector<16x16xi32>
    %2342 = arith.cmpi slt, %2340, %2341 : vector<16x16xi32>
    %2343 = arith.andi %2338, %2342 : vector<16x16xi1>
    %c0_i32_735 = arith.constant 0 : i32
    %2344 = vector.broadcast %c0_i32_735 : i32 to vector<16x16xi32>
    %2345 = arith.addi %1, %2344 : vector<16x16xi32>
    %c0_i32_736 = arith.constant 0 : i32
    %2346 = vector.broadcast %c0_i32_736 : i32 to vector<16x16xi32>
    %2347 = arith.cmpi sge, %2345, %2346 : vector<16x16xi32>
    %2348 = arith.andi %2343, %2347 : vector<16x16xi1>
    %c0_i32_737 = arith.constant 0 : i32
    %2349 = vector.broadcast %c0_i32_737 : i32 to vector<16x16xi32>
    %2350 = arith.addi %1, %2349 : vector<16x16xi32>
    %c16_i32_738 = arith.constant 16 : i32
    %2351 = vector.broadcast %c16_i32_738 : i32 to vector<16x16xi32>
    %2352 = arith.cmpi slt, %2350, %2351 : vector<16x16xi32>
    %2353 = arith.andi %2348, %2352 : vector<16x16xi1>
    %cst_739 = arith.constant 0.000000e+00 : f32
    %2354 = vector.broadcast %cst_739 : f32 to vector<16x16xf32>
    %2355 = arith.select %2353, %2334, %2354 : vector<16x16xi1>, vector<16x16xf32>
    %c7_740 = arith.constant 7 : index
    %2356 = memref.load %arg4[%c7_740] : memref<144xf32, #tpu.memory_space<smem>>
    %2357 = vector.broadcast %2356 : f32 to vector<16x16xf32>
    %2358 = arith.mulf %2357, %2355 : vector<16x16xf32>
    %2359 = arith.addf %2321, %2358 : vector<16x16xf32>
    %c43_741 = arith.constant 43 : index
    %2360 = memref.load %arg4[%c43_741] : memref<144xf32, #tpu.memory_space<smem>>
    %2361 = vector.broadcast %2360 : f32 to vector<16x16xf32>
    %2362 = arith.mulf %2361, %2355 : vector<16x16xf32>
    %2363 = arith.addf %2325, %2362 : vector<16x16xf32>
    %c79_742 = arith.constant 79 : index
    %2364 = memref.load %arg4[%c79_742] : memref<144xf32, #tpu.memory_space<smem>>
    %2365 = vector.broadcast %2364 : f32 to vector<16x16xf32>
    %2366 = arith.mulf %2365, %2355 : vector<16x16xf32>
    %2367 = arith.addf %2329, %2366 : vector<16x16xf32>
    %c115_743 = arith.constant 115 : index
    %2368 = memref.load %arg4[%c115_743] : memref<144xf32, #tpu.memory_space<smem>>
    %2369 = vector.broadcast %2368 : f32 to vector<16x16xf32>
    %2370 = arith.mulf %2369, %2355 : vector<16x16xf32>
    %2371 = arith.addf %2333, %2370 : vector<16x16xf32>
    %c15_i32_744 = arith.constant 15 : i32
    %2372 = tpu.dynamic_rotate %1331 by %c15_i32_744 dim 0 : vector<16x16xf32>, i32 -> vector<16x16xf32>
    %c1_i32_745 = arith.constant 1 : i32
    %2373 = vector.broadcast %c1_i32_745 : i32 to vector<16x16xi32>
    %2374 = arith.addi %0, %2373 : vector<16x16xi32>
    %c0_i32_746 = arith.constant 0 : i32
    %2375 = vector.broadcast %c0_i32_746 : i32 to vector<16x16xi32>
    %2376 = arith.cmpi sge, %2374, %2375 : vector<16x16xi32>
    %c1_i32_747 = arith.constant 1 : i32
    %2377 = vector.broadcast %c1_i32_747 : i32 to vector<16x16xi32>
    %2378 = arith.addi %0, %2377 : vector<16x16xi32>
    %c16_i32_748 = arith.constant 16 : i32
    %2379 = vector.broadcast %c16_i32_748 : i32 to vector<16x16xi32>
    %2380 = arith.cmpi slt, %2378, %2379 : vector<16x16xi32>
    %2381 = arith.andi %2376, %2380 : vector<16x16xi1>
    %c0_i32_749 = arith.constant 0 : i32
    %2382 = vector.broadcast %c0_i32_749 : i32 to vector<16x16xi32>
    %2383 = arith.addi %1, %2382 : vector<16x16xi32>
    %c0_i32_750 = arith.constant 0 : i32
    %2384 = vector.broadcast %c0_i32_750 : i32 to vector<16x16xi32>
    %2385 = arith.cmpi sge, %2383, %2384 : vector<16x16xi32>
    %2386 = arith.andi %2381, %2385 : vector<16x16xi1>
    %c0_i32_751 = arith.constant 0 : i32
    %2387 = vector.broadcast %c0_i32_751 : i32 to vector<16x16xi32>
    %2388 = arith.addi %1, %2387 : vector<16x16xi32>
    %c16_i32_752 = arith.constant 16 : i32
    %2389 = vector.broadcast %c16_i32_752 : i32 to vector<16x16xi32>
    %2390 = arith.cmpi slt, %2388, %2389 : vector<16x16xi32>
    %2391 = arith.andi %2386, %2390 : vector<16x16xi1>
    %cst_753 = arith.constant 0.000000e+00 : f32
    %2392 = vector.broadcast %cst_753 : f32 to vector<16x16xf32>
    %2393 = arith.select %2391, %2372, %2392 : vector<16x16xi1>, vector<16x16xf32>
    %c16_754 = arith.constant 16 : index
    %2394 = memref.load %arg4[%c16_754] : memref<144xf32, #tpu.memory_space<smem>>
    %2395 = vector.broadcast %2394 : f32 to vector<16x16xf32>
    %2396 = arith.mulf %2395, %2393 : vector<16x16xf32>
    %2397 = arith.addf %2359, %2396 : vector<16x16xf32>
    %c52_755 = arith.constant 52 : index
    %2398 = memref.load %arg4[%c52_755] : memref<144xf32, #tpu.memory_space<smem>>
    %2399 = vector.broadcast %2398 : f32 to vector<16x16xf32>
    %2400 = arith.mulf %2399, %2393 : vector<16x16xf32>
    %2401 = arith.addf %2363, %2400 : vector<16x16xf32>
    %c88_756 = arith.constant 88 : index
    %2402 = memref.load %arg4[%c88_756] : memref<144xf32, #tpu.memory_space<smem>>
    %2403 = vector.broadcast %2402 : f32 to vector<16x16xf32>
    %2404 = arith.mulf %2403, %2393 : vector<16x16xf32>
    %2405 = arith.addf %2367, %2404 : vector<16x16xf32>
    %c124_757 = arith.constant 124 : index
    %2406 = memref.load %arg4[%c124_757] : memref<144xf32, #tpu.memory_space<smem>>
    %2407 = vector.broadcast %2406 : f32 to vector<16x16xf32>
    %2408 = arith.mulf %2407, %2393 : vector<16x16xf32>
    %2409 = arith.addf %2371, %2408 : vector<16x16xf32>
    %c15_i32_758 = arith.constant 15 : i32
    %2410 = tpu.dynamic_rotate %1336 by %c15_i32_758 dim 0 : vector<16x16xf32>, i32 -> vector<16x16xf32>
    %c1_i32_759 = arith.constant 1 : i32
    %2411 = vector.broadcast %c1_i32_759 : i32 to vector<16x16xi32>
    %2412 = arith.addi %0, %2411 : vector<16x16xi32>
    %c0_i32_760 = arith.constant 0 : i32
    %2413 = vector.broadcast %c0_i32_760 : i32 to vector<16x16xi32>
    %2414 = arith.cmpi sge, %2412, %2413 : vector<16x16xi32>
    %c1_i32_761 = arith.constant 1 : i32
    %2415 = vector.broadcast %c1_i32_761 : i32 to vector<16x16xi32>
    %2416 = arith.addi %0, %2415 : vector<16x16xi32>
    %c16_i32_762 = arith.constant 16 : i32
    %2417 = vector.broadcast %c16_i32_762 : i32 to vector<16x16xi32>
    %2418 = arith.cmpi slt, %2416, %2417 : vector<16x16xi32>
    %2419 = arith.andi %2414, %2418 : vector<16x16xi1>
    %c0_i32_763 = arith.constant 0 : i32
    %2420 = vector.broadcast %c0_i32_763 : i32 to vector<16x16xi32>
    %2421 = arith.addi %1, %2420 : vector<16x16xi32>
    %c0_i32_764 = arith.constant 0 : i32
    %2422 = vector.broadcast %c0_i32_764 : i32 to vector<16x16xi32>
    %2423 = arith.cmpi sge, %2421, %2422 : vector<16x16xi32>
    %2424 = arith.andi %2419, %2423 : vector<16x16xi1>
    %c0_i32_765 = arith.constant 0 : i32
    %2425 = vector.broadcast %c0_i32_765 : i32 to vector<16x16xi32>
    %2426 = arith.addi %1, %2425 : vector<16x16xi32>
    %c16_i32_766 = arith.constant 16 : i32
    %2427 = vector.broadcast %c16_i32_766 : i32 to vector<16x16xi32>
    %2428 = arith.cmpi slt, %2426, %2427 : vector<16x16xi32>
    %2429 = arith.andi %2424, %2428 : vector<16x16xi1>
    %cst_767 = arith.constant 0.000000e+00 : f32
    %2430 = vector.broadcast %cst_767 : f32 to vector<16x16xf32>
    %2431 = arith.select %2429, %2410, %2430 : vector<16x16xi1>, vector<16x16xf32>
    %c25_768 = arith.constant 25 : index
    %2432 = memref.load %arg4[%c25_768] : memref<144xf32, #tpu.memory_space<smem>>
    %2433 = vector.broadcast %2432 : f32 to vector<16x16xf32>
    %2434 = arith.mulf %2433, %2431 : vector<16x16xf32>
    %2435 = arith.addf %2397, %2434 : vector<16x16xf32>
    %c61_769 = arith.constant 61 : index
    %2436 = memref.load %arg4[%c61_769] : memref<144xf32, #tpu.memory_space<smem>>
    %2437 = vector.broadcast %2436 : f32 to vector<16x16xf32>
    %2438 = arith.mulf %2437, %2431 : vector<16x16xf32>
    %2439 = arith.addf %2401, %2438 : vector<16x16xf32>
    %c97_770 = arith.constant 97 : index
    %2440 = memref.load %arg4[%c97_770] : memref<144xf32, #tpu.memory_space<smem>>
    %2441 = vector.broadcast %2440 : f32 to vector<16x16xf32>
    %2442 = arith.mulf %2441, %2431 : vector<16x16xf32>
    %2443 = arith.addf %2405, %2442 : vector<16x16xf32>
    %c133_771 = arith.constant 133 : index
    %2444 = memref.load %arg4[%c133_771] : memref<144xf32, #tpu.memory_space<smem>>
    %2445 = vector.broadcast %2444 : f32 to vector<16x16xf32>
    %2446 = arith.mulf %2445, %2431 : vector<16x16xf32>
    %2447 = arith.addf %2409, %2446 : vector<16x16xf32>
    %c15_i32_772 = arith.constant 15 : i32
    %2448 = tpu.dynamic_rotate %1341 by %c15_i32_772 dim 0 : vector<16x16xf32>, i32 -> vector<16x16xf32>
    %c1_i32_773 = arith.constant 1 : i32
    %2449 = vector.broadcast %c1_i32_773 : i32 to vector<16x16xi32>
    %2450 = arith.addi %0, %2449 : vector<16x16xi32>
    %c0_i32_774 = arith.constant 0 : i32
    %2451 = vector.broadcast %c0_i32_774 : i32 to vector<16x16xi32>
    %2452 = arith.cmpi sge, %2450, %2451 : vector<16x16xi32>
    %c1_i32_775 = arith.constant 1 : i32
    %2453 = vector.broadcast %c1_i32_775 : i32 to vector<16x16xi32>
    %2454 = arith.addi %0, %2453 : vector<16x16xi32>
    %c16_i32_776 = arith.constant 16 : i32
    %2455 = vector.broadcast %c16_i32_776 : i32 to vector<16x16xi32>
    %2456 = arith.cmpi slt, %2454, %2455 : vector<16x16xi32>
    %2457 = arith.andi %2452, %2456 : vector<16x16xi1>
    %c0_i32_777 = arith.constant 0 : i32
    %2458 = vector.broadcast %c0_i32_777 : i32 to vector<16x16xi32>
    %2459 = arith.addi %1, %2458 : vector<16x16xi32>
    %c0_i32_778 = arith.constant 0 : i32
    %2460 = vector.broadcast %c0_i32_778 : i32 to vector<16x16xi32>
    %2461 = arith.cmpi sge, %2459, %2460 : vector<16x16xi32>
    %2462 = arith.andi %2457, %2461 : vector<16x16xi1>
    %c0_i32_779 = arith.constant 0 : i32
    %2463 = vector.broadcast %c0_i32_779 : i32 to vector<16x16xi32>
    %2464 = arith.addi %1, %2463 : vector<16x16xi32>
    %c16_i32_780 = arith.constant 16 : i32
    %2465 = vector.broadcast %c16_i32_780 : i32 to vector<16x16xi32>
    %2466 = arith.cmpi slt, %2464, %2465 : vector<16x16xi32>
    %2467 = arith.andi %2462, %2466 : vector<16x16xi1>
    %cst_781 = arith.constant 0.000000e+00 : f32
    %2468 = vector.broadcast %cst_781 : f32 to vector<16x16xf32>
    %2469 = arith.select %2467, %2448, %2468 : vector<16x16xi1>, vector<16x16xf32>
    %c34_782 = arith.constant 34 : index
    %2470 = memref.load %arg4[%c34_782] : memref<144xf32, #tpu.memory_space<smem>>
    %2471 = vector.broadcast %2470 : f32 to vector<16x16xf32>
    %2472 = arith.mulf %2471, %2469 : vector<16x16xf32>
    %2473 = arith.addf %2435, %2472 : vector<16x16xf32>
    %c70_783 = arith.constant 70 : index
    %2474 = memref.load %arg4[%c70_783] : memref<144xf32, #tpu.memory_space<smem>>
    %2475 = vector.broadcast %2474 : f32 to vector<16x16xf32>
    %2476 = arith.mulf %2475, %2469 : vector<16x16xf32>
    %2477 = arith.addf %2439, %2476 : vector<16x16xf32>
    %c106_784 = arith.constant 106 : index
    %2478 = memref.load %arg4[%c106_784] : memref<144xf32, #tpu.memory_space<smem>>
    %2479 = vector.broadcast %2478 : f32 to vector<16x16xf32>
    %2480 = arith.mulf %2479, %2469 : vector<16x16xf32>
    %2481 = arith.addf %2443, %2480 : vector<16x16xf32>
    %c142_785 = arith.constant 142 : index
    %2482 = memref.load %arg4[%c142_785] : memref<144xf32, #tpu.memory_space<smem>>
    %2483 = vector.broadcast %2482 : f32 to vector<16x16xf32>
    %2484 = arith.mulf %2483, %2469 : vector<16x16xf32>
    %2485 = arith.addf %2447, %2484 : vector<16x16xf32>
    %c15_i32_786 = arith.constant 15 : i32
    %2486 = tpu.dynamic_rotate %1326 by %c15_i32_786 dim 0 : vector<16x16xf32>, i32 -> vector<16x16xf32>
    %c15_i32_787 = arith.constant 15 : i32
    %2487 = tpu.dynamic_rotate %2486 by %c15_i32_787 dim 1 : vector<16x16xf32>, i32 -> vector<16x16xf32>
    %c1_i32_788 = arith.constant 1 : i32
    %2488 = vector.broadcast %c1_i32_788 : i32 to vector<16x16xi32>
    %2489 = arith.addi %0, %2488 : vector<16x16xi32>
    %c0_i32_789 = arith.constant 0 : i32
    %2490 = vector.broadcast %c0_i32_789 : i32 to vector<16x16xi32>
    %2491 = arith.cmpi sge, %2489, %2490 : vector<16x16xi32>
    %c1_i32_790 = arith.constant 1 : i32
    %2492 = vector.broadcast %c1_i32_790 : i32 to vector<16x16xi32>
    %2493 = arith.addi %0, %2492 : vector<16x16xi32>
    %c16_i32_791 = arith.constant 16 : i32
    %2494 = vector.broadcast %c16_i32_791 : i32 to vector<16x16xi32>
    %2495 = arith.cmpi slt, %2493, %2494 : vector<16x16xi32>
    %2496 = arith.andi %2491, %2495 : vector<16x16xi1>
    %c1_i32_792 = arith.constant 1 : i32
    %2497 = vector.broadcast %c1_i32_792 : i32 to vector<16x16xi32>
    %2498 = arith.addi %1, %2497 : vector<16x16xi32>
    %c0_i32_793 = arith.constant 0 : i32
    %2499 = vector.broadcast %c0_i32_793 : i32 to vector<16x16xi32>
    %2500 = arith.cmpi sge, %2498, %2499 : vector<16x16xi32>
    %2501 = arith.andi %2496, %2500 : vector<16x16xi1>
    %c1_i32_794 = arith.constant 1 : i32
    %2502 = vector.broadcast %c1_i32_794 : i32 to vector<16x16xi32>
    %2503 = arith.addi %1, %2502 : vector<16x16xi32>
    %c16_i32_795 = arith.constant 16 : i32
    %2504 = vector.broadcast %c16_i32_795 : i32 to vector<16x16xi32>
    %2505 = arith.cmpi slt, %2503, %2504 : vector<16x16xi32>
    %2506 = arith.andi %2501, %2505 : vector<16x16xi1>
    %cst_796 = arith.constant 0.000000e+00 : f32
    %2507 = vector.broadcast %cst_796 : f32 to vector<16x16xf32>
    %2508 = arith.select %2506, %2487, %2507 : vector<16x16xi1>, vector<16x16xf32>
    %c8_797 = arith.constant 8 : index
    %2509 = memref.load %arg4[%c8_797] : memref<144xf32, #tpu.memory_space<smem>>
    %2510 = vector.broadcast %2509 : f32 to vector<16x16xf32>
    %2511 = arith.mulf %2510, %2508 : vector<16x16xf32>
    %2512 = arith.addf %2473, %2511 : vector<16x16xf32>
    %c44_798 = arith.constant 44 : index
    %2513 = memref.load %arg4[%c44_798] : memref<144xf32, #tpu.memory_space<smem>>
    %2514 = vector.broadcast %2513 : f32 to vector<16x16xf32>
    %2515 = arith.mulf %2514, %2508 : vector<16x16xf32>
    %2516 = arith.addf %2477, %2515 : vector<16x16xf32>
    %c80_799 = arith.constant 80 : index
    %2517 = memref.load %arg4[%c80_799] : memref<144xf32, #tpu.memory_space<smem>>
    %2518 = vector.broadcast %2517 : f32 to vector<16x16xf32>
    %2519 = arith.mulf %2518, %2508 : vector<16x16xf32>
    %2520 = arith.addf %2481, %2519 : vector<16x16xf32>
    %c116_800 = arith.constant 116 : index
    %2521 = memref.load %arg4[%c116_800] : memref<144xf32, #tpu.memory_space<smem>>
    %2522 = vector.broadcast %2521 : f32 to vector<16x16xf32>
    %2523 = arith.mulf %2522, %2508 : vector<16x16xf32>
    %2524 = arith.addf %2485, %2523 : vector<16x16xf32>
    %c15_i32_801 = arith.constant 15 : i32
    %2525 = tpu.dynamic_rotate %1331 by %c15_i32_801 dim 0 : vector<16x16xf32>, i32 -> vector<16x16xf32>
    %c15_i32_802 = arith.constant 15 : i32
    %2526 = tpu.dynamic_rotate %2525 by %c15_i32_802 dim 1 : vector<16x16xf32>, i32 -> vector<16x16xf32>
    %c1_i32_803 = arith.constant 1 : i32
    %2527 = vector.broadcast %c1_i32_803 : i32 to vector<16x16xi32>
    %2528 = arith.addi %0, %2527 : vector<16x16xi32>
    %c0_i32_804 = arith.constant 0 : i32
    %2529 = vector.broadcast %c0_i32_804 : i32 to vector<16x16xi32>
    %2530 = arith.cmpi sge, %2528, %2529 : vector<16x16xi32>
    %c1_i32_805 = arith.constant 1 : i32
    %2531 = vector.broadcast %c1_i32_805 : i32 to vector<16x16xi32>
    %2532 = arith.addi %0, %2531 : vector<16x16xi32>
    %c16_i32_806 = arith.constant 16 : i32
    %2533 = vector.broadcast %c16_i32_806 : i32 to vector<16x16xi32>
    %2534 = arith.cmpi slt, %2532, %2533 : vector<16x16xi32>
    %2535 = arith.andi %2530, %2534 : vector<16x16xi1>
    %c1_i32_807 = arith.constant 1 : i32
    %2536 = vector.broadcast %c1_i32_807 : i32 to vector<16x16xi32>
    %2537 = arith.addi %1, %2536 : vector<16x16xi32>
    %c0_i32_808 = arith.constant 0 : i32
    %2538 = vector.broadcast %c0_i32_808 : i32 to vector<16x16xi32>
    %2539 = arith.cmpi sge, %2537, %2538 : vector<16x16xi32>
    %2540 = arith.andi %2535, %2539 : vector<16x16xi1>
    %c1_i32_809 = arith.constant 1 : i32
    %2541 = vector.broadcast %c1_i32_809 : i32 to vector<16x16xi32>
    %2542 = arith.addi %1, %2541 : vector<16x16xi32>
    %c16_i32_810 = arith.constant 16 : i32
    %2543 = vector.broadcast %c16_i32_810 : i32 to vector<16x16xi32>
    %2544 = arith.cmpi slt, %2542, %2543 : vector<16x16xi32>
    %2545 = arith.andi %2540, %2544 : vector<16x16xi1>
    %cst_811 = arith.constant 0.000000e+00 : f32
    %2546 = vector.broadcast %cst_811 : f32 to vector<16x16xf32>
    %2547 = arith.select %2545, %2526, %2546 : vector<16x16xi1>, vector<16x16xf32>
    %c17_812 = arith.constant 17 : index
    %2548 = memref.load %arg4[%c17_812] : memref<144xf32, #tpu.memory_space<smem>>
    %2549 = vector.broadcast %2548 : f32 to vector<16x16xf32>
    %2550 = arith.mulf %2549, %2547 : vector<16x16xf32>
    %2551 = arith.addf %2512, %2550 : vector<16x16xf32>
    %c53_813 = arith.constant 53 : index
    %2552 = memref.load %arg4[%c53_813] : memref<144xf32, #tpu.memory_space<smem>>
    %2553 = vector.broadcast %2552 : f32 to vector<16x16xf32>
    %2554 = arith.mulf %2553, %2547 : vector<16x16xf32>
    %2555 = arith.addf %2516, %2554 : vector<16x16xf32>
    %c89_814 = arith.constant 89 : index
    %2556 = memref.load %arg4[%c89_814] : memref<144xf32, #tpu.memory_space<smem>>
    %2557 = vector.broadcast %2556 : f32 to vector<16x16xf32>
    %2558 = arith.mulf %2557, %2547 : vector<16x16xf32>
    %2559 = arith.addf %2520, %2558 : vector<16x16xf32>
    %c125_815 = arith.constant 125 : index
    %2560 = memref.load %arg4[%c125_815] : memref<144xf32, #tpu.memory_space<smem>>
    %2561 = vector.broadcast %2560 : f32 to vector<16x16xf32>
    %2562 = arith.mulf %2561, %2547 : vector<16x16xf32>
    %2563 = arith.addf %2524, %2562 : vector<16x16xf32>
    %c15_i32_816 = arith.constant 15 : i32
    %2564 = tpu.dynamic_rotate %1336 by %c15_i32_816 dim 0 : vector<16x16xf32>, i32 -> vector<16x16xf32>
    %c15_i32_817 = arith.constant 15 : i32
    %2565 = tpu.dynamic_rotate %2564 by %c15_i32_817 dim 1 : vector<16x16xf32>, i32 -> vector<16x16xf32>
    %c1_i32_818 = arith.constant 1 : i32
    %2566 = vector.broadcast %c1_i32_818 : i32 to vector<16x16xi32>
    %2567 = arith.addi %0, %2566 : vector<16x16xi32>
    %c0_i32_819 = arith.constant 0 : i32
    %2568 = vector.broadcast %c0_i32_819 : i32 to vector<16x16xi32>
    %2569 = arith.cmpi sge, %2567, %2568 : vector<16x16xi32>
    %c1_i32_820 = arith.constant 1 : i32
    %2570 = vector.broadcast %c1_i32_820 : i32 to vector<16x16xi32>
    %2571 = arith.addi %0, %2570 : vector<16x16xi32>
    %c16_i32_821 = arith.constant 16 : i32
    %2572 = vector.broadcast %c16_i32_821 : i32 to vector<16x16xi32>
    %2573 = arith.cmpi slt, %2571, %2572 : vector<16x16xi32>
    %2574 = arith.andi %2569, %2573 : vector<16x16xi1>
    %c1_i32_822 = arith.constant 1 : i32
    %2575 = vector.broadcast %c1_i32_822 : i32 to vector<16x16xi32>
    %2576 = arith.addi %1, %2575 : vector<16x16xi32>
    %c0_i32_823 = arith.constant 0 : i32
    %2577 = vector.broadcast %c0_i32_823 : i32 to vector<16x16xi32>
    %2578 = arith.cmpi sge, %2576, %2577 : vector<16x16xi32>
    %2579 = arith.andi %2574, %2578 : vector<16x16xi1>
    %c1_i32_824 = arith.constant 1 : i32
    %2580 = vector.broadcast %c1_i32_824 : i32 to vector<16x16xi32>
    %2581 = arith.addi %1, %2580 : vector<16x16xi32>
    %c16_i32_825 = arith.constant 16 : i32
    %2582 = vector.broadcast %c16_i32_825 : i32 to vector<16x16xi32>
    %2583 = arith.cmpi slt, %2581, %2582 : vector<16x16xi32>
    %2584 = arith.andi %2579, %2583 : vector<16x16xi1>
    %cst_826 = arith.constant 0.000000e+00 : f32
    %2585 = vector.broadcast %cst_826 : f32 to vector<16x16xf32>
    %2586 = arith.select %2584, %2565, %2585 : vector<16x16xi1>, vector<16x16xf32>
    %c26_827 = arith.constant 26 : index
    %2587 = memref.load %arg4[%c26_827] : memref<144xf32, #tpu.memory_space<smem>>
    %2588 = vector.broadcast %2587 : f32 to vector<16x16xf32>
    %2589 = arith.mulf %2588, %2586 : vector<16x16xf32>
    %2590 = arith.addf %2551, %2589 : vector<16x16xf32>
    %c62_828 = arith.constant 62 : index
    %2591 = memref.load %arg4[%c62_828] : memref<144xf32, #tpu.memory_space<smem>>
    %2592 = vector.broadcast %2591 : f32 to vector<16x16xf32>
    %2593 = arith.mulf %2592, %2586 : vector<16x16xf32>
    %2594 = arith.addf %2555, %2593 : vector<16x16xf32>
    %c98_829 = arith.constant 98 : index
    %2595 = memref.load %arg4[%c98_829] : memref<144xf32, #tpu.memory_space<smem>>
    %2596 = vector.broadcast %2595 : f32 to vector<16x16xf32>
    %2597 = arith.mulf %2596, %2586 : vector<16x16xf32>
    %2598 = arith.addf %2559, %2597 : vector<16x16xf32>
    %c134_830 = arith.constant 134 : index
    %2599 = memref.load %arg4[%c134_830] : memref<144xf32, #tpu.memory_space<smem>>
    %2600 = vector.broadcast %2599 : f32 to vector<16x16xf32>
    %2601 = arith.mulf %2600, %2586 : vector<16x16xf32>
    %2602 = arith.addf %2563, %2601 : vector<16x16xf32>
    %c15_i32_831 = arith.constant 15 : i32
    %2603 = tpu.dynamic_rotate %1341 by %c15_i32_831 dim 0 : vector<16x16xf32>, i32 -> vector<16x16xf32>
    %c15_i32_832 = arith.constant 15 : i32
    %2604 = tpu.dynamic_rotate %2603 by %c15_i32_832 dim 1 : vector<16x16xf32>, i32 -> vector<16x16xf32>
    %c1_i32_833 = arith.constant 1 : i32
    %2605 = vector.broadcast %c1_i32_833 : i32 to vector<16x16xi32>
    %2606 = arith.addi %0, %2605 : vector<16x16xi32>
    %c0_i32_834 = arith.constant 0 : i32
    %2607 = vector.broadcast %c0_i32_834 : i32 to vector<16x16xi32>
    %2608 = arith.cmpi sge, %2606, %2607 : vector<16x16xi32>
    %c1_i32_835 = arith.constant 1 : i32
    %2609 = vector.broadcast %c1_i32_835 : i32 to vector<16x16xi32>
    %2610 = arith.addi %0, %2609 : vector<16x16xi32>
    %c16_i32_836 = arith.constant 16 : i32
    %2611 = vector.broadcast %c16_i32_836 : i32 to vector<16x16xi32>
    %2612 = arith.cmpi slt, %2610, %2611 : vector<16x16xi32>
    %2613 = arith.andi %2608, %2612 : vector<16x16xi1>
    %c1_i32_837 = arith.constant 1 : i32
    %2614 = vector.broadcast %c1_i32_837 : i32 to vector<16x16xi32>
    %2615 = arith.addi %1, %2614 : vector<16x16xi32>
    %c0_i32_838 = arith.constant 0 : i32
    %2616 = vector.broadcast %c0_i32_838 : i32 to vector<16x16xi32>
    %2617 = arith.cmpi sge, %2615, %2616 : vector<16x16xi32>
    %2618 = arith.andi %2613, %2617 : vector<16x16xi1>
    %c1_i32_839 = arith.constant 1 : i32
    %2619 = vector.broadcast %c1_i32_839 : i32 to vector<16x16xi32>
    %2620 = arith.addi %1, %2619 : vector<16x16xi32>
    %c16_i32_840 = arith.constant 16 : i32
    %2621 = vector.broadcast %c16_i32_840 : i32 to vector<16x16xi32>
    %2622 = arith.cmpi slt, %2620, %2621 : vector<16x16xi32>
    %2623 = arith.andi %2618, %2622 : vector<16x16xi1>
    %cst_841 = arith.constant 0.000000e+00 : f32
    %2624 = vector.broadcast %cst_841 : f32 to vector<16x16xf32>
    %2625 = arith.select %2623, %2604, %2624 : vector<16x16xi1>, vector<16x16xf32>
    %c35_842 = arith.constant 35 : index
    %2626 = memref.load %arg4[%c35_842] : memref<144xf32, #tpu.memory_space<smem>>
    %2627 = vector.broadcast %2626 : f32 to vector<16x16xf32>
    %2628 = arith.mulf %2627, %2625 : vector<16x16xf32>
    %2629 = arith.addf %2590, %2628 : vector<16x16xf32>
    %c71_843 = arith.constant 71 : index
    %2630 = memref.load %arg4[%c71_843] : memref<144xf32, #tpu.memory_space<smem>>
    %2631 = vector.broadcast %2630 : f32 to vector<16x16xf32>
    %2632 = arith.mulf %2631, %2625 : vector<16x16xf32>
    %2633 = arith.addf %2594, %2632 : vector<16x16xf32>
    %c107_844 = arith.constant 107 : index
    %2634 = memref.load %arg4[%c107_844] : memref<144xf32, #tpu.memory_space<smem>>
    %2635 = vector.broadcast %2634 : f32 to vector<16x16xf32>
    %2636 = arith.mulf %2635, %2625 : vector<16x16xf32>
    %2637 = arith.addf %2598, %2636 : vector<16x16xf32>
    %c143_845 = arith.constant 143 : index
    %2638 = memref.load %arg4[%c143_845] : memref<144xf32, #tpu.memory_space<smem>>
    %2639 = vector.broadcast %2638 : f32 to vector<16x16xf32>
    %2640 = arith.mulf %2639, %2625 : vector<16x16xf32>
    %2641 = arith.addf %2602, %2640 : vector<16x16xf32>
    %c0_846 = arith.constant 0 : index
    %2642 = memref.load %arg5[%c0_846] : memref<4xf32, #tpu.memory_space<smem>>
    %2643 = vector.broadcast %2642 : f32 to vector<16x16xf32>
    %2644 = arith.addf %2629, %2643 : vector<16x16xf32>
    %c1_847 = arith.constant 1 : index
    %2645 = memref.load %arg5[%c1_847] : memref<4xf32, #tpu.memory_space<smem>>
    %2646 = vector.broadcast %2645 : f32 to vector<16x16xf32>
    %2647 = arith.addf %2633, %2646 : vector<16x16xf32>
    %c2_848 = arith.constant 2 : index
    %2648 = memref.load %arg5[%c2_848] : memref<4xf32, #tpu.memory_space<smem>>
    %2649 = vector.broadcast %2648 : f32 to vector<16x16xf32>
    %2650 = arith.addf %2637, %2649 : vector<16x16xf32>
    %c3_849 = arith.constant 3 : index
    %2651 = memref.load %arg5[%c3_849] : memref<4xf32, #tpu.memory_space<smem>>
    %2652 = vector.broadcast %2651 : f32 to vector<16x16xf32>
    %2653 = arith.addf %2641, %2652 : vector<16x16xf32>
    %2654 = arith.addf %2644, %3 : vector<16x16xf32>
    %cst_850 = arith.constant 0.000000e+00 : f32
    %2655 = vector.broadcast %cst_850 : f32 to vector<16x16xf32>
    %2656 = arith.cmpf ogt, %2654, %2655 : vector<16x16xf32>
    %cst_851 = arith.constant 2.000000e-01 : f32
    %2657 = vector.broadcast %cst_851 : f32 to vector<16x16xf32>
    %2658 = arith.mulf %2657, %2654 : vector<16x16xf32>
    %2659 = arith.select %2656, %2654, %2658 : vector<16x16xi1>, vector<16x16xf32>
    %c0_852 = arith.constant 0 : index
    %c0_853 = arith.constant 0 : index
    %c0_854 = arith.constant 0 : index
    %c0_855 = arith.constant 0 : index
    %2660 = vector.load %arg6[%c0_852, %c0_853, %c0_854, %c0_855] : memref<1x4x16x16xf32, #tpu.memory_space<vmem>>, vector<1x1x16x16xf32>
    %2661 = vector.shape_cast %2660 : vector<1x1x16x16xf32> to vector<16x16xf32>
    %2662 = vector.shape_cast %2659 : vector<16x16xf32> to vector<1x1x16x16xf32>
    tpu.vector_store %arg6[%c0_852, %c0_853, %c0_854, %c0_855], %2662 {strides = array<i32>} : memref<1x4x16x16xf32, #tpu.memory_space<vmem>>, vector<1x1x16x16xf32>,
    %2663 = arith.addf %2647, %5 : vector<16x16xf32>
    %cst_856 = arith.constant 0.000000e+00 : f32
    %2664 = vector.broadcast %cst_856 : f32 to vector<16x16xf32>
    %2665 = arith.cmpf ogt, %2663, %2664 : vector<16x16xf32>
    %cst_857 = arith.constant 2.000000e-01 : f32
    %2666 = vector.broadcast %cst_857 : f32 to vector<16x16xf32>
    %2667 = arith.mulf %2666, %2663 : vector<16x16xf32>
    %2668 = arith.select %2665, %2663, %2667 : vector<16x16xi1>, vector<16x16xf32>
    %c0_858 = arith.constant 0 : index
    %c1_859 = arith.constant 1 : index
    %c0_860 = arith.constant 0 : index
    %c0_861 = arith.constant 0 : index
    %2669 = vector.load %arg6[%c0_858, %c1_859, %c0_860, %c0_861] : memref<1x4x16x16xf32, #tpu.memory_space<vmem>>, vector<1x1x16x16xf32>
    %2670 = vector.shape_cast %2669 : vector<1x1x16x16xf32> to vector<16x16xf32>
    %2671 = vector.shape_cast %2668 : vector<16x16xf32> to vector<1x1x16x16xf32>
    tpu.vector_store %arg6[%c0_858, %c1_859, %c0_860, %c0_861], %2671 {strides = array<i32>} : memref<1x4x16x16xf32, #tpu.memory_space<vmem>>, vector<1x1x16x16xf32>,
    %2672 = arith.addf %2650, %7 : vector<16x16xf32>
    %cst_862 = arith.constant 0.000000e+00 : f32
    %2673 = vector.broadcast %cst_862 : f32 to vector<16x16xf32>
    %2674 = arith.cmpf ogt, %2672, %2673 : vector<16x16xf32>
    %cst_863 = arith.constant 2.000000e-01 : f32
    %2675 = vector.broadcast %cst_863 : f32 to vector<16x16xf32>
    %2676 = arith.mulf %2675, %2672 : vector<16x16xf32>
    %2677 = arith.select %2674, %2672, %2676 : vector<16x16xi1>, vector<16x16xf32>
    %c0_864 = arith.constant 0 : index
    %c2_865 = arith.constant 2 : index
    %c0_866 = arith.constant 0 : index
    %c0_867 = arith.constant 0 : index
    %2678 = vector.load %arg6[%c0_864, %c2_865, %c0_866, %c0_867] : memref<1x4x16x16xf32, #tpu.memory_space<vmem>>, vector<1x1x16x16xf32>
    %2679 = vector.shape_cast %2678 : vector<1x1x16x16xf32> to vector<16x16xf32>
    %2680 = vector.shape_cast %2677 : vector<16x16xf32> to vector<1x1x16x16xf32>
    tpu.vector_store %arg6[%c0_864, %c2_865, %c0_866, %c0_867], %2680 {strides = array<i32>} : memref<1x4x16x16xf32, #tpu.memory_space<vmem>>, vector<1x1x16x16xf32>,
    %2681 = arith.addf %2653, %9 : vector<16x16xf32>
    %cst_868 = arith.constant 0.000000e+00 : f32
    %2682 = vector.broadcast %cst_868 : f32 to vector<16x16xf32>
    %2683 = arith.cmpf ogt, %2681, %2682 : vector<16x16xf32>
    %cst_869 = arith.constant 2.000000e-01 : f32
    %2684 = vector.broadcast %cst_869 : f32 to vector<16x16xf32>
    %2685 = arith.mulf %2684, %2681 : vector<16x16xf32>
    %2686 = arith.select %2683, %2681, %2685 : vector<16x16xi1>, vector<16x16xf32>
    %c0_870 = arith.constant 0 : index
    %c3_871 = arith.constant 3 : index
    %c0_872 = arith.constant 0 : index
    %c0_873 = arith.constant 0 : index
    %2687 = vector.load %arg6[%c0_870, %c3_871, %c0_872, %c0_873] : memref<1x4x16x16xf32, #tpu.memory_space<vmem>>, vector<1x1x16x16xf32>
    %2688 = vector.shape_cast %2687 : vector<1x1x16x16xf32> to vector<16x16xf32>
    %2689 = vector.shape_cast %2686 : vector<16x16xf32> to vector<1x1x16x16xf32>
    tpu.vector_store %arg6[%c0_870, %c3_871, %c0_872, %c0_873], %2689 {strides = array<i32>} : memref<1x4x16x16xf32, #tpu.memory_space<vmem>>, vector<1x1x16x16xf32>,
    return
  }
  func.func @transform_0(%arg0: i32) -> (i32, i32, i32, i32) {
    %c0_i32 = arith.constant 0 : i32
    %c0_i32_0 = arith.constant 0 : i32
    %c0_i32_1 = arith.constant 0 : i32
    %c0_i32_2 = arith.constant 0 : i32
    return %arg0, %c0_i32, %c0_i32_0, %c0_i32_1 : i32, i32, i32, i32
  }
  func.func @transform_1(%arg0: i32) -> i32 {
    %c0_i32 = arith.constant 0 : i32
    %c0_i32_0 = arith.constant 0 : i32
    return %c0_i32 : i32
  }
  func.func @transform_2(%arg0: i32) -> i32 {
    %c0_i32 = arith.constant 0 : i32
    %c0_i32_0 = arith.constant 0 : i32
    return %c0_i32 : i32
  }
  func.func @transform_3(%arg0: i32) -> i32 {
    %c0_i32 = arith.constant 0 : i32
    %c0_i32_0 = arith.constant 0 : i32
    return %c0_i32 : i32
  }
  func.func @transform_4(%arg0: i32) -> i32 {
    %c0_i32 = arith.constant 0 : i32
    %c0_i32_0 = arith.constant 0 : i32
    return %c0_i32 : i32
  }
  func.func @transform_5(%arg0: i32) -> (i32, i32, i32, i32) {
    %c0_i32 = arith.constant 0 : i32
    %c0_i32_0 = arith.constant 0 : i32
    %c0_i32_1 = arith.constant 0 : i32
    %c0_i32_2 = arith.constant 0 : i32
    return %arg0, %c0_i32, %c0_i32_0, %c0_i32_1 : i32, i32, i32, i32
  }
}

</mosaic_0001>

<llo_original>
// kernel: tpu_custom_call.1
$region0: #{tpu_custom_call.1}
  #allocation0 [shape = 'u32[]', space=smem, size = 0x4, offset = 0x4, fixed_abs, tag = 'smem constant byte address 0x4 - core index']
  #allocation1 [shape = 'u32[72,128]{1,0:T(1,128)}', space=vmem, size = 0x9000, scoped, tag = 'internal scratch']
  %s0 = inlined_call_operand.hbm [shape: f32[2,4,16,16], index: 0, kind: input, shape index: {}]
  %s1 = inlined_call_operand.hbm [shape: f32[144], index: 1, kind: input, shape index: {}]
  %s2 = inlined_call_operand.hbm [shape: f32[4], index: 2, kind: input, shape index: {}]
  %s3 = inlined_call_operand.vmem [shape: f32[144], index: 3, kind: input, shape index: {}]
  %s4 = inlined_call_operand.vmem [shape: f32[4], index: 4, kind: input, shape index: {}]
  %s5 = inlined_call_operand.hbm [shape: f32[2,4,16,16], index: 5, kind: output, shape index: {}]
  %s6 = sld [smem:[#allocation0]]
  $region73: #{tpu_custom_call.1} parent=0
    _
  %s8 = ssub.s32 1, %s6
  %s9 = scalar_select 0, %s8, %s6
  $region1: #{tpu_custom_call.1} parent=0
    #allocation2 [shape = 'u8[65536]{0}', space=vmem, size = 0x10000, scoped, tag = 'input window, operand 0']
    #allocation3 [shape = 's32[2]{0}', space=sflag, size = 0x8, scoped, tag = 'scoped memory for tpu_custom_call.1']
    #allocation4 [shape = 's32[2]{0}', space=sflag, size = 0x8, scoped, tag = 'scoped memory for tpu_custom_call.1']
    #allocation5 [shape = 's32[2]{0}', space=sflag, size = 0x8, scoped, tag = 'scoped memory for tpu_custom_call.1']
    #allocation6 [shape = 's32[2]{0}', space=sflag, size = 0x8, scoped, tag = 'scoped memory for tpu_custom_call.1']
    #allocation7 [shape = 'u8[1024]{0}', space=smem, size = 0x400, scoped, tag = 'input window, operand 1, single buffered']
    #allocation8 [shape = 'u8[512]{0}', space=smem, size = 0x200, scoped, tag = 'input window, operand 2, single buffered']
    #allocation9 [shape = 's32[1]{0}', space=sflag, size = 0x4, scoped, tag = 'scoped memory for tpu_custom_call.1']
    #allocation10 [shape = 'u8[1024]{0}', space=smem, size = 0x400, scoped, tag = 'input window, operand 3, single buffered']
    #allocation11 [shape = 'u8[512]{0}', space=smem, size = 0x200, scoped, tag = 'input window, operand 4, single buffered']
    #allocation12 [shape = 's32[1]{0}', space=sflag, size = 0x4, scoped, tag = 'scoped memory for tpu_custom_call.1']
    #allocation13 [shape = 'u8[65536]{0}', space=vmem, size = 0x10000, scoped, tag = 'output window, operand 0']
    %10 = vsyncpa [#allocation3], 0
    %s11 = scalar_lea.sflag [#allocation3], 1
    %12 = vsyncpa %s11, 0
    %13 = vsyncpa [#allocation5], 0
    %14 = vsyncpa [#allocation9], 0
    %15 = vsyncpa [#allocation6], 0
    %16 = vsyncpa [#allocation12], 0
    %17 = vsyncpa [#allocation4], 0
    %s18 = scalar_lea.sflag [#allocation4], 1
    %19 = vsyncpa %s18, 0
    loop: start=0, step=1, limit=4
    $region2: #{tpu_custom_call.1} parent=1 // loop_pre_header
      _
    $region3: #{tpu_custom_call.1} parent=1 // loop_header
      %s21 = sphi 0, %s25
      %p22 = scmp.ge.s32.totalorder %s21, 4
      %s31 = sphi 0, %s33
      %s34 = sphi 0, %s31
      %s35 = sphi 0, %s34
      %s51 = sphi 0, %s35
      %s55 = sphi 0, %s55
      %s57 = sphi 0, %s55
      %s58 = sphi 0, %s57
      %s72 = sphi 0, %s58
      %s76 = sphi 0, %s76
      %s78 = sphi 0, %s76
      %s79 = sphi 0, %s78
      %s93 = sphi 0, %s79
      %s97 = sphi 0, %s97
      %s99 = sphi 0, %s97
      %s100 = sphi 0, %s99
      %s114 = sphi 0, %s100
      %s118 = sphi 0, %s118
      %s120 = sphi 0, %s118
      %s121 = sphi 0, %s120
      %s135 = sphi 0, %s121
      %s141 = sphi 0, %s143
      %s144 = sphi 0, %s141
      %s145 = sphi 0, %s144
      %s161 = sphi 0, %s145
    $region4: #{tpu_custom_call.1} parent=1 // loop_header_branch
      %24 = sbr.rel (%p22) target = $region8
    $region5: #{tpu_custom_call.1} parent=1 // loop_body
      %s26 = ssub.s32 %s21, 1
      %s27 = ssub.s32 %s21, 2
      %s28 = sadd.s32 %s21, 1
      %s29 = ssub.s32 %s21, %s28
      %p30 = scmp.eq.s32.totalorder %s29, 0
      %s32 = sadd.s32 %s31, 1
      %s33 = scalar_select %p30, %s31, %s32
      %p36 = pneg %p30
      %p37 = scmp.eq.s32.totalorder %s21, 1
      %p38 = por %p36, %p37
      %p39 = scmp.ne.s32.totalorder %s31, %s34
      %p40 = scmp.eq.s32.totalorder %s21, 0
      %p41 = por %p39, %p40
      %p42 = scmp.ne.s32.totalorder %s31, %s34
      %p43 = scmp.eq.s32.totalorder %s26, 1
      %p44 = por %p42, %p43
      %p45 = scmp.ne.s32.totalorder %s34, %s35
      %p46 = scmp.eq.s32.totalorder %s26, 0
      %p47 = por %p45, %p46
      %p48 = scmp.ne.s32.totalorder %s34, %s35
      %p49 = scmp.eq.s32.totalorder %s27, 1
      %p50 = por %p48, %p49
      %p52 = scmp.ne.s32.totalorder %s35, %s51
      %p53 = scmp.eq.s32.totalorder %s27, 0
      %p54 = por %p52, %p53
      %s56 = sadd.s32 %s55, 1
      %p59 = scmp.eq.s32.totalorder %s21, 1
      %p60 = scmp.ne.s32.totalorder %s55, %s57
      %p61 = scmp.eq.s32.totalorder %s21, 0
      %p62 = por %p60, %p61
      %p63 = scmp.ne.s32.totalorder %s55, %s57
      %p64 = scmp.eq.s32.totalorder %s26, 1
      %p65 = por %p63, %p64
      %p66 = scmp.ne.s32.totalorder %s57, %s58
      %p67 = scmp.eq.s32.totalorder %s26, 0
      %p68 = por %p66, %p67
      %p69 = scmp.ne.s32.totalorder %s57, %s58
      %p70 = scmp.eq.s32.totalorder %s27, 1
      %p71 = por %p69, %p70
      %p73 = scmp.ne.s32.totalorder %s58, %s72
      %p74 = scmp.eq.s32.totalorder %s27, 0
      %p75 = por %p73, %p74
      %s77 = sadd.s32 %s76, 1
      %p80 = scmp.eq.s32.totalorder %s21, 1
      %p81 = scmp.ne.s32.totalorder %s76, %s78
      %p82 = scmp.eq.s32.totalorder %s21, 0
      %p83 = por %p81, %p82
      %p84 = scmp.ne.s32.totalorder %s76, %s78
      %p85 = scmp.eq.s32.totalorder %s26, 1
      %p86 = por %p84, %p85
      %p87 = scmp.ne.s32.totalorder %s78, %s79
      %p88 = scmp.eq.s32.totalorder %s26, 0
      %p89 = por %p87, %p88
      %p90 = scmp.ne.s32.totalorder %s78, %s79
      %p91 = scmp.eq.s32.totalorder %s27, 1
      %p92 = por %p90, %p91
      %p94 = scmp.ne.s32.totalorder %s79, %s93
      %p95 = scmp.eq.s32.totalorder %s27, 0
      %p96 = por %p94, %p95
      %s98 = sadd.s32 %s97, 1
      %p101 = scmp.eq.s32.totalorder %s21, 1
      %p102 = scmp.ne.s32.totalorder %s97, %s99
      %p103 = scmp.eq.s32.totalorder %s21, 0
      %p104 = por %p102, %p103
      %p105 = scmp.ne.s32.totalorder %s97, %s99
      %p106 = scmp.eq.s32.totalorder %s26, 1
      %p107 = por %p105, %p106
      %p108 = scmp.ne.s32.totalorder %s99, %s100
      %p109 = scmp.eq.s32.totalorder %s26, 0
      %p110 = por %p108, %p109
      %p111 = scmp.ne.s32.totalorder %s99, %s100
      %p112 = scmp.eq.s32.totalorder %s27, 1
      %p113 = por %p111, %p112
      %p115 = scmp.ne.s32.totalorder %s100, %s114
      %p116 = scmp.eq.s32.totalorder %s27, 0
      %p117 = por %p115, %p116
      %s119 = sadd.s32 %s118, 1
      %p122 = scmp.eq.s32.totalorder %s21, 1
      %p123 = scmp.ne.s32.totalorder %s118, %s120
      %p124 = scmp.eq.s32.totalorder %s21, 0
      %p125 = por %p123, %p124
      %p126 = scmp.ne.s32.totalorder %s118, %s120
      %p127 = scmp.eq.s32.totalorder %s26, 1
      %p128 = por %p126, %p127
      %p129 = scmp.ne.s32.totalorder %s120, %s121
      %p130 = scmp.eq.s32.totalorder %s26, 0
      %p131 = por %p129, %p130
      %p132 = scmp.ne.s32.totalorder %s120, %s121
      %p133 = scmp.eq.s32.totalorder %s27, 1
      %p134 = por %p132, %p133
      %p136 = scmp.ne.s32.totalorder %s121, %s135
      %p137 = scmp.eq.s32.totalorder %s27, 0
      %p138 = por %p136, %p137
      %s139 = ssub.s32 %s21, %s28
      %p140 = scmp.eq.s32.totalorder %s139, 0
      %s142 = sadd.s32 %s141, 1
      %s143 = scalar_select %p140, %s141, %s142
      %p146 = pneg %p140
      %p147 = scmp.eq.s32.totalorder %s21, 1
      %p148 = por %p146, %p147
      %p149 = scmp.ne.s32.totalorder %s141, %s144
      %p150 = scmp.eq.s32.totalorder %s21, 0
      %p151 = por %p149, %p150
      %p152 = scmp.ne.s32.totalorder %s141, %s144
      %p153 = scmp.eq.s32.totalorder %s26, 1
      %p154 = por %p152, %p153
      %p155 = scmp.ne.s32.totalorder %s144, %s145
      %p156 = scmp.eq.s32.totalorder %s26, 0
      %p157 = por %p155, %p156
      %p158 = scmp.ne.s32.totalorder %s144, %s145
      %p159 = scmp.eq.s32.totalorder %s27, 1
      %p160 = por %p158, %p159
      %p162 = scmp.ne.s32.totalorder %s145, %s161
      %p163 = scmp.eq.s32.totalorder %s27, 0
      %p164 = por %p162, %p163
      %p165 = scmp.le.s32.totalorder 1, %s21
      %p166 = scmp.lt.s32.totalorder %s21, 3
      %p167 = pnand %p165, %p166
      %p168 = pneg %p167
      // Predicated region
      $region9: #{tpu_custom_call.1} parent=5 // pred_check
        _
      $region10: #{tpu_custom_call.1} parent=5 // pred_check_branch
        %170 = sbr.rel (%p167) target = $region12
      $region11: #{tpu_custom_call.1} parent=5 // pred_region
        %s171 = ssub.s32 %s21, 1
        // Predicated region
        $region13: #{tpu_custom_call.1} parent=11 // pred_check
          %p172 = pneg %p68
        $region14: #{tpu_custom_call.1} parent=11 // pred_check_branch
          %174 = sbr.rel (%p172) target = $region16
        $region15: #{tpu_custom_call.1} parent=11 // pred_region
          %176 = vsyncadd [#allocation5], 0
          %s178 = sshll.u32 %s1, 4
          %s179 = int_to_ptr.hbm [resolvable:$true] %s178
          %181 = dma.hbm_to_smem %s179, 32, [#allocation7], [#allocation5]
        $region16: #{tpu_custom_call.1} parent=11 // pred_fallthru
          _
        // Predicated region
        $region17: #{tpu_custom_call.1} parent=11 // pred_check
          %p182 = pneg %p89
        $region18: #{tpu_custom_call.1} parent=11 // pred_check_branch
          %184 = sbr.rel (%p182) target = $region20
        $region19: #{tpu_custom_call.1} parent=11 // pred_region
          %186 = vsyncadd [#allocation9], 0
          %s188 = sshll.u32 %s2, 4
          %s189 = int_to_ptr.hbm [resolvable:$true] %s188
          %191 = dma.hbm_to_smem %s189, 16, [#allocation8], [#allocation9]
        $region20: #{tpu_custom_call.1} parent=11 // pred_fallthru
          _
        // Predicated region
        $region21: #{tpu_custom_call.1} parent=11 // pred_check
          %p192 = pneg %p110
        $region22: #{tpu_custom_call.1} parent=11 // pred_check_branch
          %194 = sbr.rel (%p192) target = $region24
        $region23: #{tpu_custom_call.1} parent=11 // pred_region
          %196 = vsyncadd [#allocation6], 0
          %s198 = sshll.u32 %s3, 4
          %s199 = int_to_ptr.vmem [resolvable:$true] %s198
          %201 = dma.vmem_to_smem %s199, 32, [#allocation10], [#allocation6]
        $region24: #{tpu_custom_call.1} parent=11 // pred_fallthru
          _
        // Predicated region
        $region25: #{tpu_custom_call.1} parent=11 // pred_check
          %p202 = pneg %p131
        $region26: #{tpu_custom_call.1} parent=11 // pred_check_branch
          %204 = sbr.rel (%p202) target = $region28
        $region27: #{tpu_custom_call.1} parent=11 // pred_region
          %206 = vsyncadd [#allocation12], 0
          %s208 = sshll.u32 %s4, 4
          %s209 = int_to_ptr.vmem [resolvable:$true] %s208
          %211 = dma.vmem_to_smem %s209, 16, [#allocation11], [#allocation12]
        $region28: #{tpu_custom_call.1} parent=11 // pred_fallthru
          _
      $region12: #{tpu_custom_call.1} parent=5 // pred_fallthru
        _
      %p212 = scmp.lt.s32.totalorder %s21, 2
      // Predicated region
      $region29: #{tpu_custom_call.1} parent=5 // pred_check
        %p213 = pneg %p212
      $region30: #{tpu_custom_call.1} parent=5 // pred_check_branch
        %215 = sbr.rel (%p213) target = $region32
      $region31: #{tpu_custom_call.1} parent=5 // pred_region
        // Predicated region
        $region33: #{tpu_custom_call.1} parent=31 // pred_check
          %p216 = pneg %p41
        $region34: #{tpu_custom_call.1} parent=31 // pred_check_branch
          %218 = sbr.rel (%p216) target = $region36
        $region35: #{tpu_custom_call.1} parent=31 // pred_region
          %s219 = sand.u32 %s31, 1
          %s220 = scalar_lea.sflag [#allocation3], %s219
          %s221 = sand.u32 %s31, 1
          %s222 = smul.addr %s221, 64
          %s223 = scalar_lea.vmem [#allocation2], %s222
          %225 = vsyncadd %s220, 0
          %s226 = smul.addr %s21, 8
          %s227 = smul.addr %s226, 8
          %s228 = scalar_lea.hbm %s0, %s227
          %s229 = sshll.u32 %s228, 4
          %s230 = int_to_ptr.hbm [resolvable:$true] %s229
          %s231 = sshll.u32 %s223, 4
          %s232 = int_to_ptr.vmem [resolvable:$true] %s231
          %237 = dma.hbm_to_vmem [thread:$0]  %s230, 1024, %s232, %s220, 128, 128, 8
        $region36: #{tpu_custom_call.1} parent=31 // pred_fallthru
          _
      $region32: #{tpu_custom_call.1} parent=5 // pred_fallthru
        _
      %p238 = scmp.le.s32.totalorder 1, %s21
      %p239 = scmp.lt.s32.totalorder %s21, 3
      %p240 = pnand %p238, %p239
      %p241 = pneg %p240
      // Predicated region
      $region37: #{tpu_custom_call.1} parent=5 // pred_check
        _
      $region38: #{tpu_custom_call.1} parent=5 // pred_check_branch
        %243 = sbr.rel (%p240) target = $region40
      $region39: #{tpu_custom_call.1} parent=5 // pred_region
        %s244 = ssub.s32 %s21, 1
        %s245 = sand.u32 %s34, 1
        %s246 = scalar_lea.sflag [#allocation3], %s245
        %s247 = sand.u32 %s34, 1
        %s248 = smul.addr %s247, 64
        %s249 = scalar_lea.vmem [#allocation2], %s248
        // Predicated region
        $region41: #{tpu_custom_call.1} parent=39 // pred_check
          %p250 = pneg %p47
        $region42: #{tpu_custom_call.1} parent=39 // pred_check_branch
          %252 = sbr.rel (%p250) target = $region44
        $region43: #{tpu_custom_call.1} parent=39 // pred_region
          %254 = dma.done %s246, 1024
        $region44: #{tpu_custom_call.1} parent=39 // pred_fallthru
          _
        // Predicated region
        $region45: #{tpu_custom_call.1} parent=39 // pred_check
          %p255 = pneg %p68
        $region46: #{tpu_custom_call.1} parent=39 // pred_check_branch
          %257 = sbr.rel (%p255) target = $region48
        $region47: #{tpu_custom_call.1} parent=39 // pred_region
          %259 = dma.done [#allocation5], 32
        $region48: #{tpu_custom_call.1} parent=39 // pred_fallthru
          _
        // Predicated region
        $region49: #{tpu_custom_call.1} parent=39 // pred_check
          %p260 = pneg %p89
        $region50: #{tpu_custom_call.1} parent=39 // pred_check_branch
          %262 = sbr.rel (%p260) target = $region52
        $region51: #{tpu_custom_call.1} parent=39 // pred_region
          %264 = dma.done [#allocation9], 16
        $region52: #{tpu_custom_call.1} parent=39 // pred_fallthru
          _
        // Predicated region
        $region53: #{tpu_custom_call.1} parent=39 // pred_check
          %p265 = pneg %p110
        $region54: #{tpu_custom_call.1} parent=39 // pred_check_branch
          %267 = sbr.rel (%p265) target = $region56
        $region55: #{tpu_custom_call.1} parent=39 // pred_region
          %269 = dma.done [#allocation6], 32
        $region56: #{tpu_custom_call.1} parent=39 // pred_fallthru
          _
        // Predicated region
        $region57: #{tpu_custom_call.1} parent=39 // pred_check
          %p270 = pneg %p131
        $region58: #{tpu_custom_call.1} parent=39 // pred_check_branch
          %272 = sbr.rel (%p270) target = $region60
        $region59: #{tpu_custom_call.1} parent=39 // pred_region
          %274 = dma.done [#allocation12], 16
        $region60: #{tpu_custom_call.1} parent=39 // pred_fallthru
          _
        %275 = sfence
        %s276 = sand.u32 %s34, 1
        %s277 = scalar_lea.sflag [#allocation3], %s276
        %s278 = sand.u32 %s34, 1
        %s279 = smul.addr %s278, 64
        %s280 = scalar_lea.vmem [#allocation2], %s279
        %p281 = pneg %p47
        %p282 = pneg %p44
        %p283 = pneg %p68
        %p284 = pneg %p65
        %p285 = pneg %p89
        %p286 = pneg %p86
        %p287 = pneg %p110
        %p288 = pneg %p107
        %p289 = pneg %p131
        %p290 = pneg %p128
        %p291 = pneg %p157
        %p292 = pneg %p154
        %s293 = sand.u32 %s144, 1
        %s294 = scalar_lea.sflag [#allocation4], %s293
        %s295 = sand.u32 %s144, 1
        %s296 = smul.addr %s295, 64
        %s297 = scalar_lea.vmem [#allocation13], %s296
        %v298 = vlaneseq
        %v299 = vshrl.u32 %v298, 7
        %v300 = vadd.s32 %v299, 8
        %v301 = vlaneseq
        %v302 = vand.u32 %v301, 127
        %v303 = vld [vmem:[%s249] sm:$0xff]
        %v304 = vld [vmem:[%s249 + $0x8] sm:$0xff]
        %s305 = scalar_lea.vmem %s249, 16 [#allocation2]
        %v306 = vld [vmem:[%s305] sm:$0xff]
        %v307 = vld [vmem:[%s305 + $0x8] sm:$0xff]
        %s308 = scalar_lea.vmem %s249, 32 [#allocation2]
        %v309 = vld [vmem:[%s308] sm:$0xff]
        %v310 = vld [vmem:[%s308 + $0x8] sm:$0xff]
        %s311 = scalar_lea.vmem %s249, 48 [#allocation2]
        %v312 = vld [vmem:[%s311] sm:$0xff]
        %v313 = vld [vmem:[%s311 + $0x8] sm:$0xff]
        %v314 = vrot.slane %v303, 7
        %v315 = vrot.slane %v304, 7
        %vm316 = vcmp.lt.s32.totalorder %v299, 1
        %v317 = vsel %vm316, %v314, %v315
        %v318 = vsel %vm316, %v315, %v314
        %vm319 = vcmask 1047680
        %320 = vrot.lane.b32.xlu0 %v318, 16
        %v321 = vpop.permute.xlu0 %320
        %v322 = vsel %vm319, %v321, %v318
        %323 = vrot.lane.b32.xlu0 %v317, 16
        %v324 = vpop.permute.xlu0 %323
        %v325 = vsel %vm319, %v324, %v317
        %326 = vrot.lane.b32.xlu0 %v322, 16
        %v327 = vpop.permute.xlu0 %326
        %328 = vrot.lane.b32.xlu0 %v325, 16
        %v329 = vpop.permute.xlu0 %328
        %v330 = vsel %vm319, %v327, %v318
        %v331 = vsel %vm319, %v329, %v317
        %v332 = vadd.s32 %v299, 4294967295
        %v333 = vadd.s32 %v300, 4294967295
        %vm334 = vcmp.ge.s32.totalorder %v332, 0
        %vm335 = vcmp.ge.s32.totalorder %v333, 0
        %vm336 = vcmp.lt.s32.totalorder %v332, 16
        %vm337 = vcmp.lt.s32.totalorder %v333, 16
        %vm338 = vmand %vm334, %vm336
        %vm339 = vmand %vm335, %vm337
        %v340 = vadd.s32 %v302, 4294967295
        %vm341 = vcmp.ge.s32.totalorder %v340, 0
        %vm342 = vmand %vm338, %vm341
        %vm343 = vmand %vm339, %vm341
        %vm344 = vcmp.lt.s32.totalorder %v340, 16
        %vm345 = vmand %vm342, %vm344
        %vm346 = vmand %vm343, %vm344
        %349 = vrot.lane.b32.xlu0 %v330, 113
        %v350 = vpop.permute.xlu0 %349
        %351 = vrot.lane.b32.xlu0 %v331, 113
        %v352 = vpop.permute.xlu0 %351
        %v355 = vsel %vm345, %v350, 0.0
        %v356 = vsel %vm346, %v352, 0.0
        %s357 = sld [smem:[#allocation7]]
        %v358 = vstv %s357
        %v359 = vmul.f32 %v358, %v355
        %v360 = vmul.f32 %v358, %v356
        %v361 = vadd.f32 %v359, 0.0
        %v362 = vadd.f32 %v360, 0.0
        %s363 = sld [smem:[#allocation7 + $0x24]]
        %v364 = vstv %s363
        %v365 = vmul.f32 %v364, %v355
        %v366 = vmul.f32 %v364, %v356
        %v367 = vadd.f32 %v365, 0.0
        %v368 = vadd.f32 %v366, 0.0
        %s369 = sld [smem:[#allocation7 + $0x48]]
        %v370 = vstv %s369
        %v371 = vmul.f32 %v370, %v355
        %v372 = vmul.f32 %v370, %v356
        %v373 = vadd.f32 %v371, 0.0
        %v374 = vadd.f32 %v372, 0.0
        %s375 = sld [smem:[#allocation7 + $0x6c]]
        %v376 = vstv %s375
        %v377 = vmul.f32 %v376, %v355
        %v378 = vmul.f32 %v376, %v356
        %v379 = vadd.f32 %v377, 0.0
        %v380 = vadd.f32 %v378, 0.0
        %v381 = vrot.slane %v306, 7
        %v382 = vrot.slane %v307, 7
        %v383 = vsel %vm316, %v381, %v382
        %v384 = vsel %vm316, %v382, %v381
        %385 = vrot.lane.b32.xlu0 %v384, 16
        %v386 = vpop.permute.xlu0 %385
        %v387 = vsel %vm319, %v386, %v384
        %388 = vrot.lane.b32.xlu0 %v383, 16
        %v389 = vpop.permute.xlu0 %388
        %v390 = vsel %vm319, %v389, %v383
        %391 = vrot.lane.b32.xlu0 %v387, 16
        %v392 = vpop.permute.xlu0 %391
        %393 = vrot.lane.b32.xlu0 %v390, 16
        %v394 = vpop.permute.xlu0 %393
        %v395 = vsel %vm319, %v392, %v384
        %v396 = vsel %vm319, %v394, %v383
        %399 = vrot.lane.b32.xlu0 %v395, 113
        %v400 = vpop.permute.xlu0 %399
        %401 = vrot.lane.b32.xlu0 %v396, 113
        %v402 = vpop.permute.xlu0 %401
        %v405 = vsel %vm345, %v400, 0.0
        %v406 = vsel %vm346, %v402, 0.0
        %s407 = sld [smem:[#allocation7 + $0x9]]
        %v408 = vstv %s407
        %v409 = vmul.f32 %v408, %v405
        %v410 = vmul.f32 %v408, %v406
        %v411 = vadd.f32 %v361, %v409
        %v412 = vadd.f32 %v362, %v410
        %s413 = sld [smem:[#allocation7 + $0x2d]]
        %v414 = vstv %s413
        %v415 = vmul.f32 %v414, %v405
        %v416 = vmul.f32 %v414, %v406
        %v417 = vadd.f32 %v367, %v415
        %v418 = vadd.f32 %v368, %v416
        %s419 = sld [smem:[#allocation7 + $0x51]]
        %v420 = vstv %s419
        %v421 = vmul.f32 %v420, %v405
        %v422 = vmul.f32 %v420, %v406
        %v423 = vadd.f32 %v373, %v421
        %v424 = vadd.f32 %v374, %v422
        %s425 = sld [smem:[#allocation7 + $0x75]]
        %v426 = vstv %s425
        %v427 = vmul.f32 %v426, %v405
        %v428 = vmul.f32 %v426, %v406
        %v429 = vadd.f32 %v379, %v427
        %v430 = vadd.f32 %v380, %v428
        %v431 = vrot.slane %v309, 7
        %v432 = vrot.slane %v310, 7
        %v433 = vsel %vm316, %v431, %v432
        %v434 = vsel %vm316, %v432, %v431
        %435 = vrot.lane.b32.xlu0 %v434, 16
        %v436 = vpop.permute.xlu0 %435
        %v437 = vsel %vm319, %v436, %v434
        %438 = vrot.lane.b32.xlu0 %v433, 16
        %v439 = vpop.permute.xlu0 %438
        %v440 = vsel %vm319, %v439, %v433
        %441 = vrot.lane.b32.xlu0 %v437, 16
        %v442 = vpop.permute.xlu0 %441
        %443 = vrot.lane.b32.xlu0 %v440, 16
        %v444 = vpop.permute.xlu0 %443
        %v445 = vsel %vm319, %v442, %v434
        %v446 = vsel %vm319, %v444, %v433
        %449 = vrot.lane.b32.xlu0 %v445, 113
        %v450 = vpop.permute.xlu0 %449
        %451 = vrot.lane.b32.xlu0 %v446, 113
        %v452 = vpop.permute.xlu0 %451
        %v455 = vsel %vm345, %v450, 0.0
        %v456 = vsel %vm346, %v452, 0.0
        %s457 = sld [smem:[#allocation7 + $0x12]]
        %v458 = vstv %s457
        %v459 = vmul.f32 %v458, %v455
        %v460 = vmul.f32 %v458, %v456
        %v461 = vadd.f32 %v411, %v459
        %v462 = vadd.f32 %v412, %v460
        %s463 = sld [smem:[#allocation7 + $0x36]]
        %v464 = vstv %s463
        %v465 = vmul.f32 %v464, %v455
        %v466 = vmul.f32 %v464, %v456
        %v467 = vadd.f32 %v417, %v465
        %v468 = vadd.f32 %v418, %v466
        %s469 = sld [smem:[#allocation7 + $0x5a]]
        %v470 = vstv %s469
        %v471 = vmul.f32 %v470, %v455
        %v472 = vmul.f32 %v470, %v456
        %v473 = vadd.f32 %v423, %v471
        %v474 = vadd.f32 %v424, %v472
        %s475 = sld [smem:[#allocation7 + $0x7e]]
        %v476 = vstv %s475
        %v477 = vmul.f32 %v476, %v455
        %v478 = vmul.f32 %v476, %v456
        %v479 = vadd.f32 %v429, %v477
        %v480 = vadd.f32 %v430, %v478
        %v481 = vrot.slane %v312, 7
        %v482 = vrot.slane %v313, 7
        %v483 = vsel %vm316, %v481, %v482
        %v484 = vsel %vm316, %v482, %v481
        %485 = vrot.lane.b32.xlu0 %v484, 16
        %v486 = vpop.permute.xlu0 %485
        %v487 = vsel %vm319, %v486, %v484
        %488 = vrot.lane.b32.xlu0 %v483, 16
        %v489 = vpop.permute.xlu0 %488
        %v490 = vsel %vm319, %v489, %v483
        %491 = vrot.lane.b32.xlu0 %v487, 16
        %v492 = vpop.permute.xlu0 %491
        %493 = vrot.lane.b32.xlu0 %v490, 16
        %v494 = vpop.permute.xlu0 %493
        %v495 = vsel %vm319, %v492, %v484
        %v496 = vsel %vm319, %v494, %v483
        %499 = vrot.lane.b32.xlu0 %v495, 113
        %v500 = vpop.permute.xlu0 %499
        %501 = vrot.lane.b32.xlu0 %v496, 113
        %v502 = vpop.permute.xlu0 %501
        %v505 = vsel %vm345, %v500, 0.0
        %v506 = vsel %vm346, %v502, 0.0
        %s507 = sld [smem:[#allocation7 + $0x1b]]
        %v508 = vstv %s507
        %v509 = vmul.f32 %v508, %v505
        %v510 = vmul.f32 %v508, %v506
        %v511 = vadd.f32 %v461, %v509
        %v512 = vadd.f32 %v462, %v510
        %s513 = sld [smem:[#allocation7 + $0x3f]]
        %v514 = vstv %s513
        %v515 = vmul.f32 %v514, %v505
        %v516 = vmul.f32 %v514, %v506
        %v517 = vadd.f32 %v467, %v515
        %v518 = vadd.f32 %v468, %v516
        %s519 = sld [smem:[#allocation7 + $0x63]]
        %v520 = vstv %s519
        %v521 = vmul.f32 %v520, %v505
        %v522 = vmul.f32 %v520, %v506
        %v523 = vadd.f32 %v473, %v521
        %v524 = vadd.f32 %v474, %v522
        %s525 = sld [smem:[#allocation7 + $0x87]]
        %v526 = vstv %s525
        %v527 = vmul.f32 %v526, %v505
        %v528 = vmul.f32 %v526, %v506
        %v529 = vadd.f32 %v479, %v527
        %v530 = vadd.f32 %v480, %v528
        %vm531 = vcmp.ge.s32.totalorder %v302, 0
        %vm532 = vmand %vm338, %vm531
        %vm533 = vmand %vm339, %vm531
        %vm534 = vcmp.lt.s32.totalorder %v302, 16
        %vm535 = vmand %vm532, %vm534
        %vm536 = vmand %vm533, %vm534
        %v537 = vsel %vm535, %v318, 0.0
        %v538 = vsel %vm536, %v317, 0.0
        %s539 = sld [smem:[#allocation7 + $0x1]]
        %v540 = vstv %s539
        %v541 = vmul.f32 %v540, %v537
        %v542 = vmul.f32 %v540, %v538
        %v543 = vadd.f32 %v511, %v541
        %v544 = vadd.f32 %v512, %v542
        %s545 = sld [smem:[#allocation7 + $0x25]]
        %v546 = vstv %s545
        %v547 = vmul.f32 %v546, %v537
        %v548 = vmul.f32 %v546, %v538
        %v549 = vadd.f32 %v517, %v547
        %v550 = vadd.f32 %v518, %v548
        %s551 = sld [smem:[#allocation7 + $0x49]]
        %v552 = vstv %s551
        %v553 = vmul.f32 %v552, %v537
        %v554 = vmul.f32 %v552, %v538
        %v555 = vadd.f32 %v523, %v553
        %v556 = vadd.f32 %v524, %v554
        %s557 = sld [smem:[#allocation7 + $0x6d]]
        %v558 = vstv %s557
        %v559 = vmul.f32 %v558, %v537
        %v560 = vmul.f32 %v558, %v538
        %v561 = vadd.f32 %v529, %v559
        %v562 = vadd.f32 %v530, %v560
        %v563 = vsel %vm535, %v384, 0.0
        %v564 = vsel %vm536, %v383, 0.0
        %s565 = sld [smem:[#allocation7 + $0xa]]
        %v566 = vstv %s565
        %v567 = vmul.f32 %v566, %v563
        %v568 = vmul.f32 %v566, %v564
        %v569 = vadd.f32 %v543, %v567
        %v570 = vadd.f32 %v544, %v568
        %s571 = sld [smem:[#allocation7 + $0x2e]]
        %v572 = vstv %s571
        %v573 = vmul.f32 %v572, %v563
        %v574 = vmul.f32 %v572, %v564
        %v575 = vadd.f32 %v549, %v573
        %v576 = vadd.f32 %v550, %v574
        %s577 = sld [smem:[#allocation7 + $0x52]]
        %v578 = vstv %s577
        %v579 = vmul.f32 %v578, %v563
        %v580 = vmul.f32 %v578, %v564
        %v581 = vadd.f32 %v555, %v579
        %v582 = vadd.f32 %v556, %v580
        %s583 = sld [smem:[#allocation7 + $0x76]]
        %v584 = vstv %s583
        %v585 = vmul.f32 %v584, %v563
        %v586 = vmul.f32 %v584, %v564
        %v587 = vadd.f32 %v561, %v585
        %v588 = vadd.f32 %v562, %v586
        %v589 = vsel %vm535, %v434, 0.0
        %v590 = vsel %vm536, %v433, 0.0
        %s591 = sld [smem:[#allocation7 + $0x13]]
        %v592 = vstv %s591
        %v593 = vmul.f32 %v592, %v589
        %v594 = vmul.f32 %v592, %v590
        %v595 = vadd.f32 %v569, %v593
        %v596 = vadd.f32 %v570, %v594
        %s597 = sld [smem:[#allocation7 + $0x37]]
        %v598 = vstv %s597
        %v599 = vmul.f32 %v598, %v589
        %v600 = vmul.f32 %v598, %v590
        %v601 = vadd.f32 %v575, %v599
        %v602 = vadd.f32 %v576, %v600
        %s603 = sld [smem:[#allocation7 + $0x5b]]
        %v604 = vstv %s603
        %v605 = vmul.f32 %v604, %v589
        %v606 = vmul.f32 %v604, %v590
        %v607 = vadd.f32 %v581, %v605
        %v608 = vadd.f32 %v582, %v606
        %s609 = sld [smem:[#allocation7 + $0x7f]]
        %v610 = vstv %s609
        %v611 = vmul.f32 %v610, %v589
        %v612 = vmul.f32 %v610, %v590
        %v613 = vadd.f32 %v587, %v611
        %v614 = vadd.f32 %v588, %v612
        %v615 = vsel %vm535, %v484, 0.0
        %v616 = vsel %vm536, %v483, 0.0
        %s617 = sld [smem:[#allocation7 + $0x1c]]
        %v618 = vstv %s617
        %v619 = vmul.f32 %v618, %v615
        %v620 = vmul.f32 %v618, %v616
        %v621 = vadd.f32 %v595, %v619
        %v622 = vadd.f32 %v596, %v620
        %s623 = sld [smem:[#allocation7 + $0x40]]
        %v624 = vstv %s623
        %v625 = vmul.f32 %v624, %v615
        %v626 = vmul.f32 %v624, %v616
        %v627 = vadd.f32 %v601, %v625
        %v628 = vadd.f32 %v602, %v626
        %s629 = sld [smem:[#allocation7 + $0x64]]
        %v630 = vstv %s629
        %v631 = vmul.f32 %v630, %v615
        %v632 = vmul.f32 %v630, %v616
        %v633 = vadd.f32 %v607, %v631
        %v634 = vadd.f32 %v608, %v632
        %s635 = sld [smem:[#allocation7 + $0x88]]
        %v636 = vstv %s635
        %v637 = vmul.f32 %v636, %v615
        %v638 = vmul.f32 %v636, %v616
        %v639 = vadd.f32 %v613, %v637
        %v640 = vadd.f32 %v614, %v638
        %v641 = vadd.s32 %v302, 1
        %vm642 = vcmp.ge.s32.totalorder %v641, 0
        %vm643 = vmand %vm338, %vm642
        %vm644 = vmand %vm339, %vm642
        %vm645 = vcmp.lt.s32.totalorder %v641, 16
        %vm646 = vmand %vm643, %vm645
        %vm647 = vmand %vm644, %vm645
        %648 = vrot.lane.b32.xlu0 %v330, 127
        %v649 = vpop.permute.xlu0 %648
        %650 = vrot.lane.b32.xlu0 %v331, 127
        %v651 = vpop.permute.xlu0 %650
        %v654 = vsel %vm646, %v649, 0.0
        %v655 = vsel %vm647, %v651, 0.0
        %s656 = sld [smem:[#allocation7 + $0x2]]
        %v657 = vstv %s656
        %v658 = vmul.f32 %v657, %v654
        %v659 = vmul.f32 %v657, %v655
        %v660 = vadd.f32 %v621, %v658
        %v661 = vadd.f32 %v622, %v659
        %s662 = sld [smem:[#allocation7 + $0x26]]
        %v663 = vstv %s662
        %v664 = vmul.f32 %v663, %v654
        %v665 = vmul.f32 %v663, %v655
        %v666 = vadd.f32 %v627, %v664
        %v667 = vadd.f32 %v628, %v665
        %s668 = sld [smem:[#allocation7 + $0x4a]]
        %v669 = vstv %s668
        %v670 = vmul.f32 %v669, %v654
        %v671 = vmul.f32 %v669, %v655
        %v672 = vadd.f32 %v633, %v670
        %v673 = vadd.f32 %v634, %v671
        %s674 = sld [smem:[#allocation7 + $0x6e]]
        %v675 = vstv %s674
        %v676 = vmul.f32 %v675, %v654
        %v677 = vmul.f32 %v675, %v655
        %v678 = vadd.f32 %v639, %v676
        %v679 = vadd.f32 %v640, %v677
        %680 = vrot.lane.b32.xlu0 %v395, 127
        %v681 = vpop.permute.xlu0 %680
        %682 = vrot.lane.b32.xlu0 %v396, 127
        %v683 = vpop.permute.xlu0 %682
        %v686 = vsel %vm646, %v681, 0.0
        %v687 = vsel %vm647, %v683, 0.0
        %s688 = sld [smem:[#allocation7 + $0xb]]
        %v689 = vstv %s688
        %v690 = vmul.f32 %v689, %v686
        %v691 = vmul.f32 %v689, %v687
        %v692 = vadd.f32 %v660, %v690
        %v693 = vadd.f32 %v661, %v691
        %s694 = sld [smem:[#allocation7 + $0x2f]]
        %v695 = vstv %s694
        %v696 = vmul.f32 %v695, %v686
        %v697 = vmul.f32 %v695, %v687
        %v698 = vadd.f32 %v666, %v696
        %v699 = vadd.f32 %v667, %v697
        %s700 = sld [smem:[#allocation7 + $0x53]]
        %v701 = vstv %s700
        %v702 = vmul.f32 %v701, %v686
        %v703 = vmul.f32 %v701, %v687
        %v704 = vadd.f32 %v672, %v702
        %v705 = vadd.f32 %v673, %v703
        %s706 = sld [smem:[#allocation7 + $0x77]]
        %v707 = vstv %s706
        %v708 = vmul.f32 %v707, %v686
        %v709 = vmul.f32 %v707, %v687
        %v710 = vadd.f32 %v678, %v708
        %v711 = vadd.f32 %v679, %v709
        %712 = vrot.lane.b32.xlu0 %v445, 127
        %v713 = vpop.permute.xlu0 %712
        %714 = vrot.lane.b32.xlu0 %v446, 127
        %v715 = vpop.permute.xlu0 %714
        %v718 = vsel %vm646, %v713, 0.0
        %v719 = vsel %vm647, %v715, 0.0
        %s720 = sld [smem:[#allocation7 + $0x14]]
        %v721 = vstv %s720
        %v722 = vmul.f32 %v721, %v718
        %v723 = vmul.f32 %v721, %v719
        %v724 = vadd.f32 %v692, %v722
        %v725 = vadd.f32 %v693, %v723
        %s726 = sld [smem:[#allocation7 + $0x38]]
        %v727 = vstv %s726
        %v728 = vmul.f32 %v727, %v718
        %v729 = vmul.f32 %v727, %v719
        %v730 = vadd.f32 %v698, %v728
        %v731 = vadd.f32 %v699, %v729
        %s732 = sld [smem:[#allocation7 + $0x5c]]
        %v733 = vstv %s732
        %v734 = vmul.f32 %v733, %v718
        %v735 = vmul.f32 %v733, %v719
        %v736 = vadd.f32 %v704, %v734
        %v737 = vadd.f32 %v705, %v735
        %s738 = sld [smem:[#allocation7 + $0x80]]
        %v739 = vstv %s738
        %v740 = vmul.f32 %v739, %v718
        %v741 = vmul.f32 %v739, %v719
        %v742 = vadd.f32 %v710, %v740
        %v743 = vadd.f32 %v711, %v741
        %744 = vrot.lane.b32.xlu0 %v495, 127
        %v745 = vpop.permute.xlu0 %744
        %746 = vrot.lane.b32.xlu0 %v496, 127
        %v747 = vpop.permute.xlu0 %746
        %v750 = vsel %vm646, %v745, 0.0
        %v751 = vsel %vm647, %v747, 0.0
        %s752 = sld [smem:[#allocation7 + $0x1d]]
        %v753 = vstv %s752
        %v754 = vmul.f32 %v753, %v750
        %v755 = vmul.f32 %v753, %v751
        %v756 = vadd.f32 %v724, %v754
        %v757 = vadd.f32 %v725, %v755
        %s758 = sld [smem:[#allocation7 + $0x41]]
        %v759 = vstv %s758
        %v760 = vmul.f32 %v759, %v750
        %v761 = vmul.f32 %v759, %v751
        %v762 = vadd.f32 %v730, %v760
        %v763 = vadd.f32 %v731, %v761
        %s764 = sld [smem:[#allocation7 + $0x65]]
        %v765 = vstv %s764
        %v766 = vmul.f32 %v765, %v750
        %v767 = vmul.f32 %v765, %v751
        %v768 = vadd.f32 %v736, %v766
        %v769 = vadd.f32 %v737, %v767
        %s770 = sld [smem:[#allocation7 + $0x89]]
        %v771 = vstv %s770
        %v772 = vmul.f32 %v771, %v750
        %v773 = vmul.f32 %v771, %v751
        %v774 = vadd.f32 %v742, %v772
        %v775 = vadd.f32 %v743, %v773
        %776 = vrot.lane.b32.xlu0 %v303, 16
        %v777 = vpop.permute.xlu0 %776
        %v778 = vsel %vm319, %v777, %v303
        %779 = vrot.lane.b32.xlu0 %v304, 16
        %v780 = vpop.permute.xlu0 %779
        %v781 = vsel %vm319, %v780, %v304
        %782 = vrot.lane.b32.xlu0 %v778, 16
        %v783 = vpop.permute.xlu0 %782
        %784 = vrot.lane.b32.xlu0 %v781, 16
        %v785 = vpop.permute.xlu0 %784
        %v786 = vsel %vm319, %v783, %v303
        %v787 = vsel %vm319, %v785, %v304
        %vm788 = vcmp.ge.s32.totalorder %v299, 0
        %vm789 = vcmp.ge.s32.totalorder %v300, 0
        %vm790 = vcmp.lt.s32.totalorder %v299, 16
        %vm791 = vcmp.lt.s32.totalorder %v300, 16
        %vm792 = vmand %vm788, %vm790
        %vm793 = vmand %vm789, %vm791
        %vm794 = vmand %vm792, %vm341
        %vm795 = vmand %vm793, %vm341
        %vm796 = vmand %vm794, %vm344
        %vm797 = vmand %vm795, %vm344
        %800 = vrot.lane.b32.xlu0 %v786, 113
        %v801 = vpop.permute.xlu0 %800
        %802 = vrot.lane.b32.xlu0 %v787, 113
        %v803 = vpop.permute.xlu0 %802
        %v806 = vsel %vm796, %v801, 0.0
        %v807 = vsel %vm797, %v803, 0.0
        %s808 = sld [smem:[#allocation7 + $0x3]]
        %v809 = vstv %s808
        %v810 = vmul.f32 %v809, %v806
        %v811 = vmul.f32 %v809, %v807
        %v812 = vadd.f32 %v756, %v810
        %v813 = vadd.f32 %v757, %v811
        %s814 = sld [smem:[#allocation7 + $0x27]]
        %v815 = vstv %s814
        %v816 = vmul.f32 %v815, %v806
        %v817 = vmul.f32 %v815, %v807
        %v818 = vadd.f32 %v762, %v816
        %v819 = vadd.f32 %v763, %v817
        %s820 = sld [smem:[#allocation7 + $0x4b]]
        %v821 = vstv %s820
        %v822 = vmul.f32 %v821, %v806
        %v823 = vmul.f32 %v821, %v807
        %v824 = vadd.f32 %v768, %v822
        %v825 = vadd.f32 %v769, %v823
        %s826 = sld [smem:[#allocation7 + $0x6f]]
        %v827 = vstv %s826
        %v828 = vmul.f32 %v827, %v806
        %v829 = vmul.f32 %v827, %v807
        %v830 = vadd.f32 %v774, %v828
        %v831 = vadd.f32 %v775, %v829
        %832 = vrot.lane.b32.xlu0 %v306, 16
        %v833 = vpop.permute.xlu0 %832
        %v834 = vsel %vm319, %v833, %v306
        %835 = vrot.lane.b32.xlu0 %v307, 16
        %v836 = vpop.permute.xlu0 %835
        %v837 = vsel %vm319, %v836, %v307
        %838 = vrot.lane.b32.xlu0 %v834, 16
        %v839 = vpop.permute.xlu0 %838
        %840 = vrot.lane.b32.xlu0 %v837, 16
        %v841 = vpop.permute.xlu0 %840
        %v842 = vsel %vm319, %v839, %v306
        %v843 = vsel %vm319, %v841, %v307
        %846 = vrot.lane.b32.xlu0 %v842, 113
        %v847 = vpop.permute.xlu0 %846
        %848 = vrot.lane.b32.xlu0 %v843, 113
        %v849 = vpop.permute.xlu0 %848
        %v852 = vsel %vm796, %v847, 0.0
        %v853 = vsel %vm797, %v849, 0.0
        %s854 = sld [smem:[#allocation7 + $0xc]]
        %v855 = vstv %s854
        %v856 = vmul.f32 %v855, %v852
        %v857 = vmul.f32 %v855, %v853
        %v858 = vadd.f32 %v812, %v856
        %v859 = vadd.f32 %v813, %v857
        %s860 = sld [smem:[#allocation7 + $0x30]]
        %v861 = vstv %s860
        %v862 = vmul.f32 %v861, %v852
        %v863 = vmul.f32 %v861, %v853
        %v864 = vadd.f32 %v818, %v862
        %v865 = vadd.f32 %v819, %v863
        %s866 = sld [smem:[#allocation7 + $0x54]]
        %v867 = vstv %s866
        %v868 = vmul.f32 %v867, %v852
        %v869 = vmul.f32 %v867, %v853
        %v870 = vadd.f32 %v824, %v868
        %v871 = vadd.f32 %v825, %v869
        %s872 = sld [smem:[#allocation7 + $0x78]]
        %v873 = vstv %s872
        %v874 = vmul.f32 %v873, %v852
        %v875 = vmul.f32 %v873, %v853
        %v876 = vadd.f32 %v830, %v874
        %v877 = vadd.f32 %v831, %v875
        %878 = vrot.lane.b32.xlu0 %v309, 16
        %v879 = vpop.permute.xlu0 %878
        %v880 = vsel %vm319, %v879, %v309
        %881 = vrot.lane.b32.xlu0 %v310, 16
        %v882 = vpop.permute.xlu0 %881
        %v883 = vsel %vm319, %v882, %v310
        %884 = vrot.lane.b32.xlu0 %v880, 16
        %v885 = vpop.permute.xlu0 %884
        %886 = vrot.lane.b32.xlu0 %v883, 16
        %v887 = vpop.permute.xlu0 %886
        %v888 = vsel %vm319, %v885, %v309
        %v889 = vsel %vm319, %v887, %v310
        %892 = vrot.lane.b32.xlu0 %v888, 113
        %v893 = vpop.permute.xlu0 %892
        %894 = vrot.lane.b32.xlu0 %v889, 113
        %v895 = vpop.permute.xlu0 %894
        %v898 = vsel %vm796, %v893, 0.0
        %v899 = vsel %vm797, %v895, 0.0
        %s900 = sld [smem:[#allocation7 + $0x15]]
        %v901 = vstv %s900
        %v902 = vmul.f32 %v901, %v898
        %v903 = vmul.f32 %v901, %v899
        %v904 = vadd.f32 %v858, %v902
        %v905 = vadd.f32 %v859, %v903
        %s906 = sld [smem:[#allocation7 + $0x39]]
        %v907 = vstv %s906
        %v908 = vmul.f32 %v907, %v898
        %v909 = vmul.f32 %v907, %v899
        %v910 = vadd.f32 %v864, %v908
        %v911 = vadd.f32 %v865, %v909
        %s912 = sld [smem:[#allocation7 + $0x5d]]
        %v913 = vstv %s912
        %v914 = vmul.f32 %v913, %v898
        %v915 = vmul.f32 %v913, %v899
        %v916 = vadd.f32 %v870, %v914
        %v917 = vadd.f32 %v871, %v915
        %s918 = sld [smem:[#allocation7 + $0x81]]
        %v919 = vstv %s918
        %v920 = vmul.f32 %v919, %v898
        %v921 = vmul.f32 %v919, %v899
        %v922 = vadd.f32 %v876, %v920
        %v923 = vadd.f32 %v877, %v921
        %924 = vrot.lane.b32.xlu0 %v312, 16
        %v925 = vpop.permute.xlu0 %924
        %v926 = vsel %vm319, %v925, %v312
        %927 = vrot.lane.b32.xlu0 %v313, 16
        %v928 = vpop.permute.xlu0 %927
        %v929 = vsel %vm319, %v928, %v313
        %930 = vrot.lane.b32.xlu0 %v926, 16
        %v931 = vpop.permute.xlu0 %930
        %932 = vrot.lane.b32.xlu0 %v929, 16
        %v933 = vpop.permute.xlu0 %932
        %v934 = vsel %vm319, %v931, %v312
        %v935 = vsel %vm319, %v933, %v313
        %938 = vrot.lane.b32.xlu0 %v934, 113
        %v939 = vpop.permute.xlu0 %938
        %940 = vrot.lane.b32.xlu0 %v935, 113
        %v941 = vpop.permute.xlu0 %940
        %v944 = vsel %vm796, %v939, 0.0
        %v945 = vsel %vm797, %v941, 0.0
        %s946 = sld [smem:[#allocation7 + $0x1e]]
        %v947 = vstv %s946
        %v948 = vmul.f32 %v947, %v944
        %v949 = vmul.f32 %v947, %v945
        %v950 = vadd.f32 %v904, %v948
        %v951 = vadd.f32 %v905, %v949
        %s952 = sld [smem:[#allocation7 + $0x42]]
        %v953 = vstv %s952
        %v954 = vmul.f32 %v953, %v944
        %v955 = vmul.f32 %v953, %v945
        %v956 = vadd.f32 %v910, %v954
        %v957 = vadd.f32 %v911, %v955
        %s958 = sld [smem:[#allocation7 + $0x66]]
        %v959 = vstv %s958
        %v960 = vmul.f32 %v959, %v944
        %v961 = vmul.f32 %v959, %v945
        %v962 = vadd.f32 %v916, %v960
        %v963 = vadd.f32 %v917, %v961
        %s964 = sld [smem:[#allocation7 + $0x8a]]
        %v965 = vstv %s964
        %v966 = vmul.f32 %v965, %v944
        %v967 = vmul.f32 %v965, %v945
        %v968 = vadd.f32 %v922, %v966
        %v969 = vadd.f32 %v923, %v967
        %s970 = sld [smem:[#allocation7 + $0x4]]
        %v971 = vstv %s970
        %v972 = vmul.f32 %v971, %v303
        %v973 = vmul.f32 %v971, %v304
        %v974 = vadd.f32 %v950, %v972
        %v975 = vadd.f32 %v951, %v973
        %s976 = sld [smem:[#allocation7 + $0x28]]
        %v977 = vstv %s976
        %v978 = vmul.f32 %v977, %v303
        %v979 = vmul.f32 %v977, %v304
        %v980 = vadd.f32 %v956, %v978
        %v981 = vadd.f32 %v957, %v979
        %s982 = sld [smem:[#allocation7 + $0x4c]]
        %v983 = vstv %s982
        %v984 = vmul.f32 %v983, %v303
        %v985 = vmul.f32 %v983, %v304
        %v986 = vadd.f32 %v962, %v984
        %v987 = vadd.f32 %v963, %v985
        %s988 = sld [smem:[#allocation7 + $0x70]]
        %v989 = vstv %s988
        %v990 = vmul.f32 %v989, %v303
        %v991 = vmul.f32 %v989, %v304
        %v992 = vadd.f32 %v968, %v990
        %v993 = vadd.f32 %v969, %v991
        %s994 = sld [smem:[#allocation7 + $0xd]]
        %v995 = vstv %s994
        %v996 = vmul.f32 %v995, %v306
        %v997 = vmul.f32 %v995, %v307
        %v998 = vadd.f32 %v974, %v996
        %v999 = vadd.f32 %v975, %v997
        %s1000 = sld [smem:[#allocation7 + $0x31]]
        %v1001 = vstv %s1000
        %v1002 = vmul.f32 %v1001, %v306
        %v1003 = vmul.f32 %v1001, %v307
        %v1004 = vadd.f32 %v980, %v1002
        %v1005 = vadd.f32 %v981, %v1003
        %s1006 = sld [smem:[#allocation7 + $0x55]]
        %v1007 = vstv %s1006
        %v1008 = vmul.f32 %v1007, %v306
        %v1009 = vmul.f32 %v1007, %v307
        %v1010 = vadd.f32 %v986, %v1008
        %v1011 = vadd.f32 %v987, %v1009
        %s1012 = sld [smem:[#allocation7 + $0x79]]
        %v1013 = vstv %s1012
        %v1014 = vmul.f32 %v1013, %v306
        %v1015 = vmul.f32 %v1013, %v307
        %v1016 = vadd.f32 %v992, %v1014
        %v1017 = vadd.f32 %v993, %v1015
        %s1018 = sld [smem:[#allocation7 + $0x16]]
        %v1019 = vstv %s1018
        %v1020 = vmul.f32 %v1019, %v309
        %v1021 = vmul.f32 %v1019, %v310
        %v1022 = vadd.f32 %v998, %v1020
        %v1023 = vadd.f32 %v999, %v1021
        %s1024 = sld [smem:[#allocation7 + $0x3a]]
        %v1025 = vstv %s1024
        %v1026 = vmul.f32 %v1025, %v309
        %v1027 = vmul.f32 %v1025, %v310
        %v1028 = vadd.f32 %v1004, %v1026
        %v1029 = vadd.f32 %v1005, %v1027
        %s1030 = sld [smem:[#allocation7 + $0x5e]]
        %v1031 = vstv %s1030
        %v1032 = vmul.f32 %v1031, %v309
        %v1033 = vmul.f32 %v1031, %v310
        %v1034 = vadd.f32 %v1010, %v1032
        %v1035 = vadd.f32 %v1011, %v1033
        %s1036 = sld [smem:[#allocation7 + $0x82]]
        %v1037 = vstv %s1036
        %v1038 = vmul.f32 %v1037, %v309
        %v1039 = vmul.f32 %v1037, %v310
        %v1040 = vadd.f32 %v1016, %v1038
        %v1041 = vadd.f32 %v1017, %v1039
        %s1042 = sld [smem:[#allocation7 + $0x1f]]
        %v1043 = vstv %s1042
        %v1044 = vmul.f32 %v1043, %v312
        %v1045 = vmul.f32 %v1043, %v313
        %v1046 = vadd.f32 %v1022, %v1044
        %v1047 = vadd.f32 %v1023, %v1045
        %s1048 = sld [smem:[#allocation7 + $0x43]]
        %v1049 = vstv %s1048
        %v1050 = vmul.f32 %v1049, %v312
        %v1051 = vmul.f32 %v1049, %v313
        %v1052 = vadd.f32 %v1028, %v1050
        %v1053 = vadd.f32 %v1029, %v1051
        %s1054 = sld [smem:[#allocation7 + $0x67]]
        %v1055 = vstv %s1054
        %v1056 = vmul.f32 %v1055, %v312
        %v1057 = vmul.f32 %v1055, %v313
        %v1058 = vadd.f32 %v1034, %v1056
        %v1059 = vadd.f32 %v1035, %v1057
        %s1060 = sld [smem:[#allocation7 + $0x8b]]
        %v1061 = vstv %s1060
        %v1062 = vmul.f32 %v1061, %v312
        %v1063 = vmul.f32 %v1061, %v313
        %v1064 = vadd.f32 %v1040, %v1062
        %v1065 = vadd.f32 %v1041, %v1063
        %vm1066 = vmand %vm792, %vm642
        %vm1067 = vmand %vm793, %vm642
        %vm1068 = vmand %vm1066, %vm645
        %vm1069 = vmand %vm1067, %vm645
        %1070 = vrot.lane.b32.xlu0 %v786, 127
        %v1071 = vpop.permute.xlu0 %1070
        %1072 = vrot.lane.b32.xlu0 %v787, 127
        %v1073 = vpop.permute.xlu0 %1072
        %v1076 = vsel %vm1068, %v1071, 0.0
        %v1077 = vsel %vm1069, %v1073, 0.0
        %s1078 = sld [smem:[#allocation7 + $0x5]]
        %v1079 = vstv %s1078
        %v1080 = vmul.f32 %v1079, %v1076
        %v1081 = vmul.f32 %v1079, %v1077
        %v1082 = vadd.f32 %v1046, %v1080
        %v1083 = vadd.f32 %v1047, %v1081
        %s1084 = sld [smem:[#allocation7 + $0x29]]
        %v1085 = vstv %s1084
        %v1086 = vmul.f32 %v1085, %v1076
        %v1087 = vmul.f32 %v1085, %v1077
        %v1088 = vadd.f32 %v1052, %v1086
        %v1089 = vadd.f32 %v1053, %v1087
        %s1090 = sld [smem:[#allocation7 + $0x4d]]
        %v1091 = vstv %s1090
        %v1092 = vmul.f32 %v1091, %v1076
        %v1093 = vmul.f32 %v1091, %v1077
        %v1094 = vadd.f32 %v1058, %v1092
        %v1095 = vadd.f32 %v1059, %v1093
        %s1096 = sld [smem:[#allocation7 + $0x71]]
        %v1097 = vstv %s1096
        %v1098 = vmul.f32 %v1097, %v1076
        %v1099 = vmul.f32 %v1097, %v1077
        %v1100 = vadd.f32 %v1064, %v1098
        %v1101 = vadd.f32 %v1065, %v1099
        %1102 = vrot.lane.b32.xlu0 %v842, 127
        %v1103 = vpop.permute.xlu0 %1102
        %1104 = vrot.lane.b32.xlu0 %v843, 127
        %v1105 = vpop.permute.xlu0 %1104
        %v1108 = vsel %vm1068, %v1103, 0.0
        %v1109 = vsel %vm1069, %v1105, 0.0
        %s1110 = sld [smem:[#allocation7 + $0xe]]
        %v1111 = vstv %s1110
        %v1112 = vmul.f32 %v1111, %v1108
        %v1113 = vmul.f32 %v1111, %v1109
        %v1114 = vadd.f32 %v1082, %v1112
        %v1115 = vadd.f32 %v1083, %v1113
        %s1116 = sld [smem:[#allocation7 + $0x32]]
        %v1117 = vstv %s1116
        %v1118 = vmul.f32 %v1117, %v1108
        %v1119 = vmul.f32 %v1117, %v1109
        %v1120 = vadd.f32 %v1088, %v1118
        %v1121 = vadd.f32 %v1089, %v1119
        %s1122 = sld [smem:[#allocation7 + $0x56]]
        %v1123 = vstv %s1122
        %v1124 = vmul.f32 %v1123, %v1108
        %v1125 = vmul.f32 %v1123, %v1109
        %v1126 = vadd.f32 %v1094, %v1124
        %v1127 = vadd.f32 %v1095, %v1125
        %s1128 = sld [smem:[#allocation7 + $0x7a]]
        %v1129 = vstv %s1128
        %v1130 = vmul.f32 %v1129, %v1108
        %v1131 = vmul.f32 %v1129, %v1109
        %v1132 = vadd.f32 %v1100, %v1130
        %v1133 = vadd.f32 %v1101, %v1131
        %1134 = vrot.lane.b32.xlu0 %v888, 127
        %v1135 = vpop.permute.xlu0 %1134
        %1136 = vrot.lane.b32.xlu0 %v889, 127
        %v1137 = vpop.permute.xlu0 %1136
        %v1140 = vsel %vm1068, %v1135, 0.0
        %v1141 = vsel %vm1069, %v1137, 0.0
        %s1142 = sld [smem:[#allocation7 + $0x17]]
        %v1143 = vstv %s1142
        %v1144 = vmul.f32 %v1143, %v1140
        %v1145 = vmul.f32 %v1143, %v1141
        %v1146 = vadd.f32 %v1114, %v1144
        %v1147 = vadd.f32 %v1115, %v1145
        %s1148 = sld [smem:[#allocation7 + $0x3b]]
        %v1149 = vstv %s1148
        %v1150 = vmul.f32 %v1149, %v1140
        %v1151 = vmul.f32 %v1149, %v1141
        %v1152 = vadd.f32 %v1120, %v1150
        %v1153 = vadd.f32 %v1121, %v1151
        %s1154 = sld [smem:[#allocation7 + $0x5f]]
        %v1155 = vstv %s1154
        %v1156 = vmul.f32 %v1155, %v1140
        %v1157 = vmul.f32 %v1155, %v1141
        %v1158 = vadd.f32 %v1126, %v1156
        %v1159 = vadd.f32 %v1127, %v1157
        %s1160 = sld [smem:[#allocation7 + $0x83]]
        %v1161 = vstv %s1160
        %v1162 = vmul.f32 %v1161, %v1140
        %v1163 = vmul.f32 %v1161, %v1141
        %v1164 = vadd.f32 %v1132, %v1162
        %v1165 = vadd.f32 %v1133, %v1163
        %1166 = vrot.lane.b32.xlu0 %v934, 127
        %v1167 = vpop.permute.xlu0 %1166
        %1168 = vrot.lane.b32.xlu0 %v935, 127
        %v1169 = vpop.permute.xlu0 %1168
        %v1172 = vsel %vm1068, %v1167, 0.0
        %v1173 = vsel %vm1069, %v1169, 0.0
        %s1174 = sld [smem:[#allocation7 + $0x20]]
        %v1175 = vstv %s1174
        %v1176 = vmul.f32 %v1175, %v1172
        %v1177 = vmul.f32 %v1175, %v1173
        %v1178 = vadd.f32 %v1146, %v1176
        %v1179 = vadd.f32 %v1147, %v1177
        %s1180 = sld [smem:[#allocation7 + $0x44]]
        %v1181 = vstv %s1180
        %v1182 = vmul.f32 %v1181, %v1172
        %v1183 = vmul.f32 %v1181, %v1173
        %v1184 = vadd.f32 %v1152, %v1182
        %v1185 = vadd.f32 %v1153, %v1183
        %s1186 = sld [smem:[#allocation7 + $0x68]]
        %v1187 = vstv %s1186
        %v1188 = vmul.f32 %v1187, %v1172
        %v1189 = vmul.f32 %v1187, %v1173
        %v1190 = vadd.f32 %v1158, %v1188
        %v1191 = vadd.f32 %v1159, %v1189
        %s1192 = sld [smem:[#allocation7 + $0x8c]]
        %v1193 = vstv %s1192
        %v1194 = vmul.f32 %v1193, %v1172
        %v1195 = vmul.f32 %v1193, %v1173
        %v1196 = vadd.f32 %v1164, %v1194
        %v1197 = vadd.f32 %v1165, %v1195
        %v1198 = vrot.slane %v303, 1
        %v1199 = vrot.slane %v304, 1
        %vm1200 = vcmp.lt.s32.totalorder %v299, 7
        %v1201 = vsel %vm1200, %v1198, %v1199
        %v1202 = vsel %vm1200, %v1199, %v1198
        %1203 = vrot.lane.b32.xlu0 %v1201, 16
        %v1204 = vpop.permute.xlu0 %1203
        %v1205 = vsel %vm319, %v1204, %v1201
        %1206 = vrot.lane.b32.xlu0 %v1202, 16
        %v1207 = vpop.permute.xlu0 %1206
        %v1208 = vsel %vm319, %v1207, %v1202
        %1209 = vrot.lane.b32.xlu0 %v1205, 16
        %v1210 = vpop.permute.xlu0 %1209
        %1211 = vrot.lane.b32.xlu0 %v1208, 16
        %v1212 = vpop.permute.xlu0 %1211
        %v1213 = vsel %vm319, %v1210, %v1201
        %v1214 = vsel %vm319, %v1212, %v1202
        %v1215 = vadd.s32 %v299, 1
        %v1216 = vadd.s32 %v300, 1
        %vm1217 = vcmp.ge.s32.totalorder %v1215, 0
        %vm1218 = vcmp.ge.s32.totalorder %v1216, 0
        %vm1219 = vcmp.lt.s32.totalorder %v1215, 16
        %vm1220 = vcmp.lt.s32.totalorder %v1216, 16
        %vm1221 = vmand %vm1217, %vm1219
        %vm1222 = vmand %vm1218, %vm1220
        %vm1223 = vmand %vm1221, %vm341
        %vm1224 = vmand %vm1222, %vm341
        %vm1225 = vmand %vm1223, %vm344
        %vm1226 = vmand %vm1224, %vm344
        %1229 = vrot.lane.b32.xlu0 %v1213, 113
        %v1230 = vpop.permute.xlu0 %1229
        %1231 = vrot.lane.b32.xlu0 %v1214, 113
        %v1232 = vpop.permute.xlu0 %1231
        %v1235 = vsel %vm1225, %v1230, 0.0
        %v1236 = vsel %vm1226, %v1232, 0.0
        %s1237 = sld [smem:[#allocation7 + $0x6]]
        %v1238 = vstv %s1237
        %v1239 = vmul.f32 %v1238, %v1235
        %v1240 = vmul.f32 %v1238, %v1236
        %v1241 = vadd.f32 %v1178, %v1239
        %v1242 = vadd.f32 %v1179, %v1240
        %s1243 = sld [smem:[#allocation7 + $0x2a]]
        %v1244 = vstv %s1243
        %v1245 = vmul.f32 %v1244, %v1235
        %v1246 = vmul.f32 %v1244, %v1236
        %v1247 = vadd.f32 %v1184, %v1245
        %v1248 = vadd.f32 %v1185, %v1246
        %s1249 = sld [smem:[#allocation7 + $0x4e]]
        %v1250 = vstv %s1249
        %v1251 = vmul.f32 %v1250, %v1235
        %v1252 = vmul.f32 %v1250, %v1236
        %v1253 = vadd.f32 %v1190, %v1251
        %v1254 = vadd.f32 %v1191, %v1252
        %s1255 = sld [smem:[#allocation7 + $0x72]]
        %v1256 = vstv %s1255
        %v1257 = vmul.f32 %v1256, %v1235
        %v1258 = vmul.f32 %v1256, %v1236
        %v1259 = vadd.f32 %v1196, %v1257
        %v1260 = vadd.f32 %v1197, %v1258
        %v1261 = vrot.slane %v306, 1
        %v1262 = vrot.slane %v307, 1
        %v1263 = vsel %vm1200, %v1261, %v1262
        %v1264 = vsel %vm1200, %v1262, %v1261
        %1265 = vrot.lane.b32.xlu0 %v1263, 16
        %v1266 = vpop.permute.xlu0 %1265
        %v1267 = vsel %vm319, %v1266, %v1263
        %1268 = vrot.lane.b32.xlu0 %v1264, 16
        %v1269 = vpop.permute.xlu0 %1268
        %v1270 = vsel %vm319, %v1269, %v1264
        %1271 = vrot.lane.b32.xlu0 %v1267, 16
        %v1272 = vpop.permute.xlu0 %1271
        %1273 = vrot.lane.b32.xlu0 %v1270, 16
        %v1274 = vpop.permute.xlu0 %1273
        %v1275 = vsel %vm319, %v1272, %v1263
        %v1276 = vsel %vm319, %v1274, %v1264
        %1279 = vrot.lane.b32.xlu0 %v1275, 113
        %v1280 = vpop.permute.xlu0 %1279
        %1281 = vrot.lane.b32.xlu0 %v1276, 113
        %v1282 = vpop.permute.xlu0 %1281
        %v1285 = vsel %vm1225, %v1280, 0.0
        %v1286 = vsel %vm1226, %v1282, 0.0
        %s1287 = sld [smem:[#allocation7 + $0xf]]
        %v1288 = vstv %s1287
        %v1289 = vmul.f32 %v1288, %v1285
        %v1290 = vmul.f32 %v1288, %v1286
        %v1291 = vadd.f32 %v1241, %v1289
        %v1292 = vadd.f32 %v1242, %v1290
        %s1293 = sld [smem:[#allocation7 + $0x33]]
        %v1294 = vstv %s1293
        %v1295 = vmul.f32 %v1294, %v1285
        %v1296 = vmul.f32 %v1294, %v1286
        %v1297 = vadd.f32 %v1247, %v1295
        %v1298 = vadd.f32 %v1248, %v1296
        %s1299 = sld [smem:[#allocation7 + $0x57]]
        %v1300 = vstv %s1299
        %v1301 = vmul.f32 %v1300, %v1285
        %v1302 = vmul.f32 %v1300, %v1286
        %v1303 = vadd.f32 %v1253, %v1301
        %v1304 = vadd.f32 %v1254, %v1302
        %s1305 = sld [smem:[#allocation7 + $0x7b]]
        %v1306 = vstv %s1305
        %v1307 = vmul.f32 %v1306, %v1285
        %v1308 = vmul.f32 %v1306, %v1286
        %v1309 = vadd.f32 %v1259, %v1307
        %v1310 = vadd.f32 %v1260, %v1308
        %v1311 = vrot.slane %v309, 1
        %v1312 = vrot.slane %v310, 1
        %v1313 = vsel %vm1200, %v1311, %v1312
        %v1314 = vsel %vm1200, %v1312, %v1311
        %1315 = vrot.lane.b32.xlu0 %v1313, 16
        %v1316 = vpop.permute.xlu0 %1315
        %v1317 = vsel %vm319, %v1316, %v1313
        %1318 = vrot.lane.b32.xlu0 %v1314, 16
        %v1319 = vpop.permute.xlu0 %1318
        %v1320 = vsel %vm319, %v1319, %v1314
        %1321 = vrot.lane.b32.xlu0 %v1317, 16
        %v1322 = vpop.permute.xlu0 %1321
        %1323 = vrot.lane.b32.xlu0 %v1320, 16
        %v1324 = vpop.permute.xlu0 %1323
        %v1325 = vsel %vm319, %v1322, %v1313
        %v1326 = vsel %vm319, %v1324, %v1314
        %1329 = vrot.lane.b32.xlu0 %v1325, 113
        %v1330 = vpop.permute.xlu0 %1329
        %1331 = vrot.lane.b32.xlu0 %v1326, 113
        %v1332 = vpop.permute.xlu0 %1331
        %v1335 = vsel %vm1225, %v1330, 0.0
        %v1336 = vsel %vm1226, %v1332, 0.0
        %s1337 = sld [smem:[#allocation7 + $0x18]]
        %v1338 = vstv %s1337
        %v1339 = vmul.f32 %v1338, %v1335
        %v1340 = vmul.f32 %v1338, %v1336
        %v1341 = vadd.f32 %v1291, %v1339
        %v1342 = vadd.f32 %v1292, %v1340
        %s1343 = sld [smem:[#allocation7 + $0x3c]]
        %v1344 = vstv %s1343
        %v1345 = vmul.f32 %v1344, %v1335
        %v1346 = vmul.f32 %v1344, %v1336
        %v1347 = vadd.f32 %v1297, %v1345
        %v1348 = vadd.f32 %v1298, %v1346
        %s1349 = sld [smem:[#allocation7 + $0x60]]
        %v1350 = vstv %s1349
        %v1351 = vmul.f32 %v1350, %v1335
        %v1352 = vmul.f32 %v1350, %v1336
        %v1353 = vadd.f32 %v1303, %v1351
        %v1354 = vadd.f32 %v1304, %v1352
        %s1355 = sld [smem:[#allocation7 + $0x84]]
        %v1356 = vstv %s1355
        %v1357 = vmul.f32 %v1356, %v1335
        %v1358 = vmul.f32 %v1356, %v1336
        %v1359 = vadd.f32 %v1309, %v1357
        %v1360 = vadd.f32 %v1310, %v1358
        %v1361 = vrot.slane %v312, 1
        %v1362 = vrot.slane %v313, 1
        %v1363 = vsel %vm1200, %v1361, %v1362
        %v1364 = vsel %vm1200, %v1362, %v1361
        %1365 = vrot.lane.b32.xlu0 %v1363, 16
        %v1366 = vpop.permute.xlu0 %1365
        %v1367 = vsel %vm319, %v1366, %v1363
        %1368 = vrot.lane.b32.xlu0 %v1364, 16
        %v1369 = vpop.permute.xlu0 %1368
        %v1370 = vsel %vm319, %v1369, %v1364
        %1371 = vrot.lane.b32.xlu0 %v1367, 16
        %v1372 = vpop.permute.xlu0 %1371
        %1373 = vrot.lane.b32.xlu0 %v1370, 16
        %v1374 = vpop.permute.xlu0 %1373
        %v1375 = vsel %vm319, %v1372, %v1363
        %v1376 = vsel %vm319, %v1374, %v1364
        %1379 = vrot.lane.b32.xlu0 %v1375, 113
        %v1380 = vpop.permute.xlu0 %1379
        %1381 = vrot.lane.b32.xlu0 %v1376, 113
        %v1382 = vpop.permute.xlu0 %1381
        %v1385 = vsel %vm1225, %v1380, 0.0
        %v1386 = vsel %vm1226, %v1382, 0.0
        %s1387 = sld [smem:[#allocation7 + $0x21]]
        %v1388 = vstv %s1387
        %v1389 = vmul.f32 %v1388, %v1385
        %v1390 = vmul.f32 %v1388, %v1386
        %v1391 = vadd.f32 %v1341, %v1389
        %v1392 = vadd.f32 %v1342, %v1390
        %s1393 = sld [smem:[#allocation7 + $0x45]]
        %v1394 = vstv %s1393
        %v1395 = vmul.f32 %v1394, %v1385
        %v1396 = vmul.f32 %v1394, %v1386
        %v1397 = vadd.f32 %v1347, %v1395
        %v1398 = vadd.f32 %v1348, %v1396
        %s1399 = sld [smem:[#allocation7 + $0x69]]
        %v1400 = vstv %s1399
        %v1401 = vmul.f32 %v1400, %v1385
        %v1402 = vmul.f32 %v1400, %v1386
        %v1403 = vadd.f32 %v1353, %v1401
        %v1404 = vadd.f32 %v1354, %v1402
        %s1405 = sld [smem:[#allocation7 + $0x8d]]
        %v1406 = vstv %s1405
        %v1407 = vmul.f32 %v1406, %v1385
        %v1408 = vmul.f32 %v1406, %v1386
        %v1409 = vadd.f32 %v1359, %v1407
        %v1410 = vadd.f32 %v1360, %v1408
        %vm1411 = vmand %vm1221, %vm531
        %vm1412 = vmand %vm1222, %vm531
        %vm1413 = vmand %vm1411, %vm534
        %vm1414 = vmand %vm1412, %vm534
        %v1415 = vsel %vm1413, %v1201, 0.0
        %v1416 = vsel %vm1414, %v1202, 0.0
        %s1417 = sld [smem:[#allocation7 + $0x7]]
        %v1418 = vstv %s1417
        %v1419 = vmul.f32 %v1418, %v1415
        %v1420 = vmul.f32 %v1418, %v1416
        %v1421 = vadd.f32 %v1391, %v1419
        %v1422 = vadd.f32 %v1392, %v1420
        %s1423 = sld [smem:[#allocation7 + $0x2b]]
        %v1424 = vstv %s1423
        %v1425 = vmul.f32 %v1424, %v1415
        %v1426 = vmul.f32 %v1424, %v1416
        %v1427 = vadd.f32 %v1397, %v1425
        %v1428 = vadd.f32 %v1398, %v1426
        %s1429 = sld [smem:[#allocation7 + $0x4f]]
        %v1430 = vstv %s1429
        %v1431 = vmul.f32 %v1430, %v1415
        %v1432 = vmul.f32 %v1430, %v1416
        %v1433 = vadd.f32 %v1403, %v1431
        %v1434 = vadd.f32 %v1404, %v1432
        %s1435 = sld [smem:[#allocation7 + $0x73]]
        %v1436 = vstv %s1435
        %v1437 = vmul.f32 %v1436, %v1415
        %v1438 = vmul.f32 %v1436, %v1416
        %v1439 = vadd.f32 %v1409, %v1437
        %v1440 = vadd.f32 %v1410, %v1438
        %v1441 = vsel %vm1413, %v1263, 0.0
        %v1442 = vsel %vm1414, %v1264, 0.0
        %s1443 = sld [smem:[#allocation7 + $0x10]]
        %v1444 = vstv %s1443
        %v1445 = vmul.f32 %v1444, %v1441
        %v1446 = vmul.f32 %v1444, %v1442
        %v1447 = vadd.f32 %v1421, %v1445
        %v1448 = vadd.f32 %v1422, %v1446
        %s1449 = sld [smem:[#allocation7 + $0x34]]
        %v1450 = vstv %s1449
        %v1451 = vmul.f32 %v1450, %v1441
        %v1452 = vmul.f32 %v1450, %v1442
        %v1453 = vadd.f32 %v1427, %v1451
        %v1454 = vadd.f32 %v1428, %v1452
        %s1455 = sld [smem:[#allocation7 + $0x58]]
        %v1456 = vstv %s1455
        %v1457 = vmul.f32 %v1456, %v1441
        %v1458 = vmul.f32 %v1456, %v1442
        %v1459 = vadd.f32 %v1433, %v1457
        %v1460 = vadd.f32 %v1434, %v1458
        %s1461 = sld [smem:[#allocation7 + $0x7c]]
        %v1462 = vstv %s1461
        %v1463 = vmul.f32 %v1462, %v1441
        %v1464 = vmul.f32 %v1462, %v1442
        %v1465 = vadd.f32 %v1439, %v1463
        %v1466 = vadd.f32 %v1440, %v1464
        %v1467 = vsel %vm1413, %v1313, 0.0
        %v1468 = vsel %vm1414, %v1314, 0.0
        %s1469 = sld [smem:[#allocation7 + $0x19]]
        %v1470 = vstv %s1469
        %v1471 = vmul.f32 %v1470, %v1467
        %v1472 = vmul.f32 %v1470, %v1468
        %v1473 = vadd.f32 %v1447, %v1471
        %v1474 = vadd.f32 %v1448, %v1472
        %s1475 = sld [smem:[#allocation7 + $0x3d]]
        %v1476 = vstv %s1475
        %v1477 = vmul.f32 %v1476, %v1467
        %v1478 = vmul.f32 %v1476, %v1468
        %v1479 = vadd.f32 %v1453, %v1477
        %v1480 = vadd.f32 %v1454, %v1478
        %s1481 = sld [smem:[#allocation7 + $0x61]]
        %v1482 = vstv %s1481
        %v1483 = vmul.f32 %v1482, %v1467
        %v1484 = vmul.f32 %v1482, %v1468
        %v1485 = vadd.f32 %v1459, %v1483
        %v1486 = vadd.f32 %v1460, %v1484
        %s1487 = sld [smem:[#allocation7 + $0x85]]
        %v1488 = vstv %s1487
        %v1489 = vmul.f32 %v1488, %v1467
        %v1490 = vmul.f32 %v1488, %v1468
        %v1491 = vadd.f32 %v1465, %v1489
        %v1492 = vadd.f32 %v1466, %v1490
        %v1493 = vsel %vm1413, %v1363, 0.0
        %v1494 = vsel %vm1414, %v1364, 0.0
        %s1495 = sld [smem:[#allocation7 + $0x22]]
        %v1496 = vstv %s1495
        %v1497 = vmul.f32 %v1496, %v1493
        %v1498 = vmul.f32 %v1496, %v1494
        %v1499 = vadd.f32 %v1473, %v1497
        %v1500 = vadd.f32 %v1474, %v1498
        %s1501 = sld [smem:[#allocation7 + $0x46]]
        %v1502 = vstv %s1501
        %v1503 = vmul.f32 %v1502, %v1493
        %v1504 = vmul.f32 %v1502, %v1494
        %v1505 = vadd.f32 %v1479, %v1503
        %v1506 = vadd.f32 %v1480, %v1504
        %s1507 = sld [smem:[#allocation7 + $0x6a]]
        %v1508 = vstv %s1507
        %v1509 = vmul.f32 %v1508, %v1493
        %v1510 = vmul.f32 %v1508, %v1494
        %v1511 = vadd.f32 %v1485, %v1509
        %v1512 = vadd.f32 %v1486, %v1510
        %s1513 = sld [smem:[#allocation7 + $0x8e]]
        %v1514 = vstv %s1513
        %v1515 = vmul.f32 %v1514, %v1493
        %v1516 = vmul.f32 %v1514, %v1494
        %v1517 = vadd.f32 %v1491, %v1515
        %v1518 = vadd.f32 %v1492, %v1516
        %vm1519 = vmand %vm1221, %vm642
        %vm1520 = vmand %vm1222, %vm642
        %vm1521 = vmand %vm1519, %vm645
        %vm1522 = vmand %vm1520, %vm645
        %1523 = vrot.lane.b32.xlu0 %v1213, 127
        %v1524 = vpop.permute.xlu0 %1523
        %1525 = vrot.lane.b32.xlu0 %v1214, 127
        %v1526 = vpop.permute.xlu0 %1525
        %v1529 = vsel %vm1521, %v1524, 0.0
        %v1530 = vsel %vm1522, %v1526, 0.0
        %s1531 = sld [smem:[#allocation7 + $0x8]]
        %v1532 = vstv %s1531
        %v1533 = vmul.f32 %v1532, %v1529
        %v1534 = vmul.f32 %v1532, %v1530
        %v1535 = vadd.f32 %v1499, %v1533
        %v1536 = vadd.f32 %v1500, %v1534
        %s1537 = sld [smem:[#allocation7 + $0x2c]]
        %v1538 = vstv %s1537
        %v1539 = vmul.f32 %v1538, %v1529
        %v1540 = vmul.f32 %v1538, %v1530
        %v1541 = vadd.f32 %v1505, %v1539
        %v1542 = vadd.f32 %v1506, %v1540
        %s1543 = sld [smem:[#allocation7 + $0x50]]
        %v1544 = vstv %s1543
        %v1545 = vmul.f32 %v1544, %v1529
        %v1546 = vmul.f32 %v1544, %v1530
        %v1547 = vadd.f32 %v1511, %v1545
        %v1548 = vadd.f32 %v1512, %v1546
        %s1549 = sld [smem:[#allocation7 + $0x74]]
        %v1550 = vstv %s1549
        %v1551 = vmul.f32 %v1550, %v1529
        %v1552 = vmul.f32 %v1550, %v1530
        %v1553 = vadd.f32 %v1517, %v1551
        %v1554 = vadd.f32 %v1518, %v1552
        %1555 = vrot.lane.b32.xlu0 %v1275, 127
        %v1556 = vpop.permute.xlu0 %1555
        %1557 = vrot.lane.b32.xlu0 %v1276, 127
        %v1558 = vpop.permute.xlu0 %1557
        %v1561 = vsel %vm1521, %v1556, 0.0
        %v1562 = vsel %vm1522, %v1558, 0.0
        %s1563 = sld [smem:[#allocation7 + $0x11]]
        %v1564 = vstv %s1563
        %v1565 = vmul.f32 %v1564, %v1561
        %v1566 = vmul.f32 %v1564, %v1562
        %v1567 = vadd.f32 %v1535, %v1565
        %v1568 = vadd.f32 %v1536, %v1566
        %s1569 = sld [smem:[#allocation7 + $0x35]]
        %v1570 = vstv %s1569
        %v1571 = vmul.f32 %v1570, %v1561
        %v1572 = vmul.f32 %v1570, %v1562
        %v1573 = vadd.f32 %v1541, %v1571
        %v1574 = vadd.f32 %v1542, %v1572
        %s1575 = sld [smem:[#allocation7 + $0x59]]
        %v1576 = vstv %s1575
        %v1577 = vmul.f32 %v1576, %v1561
        %v1578 = vmul.f32 %v1576, %v1562
        %v1579 = vadd.f32 %v1547, %v1577
        %v1580 = vadd.f32 %v1548, %v1578
        %s1581 = sld [smem:[#allocation7 + $0x7d]]
        %v1582 = vstv %s1581
        %v1583 = vmul.f32 %v1582, %v1561
        %v1584 = vmul.f32 %v1582, %v1562
        %v1585 = vadd.f32 %v1553, %v1583
        %v1586 = vadd.f32 %v1554, %v1584
        %1587 = vrot.lane.b32.xlu0 %v1325, 127
        %v1588 = vpop.permute.xlu0 %1587
        %1589 = vrot.lane.b32.xlu0 %v1326, 127
        %v1590 = vpop.permute.xlu0 %1589
        %v1593 = vsel %vm1521, %v1588, 0.0
        %v1594 = vsel %vm1522, %v1590, 0.0
        %s1595 = sld [smem:[#allocation7 + $0x1a]]
        %v1596 = vstv %s1595
        %v1597 = vmul.f32 %v1596, %v1593
        %v1598 = vmul.f32 %v1596, %v1594
        %v1599 = vadd.f32 %v1567, %v1597
        %v1600 = vadd.f32 %v1568, %v1598
        %s1601 = sld [smem:[#allocation7 + $0x3e]]
        %v1602 = vstv %s1601
        %v1603 = vmul.f32 %v1602, %v1593
        %v1604 = vmul.f32 %v1602, %v1594
        %v1605 = vadd.f32 %v1573, %v1603
        %v1606 = vadd.f32 %v1574, %v1604
        %s1607 = sld [smem:[#allocation7 + $0x62]]
        %v1608 = vstv %s1607
        %v1609 = vmul.f32 %v1608, %v1593
        %v1610 = vmul.f32 %v1608, %v1594
        %v1611 = vadd.f32 %v1579, %v1609
        %v1612 = vadd.f32 %v1580, %v1610
        %s1613 = sld [smem:[#allocation7 + $0x86]]
        %v1614 = vstv %s1613
        %v1615 = vmul.f32 %v1614, %v1593
        %v1616 = vmul.f32 %v1614, %v1594
        %v1617 = vadd.f32 %v1585, %v1615
        %v1618 = vadd.f32 %v1586, %v1616
        %1619 = vrot.lane.b32.xlu0 %v1375, 127
        %v1620 = vpop.permute.xlu0 %1619
        %1621 = vrot.lane.b32.xlu0 %v1376, 127
        %v1622 = vpop.permute.xlu0 %1621
        %v1625 = vsel %vm1521, %v1620, 0.0
        %v1626 = vsel %vm1522, %v1622, 0.0
        %s1627 = sld [smem:[#allocation7 + $0x23]]
        %v1628 = vstv %s1627
        %v1629 = vmul.f32 %v1628, %v1625
        %v1630 = vmul.f32 %v1628, %v1626
        %v1631 = vadd.f32 %v1599, %v1629
        %v1632 = vadd.f32 %v1600, %v1630
        %s1633 = sld [smem:[#allocation7 + $0x47]]
        %v1634 = vstv %s1633
        %v1635 = vmul.f32 %v1634, %v1625
        %v1636 = vmul.f32 %v1634, %v1626
        %v1637 = vadd.f32 %v1605, %v1635
        %v1638 = vadd.f32 %v1606, %v1636
        %s1639 = sld [smem:[#allocation7 + $0x6b]]
        %v1640 = vstv %s1639
        %v1641 = vmul.f32 %v1640, %v1625
        %v1642 = vmul.f32 %v1640, %v1626
        %v1643 = vadd.f32 %v1611, %v1641
        %v1644 = vadd.f32 %v1612, %v1642
        %s1645 = sld [smem:[#allocation7 + $0x8f]]
        %v1646 = vstv %s1645
        %v1647 = vmul.f32 %v1646, %v1625
        %v1648 = vmul.f32 %v1646, %v1626
        %v1649 = vadd.f32 %v1617, %v1647
        %v1650 = vadd.f32 %v1618, %v1648
        %s1651 = sld [smem:[#allocation8]]
        %v1652 = vstv %s1651
        %v1653 = vadd.f32 %v1631, %v1652
        %v1654 = vadd.f32 %v1632, %v1652
        %s1655 = sld [smem:[#allocation8 + $0x1]]
        %v1656 = vstv %s1655
        %v1657 = vadd.f32 %v1637, %v1656
        %v1658 = vadd.f32 %v1638, %v1656
        %s1659 = sld [smem:[#allocation8 + $0x2]]
        %v1660 = vstv %s1659
        %v1661 = vadd.f32 %v1643, %v1660
        %v1662 = vadd.f32 %v1644, %v1660
        %s1663 = sld [smem:[#allocation8 + $0x3]]
        %v1664 = vstv %s1663
        %v1665 = vadd.f32 %v1649, %v1664
        %v1666 = vadd.f32 %v1650, %v1664
        %vm1667 = vcmp.gt.f32.partialorder %v1653, 0.0
        %vm1668 = vcmp.gt.f32.partialorder %v1654, 0.0
        %v1669 = vmul.f32 %v1653, 0.2
        %v1670 = vmul.f32 %v1654, 0.2
        %v1671 = vsel %vm1667, %v1653, %v1669
        %v1672 = vsel %vm1668, %v1654, %v1670
        %vm1673 = vcmp.gt.f32.partialorder %v1657, 0.0
        %vm1674 = vcmp.gt.f32.partialorder %v1658, 0.0
        %v1675 = vmul.f32 %v1657, 0.2
        %v1676 = vmul.f32 %v1658, 0.2
        %v1677 = vsel %vm1673, %v1657, %v1675
        %v1678 = vsel %vm1674, %v1658, %v1676
        %vm1679 = vcmp.gt.f32.partialorder %v1661, 0.0
        %vm1680 = vcmp.gt.f32.partialorder %v1662, 0.0
        %v1681 = vmul.f32 %v1661, 0.2
        %v1682 = vmul.f32 %v1662, 0.2
        %v1683 = vsel %vm1679, %v1661, %v1681
        %v1684 = vsel %vm1680, %v1662, %v1682
        %vm1685 = vcmp.gt.f32.partialorder %v1665, 0.0
        %vm1686 = vcmp.gt.f32.partialorder %v1666, 0.0
        %v1687 = vmul.f32 %v1665, 0.2
        %v1688 = vmul.f32 %v1666, 0.2
        %v1689 = vsel %vm1685, %v1665, %v1687
        %v1690 = vsel %vm1686, %v1666, %v1688
        %v1691 = vrot.slane %v1671, 7
        %v1692 = vrot.slane %v1672, 7
        %v1693 = vsel %vm316, %v1691, %v1692
        %v1694 = vsel %vm316, %v1692, %v1691
        %1695 = vrot.lane.b32.xlu0 %v1694, 16
        %v1696 = vpop.permute.xlu0 %1695
        %v1697 = vsel %vm319, %v1696, %v1694
        %1698 = vrot.lane.b32.xlu0 %v1693, 16
        %v1699 = vpop.permute.xlu0 %1698
        %v1700 = vsel %vm319, %v1699, %v1693
        %1701 = vrot.lane.b32.xlu0 %v1697, 16
        %v1702 = vpop.permute.xlu0 %1701
        %1703 = vrot.lane.b32.xlu0 %v1700, 16
        %v1704 = vpop.permute.xlu0 %1703
        %v1705 = vsel %vm319, %v1702, %v1694
        %v1706 = vsel %vm319, %v1704, %v1693
        %1709 = vrot.lane.b32.xlu0 %v1705, 113
        %v1710 = vpop.permute.xlu0 %1709
        %1711 = vrot.lane.b32.xlu0 %v1706, 113
        %v1712 = vpop.permute.xlu0 %1711
        %v1715 = vsel %vm345, %v1710, 0.0
        %v1716 = vsel %vm346, %v1712, 0.0
        %s1717 = sld [smem:[#allocation10]]
        %v1718 = vstv %s1717
        %v1719 = vmul.f32 %v1718, %v1715
        %v1720 = vmul.f32 %v1718, %v1716
        %v1721 = vadd.f32 %v1719, 0.0
        %v1722 = vadd.f32 %v1720, 0.0
        %s1723 = sld [smem:[#allocation10 + $0x24]]
        %v1724 = vstv %s1723
        %v1725 = vmul.f32 %v1724, %v1715
        %v1726 = vmul.f32 %v1724, %v1716
        %v1727 = vadd.f32 %v1725, 0.0
        %v1728 = vadd.f32 %v1726, 0.0
        %s1729 = sld [smem:[#allocation10 + $0x48]]
        %v1730 = vstv %s1729
        %v1731 = vmul.f32 %v1730, %v1715
        %v1732 = vmul.f32 %v1730, %v1716
        %v1733 = vadd.f32 %v1731, 0.0
        %v1734 = vadd.f32 %v1732, 0.0
        %s1735 = sld [smem:[#allocation10 + $0x6c]]
        %v1736 = vstv %s1735
        %v1737 = vmul.f32 %v1736, %v1715
        %v1738 = vmul.f32 %v1736, %v1716
        %v1739 = vadd.f32 %v1737, 0.0
        %v1740 = vadd.f32 %v1738, 0.0
        %v1741 = vrot.slane %v1677, 7
        %v1742 = vrot.slane %v1678, 7
        %v1743 = vsel %vm316, %v1741, %v1742
        %v1744 = vsel %vm316, %v1742, %v1741
        %1745 = vrot.lane.b32.xlu0 %v1744, 16
        %v1746 = vpop.permute.xlu0 %1745
        %v1747 = vsel %vm319, %v1746, %v1744
        %1748 = vrot.lane.b32.xlu0 %v1743, 16
        %v1749 = vpop.permute.xlu0 %1748
        %v1750 = vsel %vm319, %v1749, %v1743
        %1751 = vrot.lane.b32.xlu0 %v1747, 16
        %v1752 = vpop.permute.xlu0 %1751
        %1753 = vrot.lane.b32.xlu0 %v1750, 16
        %v1754 = vpop.permute.xlu0 %1753
        %v1755 = vsel %vm319, %v1752, %v1744
        %v1756 = vsel %vm319, %v1754, %v1743
        %1759 = vrot.lane.b32.xlu0 %v1755, 113
        %v1760 = vpop.permute.xlu0 %1759
        %1761 = vrot.lane.b32.xlu0 %v1756, 113
        %v1762 = vpop.permute.xlu0 %1761
        %v1765 = vsel %vm345, %v1760, 0.0
        %v1766 = vsel %vm346, %v1762, 0.0
        %s1767 = sld [smem:[#allocation10 + $0x9]]
        %v1768 = vstv %s1767
        %v1769 = vmul.f32 %v1768, %v1765
        %v1770 = vmul.f32 %v1768, %v1766
        %v1771 = vadd.f32 %v1721, %v1769
        %v1772 = vadd.f32 %v1722, %v1770
        %s1773 = sld [smem:[#allocation10 + $0x2d]]
        %v1774 = vstv %s1773
        %v1775 = vmul.f32 %v1774, %v1765
        %v1776 = vmul.f32 %v1774, %v1766
        %v1777 = vadd.f32 %v1727, %v1775
        %v1778 = vadd.f32 %v1728, %v1776
        %s1779 = sld [smem:[#allocation10 + $0x51]]
        %v1780 = vstv %s1779
        %v1781 = vmul.f32 %v1780, %v1765
        %v1782 = vmul.f32 %v1780, %v1766
        %v1783 = vadd.f32 %v1733, %v1781
        %v1784 = vadd.f32 %v1734, %v1782
        %s1785 = sld [smem:[#allocation10 + $0x75]]
        %v1786 = vstv %s1785
        %v1787 = vmul.f32 %v1786, %v1765
        %v1788 = vmul.f32 %v1786, %v1766
        %v1789 = vadd.f32 %v1739, %v1787
        %v1790 = vadd.f32 %v1740, %v1788
        %v1791 = vrot.slane %v1683, 7
        %v1792 = vrot.slane %v1684, 7
        %v1793 = vsel %vm316, %v1791, %v1792
        %v1794 = vsel %vm316, %v1792, %v1791
        %1795 = vrot.lane.b32.xlu0 %v1794, 16
        %v1796 = vpop.permute.xlu0 %1795
        %v1797 = vsel %vm319, %v1796, %v1794
        %1798 = vrot.lane.b32.xlu0 %v1793, 16
        %v1799 = vpop.permute.xlu0 %1798
        %v1800 = vsel %vm319, %v1799, %v1793
        %1801 = vrot.lane.b32.xlu0 %v1797, 16
        %v1802 = vpop.permute.xlu0 %1801
        %1803 = vrot.lane.b32.xlu0 %v1800, 16
        %v1804 = vpop.permute.xlu0 %1803
        %v1805 = vsel %vm319, %v1802, %v1794
        %v1806 = vsel %vm319, %v1804, %v1793
        %1809 = vrot.lane.b32.xlu0 %v1805, 113
        %v1810 = vpop.permute.xlu0 %1809
        %1811 = vrot.lane.b32.xlu0 %v1806, 113
        %v1812 = vpop.permute.xlu0 %1811
        %v1815 = vsel %vm345, %v1810, 0.0
        %v1816 = vsel %vm346, %v1812, 0.0
        %s1817 = sld [smem:[#allocation10 + $0x12]]
        %v1818 = vstv %s1817
        %v1819 = vmul.f32 %v1818, %v1815
        %v1820 = vmul.f32 %v1818, %v1816
        %v1821 = vadd.f32 %v1771, %v1819
        %v1822 = vadd.f32 %v1772, %v1820
        %s1823 = sld [smem:[#allocation10 + $0x36]]
        %v1824 = vstv %s1823
        %v1825 = vmul.f32 %v1824, %v1815
        %v1826 = vmul.f32 %v1824, %v1816
        %v1827 = vadd.f32 %v1777, %v1825
        %v1828 = vadd.f32 %v1778, %v1826
        %s1829 = sld [smem:[#allocation10 + $0x5a]]
        %v1830 = vstv %s1829
        %v1831 = vmul.f32 %v1830, %v1815
        %v1832 = vmul.f32 %v1830, %v1816
        %v1833 = vadd.f32 %v1783, %v1831
        %v1834 = vadd.f32 %v1784, %v1832
        %s1835 = sld [smem:[#allocation10 + $0x7e]]
        %v1836 = vstv %s1835
        %v1837 = vmul.f32 %v1836, %v1815
        %v1838 = vmul.f32 %v1836, %v1816
        %v1839 = vadd.f32 %v1789, %v1837
        %v1840 = vadd.f32 %v1790, %v1838
        %v1841 = vrot.slane %v1689, 7
        %v1842 = vrot.slane %v1690, 7
        %v1843 = vsel %vm316, %v1841, %v1842
        %v1844 = vsel %vm316, %v1842, %v1841
        %1845 = vrot.lane.b32.xlu0 %v1844, 16
        %v1846 = vpop.permute.xlu0 %1845
        %v1847 = vsel %vm319, %v1846, %v1844
        %1848 = vrot.lane.b32.xlu0 %v1843, 16
        %v1849 = vpop.permute.xlu0 %1848
        %v1850 = vsel %vm319, %v1849, %v1843
        %1851 = vrot.lane.b32.xlu0 %v1847, 16
        %v1852 = vpop.permute.xlu0 %1851
        %1853 = vrot.lane.b32.xlu0 %v1850, 16
        %v1854 = vpop.permute.xlu0 %1853
        %v1855 = vsel %vm319, %v1852, %v1844
        %v1856 = vsel %vm319, %v1854, %v1843
        %1859 = vrot.lane.b32.xlu0 %v1855, 113
        %v1860 = vpop.permute.xlu0 %1859
        %1861 = vrot.lane.b32.xlu0 %v1856, 113
        %v1862 = vpop.permute.xlu0 %1861
        %v1865 = vsel %vm345, %v1860, 0.0
        %v1866 = vsel %vm346, %v1862, 0.0
        %s1867 = sld [smem:[#allocation10 + $0x1b]]
        %v1868 = vstv %s1867
        %v1869 = vmul.f32 %v1868, %v1865
        %v1870 = vmul.f32 %v1868, %v1866
        %v1871 = vadd.f32 %v1821, %v1869
        %v1872 = vadd.f32 %v1822, %v1870
        %s1873 = sld [smem:[#allocation10 + $0x3f]]
        %v1874 = vstv %s1873
        %v1875 = vmul.f32 %v1874, %v1865
        %v1876 = vmul.f32 %v1874, %v1866
        %v1877 = vadd.f32 %v1827, %v1875
        %v1878 = vadd.f32 %v1828, %v1876
        %s1879 = sld [smem:[#allocation10 + $0x63]]
        %v1880 = vstv %s1879
        %v1881 = vmul.f32 %v1880, %v1865
        %v1882 = vmul.f32 %v1880, %v1866
        %v1883 = vadd.f32 %v1833, %v1881
        %v1884 = vadd.f32 %v1834, %v1882
        %s1885 = sld [smem:[#allocation10 + $0x87]]
        %v1886 = vstv %s1885
        %v1887 = vmul.f32 %v1886, %v1865
        %v1888 = vmul.f32 %v1886, %v1866
        %v1889 = vadd.f32 %v1839, %v1887
        %v1890 = vadd.f32 %v1840, %v1888
        %v1891 = vsel %vm535, %v1694, 0.0
        %v1892 = vsel %vm536, %v1693, 0.0
        %s1893 = sld [smem:[#allocation10 + $0x1]]
        %v1894 = vstv %s1893
        %v1895 = vmul.f32 %v1894, %v1891
        %v1896 = vmul.f32 %v1894, %v1892
        %v1897 = vadd.f32 %v1871, %v1895
        %v1898 = vadd.f32 %v1872, %v1896
        %s1899 = sld [smem:[#allocation10 + $0x25]]
        %v1900 = vstv %s1899
        %v1901 = vmul.f32 %v1900, %v1891
        %v1902 = vmul.f32 %v1900, %v1892
        %v1903 = vadd.f32 %v1877, %v1901
        %v1904 = vadd.f32 %v1878, %v1902
        %s1905 = sld [smem:[#allocation10 + $0x49]]
        %v1906 = vstv %s1905
        %v1907 = vmul.f32 %v1906, %v1891
        %v1908 = vmul.f32 %v1906, %v1892
        %v1909 = vadd.f32 %v1883, %v1907
        %v1910 = vadd.f32 %v1884, %v1908
        %s1911 = sld [smem:[#allocation10 + $0x6d]]
        %v1912 = vstv %s1911
        %v1913 = vmul.f32 %v1912, %v1891
        %v1914 = vmul.f32 %v1912, %v1892
        %v1915 = vadd.f32 %v1889, %v1913
        %v1916 = vadd.f32 %v1890, %v1914
        %v1917 = vsel %vm535, %v1744, 0.0
        %v1918 = vsel %vm536, %v1743, 0.0
        %s1919 = sld [smem:[#allocation10 + $0xa]]
        %v1920 = vstv %s1919
        %v1921 = vmul.f32 %v1920, %v1917
        %v1922 = vmul.f32 %v1920, %v1918
        %v1923 = vadd.f32 %v1897, %v1921
        %v1924 = vadd.f32 %v1898, %v1922
        %s1925 = sld [smem:[#allocation10 + $0x2e]]
        %v1926 = vstv %s1925
        %v1927 = vmul.f32 %v1926, %v1917
        %v1928 = vmul.f32 %v1926, %v1918
        %v1929 = vadd.f32 %v1903, %v1927
        %v1930 = vadd.f32 %v1904, %v1928
        %s1931 = sld [smem:[#allocation10 + $0x52]]
        %v1932 = vstv %s1931
        %v1933 = vmul.f32 %v1932, %v1917
        %v1934 = vmul.f32 %v1932, %v1918
        %v1935 = vadd.f32 %v1909, %v1933
        %v1936 = vadd.f32 %v1910, %v1934
        %s1937 = sld [smem:[#allocation10 + $0x76]]
        %v1938 = vstv %s1937
        %v1939 = vmul.f32 %v1938, %v1917
        %v1940 = vmul.f32 %v1938, %v1918
        %v1941 = vadd.f32 %v1915, %v1939
        %v1942 = vadd.f32 %v1916, %v1940
        %v1943 = vsel %vm535, %v1794, 0.0
        %v1944 = vsel %vm536, %v1793, 0.0
        %s1945 = sld [smem:[#allocation10 + $0x13]]
        %v1946 = vstv %s1945
        %v1947 = vmul.f32 %v1946, %v1943
        %v1948 = vmul.f32 %v1946, %v1944
        %v1949 = vadd.f32 %v1923, %v1947
        %v1950 = vadd.f32 %v1924, %v1948
        %s1951 = sld [smem:[#allocation10 + $0x37]]
        %v1952 = vstv %s1951
        %v1953 = vmul.f32 %v1952, %v1943
        %v1954 = vmul.f32 %v1952, %v1944
        %v1955 = vadd.f32 %v1929, %v1953
        %v1956 = vadd.f32 %v1930, %v1954
        %s1957 = sld [smem:[#allocation10 + $0x5b]]
        %v1958 = vstv %s1957
        %v1959 = vmul.f32 %v1958, %v1943
        %v1960 = vmul.f32 %v1958, %v1944
        %v1961 = vadd.f32 %v1935, %v1959
        %v1962 = vadd.f32 %v1936, %v1960
        %s1963 = sld [smem:[#allocation10 + $0x7f]]
        %v1964 = vstv %s1963
        %v1965 = vmul.f32 %v1964, %v1943
        %v1966 = vmul.f32 %v1964, %v1944
        %v1967 = vadd.f32 %v1941, %v1965
        %v1968 = vadd.f32 %v1942, %v1966
        %v1969 = vsel %vm535, %v1844, 0.0
        %v1970 = vsel %vm536, %v1843, 0.0
        %s1971 = sld [smem:[#allocation10 + $0x1c]]
        %v1972 = vstv %s1971
        %v1973 = vmul.f32 %v1972, %v1969
        %v1974 = vmul.f32 %v1972, %v1970
        %v1975 = vadd.f32 %v1949, %v1973
        %v1976 = vadd.f32 %v1950, %v1974
        %s1977 = sld [smem:[#allocation10 + $0x40]]
        %v1978 = vstv %s1977
        %v1979 = vmul.f32 %v1978, %v1969
        %v1980 = vmul.f32 %v1978, %v1970
        %v1981 = vadd.f32 %v1955, %v1979
        %v1982 = vadd.f32 %v1956, %v1980
        %s1983 = sld [smem:[#allocation10 + $0x64]]
        %v1984 = vstv %s1983
        %v1985 = vmul.f32 %v1984, %v1969
        %v1986 = vmul.f32 %v1984, %v1970
        %v1987 = vadd.f32 %v1961, %v1985
        %v1988 = vadd.f32 %v1962, %v1986
        %s1989 = sld [smem:[#allocation10 + $0x88]]
        %v1990 = vstv %s1989
        %v1991 = vmul.f32 %v1990, %v1969
        %v1992 = vmul.f32 %v1990, %v1970
        %v1993 = vadd.f32 %v1967, %v1991
        %v1994 = vadd.f32 %v1968, %v1992
        %1995 = vrot.lane.b32.xlu0 %v1705, 127
        %v1996 = vpop.permute.xlu0 %1995
        %1997 = vrot.lane.b32.xlu0 %v1706, 127
        %v1998 = vpop.permute.xlu0 %1997
        %v2001 = vsel %vm646, %v1996, 0.0
        %v2002 = vsel %vm647, %v1998, 0.0
        %s2003 = sld [smem:[#allocation10 + $0x2]]
        %v2004 = vstv %s2003
        %v2005 = vmul.f32 %v2004, %v2001
        %v2006 = vmul.f32 %v2004, %v2002
        %v2007 = vadd.f32 %v1975, %v2005
        %v2008 = vadd.f32 %v1976, %v2006
        %s2009 = sld [smem:[#allocation10 + $0x26]]
        %v2010 = vstv %s2009
        %v2011 = vmul.f32 %v2010, %v2001
        %v2012 = vmul.f32 %v2010, %v2002
        %v2013 = vadd.f32 %v1981, %v2011
        %v2014 = vadd.f32 %v1982, %v2012
        %s2015 = sld [smem:[#allocation10 + $0x4a]]
        %v2016 = vstv %s2015
        %v2017 = vmul.f32 %v2016, %v2001
        %v2018 = vmul.f32 %v2016, %v2002
        %v2019 = vadd.f32 %v1987, %v2017
        %v2020 = vadd.f32 %v1988, %v2018
        %s2021 = sld [smem:[#allocation10 + $0x6e]]
        %v2022 = vstv %s2021
        %v2023 = vmul.f32 %v2022, %v2001
        %v2024 = vmul.f32 %v2022, %v2002
        %v2025 = vadd.f32 %v1993, %v2023
        %v2026 = vadd.f32 %v1994, %v2024
        %2027 = vrot.lane.b32.xlu0 %v1755, 127
        %v2028 = vpop.permute.xlu0 %2027
        %2029 = vrot.lane.b32.xlu0 %v1756, 127
        %v2030 = vpop.permute.xlu0 %2029
        %v2033 = vsel %vm646, %v2028, 0.0
        %v2034 = vsel %vm647, %v2030, 0.0
        %s2035 = sld [smem:[#allocation10 + $0xb]]
        %v2036 = vstv %s2035
        %v2037 = vmul.f32 %v2036, %v2033
        %v2038 = vmul.f32 %v2036, %v2034
        %v2039 = vadd.f32 %v2007, %v2037
        %v2040 = vadd.f32 %v2008, %v2038
        %s2041 = sld [smem:[#allocation10 + $0x2f]]
        %v2042 = vstv %s2041
        %v2043 = vmul.f32 %v2042, %v2033
        %v2044 = vmul.f32 %v2042, %v2034
        %v2045 = vadd.f32 %v2013, %v2043
        %v2046 = vadd.f32 %v2014, %v2044
        %s2047 = sld [smem:[#allocation10 + $0x53]]
        %v2048 = vstv %s2047
        %v2049 = vmul.f32 %v2048, %v2033
        %v2050 = vmul.f32 %v2048, %v2034
        %v2051 = vadd.f32 %v2019, %v2049
        %v2052 = vadd.f32 %v2020, %v2050
        %s2053 = sld [smem:[#allocation10 + $0x77]]
        %v2054 = vstv %s2053
        %v2055 = vmul.f32 %v2054, %v2033
        %v2056 = vmul.f32 %v2054, %v2034
        %v2057 = vadd.f32 %v2025, %v2055
        %v2058 = vadd.f32 %v2026, %v2056
        %2059 = vrot.lane.b32.xlu0 %v1805, 127
        %v2060 = vpop.permute.xlu0 %2059
        %2061 = vrot.lane.b32.xlu0 %v1806, 127
        %v2062 = vpop.permute.xlu0 %2061
        %v2065 = vsel %vm646, %v2060, 0.0
        %v2066 = vsel %vm647, %v2062, 0.0
        %s2067 = sld [smem:[#allocation10 + $0x14]]
        %v2068 = vstv %s2067
        %v2069 = vmul.f32 %v2068, %v2065
        %v2070 = vmul.f32 %v2068, %v2066
        %v2071 = vadd.f32 %v2039, %v2069
        %v2072 = vadd.f32 %v2040, %v2070
        %s2073 = sld [smem:[#allocation10 + $0x38]]
        %v2074 = vstv %s2073
        %v2075 = vmul.f32 %v2074, %v2065
        %v2076 = vmul.f32 %v2074, %v2066
        %v2077 = vadd.f32 %v2045, %v2075
        %v2078 = vadd.f32 %v2046, %v2076
        %s2079 = sld [smem:[#allocation10 + $0x5c]]
        %v2080 = vstv %s2079
        %v2081 = vmul.f32 %v2080, %v2065
        %v2082 = vmul.f32 %v2080, %v2066
        %v2083 = vadd.f32 %v2051, %v2081
        %v2084 = vadd.f32 %v2052, %v2082
        %s2085 = sld [smem:[#allocation10 + $0x80]]
        %v2086 = vstv %s2085
        %v2087 = vmul.f32 %v2086, %v2065
        %v2088 = vmul.f32 %v2086, %v2066
        %v2089 = vadd.f32 %v2057, %v2087
        %v2090 = vadd.f32 %v2058, %v2088
        %2091 = vrot.lane.b32.xlu0 %v1855, 127
        %v2092 = vpop.permute.xlu0 %2091
        %2093 = vrot.lane.b32.xlu0 %v1856, 127
        %v2094 = vpop.permute.xlu0 %2093
        %v2097 = vsel %vm646, %v2092, 0.0
        %v2098 = vsel %vm647, %v2094, 0.0
        %s2099 = sld [smem:[#allocation10 + $0x1d]]
        %v2100 = vstv %s2099
        %v2101 = vmul.f32 %v2100, %v2097
        %v2102 = vmul.f32 %v2100, %v2098
        %v2103 = vadd.f32 %v2071, %v2101
        %v2104 = vadd.f32 %v2072, %v2102
        %s2105 = sld [smem:[#allocation10 + $0x41]]
        %v2106 = vstv %s2105
        %v2107 = vmul.f32 %v2106, %v2097
        %v2108 = vmul.f32 %v2106, %v2098
        %v2109 = vadd.f32 %v2077, %v2107
        %v2110 = vadd.f32 %v2078, %v2108
        %s2111 = sld [smem:[#allocation10 + $0x65]]
        %v2112 = vstv %s2111
        %v2113 = vmul.f32 %v2112, %v2097
        %v2114 = vmul.f32 %v2112, %v2098
        %v2115 = vadd.f32 %v2083, %v2113
        %v2116 = vadd.f32 %v2084, %v2114
        %s2117 = sld [smem:[#allocation10 + $0x89]]
        %v2118 = vstv %s2117
        %v2119 = vmul.f32 %v2118, %v2097
        %v2120 = vmul.f32 %v2118, %v2098
        %v2121 = vadd.f32 %v2089, %v2119
        %v2122 = vadd.f32 %v2090, %v2120
        %2123 = vrot.lane.b32.xlu0 %v1671, 16
        %v2124 = vpop.permute.xlu0 %2123
        %v2125 = vsel %vm319, %v2124, %v1671
        %2126 = vrot.lane.b32.xlu0 %v1672, 16
        %v2127 = vpop.permute.xlu0 %2126
        %v2128 = vsel %vm319, %v2127, %v1672
        %2129 = vrot.lane.b32.xlu0 %v2125, 16
        %v2130 = vpop.permute.xlu0 %2129
        %2131 = vrot.lane.b32.xlu0 %v2128, 16
        %v2132 = vpop.permute.xlu0 %2131
        %v2133 = vsel %vm319, %v2130, %v1671
        %v2134 = vsel %vm319, %v2132, %v1672
        %2137 = vrot.lane.b32.xlu0 %v2133, 113
        %v2138 = vpop.permute.xlu0 %2137
        %2139 = vrot.lane.b32.xlu0 %v2134, 113
        %v2140 = vpop.permute.xlu0 %2139
        %v2143 = vsel %vm796, %v2138, 0.0
        %v2144 = vsel %vm797, %v2140, 0.0
        %s2145 = sld [smem:[#allocation10 + $0x3]]
        %v2146 = vstv %s2145
        %v2147 = vmul.f32 %v2146, %v2143
        %v2148 = vmul.f32 %v2146, %v2144
        %v2149 = vadd.f32 %v2103, %v2147
        %v2150 = vadd.f32 %v2104, %v2148
        %s2151 = sld [smem:[#allocation10 + $0x27]]
        %v2152 = vstv %s2151
        %v2153 = vmul.f32 %v2152, %v2143
        %v2154 = vmul.f32 %v2152, %v2144
        %v2155 = vadd.f32 %v2109, %v2153
        %v2156 = vadd.f32 %v2110, %v2154
        %s2157 = sld [smem:[#allocation10 + $0x4b]]
        %v2158 = vstv %s2157
        %v2159 = vmul.f32 %v2158, %v2143
        %v2160 = vmul.f32 %v2158, %v2144
        %v2161 = vadd.f32 %v2115, %v2159
        %v2162 = vadd.f32 %v2116, %v2160
        %s2163 = sld [smem:[#allocation10 + $0x6f]]
        %v2164 = vstv %s2163
        %v2165 = vmul.f32 %v2164, %v2143
        %v2166 = vmul.f32 %v2164, %v2144
        %v2167 = vadd.f32 %v2121, %v2165
        %v2168 = vadd.f32 %v2122, %v2166
        %2169 = vrot.lane.b32.xlu0 %v1677, 16
        %v2170 = vpop.permute.xlu0 %2169
        %v2171 = vsel %vm319, %v2170, %v1677
        %2172 = vrot.lane.b32.xlu0 %v1678, 16
        %v2173 = vpop.permute.xlu0 %2172
        %v2174 = vsel %vm319, %v2173, %v1678
        %2175 = vrot.lane.b32.xlu0 %v2171, 16
        %v2176 = vpop.permute.xlu0 %2175
        %2177 = vrot.lane.b32.xlu0 %v2174, 16
        %v2178 = vpop.permute.xlu0 %2177
        %v2179 = vsel %vm319, %v2176, %v1677
        %v2180 = vsel %vm319, %v2178, %v1678
        %2183 = vrot.lane.b32.xlu0 %v2179, 113
        %v2184 = vpop.permute.xlu0 %2183
        %2185 = vrot.lane.b32.xlu0 %v2180, 113
        %v2186 = vpop.permute.xlu0 %2185
        %v2189 = vsel %vm796, %v2184, 0.0
        %v2190 = vsel %vm797, %v2186, 0.0
        %s2191 = sld [smem:[#allocation10 + $0xc]]
        %v2192 = vstv %s2191
        %v2193 = vmul.f32 %v2192, %v2189
        %v2194 = vmul.f32 %v2192, %v2190
        %v2195 = vadd.f32 %v2149, %v2193
        %v2196 = vadd.f32 %v2150, %v2194
        %s2197 = sld [smem:[#allocation10 + $0x30]]
        %v2198 = vstv %s2197
        %v2199 = vmul.f32 %v2198, %v2189
        %v2200 = vmul.f32 %v2198, %v2190
        %v2201 = vadd.f32 %v2155, %v2199
        %v2202 = vadd.f32 %v2156, %v2200
        %s2203 = sld [smem:[#allocation10 + $0x54]]
        %v2204 = vstv %s2203
        %v2205 = vmul.f32 %v2204, %v2189
        %v2206 = vmul.f32 %v2204, %v2190
        %v2207 = vadd.f32 %v2161, %v2205
        %v2208 = vadd.f32 %v2162, %v2206
        %s2209 = sld [smem:[#allocation10 + $0x78]]
        %v2210 = vstv %s2209
        %v2211 = vmul.f32 %v2210, %v2189
        %v2212 = vmul.f32 %v2210, %v2190
        %v2213 = vadd.f32 %v2167, %v2211
        %v2214 = vadd.f32 %v2168, %v2212
        %2215 = vrot.lane.b32.xlu0 %v1683, 16
        %v2216 = vpop.permute.xlu0 %2215
        %v2217 = vsel %vm319, %v2216, %v1683
        %2218 = vrot.lane.b32.xlu0 %v1684, 16
        %v2219 = vpop.permute.xlu0 %2218
        %v2220 = vsel %vm319, %v2219, %v1684
        %2221 = vrot.lane.b32.xlu0 %v2217, 16
        %v2222 = vpop.permute.xlu0 %2221
        %2223 = vrot.lane.b32.xlu0 %v2220, 16
        %v2224 = vpop.permute.xlu0 %2223
        %v2225 = vsel %vm319, %v2222, %v1683
        %v2226 = vsel %vm319, %v2224, %v1684
        %2229 = vrot.lane.b32.xlu0 %v2225, 113
        %v2230 = vpop.permute.xlu0 %2229
        %2231 = vrot.lane.b32.xlu0 %v2226, 113
        %v2232 = vpop.permute.xlu0 %2231
        %v2235 = vsel %vm796, %v2230, 0.0
        %v2236 = vsel %vm797, %v2232, 0.0
        %s2237 = sld [smem:[#allocation10 + $0x15]]
        %v2238 = vstv %s2237
        %v2239 = vmul.f32 %v2238, %v2235
        %v2240 = vmul.f32 %v2238, %v2236
        %v2241 = vadd.f32 %v2195, %v2239
        %v2242 = vadd.f32 %v2196, %v2240
        %s2243 = sld [smem:[#allocation10 + $0x39]]
        %v2244 = vstv %s2243
        %v2245 = vmul.f32 %v2244, %v2235
        %v2246 = vmul.f32 %v2244, %v2236
        %v2247 = vadd.f32 %v2201, %v2245
        %v2248 = vadd.f32 %v2202, %v2246
        %s2249 = sld [smem:[#allocation10 + $0x5d]]
        %v2250 = vstv %s2249
        %v2251 = vmul.f32 %v2250, %v2235
        %v2252 = vmul.f32 %v2250, %v2236
        %v2253 = vadd.f32 %v2207, %v2251
        %v2254 = vadd.f32 %v2208, %v2252
        %s2255 = sld [smem:[#allocation10 + $0x81]]
        %v2256 = vstv %s2255
        %v2257 = vmul.f32 %v2256, %v2235
        %v2258 = vmul.f32 %v2256, %v2236
        %v2259 = vadd.f32 %v2213, %v2257
        %v2260 = vadd.f32 %v2214, %v2258
        %2261 = vrot.lane.b32.xlu0 %v1689, 16
        %v2262 = vpop.permute.xlu0 %2261
        %v2263 = vsel %vm319, %v2262, %v1689
        %2264 = vrot.lane.b32.xlu0 %v1690, 16
        %v2265 = vpop.permute.xlu0 %2264
        %v2266 = vsel %vm319, %v2265, %v1690
        %2267 = vrot.lane.b32.xlu0 %v2263, 16
        %v2268 = vpop.permute.xlu0 %2267
        %2269 = vrot.lane.b32.xlu0 %v2266, 16
        %v2270 = vpop.permute.xlu0 %2269
        %v2271 = vsel %vm319, %v2268, %v1689
        %v2272 = vsel %vm319, %v2270, %v1690
        %2275 = vrot.lane.b32.xlu0 %v2271, 113
        %v2276 = vpop.permute.xlu0 %2275
        %2277 = vrot.lane.b32.xlu0 %v2272, 113
        %v2278 = vpop.permute.xlu0 %2277
        %v2281 = vsel %vm796, %v2276, 0.0
        %v2282 = vsel %vm797, %v2278, 0.0
        %s2283 = sld [smem:[#allocation10 + $0x1e]]
        %v2284 = vstv %s2283
        %v2285 = vmul.f32 %v2284, %v2281
        %v2286 = vmul.f32 %v2284, %v2282
        %v2287 = vadd.f32 %v2241, %v2285
        %v2288 = vadd.f32 %v2242, %v2286
        %s2289 = sld [smem:[#allocation10 + $0x42]]
        %v2290 = vstv %s2289
        %v2291 = vmul.f32 %v2290, %v2281
        %v2292 = vmul.f32 %v2290, %v2282
        %v2293 = vadd.f32 %v2247, %v2291
        %v2294 = vadd.f32 %v2248, %v2292
        %s2295 = sld [smem:[#allocation10 + $0x66]]
        %v2296 = vstv %s2295
        %v2297 = vmul.f32 %v2296, %v2281
        %v2298 = vmul.f32 %v2296, %v2282
        %v2299 = vadd.f32 %v2253, %v2297
        %v2300 = vadd.f32 %v2254, %v2298
        %s2301 = sld [smem:[#allocation10 + $0x8a]]
        %v2302 = vstv %s2301
        %v2303 = vmul.f32 %v2302, %v2281
        %v2304 = vmul.f32 %v2302, %v2282
        %v2305 = vadd.f32 %v2259, %v2303
        %v2306 = vadd.f32 %v2260, %v2304
        %s2307 = sld [smem:[#allocation10 + $0x4]]
        %v2308 = vstv %s2307
        %v2309 = vmul.f32 %v2308, %v1671
        %v2310 = vmul.f32 %v2308, %v1672
        %v2311 = vadd.f32 %v2287, %v2309
        %v2312 = vadd.f32 %v2288, %v2310
        %s2313 = sld [smem:[#allocation10 + $0x28]]
        %v2314 = vstv %s2313
        %v2315 = vmul.f32 %v2314, %v1671
        %v2316 = vmul.f32 %v2314, %v1672
        %v2317 = vadd.f32 %v2293, %v2315
        %v2318 = vadd.f32 %v2294, %v2316
        %s2319 = sld [smem:[#allocation10 + $0x4c]]
        %v2320 = vstv %s2319
        %v2321 = vmul.f32 %v2320, %v1671
        %v2322 = vmul.f32 %v2320, %v1672
        %v2323 = vadd.f32 %v2299, %v2321
        %v2324 = vadd.f32 %v2300, %v2322
        %s2325 = sld [smem:[#allocation10 + $0x70]]
        %v2326 = vstv %s2325
        %v2327 = vmul.f32 %v2326, %v1671
        %v2328 = vmul.f32 %v2326, %v1672
        %v2329 = vadd.f32 %v2305, %v2327
        %v2330 = vadd.f32 %v2306, %v2328
        %s2331 = sld [smem:[#allocation10 + $0xd]]
        %v2332 = vstv %s2331
        %v2333 = vmul.f32 %v2332, %v1677
        %v2334 = vmul.f32 %v2332, %v1678
        %v2335 = vadd.f32 %v2311, %v2333
        %v2336 = vadd.f32 %v2312, %v2334
        %s2337 = sld [smem:[#allocation10 + $0x31]]
        %v2338 = vstv %s2337
        %v2339 = vmul.f32 %v2338, %v1677
        %v2340 = vmul.f32 %v2338, %v1678
        %v2341 = vadd.f32 %v2317, %v2339
        %v2342 = vadd.f32 %v2318, %v2340
        %s2343 = sld [smem:[#allocation10 + $0x55]]
        %v2344 = vstv %s2343
        %v2345 = vmul.f32 %v2344, %v1677
        %v2346 = vmul.f32 %v2344, %v1678
        %v2347 = vadd.f32 %v2323, %v2345
        %v2348 = vadd.f32 %v2324, %v2346
        %s2349 = sld [smem:[#allocation10 + $0x79]]
        %v2350 = vstv %s2349
        %v2351 = vmul.f32 %v2350, %v1677
        %v2352 = vmul.f32 %v2350, %v1678
        %v2353 = vadd.f32 %v2329, %v2351
        %v2354 = vadd.f32 %v2330, %v2352
        %s2355 = sld [smem:[#allocation10 + $0x16]]
        %v2356 = vstv %s2355
        %v2357 = vmul.f32 %v2356, %v1683
        %v2358 = vmul.f32 %v2356, %v1684
        %v2359 = vadd.f32 %v2335, %v2357
        %v2360 = vadd.f32 %v2336, %v2358
        %s2361 = sld [smem:[#allocation10 + $0x3a]]
        %v2362 = vstv %s2361
        %v2363 = vmul.f32 %v2362, %v1683
        %v2364 = vmul.f32 %v2362, %v1684
        %v2365 = vadd.f32 %v2341, %v2363
        %v2366 = vadd.f32 %v2342, %v2364
        %s2367 = sld [smem:[#allocation10 + $0x5e]]
        %v2368 = vstv %s2367
        %v2369 = vmul.f32 %v2368, %v1683
        %v2370 = vmul.f32 %v2368, %v1684
        %v2371 = vadd.f32 %v2347, %v2369
        %v2372 = vadd.f32 %v2348, %v2370
        %s2373 = sld [smem:[#allocation10 + $0x82]]
        %v2374 = vstv %s2373
        %v2375 = vmul.f32 %v2374, %v1683
        %v2376 = vmul.f32 %v2374, %v1684
        %v2377 = vadd.f32 %v2353, %v2375
        %v2378 = vadd.f32 %v2354, %v2376
        %s2379 = sld [smem:[#allocation10 + $0x1f]]
        %v2380 = vstv %s2379
        %v2381 = vmul.f32 %v2380, %v1689
        %v2382 = vmul.f32 %v2380, %v1690
        %v2383 = vadd.f32 %v2359, %v2381
        %v2384 = vadd.f32 %v2360, %v2382
        %s2385 = sld [smem:[#allocation10 + $0x43]]
        %v2386 = vstv %s2385
        %v2387 = vmul.f32 %v2386, %v1689
        %v2388 = vmul.f32 %v2386, %v1690
        %v2389 = vadd.f32 %v2365, %v2387
        %v2390 = vadd.f32 %v2366, %v2388
        %s2391 = sld [smem:[#allocation10 + $0x67]]
        %v2392 = vstv %s2391
        %v2393 = vmul.f32 %v2392, %v1689
        %v2394 = vmul.f32 %v2392, %v1690
        %v2395 = vadd.f32 %v2371, %v2393
        %v2396 = vadd.f32 %v2372, %v2394
        %s2397 = sld [smem:[#allocation10 + $0x8b]]
        %v2398 = vstv %s2397
        %v2399 = vmul.f32 %v2398, %v1689
        %v2400 = vmul.f32 %v2398, %v1690
        %v2401 = vadd.f32 %v2377, %v2399
        %v2402 = vadd.f32 %v2378, %v2400
        %2403 = vrot.lane.b32.xlu0 %v2133, 127
        %v2404 = vpop.permute.xlu0 %2403
        %2405 = vrot.lane.b32.xlu0 %v2134, 127
        %v2406 = vpop.permute.xlu0 %2405
        %v2409 = vsel %vm1068, %v2404, 0.0
        %v2410 = vsel %vm1069, %v2406, 0.0
        %s2411 = sld [smem:[#allocation10 + $0x5]]
        %v2412 = vstv %s2411
        %v2413 = vmul.f32 %v2412, %v2409
        %v2414 = vmul.f32 %v2412, %v2410
        %v2415 = vadd.f32 %v2383, %v2413
        %v2416 = vadd.f32 %v2384, %v2414
        %s2417 = sld [smem:[#allocation10 + $0x29]]
        %v2418 = vstv %s2417
        %v2419 = vmul.f32 %v2418, %v2409
        %v2420 = vmul.f32 %v2418, %v2410
        %v2421 = vadd.f32 %v2389, %v2419
        %v2422 = vadd.f32 %v2390, %v2420
        %s2423 = sld [smem:[#allocation10 + $0x4d]]
        %v2424 = vstv %s2423
        %v2425 = vmul.f32 %v2424, %v2409
        %v2426 = vmul.f32 %v2424, %v2410
        %v2427 = vadd.f32 %v2395, %v2425
        %v2428 = vadd.f32 %v2396, %v2426
        %s2429 = sld [smem:[#allocation10 + $0x71]]
        %v2430 = vstv %s2429
        %v2431 = vmul.f32 %v2430, %v2409
        %v2432 = vmul.f32 %v2430, %v2410
        %v2433 = vadd.f32 %v2401, %v2431
        %v2434 = vadd.f32 %v2402, %v2432
        %2435 = vrot.lane.b32.xlu0 %v2179, 127
        %v2436 = vpop.permute.xlu0 %2435
        %2437 = vrot.lane.b32.xlu0 %v2180, 127
        %v2438 = vpop.permute.xlu0 %2437
        %v2441 = vsel %vm1068, %v2436, 0.0
        %v2442 = vsel %vm1069, %v2438, 0.0
        %s2443 = sld [smem:[#allocation10 + $0xe]]
        %v2444 = vstv %s2443
        %v2445 = vmul.f32 %v2444, %v2441
        %v2446 = vmul.f32 %v2444, %v2442
        %v2447 = vadd.f32 %v2415, %v2445
        %v2448 = vadd.f32 %v2416, %v2446
        %s2449 = sld [smem:[#allocation10 + $0x32]]
        %v2450 = vstv %s2449
        %v2451 = vmul.f32 %v2450, %v2441
        %v2452 = vmul.f32 %v2450, %v2442
        %v2453 = vadd.f32 %v2421, %v2451
        %v2454 = vadd.f32 %v2422, %v2452
        %s2455 = sld [smem:[#allocation10 + $0x56]]
        %v2456 = vstv %s2455
        %v2457 = vmul.f32 %v2456, %v2441
        %v2458 = vmul.f32 %v2456, %v2442
        %v2459 = vadd.f32 %v2427, %v2457
        %v2460 = vadd.f32 %v2428, %v2458
        %s2461 = sld [smem:[#allocation10 + $0x7a]]
        %v2462 = vstv %s2461
        %v2463 = vmul.f32 %v2462, %v2441
        %v2464 = vmul.f32 %v2462, %v2442
        %v2465 = vadd.f32 %v2433, %v2463
        %v2466 = vadd.f32 %v2434, %v2464
        %2467 = vrot.lane.b32.xlu0 %v2225, 127
        %v2468 = vpop.permute.xlu0 %2467
        %2469 = vrot.lane.b32.xlu0 %v2226, 127
        %v2470 = vpop.permute.xlu0 %2469
        %v2473 = vsel %vm1068, %v2468, 0.0
        %v2474 = vsel %vm1069, %v2470, 0.0
        %s2475 = sld [smem:[#allocation10 + $0x17]]
        %v2476 = vstv %s2475
        %v2477 = vmul.f32 %v2476, %v2473
        %v2478 = vmul.f32 %v2476, %v2474
        %v2479 = vadd.f32 %v2447, %v2477
        %v2480 = vadd.f32 %v2448, %v2478
        %s2481 = sld [smem:[#allocation10 + $0x3b]]
        %v2482 = vstv %s2481
        %v2483 = vmul.f32 %v2482, %v2473
        %v2484 = vmul.f32 %v2482, %v2474
        %v2485 = vadd.f32 %v2453, %v2483
        %v2486 = vadd.f32 %v2454, %v2484
        %s2487 = sld [smem:[#allocation10 + $0x5f]]
        %v2488 = vstv %s2487
        %v2489 = vmul.f32 %v2488, %v2473
        %v2490 = vmul.f32 %v2488, %v2474
        %v2491 = vadd.f32 %v2459, %v2489
        %v2492 = vadd.f32 %v2460, %v2490
        %s2493 = sld [smem:[#allocation10 + $0x83]]
        %v2494 = vstv %s2493
        %v2495 = vmul.f32 %v2494, %v2473
        %v2496 = vmul.f32 %v2494, %v2474
        %v2497 = vadd.f32 %v2465, %v2495
        %v2498 = vadd.f32 %v2466, %v2496
        %2499 = vrot.lane.b32.xlu0 %v2271, 127
        %v2500 = vpop.permute.xlu0 %2499
        %2501 = vrot.lane.b32.xlu0 %v2272, 127
        %v2502 = vpop.permute.xlu0 %2501
        %v2505 = vsel %vm1068, %v2500, 0.0
        %v2506 = vsel %vm1069, %v2502, 0.0
        %s2507 = sld [smem:[#allocation10 + $0x20]]
        %v2508 = vstv %s2507
        %v2509 = vmul.f32 %v2508, %v2505
        %v2510 = vmul.f32 %v2508, %v2506
        %v2511 = vadd.f32 %v2479, %v2509
        %v2512 = vadd.f32 %v2480, %v2510
        %s2513 = sld [smem:[#allocation10 + $0x44]]
        %v2514 = vstv %s2513
        %v2515 = vmul.f32 %v2514, %v2505
        %v2516 = vmul.f32 %v2514, %v2506
        %v2517 = vadd.f32 %v2485, %v2515
        %v2518 = vadd.f32 %v2486, %v2516
        %s2519 = sld [smem:[#allocation10 + $0x68]]
        %v2520 = vstv %s2519
        %v2521 = vmul.f32 %v2520, %v2505
        %v2522 = vmul.f32 %v2520, %v2506
        %v2523 = vadd.f32 %v2491, %v2521
        %v2524 = vadd.f32 %v2492, %v2522
        %s2525 = sld [smem:[#allocation10 + $0x8c]]
        %v2526 = vstv %s2525
        %v2527 = vmul.f32 %v2526, %v2505
        %v2528 = vmul.f32 %v2526, %v2506
        %v2529 = vadd.f32 %v2497, %v2527
        %v2530 = vadd.f32 %v2498, %v2528
        %v2531 = vrot.slane %v1671, 1
        %v2532 = vrot.slane %v1672, 1
        %v2533 = vsel %vm1200, %v2531, %v2532
        %v2534 = vsel %vm1200, %v2532, %v2531
        %2535 = vrot.lane.b32.xlu0 %v2533, 16
        %v2536 = vpop.permute.xlu0 %2535
        %v2537 = vsel %vm319, %v2536, %v2533
        %2538 = vrot.lane.b32.xlu0 %v2534, 16
        %v2539 = vpop.permute.xlu0 %2538
        %v2540 = vsel %vm319, %v2539, %v2534
        %2541 = vrot.lane.b32.xlu0 %v2537, 16
        %v2542 = vpop.permute.xlu0 %2541
        %2543 = vrot.lane.b32.xlu0 %v2540, 16
        %v2544 = vpop.permute.xlu0 %2543
        %v2545 = vsel %vm319, %v2542, %v2533
        %v2546 = vsel %vm319, %v2544, %v2534
        %2549 = vrot.lane.b32.xlu0 %v2545, 113
        %v2550 = vpop.permute.xlu0 %2549
        %2551 = vrot.lane.b32.xlu0 %v2546, 113
        %v2552 = vpop.permute.xlu0 %2551
        %v2555 = vsel %vm1225, %v2550, 0.0
        %v2556 = vsel %vm1226, %v2552, 0.0
        %s2557 = sld [smem:[#allocation10 + $0x6]]
        %v2558 = vstv %s2557
        %v2559 = vmul.f32 %v2558, %v2555
        %v2560 = vmul.f32 %v2558, %v2556
        %v2561 = vadd.f32 %v2511, %v2559
        %v2562 = vadd.f32 %v2512, %v2560
        %s2563 = sld [smem:[#allocation10 + $0x2a]]
        %v2564 = vstv %s2563
        %v2565 = vmul.f32 %v2564, %v2555
        %v2566 = vmul.f32 %v2564, %v2556
        %v2567 = vadd.f32 %v2517, %v2565
        %v2568 = vadd.f32 %v2518, %v2566
        %s2569 = sld [smem:[#allocation10 + $0x4e]]
        %v2570 = vstv %s2569
        %v2571 = vmul.f32 %v2570, %v2555
        %v2572 = vmul.f32 %v2570, %v2556
        %v2573 = vadd.f32 %v2523, %v2571
        %v2574 = vadd.f32 %v2524, %v2572
        %s2575 = sld [smem:[#allocation10 + $0x72]]
        %v2576 = vstv %s2575
        %v2577 = vmul.f32 %v2576, %v2555
        %v2578 = vmul.f32 %v2576, %v2556
        %v2579 = vadd.f32 %v2529, %v2577
        %v2580 = vadd.f32 %v2530, %v2578
        %v2581 = vrot.slane %v1677, 1
        %v2582 = vrot.slane %v1678, 1
        %v2583 = vsel %vm1200, %v2581, %v2582
        %v2584 = vsel %vm1200, %v2582, %v2581
        %2585 = vrot.lane.b32.xlu0 %v2583, 16
        %v2586 = vpop.permute.xlu0 %2585
        %v2587 = vsel %vm319, %v2586, %v2583
        %2588 = vrot.lane.b32.xlu0 %v2584, 16
        %v2589 = vpop.permute.xlu0 %2588
        %v2590 = vsel %vm319, %v2589, %v2584
        %2591 = vrot.lane.b32.xlu0 %v2587, 16
        %v2592 = vpop.permute.xlu0 %2591
        %2593 = vrot.lane.b32.xlu0 %v2590, 16
        %v2594 = vpop.permute.xlu0 %2593
        %v2595 = vsel %vm319, %v2592, %v2583
        %v2596 = vsel %vm319, %v2594, %v2584
        %2599 = vrot.lane.b32.xlu0 %v2595, 113
        %v2600 = vpop.permute.xlu0 %2599
        %2601 = vrot.lane.b32.xlu0 %v2596, 113
        %v2602 = vpop.permute.xlu0 %2601
        %v2605 = vsel %vm1225, %v2600, 0.0
        %v2606 = vsel %vm1226, %v2602, 0.0
        %s2607 = sld [smem:[#allocation10 + $0xf]]
        %v2608 = vstv %s2607
        %v2609 = vmul.f32 %v2608, %v2605
        %v2610 = vmul.f32 %v2608, %v2606
        %v2611 = vadd.f32 %v2561, %v2609
        %v2612 = vadd.f32 %v2562, %v2610
        %s2613 = sld [smem:[#allocation10 + $0x33]]
        %v2614 = vstv %s2613
        %v2615 = vmul.f32 %v2614, %v2605
        %v2616 = vmul.f32 %v2614, %v2606
        %v2617 = vadd.f32 %v2567, %v2615
        %v2618 = vadd.f32 %v2568, %v2616
        %s2619 = sld [smem:[#allocation10 + $0x57]]
        %v2620 = vstv %s2619
        %v2621 = vmul.f32 %v2620, %v2605
        %v2622 = vmul.f32 %v2620, %v2606
        %v2623 = vadd.f32 %v2573, %v2621
        %v2624 = vadd.f32 %v2574, %v2622
        %s2625 = sld [smem:[#allocation10 + $0x7b]]
        %v2626 = vstv %s2625
        %v2627 = vmul.f32 %v2626, %v2605
        %v2628 = vmul.f32 %v2626, %v2606
        %v2629 = vadd.f32 %v2579, %v2627
        %v2630 = vadd.f32 %v2580, %v2628
        %v2631 = vrot.slane %v1683, 1
        %v2632 = vrot.slane %v1684, 1
        %v2633 = vsel %vm1200, %v2631, %v2632
        %v2634 = vsel %vm1200, %v2632, %v2631
        %2635 = vrot.lane.b32.xlu0 %v2633, 16
        %v2636 = vpop.permute.xlu0 %2635
        %v2637 = vsel %vm319, %v2636, %v2633
        %2638 = vrot.lane.b32.xlu0 %v2634, 16
        %v2639 = vpop.permute.xlu0 %2638
        %v2640 = vsel %vm319, %v2639, %v2634
        %2641 = vrot.lane.b32.xlu0 %v2637, 16
        %v2642 = vpop.permute.xlu0 %2641
        %2643 = vrot.lane.b32.xlu0 %v2640, 16
        %v2644 = vpop.permute.xlu0 %2643
        %v2645 = vsel %vm319, %v2642, %v2633
        %v2646 = vsel %vm319, %v2644, %v2634
        %2649 = vrot.lane.b32.xlu0 %v2645, 113
        %v2650 = vpop.permute.xlu0 %2649
        %2651 = vrot.lane.b32.xlu0 %v2646, 113
        %v2652 = vpop.permute.xlu0 %2651
        %v2655 = vsel %vm1225, %v2650, 0.0
        %v2656 = vsel %vm1226, %v2652, 0.0
        %s2657 = sld [smem:[#allocation10 + $0x18]]
        %v2658 = vstv %s2657
        %v2659 = vmul.f32 %v2658, %v2655
        %v2660 = vmul.f32 %v2658, %v2656
        %v2661 = vadd.f32 %v2611, %v2659
        %v2662 = vadd.f32 %v2612, %v2660
        %s2663 = sld [smem:[#allocation10 + $0x3c]]
        %v2664 = vstv %s2663
        %v2665 = vmul.f32 %v2664, %v2655
        %v2666 = vmul.f32 %v2664, %v2656
        %v2667 = vadd.f32 %v2617, %v2665
        %v2668 = vadd.f32 %v2618, %v2666
        %s2669 = sld [smem:[#allocation10 + $0x60]]
        %v2670 = vstv %s2669
        %v2671 = vmul.f32 %v2670, %v2655
        %v2672 = vmul.f32 %v2670, %v2656
        %v2673 = vadd.f32 %v2623, %v2671
        %v2674 = vadd.f32 %v2624, %v2672
        %s2675 = sld [smem:[#allocation10 + $0x84]]
        %v2676 = vstv %s2675
        %v2677 = vmul.f32 %v2676, %v2655
        %v2678 = vmul.f32 %v2676, %v2656
        %v2679 = vadd.f32 %v2629, %v2677
        %v2680 = vadd.f32 %v2630, %v2678
        %v2681 = vrot.slane %v1689, 1
        %v2682 = vrot.slane %v1690, 1
        %v2683 = vsel %vm1200, %v2681, %v2682
        %v2684 = vsel %vm1200, %v2682, %v2681
        %2685 = vrot.lane.b32.xlu0 %v2683, 16
        %v2686 = vpop.permute.xlu0 %2685
        %v2687 = vsel %vm319, %v2686, %v2683
        %2688 = vrot.lane.b32.xlu0 %v2684, 16
        %v2689 = vpop.permute.xlu0 %2688
        %v2690 = vsel %vm319, %v2689, %v2684
        %2691 = vrot.lane.b32.xlu0 %v2687, 16
        %v2692 = vpop.permute.xlu0 %2691
        %2693 = vrot.lane.b32.xlu0 %v2690, 16
        %v2694 = vpop.permute.xlu0 %2693
        %v2695 = vsel %vm319, %v2692, %v2683
        %v2696 = vsel %vm319, %v2694, %v2684
        %2699 = vrot.lane.b32.xlu0 %v2695, 113
        %v2700 = vpop.permute.xlu0 %2699
        %2701 = vrot.lane.b32.xlu0 %v2696, 113
        %v2702 = vpop.permute.xlu0 %2701
        %v2705 = vsel %vm1225, %v2700, 0.0
        %v2706 = vsel %vm1226, %v2702, 0.0
        %s2707 = sld [smem:[#allocation10 + $0x21]]
        %v2708 = vstv %s2707
        %v2709 = vmul.f32 %v2708, %v2705
        %v2710 = vmul.f32 %v2708, %v2706
        %v2711 = vadd.f32 %v2661, %v2709
        %v2712 = vadd.f32 %v2662, %v2710
        %s2713 = sld [smem:[#allocation10 + $0x45]]
        %v2714 = vstv %s2713
        %v2715 = vmul.f32 %v2714, %v2705
        %v2716 = vmul.f32 %v2714, %v2706
        %v2717 = vadd.f32 %v2667, %v2715
        %v2718 = vadd.f32 %v2668, %v2716
        %s2719 = sld [smem:[#allocation10 + $0x69]]
        %v2720 = vstv %s2719
        %v2721 = vmul.f32 %v2720, %v2705
        %v2722 = vmul.f32 %v2720, %v2706
        %v2723 = vadd.f32 %v2673, %v2721
        %v2724 = vadd.f32 %v2674, %v2722
        %s2725 = sld [smem:[#allocation10 + $0x8d]]
        %v2726 = vstv %s2725
        %v2727 = vmul.f32 %v2726, %v2705
        %v2728 = vmul.f32 %v2726, %v2706
        %v2729 = vadd.f32 %v2679, %v2727
        %v2730 = vadd.f32 %v2680, %v2728
        %v2731 = vsel %vm1413, %v2533, 0.0
        %v2732 = vsel %vm1414, %v2534, 0.0
        %s2733 = sld [smem:[#allocation10 + $0x7]]
        %v2734 = vstv %s2733
        %v2735 = vmul.f32 %v2734, %v2731
        %v2736 = vmul.f32 %v2734, %v2732
        %v2737 = vadd.f32 %v2711, %v2735
        %v2738 = vadd.f32 %v2712, %v2736
        %s2739 = sld [smem:[#allocation10 + $0x2b]]
        %v2740 = vstv %s2739
        %v2741 = vmul.f32 %v2740, %v2731
        %v2742 = vmul.f32 %v2740, %v2732
        %v2743 = vadd.f32 %v2717, %v2741
        %v2744 = vadd.f32 %v2718, %v2742
        %s2745 = sld [smem:[#allocation10 + $0x4f]]
        %v2746 = vstv %s2745
        %v2747 = vmul.f32 %v2746, %v2731
        %v2748 = vmul.f32 %v2746, %v2732
        %v2749 = vadd.f32 %v2723, %v2747
        %v2750 = vadd.f32 %v2724, %v2748
        %s2751 = sld [smem:[#allocation10 + $0x73]]
        %v2752 = vstv %s2751
        %v2753 = vmul.f32 %v2752, %v2731
        %v2754 = vmul.f32 %v2752, %v2732
        %v2755 = vadd.f32 %v2729, %v2753
        %v2756 = vadd.f32 %v2730, %v2754
        %v2757 = vsel %vm1413, %v2583, 0.0
        %v2758 = vsel %vm1414, %v2584, 0.0
        %s2759 = sld [smem:[#allocation10 + $0x10]]
        %v2760 = vstv %s2759
        %v2761 = vmul.f32 %v2760, %v2757
        %v2762 = vmul.f32 %v2760, %v2758
        %v2763 = vadd.f32 %v2737, %v2761
        %v2764 = vadd.f32 %v2738, %v2762
        %s2765 = sld [smem:[#allocation10 + $0x34]]
        %v2766 = vstv %s2765
        %v2767 = vmul.f32 %v2766, %v2757
        %v2768 = vmul.f32 %v2766, %v2758
        %v2769 = vadd.f32 %v2743, %v2767
        %v2770 = vadd.f32 %v2744, %v2768
        %s2771 = sld [smem:[#allocation10 + $0x58]]
        %v2772 = vstv %s2771
        %v2773 = vmul.f32 %v2772, %v2757
        %v2774 = vmul.f32 %v2772, %v2758
        %v2775 = vadd.f32 %v2749, %v2773
        %v2776 = vadd.f32 %v2750, %v2774
        %s2777 = sld [smem:[#allocation10 + $0x7c]]
        %v2778 = vstv %s2777
        %v2779 = vmul.f32 %v2778, %v2757
        %v2780 = vmul.f32 %v2778, %v2758
        %v2781 = vadd.f32 %v2755, %v2779
        %v2782 = vadd.f32 %v2756, %v2780
        %v2783 = vsel %vm1413, %v2633, 0.0
        %v2784 = vsel %vm1414, %v2634, 0.0
        %s2785 = sld [smem:[#allocation10 + $0x19]]
        %v2786 = vstv %s2785
        %v2787 = vmul.f32 %v2786, %v2783
        %v2788 = vmul.f32 %v2786, %v2784
        %v2789 = vadd.f32 %v2763, %v2787
        %v2790 = vadd.f32 %v2764, %v2788
        %s2791 = sld [smem:[#allocation10 + $0x3d]]
        %v2792 = vstv %s2791
        %v2793 = vmul.f32 %v2792, %v2783
        %v2794 = vmul.f32 %v2792, %v2784
        %v2795 = vadd.f32 %v2769, %v2793
        %v2796 = vadd.f32 %v2770, %v2794
        %s2797 = sld [smem:[#allocation10 + $0x61]]
        %v2798 = vstv %s2797
        %v2799 = vmul.f32 %v2798, %v2783
        %v2800 = vmul.f32 %v2798, %v2784
        %v2801 = vadd.f32 %v2775, %v2799
        %v2802 = vadd.f32 %v2776, %v2800
        %s2803 = sld [smem:[#allocation10 + $0x85]]
        %v2804 = vstv %s2803
        %v2805 = vmul.f32 %v2804, %v2783
        %v2806 = vmul.f32 %v2804, %v2784
        %v2807 = vadd.f32 %v2781, %v2805
        %v2808 = vadd.f32 %v2782, %v2806
        %v2809 = vsel %vm1413, %v2683, 0.0
        %v2810 = vsel %vm1414, %v2684, 0.0
        %s2811 = sld [smem:[#allocation10 + $0x22]]
        %v2812 = vstv %s2811
        %v2813 = vmul.f32 %v2812, %v2809
        %v2814 = vmul.f32 %v2812, %v2810
        %v2815 = vadd.f32 %v2789, %v2813
        %v2816 = vadd.f32 %v2790, %v2814
        %s2817 = sld [smem:[#allocation10 + $0x46]]
        %v2818 = vstv %s2817
        %v2819 = vmul.f32 %v2818, %v2809
        %v2820 = vmul.f32 %v2818, %v2810
        %v2821 = vadd.f32 %v2795, %v2819
        %v2822 = vadd.f32 %v2796, %v2820
        %s2823 = sld [smem:[#allocation10 + $0x6a]]
        %v2824 = vstv %s2823
        %v2825 = vmul.f32 %v2824, %v2809
        %v2826 = vmul.f32 %v2824, %v2810
        %v2827 = vadd.f32 %v2801, %v2825
        %v2828 = vadd.f32 %v2802, %v2826
        %s2829 = sld [smem:[#allocation10 + $0x8e]]
        %v2830 = vstv %s2829
        %v2831 = vmul.f32 %v2830, %v2809
        %v2832 = vmul.f32 %v2830, %v2810
        %v2833 = vadd.f32 %v2807, %v2831
        %v2834 = vadd.f32 %v2808, %v2832
        %2835 = vrot.lane.b32.xlu0 %v2545, 127
        %v2836 = vpop.permute.xlu0 %2835
        %2837 = vrot.lane.b32.xlu0 %v2546, 127
        %v2838 = vpop.permute.xlu0 %2837
        %v2841 = vsel %vm1521, %v2836, 0.0
        %v2842 = vsel %vm1522, %v2838, 0.0
        %s2843 = sld [smem:[#allocation10 + $0x8]]
        %v2844 = vstv %s2843
        %v2845 = vmul.f32 %v2844, %v2841
        %v2846 = vmul.f32 %v2844, %v2842
        %v2847 = vadd.f32 %v2815, %v2845
        %v2848 = vadd.f32 %v2816, %v2846
        %s2849 = sld [smem:[#allocation10 + $0x2c]]
        %v2850 = vstv %s2849
        %v2851 = vmul.f32 %v2850, %v2841
        %v2852 = vmul.f32 %v2850, %v2842
        %v2853 = vadd.f32 %v2821, %v2851
        %v2854 = vadd.f32 %v2822, %v2852
        %s2855 = sld [smem:[#allocation10 + $0x50]]
        %v2856 = vstv %s2855
        %v2857 = vmul.f32 %v2856, %v2841
        %v2858 = vmul.f32 %v2856, %v2842
        %v2859 = vadd.f32 %v2827, %v2857
        %v2860 = vadd.f32 %v2828, %v2858
        %s2861 = sld [smem:[#allocation10 + $0x74]]
        %v2862 = vstv %s2861
        %v2863 = vmul.f32 %v2862, %v2841
        %v2864 = vmul.f32 %v2862, %v2842
        %v2865 = vadd.f32 %v2833, %v2863
        %v2866 = vadd.f32 %v2834, %v2864
        %2867 = vrot.lane.b32.xlu0 %v2595, 127
        %v2868 = vpop.permute.xlu0 %2867
        %2869 = vrot.lane.b32.xlu0 %v2596, 127
        %v2870 = vpop.permute.xlu0 %2869
        %v2873 = vsel %vm1521, %v2868, 0.0
        %v2874 = vsel %vm1522, %v2870, 0.0
        %s2875 = sld [smem:[#allocation10 + $0x11]]
        %v2876 = vstv %s2875
        %v2877 = vmul.f32 %v2876, %v2873
        %v2878 = vmul.f32 %v2876, %v2874
        %v2879 = vadd.f32 %v2847, %v2877
        %v2880 = vadd.f32 %v2848, %v2878
        %s2881 = sld [smem:[#allocation10 + $0x35]]
        %v2882 = vstv %s2881
        %v2883 = vmul.f32 %v2882, %v2873
        %v2884 = vmul.f32 %v2882, %v2874
        %v2885 = vadd.f32 %v2853, %v2883
        %v2886 = vadd.f32 %v2854, %v2884
        %s2887 = sld [smem:[#allocation10 + $0x59]]
        %v2888 = vstv %s2887
        %v2889 = vmul.f32 %v2888, %v2873
        %v2890 = vmul.f32 %v2888, %v2874
        %v2891 = vadd.f32 %v2859, %v2889
        %v2892 = vadd.f32 %v2860, %v2890
        %s2893 = sld [smem:[#allocation10 + $0x7d]]
        %v2894 = vstv %s2893
        %v2895 = vmul.f32 %v2894, %v2873
        %v2896 = vmul.f32 %v2894, %v2874
        %v2897 = vadd.f32 %v2865, %v2895
        %v2898 = vadd.f32 %v2866, %v2896
        %2899 = vrot.lane.b32.xlu0 %v2645, 127
        %v2900 = vpop.permute.xlu0 %2899
        %2901 = vrot.lane.b32.xlu0 %v2646, 127
        %v2902 = vpop.permute.xlu0 %2901
        %v2905 = vsel %vm1521, %v2900, 0.0
        %v2906 = vsel %vm1522, %v2902, 0.0
        %s2907 = sld [smem:[#allocation10 + $0x1a]]
        %v2908 = vstv %s2907
        %v2909 = vmul.f32 %v2908, %v2905
        %v2910 = vmul.f32 %v2908, %v2906
        %v2911 = vadd.f32 %v2879, %v2909
        %v2912 = vadd.f32 %v2880, %v2910
        %s2913 = sld [smem:[#allocation10 + $0x3e]]
        %v2914 = vstv %s2913
        %v2915 = vmul.f32 %v2914, %v2905
        %v2916 = vmul.f32 %v2914, %v2906
        %v2917 = vadd.f32 %v2885, %v2915
        %v2918 = vadd.f32 %v2886, %v2916
        %s2919 = sld [smem:[#allocation10 + $0x62]]
        %v2920 = vstv %s2919
        %v2921 = vmul.f32 %v2920, %v2905
        %v2922 = vmul.f32 %v2920, %v2906
        %v2923 = vadd.f32 %v2891, %v2921
        %v2924 = vadd.f32 %v2892, %v2922
        %s2925 = sld [smem:[#allocation10 + $0x86]]
        %v2926 = vstv %s2925
        %v2927 = vmul.f32 %v2926, %v2905
        %v2928 = vmul.f32 %v2926, %v2906
        %v2929 = vadd.f32 %v2897, %v2927
        %v2930 = vadd.f32 %v2898, %v2928
        %2931 = vrot.lane.b32.xlu0 %v2695, 127
        %v2932 = vpop.permute.xlu0 %2931
        %2933 = vrot.lane.b32.xlu0 %v2696, 127
        %v2934 = vpop.permute.xlu0 %2933
        %v2937 = vsel %vm1521, %v2932, 0.0
        %v2938 = vsel %vm1522, %v2934, 0.0
        %s2939 = sld [smem:[#allocation10 + $0x23]]
        %v2940 = vstv %s2939
        %v2941 = vmul.f32 %v2940, %v2937
        %v2942 = vmul.f32 %v2940, %v2938
        %v2943 = vadd.f32 %v2911, %v2941
        %v2944 = vadd.f32 %v2912, %v2942
        %s2945 = sld [smem:[#allocation10 + $0x47]]
        %v2946 = vstv %s2945
        %v2947 = vmul.f32 %v2946, %v2937
        %v2948 = vmul.f32 %v2946, %v2938
        %v2949 = vadd.f32 %v2917, %v2947
        %v2950 = vadd.f32 %v2918, %v2948
        %s2951 = sld [smem:[#allocation10 + $0x6b]]
        %v2952 = vstv %s2951
        %v2953 = vmul.f32 %v2952, %v2937
        %v2954 = vmul.f32 %v2952, %v2938
        %v2955 = vadd.f32 %v2923, %v2953
        %v2956 = vadd.f32 %v2924, %v2954
        %s2957 = sld [smem:[#allocation10 + $0x8f]]
        %v2958 = vstv %s2957
        %v2959 = vmul.f32 %v2958, %v2937
        %v2960 = vmul.f32 %v2958, %v2938
        %v2961 = vadd.f32 %v2929, %v2959
        %v2962 = vadd.f32 %v2930, %v2960
        %s2963 = sld [smem:[#allocation11]]
        %v2964 = vstv %s2963
        %v2965 = vadd.f32 %v2943, %v2964
        %v2966 = vadd.f32 %v2944, %v2964
        %s2967 = sld [smem:[#allocation11 + $0x1]]
        %v2968 = vstv %s2967
        %v2969 = vadd.f32 %v2949, %v2968
        %v2970 = vadd.f32 %v2950, %v2968
        %s2971 = sld [smem:[#allocation11 + $0x2]]
        %v2972 = vstv %s2971
        %v2973 = vadd.f32 %v2955, %v2972
        %v2974 = vadd.f32 %v2956, %v2972
        %s2975 = sld [smem:[#allocation11 + $0x3]]
        %v2976 = vstv %s2975
        %v2977 = vadd.f32 %v2961, %v2976
        %v2978 = vadd.f32 %v2962, %v2976
        %v2979 = vadd.f32 %v2965, %v303
        %v2980 = vadd.f32 %v2966, %v304
        %vm2981 = vcmp.gt.f32.partialorder %v2979, 0.0
        %vm2982 = vcmp.gt.f32.partialorder %v2980, 0.0
        %v2983 = vmul.f32 %v2979, 0.2
        %v2984 = vmul.f32 %v2980, 0.2
        %v2985 = vsel %vm2981, %v2979, %v2983
        %v2986 = vsel %vm2982, %v2980, %v2984
        %vm2987 = vcmask 130048
        %2988 = vst.msk [vmem:[%s297] sm:$0xff] %vm2987, %v2985
        %2989 = vst.msk [vmem:[%s297 + $0x8] sm:$0xff] %vm2987, %v2986
        %v2990 = vadd.f32 %v2969, %v306
        %v2991 = vadd.f32 %v2970, %v307
        %vm2992 = vcmp.gt.f32.partialorder %v2990, 0.0
        %vm2993 = vcmp.gt.f32.partialorder %v2991, 0.0
        %v2994 = vmul.f32 %v2990, 0.2
        %v2995 = vmul.f32 %v2991, 0.2
        %v2996 = vsel %vm2992, %v2990, %v2994
        %v2997 = vsel %vm2993, %v2991, %v2995
        %s2998 = scalar_lea.vmem %s297, 16 [#allocation13]
        %2999 = vst.msk [vmem:[%s2998] sm:$0xff] %vm2987, %v2996
        %3000 = vst.msk [vmem:[%s2998 + $0x8] sm:$0xff] %vm2987, %v2997
        %v3001 = vadd.f32 %v2973, %v309
        %v3002 = vadd.f32 %v2974, %v310
        %vm3003 = vcmp.gt.f32.partialorder %v3001, 0.0
        %vm3004 = vcmp.gt.f32.partialorder %v3002, 0.0
        %v3005 = vmul.f32 %v3001, 0.2
        %v3006 = vmul.f32 %v3002, 0.2
        %v3007 = vsel %vm3003, %v3001, %v3005
        %v3008 = vsel %vm3004, %v3002, %v3006
        %s3009 = scalar_lea.vmem %s297, 32 [#allocation13]
        %3010 = vst.msk [vmem:[%s3009] sm:$0xff] %vm2987, %v3007
        %3011 = vst.msk [vmem:[%s3009 + $0x8] sm:$0xff] %vm2987, %v3008
        %v3012 = vadd.f32 %v2977, %v312
        %v3013 = vadd.f32 %v2978, %v313
        %vm3014 = vcmp.gt.f32.partialorder %v3012, 0.0
        %vm3015 = vcmp.gt.f32.partialorder %v3013, 0.0
        %v3016 = vmul.f32 %v3012, 0.2
        %v3017 = vmul.f32 %v3013, 0.2
        %v3018 = vsel %vm3014, %v3012, %v3016
        %v3019 = vsel %vm3015, %v3013, %v3017
        %s3020 = scalar_lea.vmem %s297, 48 [#allocation13]
        %3021 = vst.msk [vmem:[%s3020] sm:$0xff] %vm2987, %v3018
        %3022 = vst.msk [vmem:[%s3020 + $0x8] sm:$0xff] %vm2987, %v3019
        %s3023 = sand.u32 %s144, 1
        %s3024 = scalar_lea.sflag [#allocation4], %s3023
        %s3025 = sand.u32 %s144, 1
        %s3026 = smul.addr %s3025, 64
        %s3027 = scalar_lea.vmem [#allocation13], %s3026
        // Predicated region
        $region61: #{tpu_custom_call.1} parent=39 // pred_check
          %p3028 = pneg %p154
        $region62: #{tpu_custom_call.1} parent=39 // pred_check_branch
          %3030 = sbr.rel (%p3028) target = $region64
        $region63: #{tpu_custom_call.1} parent=39 // pred_region
          %3032 = vsyncadd %s3024, 0
          %s3033 = smul.addr %s26, 8
          %s3034 = smul.addr %s3033, 8
          %s3035 = scalar_lea.hbm %s5, %s3034
          %s3036 = sshll.u32 %s3027, 4
          %s3037 = int_to_ptr.vmem [resolvable:$true] %s3036
          %s3038 = sshll.u32 %s3035, 4
          %s3039 = int_to_ptr.hbm [resolvable:$true] %s3038
          %3044 = dma.vmem_to_hbm [thread:$0]  %s3037, 1024, %s3039, %s3024, 128, 128, 8
        $region64: #{tpu_custom_call.1} parent=39 // pred_fallthru
          _
      $region40: #{tpu_custom_call.1} parent=5 // pred_fallthru
        _
      %p3045 = scmp.le.s32.totalorder 2, %s21
      // Predicated region
      $region65: #{tpu_custom_call.1} parent=5 // pred_check
        %p3046 = pneg %p3045
      $region66: #{tpu_custom_call.1} parent=5 // pred_check_branch
        %3048 = sbr.rel (%p3046) target = $region68
      $region67: #{tpu_custom_call.1} parent=5 // pred_region
        %s3049 = ssub.s32 %s21, 2
        // Predicated region
        $region69: #{tpu_custom_call.1} parent=67 // pred_check
          %p3050 = pneg %p160
        $region70: #{tpu_custom_call.1} parent=67 // pred_check_branch
          %3052 = sbr.rel (%p3050) target = $region72
        $region71: #{tpu_custom_call.1} parent=67 // pred_region
          %s3053 = sand.u32 %s145, 1
          %s3054 = scalar_lea.sflag [#allocation4], %s3053
          %s3055 = sand.u32 %s145, 1
          %s3056 = smul.addr %s3055, 64
          %s3057 = scalar_lea.vmem [#allocation13], %s3056
          %3059 = dma.done %s3054, 1024
        $region72: #{tpu_custom_call.1} parent=67 // pred_fallthru
          _
      $region68: #{tpu_custom_call.1} parent=5 // pred_fallthru
        _
    $region6: #{tpu_custom_call.1} parent=1 // loop_footer
      %s25 = sadd.s32 1, %s21
    $region7: #{tpu_custom_call.1} parent=1 // loop_footer_branch
      %20 = sbr.rel target = $region3
    $region8: #{tpu_custom_call.1} parent=1 // loop_exit
      _
    %3060 = vsyncpa [#allocation3], 1
    %s3061 = scalar_lea.sflag [#allocation3], 1
    %3062 = vsyncpa %s3061, 1
    %3063 = vsyncpa [#allocation4], 1
    %s3064 = scalar_lea.sflag [#allocation4], 1
    %3065 = vsyncpa %s3064, 1
    %3066 = vsyncpa [#allocation5], 1
    %s3067 = scalar_lea.sflag [#allocation5], 1
    %3068 = vsyncpa %s3067, 1
    %3069 = vsyncpa [#allocation9], 1
    %3070 = vsyncpa [#allocation6], 1
    %s3071 = scalar_lea.sflag [#allocation6], 1
    %3072 = vsyncpa %s3071, 1
    %3073 = vsyncpa [#allocation12], 1

</llo_original>
